<compile_context>
chip_gen: v7x
topology: tpu7x:2x2x1
jax: 0.10.0
libtpu: 0.0.40
codegen_flags: <defaults>
</compile_context>

<pallas_src>
import functools

import jax
import jax.numpy as jnp
from jax.experimental import pallas as pl
from jax.experimental.pallas import tpu as pltpu

# Logical (PyTorch) layer sizes and the padded sizes used on-device.
SIZES = [(561, 2048), (2048, 1024), (1024, 256), (256, 12)]
K_PAD = 640     # 561 -> 640 (multiple of 128): lane/sublane aligned x & W1
N_PAD = 128     # 12  -> 128: lane-dense final output block (no masked stores)


def _mlp_fused_kernel(x_ref,
                      w1_ref, b1_ref,
                      w2_ref, b2_ref,
                      w3_ref, b3_ref,
                      w4_ref, b4_ref,
                      o_ref):
    """Full 4-layer MLP on a single VMEM-resident tile.

    Weights are bf16; matmuls run bf16 x bf16 on the MXU with f32 accumulation.
    Bias add + ReLU are done in f32, then activations are cast back to bf16 to
    feed the next matmul.
    """
    # Layer 1: (B, 640) @ (640, 2048) + b1, ReLU
    h = jnp.dot(x_ref[...].astype(jnp.bfloat16), w1_ref[...],
                preferred_element_type=jnp.float32)
    h = jnp.maximum(h + b1_ref[...], 0.0)

    # Layer 2: (B, 2048) @ (2048, 1024) + b2, ReLU
    h = jnp.dot(h.astype(jnp.bfloat16), w2_ref[...],
                preferred_element_type=jnp.float32)
    h = jnp.maximum(h + b2_ref[...], 0.0)

    # Layer 3: (B, 1024) @ (1024, 256) + b3, ReLU
    h = jnp.dot(h.astype(jnp.bfloat16), w3_ref[...],
                preferred_element_type=jnp.float32)
    h = jnp.maximum(h + b3_ref[...], 0.0)

    # Layer 4: (B, 256) @ (256, 128 padded) + b4, no ReLU
    h = jnp.dot(h.astype(jnp.bfloat16), w4_ref[...],
                preferred_element_type=jnp.float32)
    o_ref[...] = (h + b4_ref[...]).astype(o_ref.dtype)


def _full_spec(shape):
    # Single-tile block == whole array, constant index map.
    return pl.BlockSpec(shape, lambda i: tuple(0 for _ in shape))


def mnist_2nn_fused(x, padded_params):
    """Fused forward: x (B, 561) f32 -> (B, 12) f32."""
    B, K = x.shape
    assert K == SIZES[0][0]
    (w1, b1), (w2, b2), (w3, b3), (w4, b4) = padded_params

    # Zero-pad the input feature dim to the aligned K_PAD (zero rows of W1
    # match, so the result is bit-identical math).
    x_pad = jnp.pad(x, ((0, 0), (0, K_PAD - K)))

    flops = 2 * B * sum(w.shape[0] * w.shape[1] for w, _ in padded_params)
    bytes_accessed = (
        sum(w.size * w.dtype.itemsize + b.size * b.dtype.itemsize
            for w, b in padded_params)
        + x_pad.size * x_pad.dtype.itemsize
        + B * N_PAD * 4
    )

    out_pad = pl.pallas_call(
        _mlp_fused_kernel,
        out_shape=jax.ShapeDtypeStruct((B, N_PAD), jnp.float32),
        grid=(1,),
        in_specs=[
            _full_spec((B, K_PAD)),
            _full_spec(w1.shape), _full_spec(b1.shape),
            _full_spec(w2.shape), _full_spec(b2.shape),
            _full_spec(w3.shape), _full_spec(b3.shape),
            _full_spec(w4.shape), _full_spec(b4.shape),
        ],
        out_specs=_full_spec((B, N_PAD)),
        compiler_params=pltpu.CompilerParams(
            dimension_semantics=("arbitrary",),
            # Right-sized: ~15 MiB of (double-buffered) bf16 weights + slack.
            # Safe on v7x (64 MiB physical VMEM per TC).
            vmem_limit_bytes=32 << 20,
        ),
        cost_estimate=pl.CostEstimate(
            flops=flops, transcendentals=0, bytes_accessed=bytes_accessed),
    )(x_pad, w1, b1, w2, b2, w3, b3, w4, b4)

    # Slice the lane-dense padded output back to the logical 12 classes.
    return out_pad[:, : SIZES[-1][1]]


def init_params(key):
    """nn.Linear-style U(-1/sqrt(fan_in), 1/sqrt(fan_in)) init, f32, (in, out)."""
    params = []
    for fan_in, fan_out in SIZES:
        key, kw, kb = jax.random.split(key, 3)
        bound = 1.0 / jnp.sqrt(jnp.float32(fan_in))
        w = jax.random.uniform(kw, (fan_in, fan_out), jnp.float32, -bound, bound)
        b = jax.random.uniform(kb, (fan_out,), jnp.float32, -bound, bound)
        params.append((w, b))
    return params


def pad_and_quantize_params(params_f32):
    """bf16 weights + zero padding: W1 rows 561->640, W4/b4 cols 12->128."""
    (w1, b1), (w2, b2), (w3, b3), (w4, b4) = params_f32
    w1p = jnp.pad(w1, ((0, K_PAD - w1.shape[0]), (0, 0))).astype(jnp.bfloat16)
    w2p = w2.astype(jnp.bfloat16)
    w3p = w3.astype(jnp.bfloat16)
    w4p = jnp.pad(w4, ((0, 0), (0, N_PAD - w4.shape[1]))).astype(jnp.bfloat16)
    b4p = jnp.pad(b4, (0, N_PAD - b4.shape[0]))
    # Biases stay f32, shaped (1, N) for in-kernel broadcast over batch.
    return [
        (w1p, b1.reshape(1, -1).astype(jnp.float32)),
        (w2p, b2.reshape(1, -1).astype(jnp.float32)),
        (w3p, b3.reshape(1, -1).astype(jnp.float32)),
        (w4p, b4p.reshape(1, -1).astype(jnp.float32)),
    ]


@jax.jit
def mnist_2nn_forward(x, padded_params):
    return mnist_2nn_fused(x, padded_params)


def reference_forward(x, params_f32):
    """Pure-JAX reference emulating the kernel's bf16 weight/activation casts."""
    t = x
    for i, (w, b) in enumerate(params_f32):
        t16 = t.astype(jnp.bfloat16).astype(jnp.float32)
        w16 = w.astype(jnp.bfloat16).astype(jnp.float32)
        t = t16 @ w16 + b
        if i < 3:
            t = jnp.maximum(t, 0.0)
    return t


if __name__ == "__main__":
    key = jax.random.PRNGKey(0)
    key, kx = jax.random.split(key)
    batch = 8
    x = jax.random.normal(kx, (batch, 561), jnp.float32)

    params_f32 = init_params(key)
    padded_params = pad_and_quantize_params(params_f32)

    out = mnist_2nn_forward(x, padded_params)
    out = jax.block_until_ready(out)

    ref = reference_forward(x, params_f32)
    assert out.shape == (batch, 12), out.shape
    assert jnp.allclose(out, ref, atol=1e-3, rtol=1e-3), "mismatch vs reference"

    print("KERNEL_OK")
</pallas_src>

<mosaic_0001>
module attributes {stable_mosaic.version = 11 : i64} {
  func.func @_mlp_fused_kernel(%arg0: i32, %arg1: memref<8x640xf32, #tpu.memory_space<vmem>>, %arg2: memref<640x2048xbf16, #tpu.memory_space<vmem>>, %arg3: memref<1x2048xf32, #tpu.memory_space<vmem>>, %arg4: memref<2048x1024xbf16, #tpu.memory_space<vmem>>, %arg5: memref<1x1024xf32, #tpu.memory_space<vmem>>, %arg6: memref<1024x256xbf16, #tpu.memory_space<vmem>>, %arg7: memref<1x256xf32, #tpu.memory_space<vmem>>, %arg8: memref<256x128xbf16, #tpu.memory_space<vmem>>, %arg9: memref<1x128xf32, #tpu.memory_space<vmem>>, %arg10: memref<8x128xf32, #tpu.memory_space<vmem>>) attributes {dimension_semantics = [#tpu.dimension_semantics<arbitrary>], iteration_bounds = array<i64: 1>, scalar_prefetch = 0 : i64, scratch_operands = 0 : i64, tpu.core_type = #tpu.core_type<tc>, window_params = [{pipeline_mode = #tpu.pipeline_mode<synchronous>, transform_indices = @transform_0, window_bounds = array<i64: 8, 640>}, {pipeline_mode = #tpu.pipeline_mode<synchronous>, transform_indices = @transform_1, window_bounds = array<i64: 640, 2048>}, {pipeline_mode = #tpu.pipeline_mode<synchronous>, transform_indices = @transform_2, window_bounds = array<i64: 1, 2048>}, {pipeline_mode = #tpu.pipeline_mode<synchronous>, transform_indices = @transform_3, window_bounds = array<i64: 2048, 1024>}, {pipeline_mode = #tpu.pipeline_mode<synchronous>, transform_indices = @transform_4, window_bounds = array<i64: 1, 1024>}, {pipeline_mode = #tpu.pipeline_mode<synchronous>, transform_indices = @transform_5, window_bounds = array<i64: 1024, 256>}, {pipeline_mode = #tpu.pipeline_mode<synchronous>, transform_indices = @transform_6, window_bounds = array<i64: 1, 256>}, {pipeline_mode = #tpu.pipeline_mode<synchronous>, transform_indices = @transform_7, window_bounds = array<i64: 256, 128>}, {pipeline_mode = #tpu.pipeline_mode<synchronous>, transform_indices = @transform_8, window_bounds = array<i64: 1, 128>}, {pipeline_mode = #tpu.pipeline_mode<synchronous>, transform_indices = @transform_9, window_bounds = array<i64: 8, 128>}]} {
    %c0 = arith.constant 0 : index
    %c0_0 = arith.constant 0 : index
    %0 = vector.load %arg1[%c0, %c0_0] : memref<8x640xf32, #tpu.memory_space<vmem>>, vector<8x640xf32>
    %1 = arith.truncf %0 : vector<8x640xf32> to vector<8x640xbf16>
    %c0_1 = arith.constant 0 : index
    %c0_2 = arith.constant 0 : index
    %2 = vector.load %arg2[%c0_1, %c0_2] : memref<640x2048xbf16, #tpu.memory_space<vmem>>, vector<640x2048xbf16>
    %cst = arith.constant dense<0.000000e+00> : vector<8x2048xf32>
    %3 = tpu.matmul %1, %2, %cst {dimension_numbers = #tpu.dot_dimension_numbers<[1], [0], [0], [1], [0, 0, 1, 1], [], []>} : vector<8x640xbf16>, vector<640x2048xbf16>, vector<8x2048xf32> -> vector<8x2048xf32>
    %c0_3 = arith.constant 0 : index
    %c0_4 = arith.constant 0 : index
    %4 = vector.load %arg3[%c0_3, %c0_4] : memref<1x2048xf32, #tpu.memory_space<vmem>>, vector<1x2048xf32>
    %5 = vector.broadcast %4 : vector<1x2048xf32> to vector<8x2048xf32>
    %6 = arith.addf %3, %5 : vector<8x2048xf32>
    %cst_5 = arith.constant 0.000000e+00 : f32
    %7 = vector.broadcast %cst_5 : f32 to vector<8x2048xf32>
    %8 = arith.maximumf %6, %7 : vector<8x2048xf32>
    %9 = arith.truncf %8 : vector<8x2048xf32> to vector<8x2048xbf16>
    %c0_6 = arith.constant 0 : index
    %c0_7 = arith.constant 0 : index
    %10 = vector.load %arg4[%c0_6, %c0_7] : memref<2048x1024xbf16, #tpu.memory_space<vmem>>, vector<2048x1024xbf16>
    %cst_8 = arith.constant dense<0.000000e+00> : vector<8x1024xf32>
    %11 = tpu.matmul %9, %10, %cst_8 {dimension_numbers = #tpu.dot_dimension_numbers<[1], [0], [0], [1], [0, 0, 1, 1], [], []>} : vector<8x2048xbf16>, vector<2048x1024xbf16>, vector<8x1024xf32> -> vector<8x1024xf32>
    %c0_9 = arith.constant 0 : index
    %c0_10 = arith.constant 0 : index
    %12 = vector.load %arg5[%c0_9, %c0_10] : memref<1x1024xf32, #tpu.memory_space<vmem>>, vector<1x1024xf32>
    %13 = vector.broadcast %12 : vector<1x1024xf32> to vector<8x1024xf32>
    %14 = arith.addf %11, %13 : vector<8x1024xf32>
    %cst_11 = arith.constant 0.000000e+00 : f32
    %15 = vector.broadcast %cst_11 : f32 to vector<8x1024xf32>
    %16 = arith.maximumf %14, %15 : vector<8x1024xf32>
    %17 = arith.truncf %16 : vector<8x1024xf32> to vector<8x1024xbf16>
    %c0_12 = arith.constant 0 : index
    %c0_13 = arith.constant 0 : index
    %18 = vector.load %arg6[%c0_12, %c0_13] : memref<1024x256xbf16, #tpu.memory_space<vmem>>, vector<1024x256xbf16>
    %cst_14 = arith.constant dense<0.000000e+00> : vector<8x256xf32>
    %19 = tpu.matmul %17, %18, %cst_14 {dimension_numbers = #tpu.dot_dimension_numbers<[1], [0], [0], [1], [0, 0, 1, 1], [], []>} : vector<8x1024xbf16>, vector<1024x256xbf16>, vector<8x256xf32> -> vector<8x256xf32>
    %c0_15 = arith.constant 0 : index
    %c0_16 = arith.constant 0 : index
    %20 = vector.load %arg7[%c0_15, %c0_16] : memref<1x256xf32, #tpu.memory_space<vmem>>, vector<1x256xf32>
    %21 = vector.broadcast %20 : vector<1x256xf32> to vector<8x256xf32>
    %22 = arith.addf %19, %21 : vector<8x256xf32>
    %cst_17 = arith.constant 0.000000e+00 : f32
    %23 = vector.broadcast %cst_17 : f32 to vector<8x256xf32>
    %24 = arith.maximumf %22, %23 : vector<8x256xf32>
    %25 = arith.truncf %24 : vector<8x256xf32> to vector<8x256xbf16>
    %c0_18 = arith.constant 0 : index
    %c0_19 = arith.constant 0 : index
    %26 = vector.load %arg8[%c0_18, %c0_19] : memref<256x128xbf16, #tpu.memory_space<vmem>>, vector<256x128xbf16>
    %cst_20 = arith.constant dense<0.000000e+00> : vector<8x128xf32>
    %27 = tpu.matmul %25, %26, %cst_20 {dimension_numbers = #tpu.dot_dimension_numbers<[1], [0], [0], [1], [0, 0, 1, 1], [], []>} : vector<8x256xbf16>, vector<256x128xbf16>, vector<8x128xf32> -> vector<8x128xf32>
    %c0_21 = arith.constant 0 : index
    %c0_22 = arith.constant 0 : index
    %28 = vector.load %arg9[%c0_21, %c0_22] : memref<1x128xf32, #tpu.memory_space<vmem>>, vector<1x128xf32>
    %29 = vector.broadcast %28 : vector<1x128xf32> to vector<8x128xf32>
    %30 = arith.addf %27, %29 : vector<8x128xf32>
    %c0_23 = arith.constant 0 : index
    %c0_24 = arith.constant 0 : index
    %31 = vector.load %arg10[%c0_23, %c0_24] : memref<8x128xf32, #tpu.memory_space<vmem>>, vector<8x128xf32>
    tpu.vector_store %arg10[%c0_23, %c0_24], %30 {strides = array<i32>} : memref<8x128xf32, #tpu.memory_space<vmem>>, vector<8x128xf32>,
    return
  }
  func.func @transform_0(%arg0: i32) -> (i32, i32) {
    %c0_i32 = arith.constant 0 : i32
    %c0_i32_0 = arith.constant 0 : i32
    %c0_i32_1 = arith.constant 0 : i32
    return %c0_i32, %c0_i32_0 : i32, i32
  }
  func.func @transform_1(%arg0: i32) -> (i32, i32) {
    %c0_i32 = arith.constant 0 : i32
    %c0_i32_0 = arith.constant 0 : i32
    %c0_i32_1 = arith.constant 0 : i32
    return %c0_i32, %c0_i32_0 : i32, i32
  }
  func.func @transform_2(%arg0: i32) -> (i32, i32) {
    %c0_i32 = arith.constant 0 : i32
    %c0_i32_0 = arith.constant 0 : i32
    %c0_i32_1 = arith.constant 0 : i32
    return %c0_i32, %c0_i32_0 : i32, i32
  }
  func.func @transform_3(%arg0: i32) -> (i32, i32) {
    %c0_i32 = arith.constant 0 : i32
    %c0_i32_0 = arith.constant 0 : i32
    %c0_i32_1 = arith.constant 0 : i32
    return %c0_i32, %c0_i32_0 : i32, i32
  }
  func.func @transform_4(%arg0: i32) -> (i32, i32) {
    %c0_i32 = arith.constant 0 : i32
    %c0_i32_0 = arith.constant 0 : i32
    %c0_i32_1 = arith.constant 0 : i32
    return %c0_i32, %c0_i32_0 : i32, i32
  }
  func.func @transform_5(%arg0: i32) -> (i32, i32) {
    %c0_i32 = arith.constant 0 : i32
    %c0_i32_0 = arith.constant 0 : i32
    %c0_i32_1 = arith.constant 0 : i32
    return %c0_i32, %c0_i32_0 : i32, i32
  }
  func.func @transform_6(%arg0: i32) -> (i32, i32) {
    %c0_i32 = arith.constant 0 : i32
    %c0_i32_0 = arith.constant 0 : i32
    %c0_i32_1 = arith.constant 0 : i32
    return %c0_i32, %c0_i32_0 : i32, i32
  }
  func.func @transform_7(%arg0: i32) -> (i32, i32) {
    %c0_i32 = arith.constant 0 : i32
    %c0_i32_0 = arith.constant 0 : i32
    %c0_i32_1 = arith.constant 0 : i32
    return %c0_i32, %c0_i32_0 : i32, i32
  }
  func.func @transform_8(%arg0: i32) -> (i32, i32) {
    %c0_i32 = arith.constant 0 : i32
    %c0_i32_0 = arith.constant 0 : i32
    %c0_i32_1 = arith.constant 0 : i32
    return %c0_i32, %c0_i32_0 : i32, i32
  }
  func.func @transform_9(%arg0: i32) -> (i32, i32) {
    %c0_i32 = arith.constant 0 : i32
    %c0_i32_0 = arith.constant 0 : i32
    %c0_i32_1 = arith.constant 0 : i32
    return %c0_i32, %c0_i32_0 : i32, i32
  }
}

</mosaic_0001>

<llo_original>
// kernel: mnist_2nn_forward.1
$region0: #{mnist_2nn_forward.1}
  #allocation0 [shape = 'u32[]', space=smem, size = 0x4, offset = 0x4, fixed_abs, tag = 'smem constant byte address 0x4 - core index']
  #allocation1 [shape = 'u32[144,128]{1,0:T(1,128)}', space=vmem, size = 0x12000, scoped, tag = 'internal scratch']
  %s0 = inlined_call_operand.vmem [shape: f32[8,640], index: 0, kind: input, shape index: {}]
  %s1 = inlined_call_operand.hbm [shape: bf16[640,2048], index: 1, kind: input, shape index: {}]
  %s2 = inlined_call_operand.hbm [shape: f32[1,2048], index: 2, kind: input, shape index: {}]
  %s3 = inlined_call_operand.hbm [shape: bf16[2048,1024], index: 3, kind: input, shape index: {}]
  %s4 = inlined_call_operand.hbm [shape: f32[1,1024], index: 4, kind: input, shape index: {}]
  %s5 = inlined_call_operand.hbm [shape: bf16[1024,256], index: 5, kind: input, shape index: {}]
  %s6 = inlined_call_operand.hbm [shape: f32[1,256], index: 6, kind: input, shape index: {}]
  %s7 = inlined_call_operand.hbm [shape: bf16[256,128], index: 7, kind: input, shape index: {}]
  %s8 = inlined_call_operand.hbm [shape: f32[1,128], index: 8, kind: input, shape index: {}]
  %s9 = inlined_call_operand.hbm [shape: f32[8,128], index: 9, kind: output, shape index: {}]
  %s10 = sld [smem:[#allocation0]]
  $region78: #{mnist_2nn_forward.1} parent=0
    _
  %s12 = ssub.s32 1, %s10
  %s13 = scalar_select 0, %s12, %s10
  $region1: #{mnist_2nn_forward.1} parent=0
    #allocation2 [shape = 'u8[2621440]{0}', space=vmem, size = 0x280000, scoped, tag = 'input window, operand 1, single buffered']
    #allocation3 [shape = 's32[1]{0}', space=sflag, size = 0x4, scoped, tag = 'scoped memory for mnist_2nn_forward.1']
    #allocation4 [shape = 's32[1]{0}', space=sflag, size = 0x4, scoped, tag = 'scoped memory for mnist_2nn_forward.1']
    #allocation5 [shape = 'u8[8192]{0}', space=vmem, size = 0x2000, scoped, tag = 'input window, operand 2, single buffered']
    #allocation6 [shape = 's32[1]{0}', space=sflag, size = 0x4, scoped, tag = 'scoped memory for mnist_2nn_forward.1']
    #allocation7 [shape = 'u8[4194304]{0}', space=vmem, size = 0x400000, scoped, tag = 'input window, operand 3, single buffered']
    #allocation8 [shape = 'u8[4096]{0}', space=vmem, size = 0x1000, scoped, tag = 'input window, operand 4, single buffered']
    #allocation9 [shape = 's32[1]{0}', space=sflag, size = 0x4, scoped, tag = 'scoped memory for mnist_2nn_forward.1']
    #allocation10 [shape = 'u8[524288]{0}', space=vmem, size = 0x80000, scoped, tag = 'input window, operand 5, single buffered']
    #allocation11 [shape = 'u8[1024]{0}', space=vmem, size = 0x400, scoped, tag = 'input window, operand 6, single buffered']
    #allocation12 [shape = 's32[1]{0}', space=sflag, size = 0x4, scoped, tag = 'scoped memory for mnist_2nn_forward.1']
    #allocation13 [shape = 'u8[65536]{0}', space=vmem, size = 0x10000, scoped, tag = 'input window, operand 7, single buffered']
    #allocation14 [shape = 'u8[512]{0}', space=vmem, size = 0x400, scoped, tag = 'input window, operand 8, single buffered']
    #allocation15 [shape = 's32[1]{0}', space=sflag, size = 0x4, scoped, tag = 'scoped memory for mnist_2nn_forward.1']
    #allocation16 [shape = 'u8[4096]{0}', space=vmem, size = 0x1000, scoped, tag = 'output window, operand 0, single buffered']
    %14 = vsyncpa [#allocation3], 0
    %15 = vsyncpa [#allocation6], 0
    %16 = vsyncpa [#allocation9], 0
    %17 = vsyncpa [#allocation12], 0
    %18 = vsyncpa [#allocation15], 0
    %19 = vsyncpa [#allocation4], 0
    // Predicated region
    $region2: #{mnist_2nn_forward.1} parent=1 // pred_check
      _
    $region3: #{mnist_2nn_forward.1} parent=1 // pred_check_branch
      %21 = sbr.rel (0) target = $region5
    $region4: #{mnist_2nn_forward.1} parent=1 // pred_region
      _
    $region5: #{mnist_2nn_forward.1} parent=1 // pred_fallthru
      _
    // Predicated region
    $region6: #{mnist_2nn_forward.1} parent=1 // pred_check
      _
    $region7: #{mnist_2nn_forward.1} parent=1 // pred_check_branch
      %23 = sbr.rel (0) target = $region9
    $region8: #{mnist_2nn_forward.1} parent=1 // pred_region
      %s25 = ssub.s32 81920, 81920
      %26 = vsyncadd [#allocation3], %s25
      %s27 = sshll.u32 [#allocation2], 4
      %s28 = int_to_ptr.vmem [resolvable:$true] %s27
      %33 = dma.hbm_to_vmem [thread:$0]  %s1, 81920, %s28, [#allocation3], 1024, 1024, 64
    $region9: #{mnist_2nn_forward.1} parent=1 // pred_fallthru
      _
    // Predicated region
    $region10: #{mnist_2nn_forward.1} parent=1 // pred_check
      _
    $region11: #{mnist_2nn_forward.1} parent=1 // pred_check_branch
      %35 = sbr.rel (0) target = $region13
    $region12: #{mnist_2nn_forward.1} parent=1 // pred_region
      %s37 = ssub.s32 256, 256
      %38 = vsyncadd [#allocation6], %s37
      %s40 = sshll.u32 [#allocation5], 4
      %s41 = int_to_ptr.vmem [resolvable:$true] %s40
      %43 = dma.hbm_to_vmem [thread:$0]  %s2, 256, %s41, [#allocation6]
    $region13: #{mnist_2nn_forward.1} parent=1 // pred_fallthru
      _
    // Predicated region
    $region14: #{mnist_2nn_forward.1} parent=1 // pred_check
      _
    $region15: #{mnist_2nn_forward.1} parent=1 // pred_check_branch
      %45 = sbr.rel (0) target = $region17
    $region16: #{mnist_2nn_forward.1} parent=1 // pred_region
      %s47 = ssub.s32 131072, 131072
      %48 = vsyncadd [#allocation6], %s47
      %s49 = sshll.u32 [#allocation7], 4
      %s50 = int_to_ptr.vmem [resolvable:$true] %s49
      %55 = dma.hbm_to_vmem [thread:$0]  %s3, 131072, %s50, [#allocation6], 512, 512, 32
    $region17: #{mnist_2nn_forward.1} parent=1 // pred_fallthru
      _
    // Predicated region
    $region18: #{mnist_2nn_forward.1} parent=1 // pred_check
      _
    $region19: #{mnist_2nn_forward.1} parent=1 // pred_check_branch
      %57 = sbr.rel (0) target = $region21
    $region20: #{mnist_2nn_forward.1} parent=1 // pred_region
      %s59 = ssub.s32 128, 128
      %60 = vsyncadd [#allocation9], %s59
      %s62 = sshll.u32 [#allocation8], 4
      %s63 = int_to_ptr.vmem [resolvable:$true] %s62
      %65 = dma.hbm_to_vmem [thread:$0]  %s4, 128, %s63, [#allocation9]
    $region21: #{mnist_2nn_forward.1} parent=1 // pred_fallthru
      _
    // Predicated region
    $region22: #{mnist_2nn_forward.1} parent=1 // pred_check
      _
    $region23: #{mnist_2nn_forward.1} parent=1 // pred_check_branch
      %67 = sbr.rel (0) target = $region25
    $region24: #{mnist_2nn_forward.1} parent=1 // pred_region
      %s69 = ssub.s32 16384, 16384
      %70 = vsyncadd [#allocation9], %s69
      %s71 = sshll.u32 [#allocation10], 4
      %s72 = int_to_ptr.vmem [resolvable:$true] %s71
      %77 = dma.hbm_to_vmem [thread:$0]  %s5, 16384, %s72, [#allocation9], 128, 128, 8
    $region25: #{mnist_2nn_forward.1} parent=1 // pred_fallthru
      _
    // Predicated region
    $region26: #{mnist_2nn_forward.1} parent=1 // pred_check
      _
    $region27: #{mnist_2nn_forward.1} parent=1 // pred_check_branch
      %79 = sbr.rel (0) target = $region29
    $region28: #{mnist_2nn_forward.1} parent=1 // pred_region
      %s81 = ssub.s32 32, 32
      %82 = vsyncadd [#allocation12], %s81
      %s84 = sshll.u32 [#allocation11], 4
      %s85 = int_to_ptr.vmem [resolvable:$true] %s84
      %87 = dma.hbm_to_vmem [thread:$0]  %s6, 32, %s85, [#allocation12]
    $region29: #{mnist_2nn_forward.1} parent=1 // pred_fallthru
      _
    // Predicated region
    $region30: #{mnist_2nn_forward.1} parent=1 // pred_check
      _
    $region31: #{mnist_2nn_forward.1} parent=1 // pred_check_branch
      %89 = sbr.rel (0) target = $region33
    $region32: #{mnist_2nn_forward.1} parent=1 // pred_region
      %s91 = ssub.s32 2048, 2048
      %92 = vsyncadd [#allocation12], %s91
      %s93 = sshll.u32 [#allocation13], 4
      %s94 = int_to_ptr.vmem [resolvable:$true] %s93
      %99 = dma.hbm_to_vmem [thread:$0]  %s7, 2048, %s94, [#allocation12], 64, 64, 4
    $region33: #{mnist_2nn_forward.1} parent=1 // pred_fallthru
      _
    // Predicated region
    $region34: #{mnist_2nn_forward.1} parent=1 // pred_check
      _
    $region35: #{mnist_2nn_forward.1} parent=1 // pred_check_branch
      %101 = sbr.rel (0) target = $region37
    $region36: #{mnist_2nn_forward.1} parent=1 // pred_region
      %s103 = ssub.s32 16, 16
      %104 = vsyncadd [#allocation15], %s103
      %s106 = sshll.u32 [#allocation14], 4
      %s107 = int_to_ptr.vmem [resolvable:$true] %s106
      %109 = dma.hbm_to_vmem [thread:$0]  %s8, 16, %s107, [#allocation15]
    $region37: #{mnist_2nn_forward.1} parent=1 // pred_fallthru
      _
    // Predicated region
    $region38: #{mnist_2nn_forward.1} parent=1 // pred_check
      _
    $region39: #{mnist_2nn_forward.1} parent=1 // pred_check_branch
      %111 = sbr.rel (0) target = $region41
    $region40: #{mnist_2nn_forward.1} parent=1 // pred_region
      %112 = dma.done [#allocation3], 81920
    $region41: #{mnist_2nn_forward.1} parent=1 // pred_fallthru
      _
    // Predicated region
    $region42: #{mnist_2nn_forward.1} parent=1 // pred_check
      _
    $region43: #{mnist_2nn_forward.1} parent=1 // pred_check_branch
      %114 = sbr.rel (0) target = $region45
    $region44: #{mnist_2nn_forward.1} parent=1 // pred_region
      %115 = dma.done [#allocation6], 256
    $region45: #{mnist_2nn_forward.1} parent=1 // pred_fallthru
      _
    // Predicated region
    $region46: #{mnist_2nn_forward.1} parent=1 // pred_check
      _
    $region47: #{mnist_2nn_forward.1} parent=1 // pred_check_branch
      %117 = sbr.rel (0) target = $region49
    $region48: #{mnist_2nn_forward.1} parent=1 // pred_region
      %118 = dma.done [#allocation6], 131072
    $region49: #{mnist_2nn_forward.1} parent=1 // pred_fallthru
      _
    // Predicated region
    $region50: #{mnist_2nn_forward.1} parent=1 // pred_check
      _
    $region51: #{mnist_2nn_forward.1} parent=1 // pred_check_branch
      %120 = sbr.rel (0) target = $region53
    $region52: #{mnist_2nn_forward.1} parent=1 // pred_region
      %121 = dma.done [#allocation9], 128
    $region53: #{mnist_2nn_forward.1} parent=1 // pred_fallthru
      _
    // Predicated region
    $region54: #{mnist_2nn_forward.1} parent=1 // pred_check
      _
    $region55: #{mnist_2nn_forward.1} parent=1 // pred_check_branch
      %123 = sbr.rel (0) target = $region57
    $region56: #{mnist_2nn_forward.1} parent=1 // pred_region
      %124 = dma.done [#allocation9], 16384
    $region57: #{mnist_2nn_forward.1} parent=1 // pred_fallthru
      _
    // Predicated region
    $region58: #{mnist_2nn_forward.1} parent=1 // pred_check
      _
    $region59: #{mnist_2nn_forward.1} parent=1 // pred_check_branch
      %126 = sbr.rel (0) target = $region61
    $region60: #{mnist_2nn_forward.1} parent=1 // pred_region
      %127 = dma.done [#allocation12], 32
    $region61: #{mnist_2nn_forward.1} parent=1 // pred_fallthru
      _
    // Predicated region
    $region62: #{mnist_2nn_forward.1} parent=1 // pred_check
      _
    $region63: #{mnist_2nn_forward.1} parent=1 // pred_check_branch
      %129 = sbr.rel (0) target = $region65
    $region64: #{mnist_2nn_forward.1} parent=1 // pred_region
      %130 = dma.done [#allocation12], 2048
    $region65: #{mnist_2nn_forward.1} parent=1 // pred_fallthru
      _
    // Predicated region
    $region66: #{mnist_2nn_forward.1} parent=1 // pred_check
      _
    $region67: #{mnist_2nn_forward.1} parent=1 // pred_check_branch
      %132 = sbr.rel (0) target = $region69
    $region68: #{mnist_2nn_forward.1} parent=1 // pred_region
      %133 = dma.done [#allocation15], 16
    $region69: #{mnist_2nn_forward.1} parent=1 // pred_fallthru
      _
    %v135 = vld [vmem:[%s0] sm:$0xff]
    %v136 = vld [vmem:[%s0 + $0x8] sm:$0xff]
    %v137 = vld [vmem:[%s0 + $0x10] sm:$0xff]
    %v138 = vld [vmem:[%s0 + $0x18] sm:$0xff]
    %v139 = vld [vmem:[%s0 + $0x20] sm:$0xff]
    %v140 = vpack.c.bf16 %v135, %v135
    %v141 = vpack.c.bf16 %v136, %v136
    %v142 = vpack.c.bf16 %v137, %v137
    %v143 = vpack.c.bf16 %v138, %v138
    %v144 = vpack.c.bf16 %v139, %v139
    %v145 = vld [vmem:[#allocation2] sm:$0xff]
    %v146 = vld [vmem:[#allocation2 + $0x8] sm:$0xff]
    %v147 = vld [vmem:[#allocation2 + $0x10] sm:$0xff]
    %v148 = vld [vmem:[#allocation2 + $0x18] sm:$0xff]
    %v149 = vld [vmem:[#allocation2 + $0x20] sm:$0xff]
    %v150 = vld [vmem:[#allocation2 + $0x28] sm:$0xff]
    %v151 = vld [vmem:[#allocation2 + $0x30] sm:$0xff]
    %v152 = vld [vmem:[#allocation2 + $0x38] sm:$0xff]
    %v153 = vld [vmem:[#allocation2 + $0x40] sm:$0xff]
    %v154 = vld [vmem:[#allocation2 + $0x48] sm:$0xff]
    %v155 = vld [vmem:[#allocation2 + $0x50] sm:$0xff]
    %v156 = vld [vmem:[#allocation2 + $0x58] sm:$0xff]
    %v157 = vld [vmem:[#allocation2 + $0x60] sm:$0xff]
    %v158 = vld [vmem:[#allocation2 + $0x68] sm:$0xff]
    %v159 = vld [vmem:[#allocation2 + $0x70] sm:$0xff]
    %v160 = vld [vmem:[#allocation2 + $0x78] sm:$0xff]
    %v161 = vld [vmem:[#allocation2 + $0x80] sm:$0xff]
    %v162 = vld [vmem:[#allocation2 + $0x88] sm:$0xff]
    %v163 = vld [vmem:[#allocation2 + $0x90] sm:$0xff]
    %v164 = vld [vmem:[#allocation2 + $0x98] sm:$0xff]
    %v165 = vld [vmem:[#allocation2 + $0xa0] sm:$0xff]
    %v166 = vld [vmem:[#allocation2 + $0xa8] sm:$0xff]
    %v167 = vld [vmem:[#allocation2 + $0xb0] sm:$0xff]
    %v168 = vld [vmem:[#allocation2 + $0xb8] sm:$0xff]
    %v169 = vld [vmem:[#allocation2 + $0xc0] sm:$0xff]
    %v170 = vld [vmem:[#allocation2 + $0xc8] sm:$0xff]
    %v171 = vld [vmem:[#allocation2 + $0xd0] sm:$0xff]
    %v172 = vld [vmem:[#allocation2 + $0xd8] sm:$0xff]
    %v173 = vld [vmem:[#allocation2 + $0xe0] sm:$0xff]
    %v174 = vld [vmem:[#allocation2 + $0xe8] sm:$0xff]
    %v175 = vld [vmem:[#allocation2 + $0xf0] sm:$0xff]
    %v176 = vld [vmem:[#allocation2 + $0xf8] sm:$0xff]
    %v177 = vld [vmem:[#allocation2 + $0x100] sm:$0xff]
    %v178 = vld [vmem:[#allocation2 + $0x108] sm:$0xff]
    %v179 = vld [vmem:[#allocation2 + $0x110] sm:$0xff]
    %v180 = vld [vmem:[#allocation2 + $0x118] sm:$0xff]
    %v181 = vld [vmem:[#allocation2 + $0x120] sm:$0xff]
    %v182 = vld [vmem:[#allocation2 + $0x128] sm:$0xff]
    %v183 = vld [vmem:[#allocation2 + $0x130] sm:$0xff]
    %v184 = vld [vmem:[#allocation2 + $0x138] sm:$0xff]
    %v185 = vld [vmem:[#allocation2 + $0x140] sm:$0xff]
    %v186 = vld [vmem:[#allocation2 + $0x148] sm:$0xff]
    %v187 = vld [vmem:[#allocation2 + $0x150] sm:$0xff]
    %v188 = vld [vmem:[#allocation2 + $0x158] sm:$0xff]
    %v189 = vld [vmem:[#allocation2 + $0x160] sm:$0xff]
    %v190 = vld [vmem:[#allocation2 + $0x168] sm:$0xff]
    %v191 = vld [vmem:[#allocation2 + $0x170] sm:$0xff]
    %v192 = vld [vmem:[#allocation2 + $0x178] sm:$0xff]
    %v193 = vld [vmem:[#allocation2 + $0x180] sm:$0xff]
    %v194 = vld [vmem:[#allocation2 + $0x188] sm:$0xff]
    %v195 = vld [vmem:[#allocation2 + $0x190] sm:$0xff]
    %v196 = vld [vmem:[#allocation2 + $0x198] sm:$0xff]
    %v197 = vld [vmem:[#allocation2 + $0x1a0] sm:$0xff]
    %v198 = vld [vmem:[#allocation2 + $0x1a8] sm:$0xff]
    %v199 = vld [vmem:[#allocation2 + $0x1b0] sm:$0xff]
    %v200 = vld [vmem:[#allocation2 + $0x1b8] sm:$0xff]
    %v201 = vld [vmem:[#allocation2 + $0x1c0] sm:$0xff]
    %v202 = vld [vmem:[#allocation2 + $0x1c8] sm:$0xff]
    %v203 = vld [vmem:[#allocation2 + $0x1d0] sm:$0xff]
    %v204 = vld [vmem:[#allocation2 + $0x1d8] sm:$0xff]
    %v205 = vld [vmem:[#allocation2 + $0x1e0] sm:$0xff]
    %v206 = vld [vmem:[#allocation2 + $0x1e8] sm:$0xff]
    %v207 = vld [vmem:[#allocation2 + $0x1f0] sm:$0xff]
    %v208 = vld [vmem:[#allocation2 + $0x1f8] sm:$0xff]
    %v209 = vld [vmem:[#allocation2 + $0x200] sm:$0xff]
    %v210 = vld [vmem:[#allocation2 + $0x208] sm:$0xff]
    %v211 = vld [vmem:[#allocation2 + $0x210] sm:$0xff]
    %v212 = vld [vmem:[#allocation2 + $0x218] sm:$0xff]
    %v213 = vld [vmem:[#allocation2 + $0x220] sm:$0xff]
    %v214 = vld [vmem:[#allocation2 + $0x228] sm:$0xff]
    %v215 = vld [vmem:[#allocation2 + $0x230] sm:$0xff]
    %v216 = vld [vmem:[#allocation2 + $0x238] sm:$0xff]
    %v217 = vld [vmem:[#allocation2 + $0x240] sm:$0xff]
    %v218 = vld [vmem:[#allocation2 + $0x248] sm:$0xff]
    %v219 = vld [vmem:[#allocation2 + $0x250] sm:$0xff]
    %v220 = vld [vmem:[#allocation2 + $0x258] sm:$0xff]
    %v221 = vld [vmem:[#allocation2 + $0x260] sm:$0xff]
    %v222 = vld [vmem:[#allocation2 + $0x268] sm:$0xff]
    %v223 = vld [vmem:[#allocation2 + $0x270] sm:$0xff]
    %v224 = vld [vmem:[#allocation2 + $0x278] sm:$0xff]
    %v225 = vld [vmem:[#allocation2 + $0x280] sm:$0xff]
    %v226 = vld [vmem:[#allocation2 + $0x288] sm:$0xff]
    %v227 = vld [vmem:[#allocation2 + $0x290] sm:$0xff]
    %v228 = vld [vmem:[#allocation2 + $0x298] sm:$0xff]
    %v229 = vld [vmem:[#allocation2 + $0x2a0] sm:$0xff]
    %v230 = vld [vmem:[#allocation2 + $0x2a8] sm:$0xff]
    %v231 = vld [vmem:[#allocation2 + $0x2b0] sm:$0xff]
    %v232 = vld [vmem:[#allocation2 + $0x2b8] sm:$0xff]
    %v233 = vld [vmem:[#allocation2 + $0x2c0] sm:$0xff]
    %v234 = vld [vmem:[#allocation2 + $0x2c8] sm:$0xff]
    %v235 = vld [vmem:[#allocation2 + $0x2d0] sm:$0xff]
    %v236 = vld [vmem:[#allocation2 + $0x2d8] sm:$0xff]
    %v237 = vld [vmem:[#allocation2 + $0x2e0] sm:$0xff]
    %v238 = vld [vmem:[#allocation2 + $0x2e8] sm:$0xff]
    %v239 = vld [vmem:[#allocation2 + $0x2f0] sm:$0xff]
    %v240 = vld [vmem:[#allocation2 + $0x2f8] sm:$0xff]
    %v241 = vld [vmem:[#allocation2 + $0x300] sm:$0xff]
    %v242 = vld [vmem:[#allocation2 + $0x308] sm:$0xff]
    %v243 = vld [vmem:[#allocation2 + $0x310] sm:$0xff]
    %v244 = vld [vmem:[#allocation2 + $0x318] sm:$0xff]
    %v245 = vld [vmem:[#allocation2 + $0x320] sm:$0xff]
    %v246 = vld [vmem:[#allocation2 + $0x328] sm:$0xff]
    %v247 = vld [vmem:[#allocation2 + $0x330] sm:$0xff]
    %v248 = vld [vmem:[#allocation2 + $0x338] sm:$0xff]
    %v249 = vld [vmem:[#allocation2 + $0x340] sm:$0xff]
    %v250 = vld [vmem:[#allocation2 + $0x348] sm:$0xff]
    %v251 = vld [vmem:[#allocation2 + $0x350] sm:$0xff]
    %v252 = vld [vmem:[#allocation2 + $0x358] sm:$0xff]
    %v253 = vld [vmem:[#allocation2 + $0x360] sm:$0xff]
    %v254 = vld [vmem:[#allocation2 + $0x368] sm:$0xff]
    %v255 = vld [vmem:[#allocation2 + $0x370] sm:$0xff]
    %v256 = vld [vmem:[#allocation2 + $0x378] sm:$0xff]
    %v257 = vld [vmem:[#allocation2 + $0x380] sm:$0xff]
    %v258 = vld [vmem:[#allocation2 + $0x388] sm:$0xff]
    %v259 = vld [vmem:[#allocation2 + $0x390] sm:$0xff]
    %v260 = vld [vmem:[#allocation2 + $0x398] sm:$0xff]
    %v261 = vld [vmem:[#allocation2 + $0x3a0] sm:$0xff]
    %v262 = vld [vmem:[#allocation2 + $0x3a8] sm:$0xff]
    %v263 = vld [vmem:[#allocation2 + $0x3b0] sm:$0xff]
    %v264 = vld [vmem:[#allocation2 + $0x3b8] sm:$0xff]
    %v265 = vld [vmem:[#allocation2 + $0x3c0] sm:$0xff]
    %v266 = vld [vmem:[#allocation2 + $0x3c8] sm:$0xff]
    %v267 = vld [vmem:[#allocation2 + $0x3d0] sm:$0xff]
    %v268 = vld [vmem:[#allocation2 + $0x3d8] sm:$0xff]
    %v269 = vld [vmem:[#allocation2 + $0x3e0] sm:$0xff]
    %v270 = vld [vmem:[#allocation2 + $0x3e8] sm:$0xff]
    %v271 = vld [vmem:[#allocation2 + $0x3f0] sm:$0xff]
    %v272 = vld [vmem:[#allocation2 + $0x3f8] sm:$0xff]
    %v273 = vld [vmem:[#allocation2 + $0x400] sm:$0xff]
    %v274 = vld [vmem:[#allocation2 + $0x408] sm:$0xff]
    %v275 = vld [vmem:[#allocation2 + $0x410] sm:$0xff]
    %v276 = vld [vmem:[#allocation2 + $0x418] sm:$0xff]
    %v277 = vld [vmem:[#allocation2 + $0x420] sm:$0xff]
    %v278 = vld [vmem:[#allocation2 + $0x428] sm:$0xff]
    %v279 = vld [vmem:[#allocation2 + $0x430] sm:$0xff]
    %v280 = vld [vmem:[#allocation2 + $0x438] sm:$0xff]
    %v281 = vld [vmem:[#allocation2 + $0x440] sm:$0xff]
    %v282 = vld [vmem:[#allocation2 + $0x448] sm:$0xff]
    %v283 = vld [vmem:[#allocation2 + $0x450] sm:$0xff]
    %v284 = vld [vmem:[#allocation2 + $0x458] sm:$0xff]
    %v285 = vld [vmem:[#allocation2 + $0x460] sm:$0xff]
    %v286 = vld [vmem:[#allocation2 + $0x468] sm:$0xff]
    %v287 = vld [vmem:[#allocation2 + $0x470] sm:$0xff]
    %v288 = vld [vmem:[#allocation2 + $0x478] sm:$0xff]
    %v289 = vld [vmem:[#allocation2 + $0x480] sm:$0xff]
    %v290 = vld [vmem:[#allocation2 + $0x488] sm:$0xff]
    %v291 = vld [vmem:[#allocation2 + $0x490] sm:$0xff]
    %v292 = vld [vmem:[#allocation2 + $0x498] sm:$0xff]
    %v293 = vld [vmem:[#allocation2 + $0x4a0] sm:$0xff]
    %v294 = vld [vmem:[#allocation2 + $0x4a8] sm:$0xff]
    %v295 = vld [vmem:[#allocation2 + $0x4b0] sm:$0xff]
    %v296 = vld [vmem:[#allocation2 + $0x4b8] sm:$0xff]
    %v297 = vld [vmem:[#allocation2 + $0x4c0] sm:$0xff]
    %v298 = vld [vmem:[#allocation2 + $0x4c8] sm:$0xff]
    %v299 = vld [vmem:[#allocation2 + $0x4d0] sm:$0xff]
    %v300 = vld [vmem:[#allocation2 + $0x4d8] sm:$0xff]
    %v301 = vld [vmem:[#allocation2 + $0x4e0] sm:$0xff]
    %v302 = vld [vmem:[#allocation2 + $0x4e8] sm:$0xff]
    %v303 = vld [vmem:[#allocation2 + $0x4f0] sm:$0xff]
    %v304 = vld [vmem:[#allocation2 + $0x4f8] sm:$0xff]
    %v305 = vld [vmem:[#allocation2 + $0x500] sm:$0xff]
    %v306 = vld [vmem:[#allocation2 + $0x508] sm:$0xff]
    %v307 = vld [vmem:[#allocation2 + $0x510] sm:$0xff]
    %v308 = vld [vmem:[#allocation2 + $0x518] sm:$0xff]
    %v309 = vld [vmem:[#allocation2 + $0x520] sm:$0xff]
    %v310 = vld [vmem:[#allocation2 + $0x528] sm:$0xff]
    %v311 = vld [vmem:[#allocation2 + $0x530] sm:$0xff]
    %v312 = vld [vmem:[#allocation2 + $0x538] sm:$0xff]
    %v313 = vld [vmem:[#allocation2 + $0x540] sm:$0xff]
    %v314 = vld [vmem:[#allocation2 + $0x548] sm:$0xff]
    %v315 = vld [vmem:[#allocation2 + $0x550] sm:$0xff]
    %v316 = vld [vmem:[#allocation2 + $0x558] sm:$0xff]
    %v317 = vld [vmem:[#allocation2 + $0x560] sm:$0xff]
    %v318 = vld [vmem:[#allocation2 + $0x568] sm:$0xff]
    %v319 = vld [vmem:[#allocation2 + $0x570] sm:$0xff]
    %v320 = vld [vmem:[#allocation2 + $0x578] sm:$0xff]
    %v321 = vld [vmem:[#allocation2 + $0x580] sm:$0xff]
    %v322 = vld [vmem:[#allocation2 + $0x588] sm:$0xff]
    %v323 = vld [vmem:[#allocation2 + $0x590] sm:$0xff]
    %v324 = vld [vmem:[#allocation2 + $0x598] sm:$0xff]
    %v325 = vld [vmem:[#allocation2 + $0x5a0] sm:$0xff]
    %v326 = vld [vmem:[#allocation2 + $0x5a8] sm:$0xff]
    %v327 = vld [vmem:[#allocation2 + $0x5b0] sm:$0xff]
    %v328 = vld [vmem:[#allocation2 + $0x5b8] sm:$0xff]
    %v329 = vld [vmem:[#allocation2 + $0x5c0] sm:$0xff]
    %v330 = vld [vmem:[#allocation2 + $0x5c8] sm:$0xff]
    %v331 = vld [vmem:[#allocation2 + $0x5d0] sm:$0xff]
    %v332 = vld [vmem:[#allocation2 + $0x5d8] sm:$0xff]
    %v333 = vld [vmem:[#allocation2 + $0x5e0] sm:$0xff]
    %v334 = vld [vmem:[#allocation2 + $0x5e8] sm:$0xff]
    %v335 = vld [vmem:[#allocation2 + $0x5f0] sm:$0xff]
    %v336 = vld [vmem:[#allocation2 + $0x5f8] sm:$0xff]
    %v337 = vld [vmem:[#allocation2 + $0x600] sm:$0xff]
    %v338 = vld [vmem:[#allocation2 + $0x608] sm:$0xff]
    %v339 = vld [vmem:[#allocation2 + $0x610] sm:$0xff]
    %v340 = vld [vmem:[#allocation2 + $0x618] sm:$0xff]
    %v341 = vld [vmem:[#allocation2 + $0x620] sm:$0xff]
    %v342 = vld [vmem:[#allocation2 + $0x628] sm:$0xff]
    %v343 = vld [vmem:[#allocation2 + $0x630] sm:$0xff]
    %v344 = vld [vmem:[#allocation2 + $0x638] sm:$0xff]
    %v345 = vld [vmem:[#allocation2 + $0x640] sm:$0xff]
    %v346 = vld [vmem:[#allocation2 + $0x648] sm:$0xff]
    %v347 = vld [vmem:[#allocation2 + $0x650] sm:$0xff]
    %v348 = vld [vmem:[#allocation2 + $0x658] sm:$0xff]
    %v349 = vld [vmem:[#allocation2 + $0x660] sm:$0xff]
    %v350 = vld [vmem:[#allocation2 + $0x668] sm:$0xff]
    %v351 = vld [vmem:[#allocation2 + $0x670] sm:$0xff]
    %v352 = vld [vmem:[#allocation2 + $0x678] sm:$0xff]
    %v353 = vld [vmem:[#allocation2 + $0x680] sm:$0xff]
    %v354 = vld [vmem:[#allocation2 + $0x688] sm:$0xff]
    %v355 = vld [vmem:[#allocation2 + $0x690] sm:$0xff]
    %v356 = vld [vmem:[#allocation2 + $0x698] sm:$0xff]
    %v357 = vld [vmem:[#allocation2 + $0x6a0] sm:$0xff]
    %v358 = vld [vmem:[#allocation2 + $0x6a8] sm:$0xff]
    %v359 = vld [vmem:[#allocation2 + $0x6b0] sm:$0xff]
    %v360 = vld [vmem:[#allocation2 + $0x6b8] sm:$0xff]
    %v361 = vld [vmem:[#allocation2 + $0x6c0] sm:$0xff]
    %v362 = vld [vmem:[#allocation2 + $0x6c8] sm:$0xff]
    %v363 = vld [vmem:[#allocation2 + $0x6d0] sm:$0xff]
    %v364 = vld [vmem:[#allocation2 + $0x6d8] sm:$0xff]
    %v365 = vld [vmem:[#allocation2 + $0x6e0] sm:$0xff]
    %v366 = vld [vmem:[#allocation2 + $0x6e8] sm:$0xff]
    %v367 = vld [vmem:[#allocation2 + $0x6f0] sm:$0xff]
    %v368 = vld [vmem:[#allocation2 + $0x6f8] sm:$0xff]
    %v369 = vld [vmem:[#allocation2 + $0x700] sm:$0xff]
    %v370 = vld [vmem:[#allocation2 + $0x708] sm:$0xff]
    %v371 = vld [vmem:[#allocation2 + $0x710] sm:$0xff]
    %v372 = vld [vmem:[#allocation2 + $0x718] sm:$0xff]
    %v373 = vld [vmem:[#allocation2 + $0x720] sm:$0xff]
    %v374 = vld [vmem:[#allocation2 + $0x728] sm:$0xff]
    %v375 = vld [vmem:[#allocation2 + $0x730] sm:$0xff]
    %v376 = vld [vmem:[#allocation2 + $0x738] sm:$0xff]
    %v377 = vld [vmem:[#allocation2 + $0x740] sm:$0xff]
    %v378 = vld [vmem:[#allocation2 + $0x748] sm:$0xff]
    %v379 = vld [vmem:[#allocation2 + $0x750] sm:$0xff]
    %v380 = vld [vmem:[#allocation2 + $0x758] sm:$0xff]
    %v381 = vld [vmem:[#allocation2 + $0x760] sm:$0xff]
    %v382 = vld [vmem:[#allocation2 + $0x768] sm:$0xff]
    %v383 = vld [vmem:[#allocation2 + $0x770] sm:$0xff]
    %v384 = vld [vmem:[#allocation2 + $0x778] sm:$0xff]
    %v385 = vld [vmem:[#allocation2 + $0x780] sm:$0xff]
    %v386 = vld [vmem:[#allocation2 + $0x788] sm:$0xff]
    %v387 = vld [vmem:[#allocation2 + $0x790] sm:$0xff]
    %v388 = vld [vmem:[#allocation2 + $0x798] sm:$0xff]
    %v389 = vld [vmem:[#allocation2 + $0x7a0] sm:$0xff]
    %v390 = vld [vmem:[#allocation2 + $0x7a8] sm:$0xff]
    %v391 = vld [vmem:[#allocation2 + $0x7b0] sm:$0xff]
    %v392 = vld [vmem:[#allocation2 + $0x7b8] sm:$0xff]
    %v393 = vld [vmem:[#allocation2 + $0x7c0] sm:$0xff]
    %v394 = vld [vmem:[#allocation2 + $0x7c8] sm:$0xff]
    %v395 = vld [vmem:[#allocation2 + $0x7d0] sm:$0xff]
    %v396 = vld [vmem:[#allocation2 + $0x7d8] sm:$0xff]
    %v397 = vld [vmem:[#allocation2 + $0x7e0] sm:$0xff]
    %v398 = vld [vmem:[#allocation2 + $0x7e8] sm:$0xff]
    %v399 = vld [vmem:[#allocation2 + $0x7f0] sm:$0xff]
    %v400 = vld [vmem:[#allocation2 + $0x7f8] sm:$0xff]
    %v401 = vld [vmem:[#allocation2 + $0x800] sm:$0xff]
    %v402 = vld [vmem:[#allocation2 + $0x808] sm:$0xff]
    %v403 = vld [vmem:[#allocation2 + $0x810] sm:$0xff]
    %v404 = vld [vmem:[#allocation2 + $0x818] sm:$0xff]
    %v405 = vld [vmem:[#allocation2 + $0x820] sm:$0xff]
    %v406 = vld [vmem:[#allocation2 + $0x828] sm:$0xff]
    %v407 = vld [vmem:[#allocation2 + $0x830] sm:$0xff]
    %v408 = vld [vmem:[#allocation2 + $0x838] sm:$0xff]
    %v409 = vld [vmem:[#allocation2 + $0x840] sm:$0xff]
    %v410 = vld [vmem:[#allocation2 + $0x848] sm:$0xff]
    %v411 = vld [vmem:[#allocation2 + $0x850] sm:$0xff]
    %v412 = vld [vmem:[#allocation2 + $0x858] sm:$0xff]
    %v413 = vld [vmem:[#allocation2 + $0x860] sm:$0xff]
    %v414 = vld [vmem:[#allocation2 + $0x868] sm:$0xff]
    %v415 = vld [vmem:[#allocation2 + $0x870] sm:$0xff]
    %v416 = vld [vmem:[#allocation2 + $0x878] sm:$0xff]
    %v417 = vld [vmem:[#allocation2 + $0x880] sm:$0xff]
    %v418 = vld [vmem:[#allocation2 + $0x888] sm:$0xff]
    %v419 = vld [vmem:[#allocation2 + $0x890] sm:$0xff]
    %v420 = vld [vmem:[#allocation2 + $0x898] sm:$0xff]
    %v421 = vld [vmem:[#allocation2 + $0x8a0] sm:$0xff]
    %v422 = vld [vmem:[#allocation2 + $0x8a8] sm:$0xff]
    %v423 = vld [vmem:[#allocation2 + $0x8b0] sm:$0xff]
    %v424 = vld [vmem:[#allocation2 + $0x8b8] sm:$0xff]
    %v425 = vld [vmem:[#allocation2 + $0x8c0] sm:$0xff]
    %v426 = vld [vmem:[#allocation2 + $0x8c8] sm:$0xff]
    %v427 = vld [vmem:[#allocation2 + $0x8d0] sm:$0xff]
    %v428 = vld [vmem:[#allocation2 + $0x8d8] sm:$0xff]
    %v429 = vld [vmem:[#allocation2 + $0x8e0] sm:$0xff]
    %v430 = vld [vmem:[#allocation2 + $0x8e8] sm:$0xff]
    %v431 = vld [vmem:[#allocation2 + $0x8f0] sm:$0xff]
    %v432 = vld [vmem:[#allocation2 + $0x8f8] sm:$0xff]
    %v433 = vld [vmem:[#allocation2 + $0x900] sm:$0xff]
    %v434 = vld [vmem:[#allocation2 + $0x908] sm:$0xff]
    %v435 = vld [vmem:[#allocation2 + $0x910] sm:$0xff]
    %v436 = vld [vmem:[#allocation2 + $0x918] sm:$0xff]
    %v437 = vld [vmem:[#allocation2 + $0x920] sm:$0xff]
    %v438 = vld [vmem:[#allocation2 + $0x928] sm:$0xff]
    %v439 = vld [vmem:[#allocation2 + $0x930] sm:$0xff]
    %v440 = vld [vmem:[#allocation2 + $0x938] sm:$0xff]
    %v441 = vld [vmem:[#allocation2 + $0x940] sm:$0xff]
    %v442 = vld [vmem:[#allocation2 + $0x948] sm:$0xff]
    %v443 = vld [vmem:[#allocation2 + $0x950] sm:$0xff]
    %v444 = vld [vmem:[#allocation2 + $0x958] sm:$0xff]
    %v445 = vld [vmem:[#allocation2 + $0x960] sm:$0xff]
    %v446 = vld [vmem:[#allocation2 + $0x968] sm:$0xff]
    %v447 = vld [vmem:[#allocation2 + $0x970] sm:$0xff]
    %v448 = vld [vmem:[#allocation2 + $0x978] sm:$0xff]
    %v449 = vld [vmem:[#allocation2 + $0x980] sm:$0xff]
    %v450 = vld [vmem:[#allocation2 + $0x988] sm:$0xff]
    %v451 = vld [vmem:[#allocation2 + $0x990] sm:$0xff]
    %v452 = vld [vmem:[#allocation2 + $0x998] sm:$0xff]
    %v453 = vld [vmem:[#allocation2 + $0x9a0] sm:$0xff]
    %v454 = vld [vmem:[#allocation2 + $0x9a8] sm:$0xff]
    %v455 = vld [vmem:[#allocation2 + $0x9b0] sm:$0xff]
    %v456 = vld [vmem:[#allocation2 + $0x9b8] sm:$0xff]
    %v457 = vld [vmem:[#allocation2 + $0x9c0] sm:$0xff]
    %v458 = vld [vmem:[#allocation2 + $0x9c8] sm:$0xff]
    %v459 = vld [vmem:[#allocation2 + $0x9d0] sm:$0xff]
    %v460 = vld [vmem:[#allocation2 + $0x9d8] sm:$0xff]
    %v461 = vld [vmem:[#allocation2 + $0x9e0] sm:$0xff]
    %v462 = vld [vmem:[#allocation2 + $0x9e8] sm:$0xff]
    %v463 = vld [vmem:[#allocation2 + $0x9f0] sm:$0xff]
    %v464 = vld [vmem:[#allocation2 + $0x9f8] sm:$0xff]
    %v465 = vld [vmem:[#allocation2 + $0xa00] sm:$0xff]
    %v466 = vld [vmem:[#allocation2 + $0xa08] sm:$0xff]
    %v467 = vld [vmem:[#allocation2 + $0xa10] sm:$0xff]
    %v468 = vld [vmem:[#allocation2 + $0xa18] sm:$0xff]
    %v469 = vld [vmem:[#allocation2 + $0xa20] sm:$0xff]
    %v470 = vld [vmem:[#allocation2 + $0xa28] sm:$0xff]
    %v471 = vld [vmem:[#allocation2 + $0xa30] sm:$0xff]
    %v472 = vld [vmem:[#allocation2 + $0xa38] sm:$0xff]
    %v473 = vld [vmem:[#allocation2 + $0xa40] sm:$0xff]
    %v474 = vld [vmem:[#allocation2 + $0xa48] sm:$0xff]
    %v475 = vld [vmem:[#allocation2 + $0xa50] sm:$0xff]
    %v476 = vld [vmem:[#allocation2 + $0xa58] sm:$0xff]
    %v477 = vld [vmem:[#allocation2 + $0xa60] sm:$0xff]
    %v478 = vld [vmem:[#allocation2 + $0xa68] sm:$0xff]
    %v479 = vld [vmem:[#allocation2 + $0xa70] sm:$0xff]
    %v480 = vld [vmem:[#allocation2 + $0xa78] sm:$0xff]
    %v481 = vld [vmem:[#allocation2 + $0xa80] sm:$0xff]
    %v482 = vld [vmem:[#allocation2 + $0xa88] sm:$0xff]
    %v483 = vld [vmem:[#allocation2 + $0xa90] sm:$0xff]
    %v484 = vld [vmem:[#allocation2 + $0xa98] sm:$0xff]
    %v485 = vld [vmem:[#allocation2 + $0xaa0] sm:$0xff]
    %v486 = vld [vmem:[#allocation2 + $0xaa8] sm:$0xff]
    %v487 = vld [vmem:[#allocation2 + $0xab0] sm:$0xff]
    %v488 = vld [vmem:[#allocation2 + $0xab8] sm:$0xff]
    %v489 = vld [vmem:[#allocation2 + $0xac0] sm:$0xff]
    %v490 = vld [vmem:[#allocation2 + $0xac8] sm:$0xff]
    %v491 = vld [vmem:[#allocation2 + $0xad0] sm:$0xff]
    %v492 = vld [vmem:[#allocation2 + $0xad8] sm:$0xff]
    %v493 = vld [vmem:[#allocation2 + $0xae0] sm:$0xff]
    %v494 = vld [vmem:[#allocation2 + $0xae8] sm:$0xff]
    %v495 = vld [vmem:[#allocation2 + $0xaf0] sm:$0xff]
    %v496 = vld [vmem:[#allocation2 + $0xaf8] sm:$0xff]
    %v497 = vld [vmem:[#allocation2 + $0xb00] sm:$0xff]
    %v498 = vld [vmem:[#allocation2 + $0xb08] sm:$0xff]
    %v499 = vld [vmem:[#allocation2 + $0xb10] sm:$0xff]
    %v500 = vld [vmem:[#allocation2 + $0xb18] sm:$0xff]
    %v501 = vld [vmem:[#allocation2 + $0xb20] sm:$0xff]
    %v502 = vld [vmem:[#allocation2 + $0xb28] sm:$0xff]
    %v503 = vld [vmem:[#allocation2 + $0xb30] sm:$0xff]
    %v504 = vld [vmem:[#allocation2 + $0xb38] sm:$0xff]
    %v505 = vld [vmem:[#allocation2 + $0xb40] sm:$0xff]
    %v506 = vld [vmem:[#allocation2 + $0xb48] sm:$0xff]
    %v507 = vld [vmem:[#allocation2 + $0xb50] sm:$0xff]
    %v508 = vld [vmem:[#allocation2 + $0xb58] sm:$0xff]
    %v509 = vld [vmem:[#allocation2 + $0xb60] sm:$0xff]
    %v510 = vld [vmem:[#allocation2 + $0xb68] sm:$0xff]
    %v511 = vld [vmem:[#allocation2 + $0xb70] sm:$0xff]
    %v512 = vld [vmem:[#allocation2 + $0xb78] sm:$0xff]
    %v513 = vld [vmem:[#allocation2 + $0xb80] sm:$0xff]
    %v514 = vld [vmem:[#allocation2 + $0xb88] sm:$0xff]
    %v515 = vld [vmem:[#allocation2 + $0xb90] sm:$0xff]
    %v516 = vld [vmem:[#allocation2 + $0xb98] sm:$0xff]
    %v517 = vld [vmem:[#allocation2 + $0xba0] sm:$0xff]
    %v518 = vld [vmem:[#allocation2 + $0xba8] sm:$0xff]
    %v519 = vld [vmem:[#allocation2 + $0xbb0] sm:$0xff]
    %v520 = vld [vmem:[#allocation2 + $0xbb8] sm:$0xff]
    %v521 = vld [vmem:[#allocation2 + $0xbc0] sm:$0xff]
    %v522 = vld [vmem:[#allocation2 + $0xbc8] sm:$0xff]
    %v523 = vld [vmem:[#allocation2 + $0xbd0] sm:$0xff]
    %v524 = vld [vmem:[#allocation2 + $0xbd8] sm:$0xff]
    %v525 = vld [vmem:[#allocation2 + $0xbe0] sm:$0xff]
    %v526 = vld [vmem:[#allocation2 + $0xbe8] sm:$0xff]
    %v527 = vld [vmem:[#allocation2 + $0xbf0] sm:$0xff]
    %v528 = vld [vmem:[#allocation2 + $0xbf8] sm:$0xff]
    %v529 = vld [vmem:[#allocation2 + $0xc00] sm:$0xff]
    %v530 = vld [vmem:[#allocation2 + $0xc08] sm:$0xff]
    %v531 = vld [vmem:[#allocation2 + $0xc10] sm:$0xff]
    %v532 = vld [vmem:[#allocation2 + $0xc18] sm:$0xff]
    %v533 = vld [vmem:[#allocation2 + $0xc20] sm:$0xff]
    %v534 = vld [vmem:[#allocation2 + $0xc28] sm:$0xff]
    %v535 = vld [vmem:[#allocation2 + $0xc30] sm:$0xff]
    %v536 = vld [vmem:[#allocation2 + $0xc38] sm:$0xff]
    %v537 = vld [vmem:[#allocation2 + $0xc40] sm:$0xff]
    %v538 = vld [vmem:[#allocation2 + $0xc48] sm:$0xff]
    %v539 = vld [vmem:[#allocation2 + $0xc50] sm:$0xff]
    %v540 = vld [vmem:[#allocation2 + $0xc58] sm:$0xff]
    %v541 = vld [vmem:[#allocation2 + $0xc60] sm:$0xff]
    %v542 = vld [vmem:[#allocation2 + $0xc68] sm:$0xff]
    %v543 = vld [vmem:[#allocation2 + $0xc70] sm:$0xff]
    %v544 = vld [vmem:[#allocation2 + $0xc78] sm:$0xff]
    %v545 = vld [vmem:[#allocation2 + $0xc80] sm:$0xff]
    %v546 = vld [vmem:[#allocation2 + $0xc88] sm:$0xff]
    %v547 = vld [vmem:[#allocation2 + $0xc90] sm:$0xff]
    %v548 = vld [vmem:[#allocation2 + $0xc98] sm:$0xff]
    %v549 = vld [vmem:[#allocation2 + $0xca0] sm:$0xff]
    %v550 = vld [vmem:[#allocation2 + $0xca8] sm:$0xff]
    %v551 = vld [vmem:[#allocation2 + $0xcb0] sm:$0xff]
    %v552 = vld [vmem:[#allocation2 + $0xcb8] sm:$0xff]
    %v553 = vld [vmem:[#allocation2 + $0xcc0] sm:$0xff]
    %v554 = vld [vmem:[#allocation2 + $0xcc8] sm:$0xff]
    %v555 = vld [vmem:[#allocation2 + $0xcd0] sm:$0xff]
    %v556 = vld [vmem:[#allocation2 + $0xcd8] sm:$0xff]
    %v557 = vld [vmem:[#allocation2 + $0xce0] sm:$0xff]
    %v558 = vld [vmem:[#allocation2 + $0xce8] sm:$0xff]
    %v559 = vld [vmem:[#allocation2 + $0xcf0] sm:$0xff]
    %v560 = vld [vmem:[#allocation2 + $0xcf8] sm:$0xff]
    %v561 = vld [vmem:[#allocation2 + $0xd00] sm:$0xff]
    %v562 = vld [vmem:[#allocation2 + $0xd08] sm:$0xff]
    %v563 = vld [vmem:[#allocation2 + $0xd10] sm:$0xff]
    %v564 = vld [vmem:[#allocation2 + $0xd18] sm:$0xff]
    %v565 = vld [vmem:[#allocation2 + $0xd20] sm:$0xff]
    %v566 = vld [vmem:[#allocation2 + $0xd28] sm:$0xff]
    %v567 = vld [vmem:[#allocation2 + $0xd30] sm:$0xff]
    %v568 = vld [vmem:[#allocation2 + $0xd38] sm:$0xff]
    %v569 = vld [vmem:[#allocation2 + $0xd40] sm:$0xff]
    %v570 = vld [vmem:[#allocation2 + $0xd48] sm:$0xff]
    %v571 = vld [vmem:[#allocation2 + $0xd50] sm:$0xff]
    %v572 = vld [vmem:[#allocation2 + $0xd58] sm:$0xff]
    %v573 = vld [vmem:[#allocation2 + $0xd60] sm:$0xff]
    %v574 = vld [vmem:[#allocation2 + $0xd68] sm:$0xff]
    %v575 = vld [vmem:[#allocation2 + $0xd70] sm:$0xff]
    %v576 = vld [vmem:[#allocation2 + $0xd78] sm:$0xff]
    %v577 = vld [vmem:[#allocation2 + $0xd80] sm:$0xff]
    %v578 = vld [vmem:[#allocation2 + $0xd88] sm:$0xff]
    %v579 = vld [vmem:[#allocation2 + $0xd90] sm:$0xff]
    %v580 = vld [vmem:[#allocation2 + $0xd98] sm:$0xff]
    %v581 = vld [vmem:[#allocation2 + $0xda0] sm:$0xff]
    %v582 = vld [vmem:[#allocation2 + $0xda8] sm:$0xff]
    %v583 = vld [vmem:[#allocation2 + $0xdb0] sm:$0xff]
    %v584 = vld [vmem:[#allocation2 + $0xdb8] sm:$0xff]
    %v585 = vld [vmem:[#allocation2 + $0xdc0] sm:$0xff]
    %v586 = vld [vmem:[#allocation2 + $0xdc8] sm:$0xff]
    %v587 = vld [vmem:[#allocation2 + $0xdd0] sm:$0xff]
    %v588 = vld [vmem:[#allocation2 + $0xdd8] sm:$0xff]
    %v589 = vld [vmem:[#allocation2 + $0xde0] sm:$0xff]
    %v590 = vld [vmem:[#allocation2 + $0xde8] sm:$0xff]
    %v591 = vld [vmem:[#allocation2 + $0xdf0] sm:$0xff]
    %v592 = vld [vmem:[#allocation2 + $0xdf8] sm:$0xff]
    %v593 = vld [vmem:[#allocation2 + $0xe00] sm:$0xff]
    %v594 = vld [vmem:[#allocation2 + $0xe08] sm:$0xff]
    %v595 = vld [vmem:[#allocation2 + $0xe10] sm:$0xff]
    %v596 = vld [vmem:[#allocation2 + $0xe18] sm:$0xff]
    %v597 = vld [vmem:[#allocation2 + $0xe20] sm:$0xff]
    %v598 = vld [vmem:[#allocation2 + $0xe28] sm:$0xff]
    %v599 = vld [vmem:[#allocation2 + $0xe30] sm:$0xff]
    %v600 = vld [vmem:[#allocation2 + $0xe38] sm:$0xff]
    %v601 = vld [vmem:[#allocation2 + $0xe40] sm:$0xff]
    %v602 = vld [vmem:[#allocation2 + $0xe48] sm:$0xff]
    %v603 = vld [vmem:[#allocation2 + $0xe50] sm:$0xff]
    %v604 = vld [vmem:[#allocation2 + $0xe58] sm:$0xff]
    %v605 = vld [vmem:[#allocation2 + $0xe60] sm:$0xff]
    %v606 = vld [vmem:[#allocation2 + $0xe68] sm:$0xff]
    %v607 = vld [vmem:[#allocation2 + $0xe70] sm:$0xff]
    %v608 = vld [vmem:[#allocation2 + $0xe78] sm:$0xff]
    %v609 = vld [vmem:[#allocation2 + $0xe80] sm:$0xff]
    %v610 = vld [vmem:[#allocation2 + $0xe88] sm:$0xff]
    %v611 = vld [vmem:[#allocation2 + $0xe90] sm:$0xff]
    %v612 = vld [vmem:[#allocation2 + $0xe98] sm:$0xff]
    %v613 = vld [vmem:[#allocation2 + $0xea0] sm:$0xff]
    %v614 = vld [vmem:[#allocation2 + $0xea8] sm:$0xff]
    %v615 = vld [vmem:[#allocation2 + $0xeb0] sm:$0xff]
    %v616 = vld [vmem:[#allocation2 + $0xeb8] sm:$0xff]
    %v617 = vld [vmem:[#allocation2 + $0xec0] sm:$0xff]
    %v618 = vld [vmem:[#allocation2 + $0xec8] sm:$0xff]
    %v619 = vld [vmem:[#allocation2 + $0xed0] sm:$0xff]
    %v620 = vld [vmem:[#allocation2 + $0xed8] sm:$0xff]
    %v621 = vld [vmem:[#allocation2 + $0xee0] sm:$0xff]
    %v622 = vld [vmem:[#allocation2 + $0xee8] sm:$0xff]
    %v623 = vld [vmem:[#allocation2 + $0xef0] sm:$0xff]
    %v624 = vld [vmem:[#allocation2 + $0xef8] sm:$0xff]
    %v625 = vld [vmem:[#allocation2 + $0xf00] sm:$0xff]
    %v626 = vld [vmem:[#allocation2 + $0xf08] sm:$0xff]
    %v627 = vld [vmem:[#allocation2 + $0xf10] sm:$0xff]
    %v628 = vld [vmem:[#allocation2 + $0xf18] sm:$0xff]
    %v629 = vld [vmem:[#allocation2 + $0xf20] sm:$0xff]
    %v630 = vld [vmem:[#allocation2 + $0xf28] sm:$0xff]
    %v631 = vld [vmem:[#allocation2 + $0xf30] sm:$0xff]
    %v632 = vld [vmem:[#allocation2 + $0xf38] sm:$0xff]
    %v633 = vld [vmem:[#allocation2 + $0xf40] sm:$0xff]
    %v634 = vld [vmem:[#allocation2 + $0xf48] sm:$0xff]
    %v635 = vld [vmem:[#allocation2 + $0xf50] sm:$0xff]
    %v636 = vld [vmem:[#allocation2 + $0xf58] sm:$0xff]
    %v637 = vld [vmem:[#allocation2 + $0xf60] sm:$0xff]
    %v638 = vld [vmem:[#allocation2 + $0xf68] sm:$0xff]
    %v639 = vld [vmem:[#allocation2 + $0xf70] sm:$0xff]
    %v640 = vld [vmem:[#allocation2 + $0xf78] sm:$0xff]
    %v641 = vld [vmem:[#allocation2 + $0xf80] sm:$0xff]
    %v642 = vld [vmem:[#allocation2 + $0xf88] sm:$0xff]
    %v643 = vld [vmem:[#allocation2 + $0xf90] sm:$0xff]
    %v644 = vld [vmem:[#allocation2 + $0xf98] sm:$0xff]
    %v645 = vld [vmem:[#allocation2 + $0xfa0] sm:$0xff]
    %v646 = vld [vmem:[#allocation2 + $0xfa8] sm:$0xff]
    %v647 = vld [vmem:[#allocation2 + $0xfb0] sm:$0xff]
    %v648 = vld [vmem:[#allocation2 + $0xfb8] sm:$0xff]
    %v649 = vld [vmem:[#allocation2 + $0xfc0] sm:$0xff]
    %v650 = vld [vmem:[#allocation2 + $0xfc8] sm:$0xff]
    %v651 = vld [vmem:[#allocation2 + $0xfd0] sm:$0xff]
    %v652 = vld [vmem:[#allocation2 + $0xfd8] sm:$0xff]
    %v653 = vld [vmem:[#allocation2 + $0xfe0] sm:$0xff]
    %v654 = vld [vmem:[#allocation2 + $0xfe8] sm:$0xff]
    %v655 = vld [vmem:[#allocation2 + $0xff0] sm:$0xff]
    %v656 = vld [vmem:[#allocation2 + $0xff8] sm:$0xff]
    %v657 = vld [vmem:[#allocation2 + $0x1000] sm:$0xff]
    %v658 = vld [vmem:[#allocation2 + $0x1008] sm:$0xff]
    %v659 = vld [vmem:[#allocation2 + $0x1010] sm:$0xff]
    %v660 = vld [vmem:[#allocation2 + $0x1018] sm:$0xff]
    %v661 = vld [vmem:[#allocation2 + $0x1020] sm:$0xff]
    %v662 = vld [vmem:[#allocation2 + $0x1028] sm:$0xff]
    %v663 = vld [vmem:[#allocation2 + $0x1030] sm:$0xff]
    %v664 = vld [vmem:[#allocation2 + $0x1038] sm:$0xff]
    %v665 = vld [vmem:[#allocation2 + $0x1040] sm:$0xff]
    %v666 = vld [vmem:[#allocation2 + $0x1048] sm:$0xff]
    %v667 = vld [vmem:[#allocation2 + $0x1050] sm:$0xff]
    %v668 = vld [vmem:[#allocation2 + $0x1058] sm:$0xff]
    %v669 = vld [vmem:[#allocation2 + $0x1060] sm:$0xff]
    %v670 = vld [vmem:[#allocation2 + $0x1068] sm:$0xff]
    %v671 = vld [vmem:[#allocation2 + $0x1070] sm:$0xff]
    %v672 = vld [vmem:[#allocation2 + $0x1078] sm:$0xff]
    %v673 = vld [vmem:[#allocation2 + $0x1080] sm:$0xff]
    %v674 = vld [vmem:[#allocation2 + $0x1088] sm:$0xff]
    %v675 = vld [vmem:[#allocation2 + $0x1090] sm:$0xff]
    %v676 = vld [vmem:[#allocation2 + $0x1098] sm:$0xff]
    %v677 = vld [vmem:[#allocation2 + $0x10a0] sm:$0xff]
    %v678 = vld [vmem:[#allocation2 + $0x10a8] sm:$0xff]
    %v679 = vld [vmem:[#allocation2 + $0x10b0] sm:$0xff]
    %v680 = vld [vmem:[#allocation2 + $0x10b8] sm:$0xff]
    %v681 = vld [vmem:[#allocation2 + $0x10c0] sm:$0xff]
    %v682 = vld [vmem:[#allocation2 + $0x10c8] sm:$0xff]
    %v683 = vld [vmem:[#allocation2 + $0x10d0] sm:$0xff]
    %v684 = vld [vmem:[#allocation2 + $0x10d8] sm:$0xff]
    %v685 = vld [vmem:[#allocation2 + $0x10e0] sm:$0xff]
    %v686 = vld [vmem:[#allocation2 + $0x10e8] sm:$0xff]
    %v687 = vld [vmem:[#allocation2 + $0x10f0] sm:$0xff]
    %v688 = vld [vmem:[#allocation2 + $0x10f8] sm:$0xff]
    %v689 = vld [vmem:[#allocation2 + $0x1100] sm:$0xff]
    %v690 = vld [vmem:[#allocation2 + $0x1108] sm:$0xff]
    %v691 = vld [vmem:[#allocation2 + $0x1110] sm:$0xff]
    %v692 = vld [vmem:[#allocation2 + $0x1118] sm:$0xff]
    %v693 = vld [vmem:[#allocation2 + $0x1120] sm:$0xff]
    %v694 = vld [vmem:[#allocation2 + $0x1128] sm:$0xff]
    %v695 = vld [vmem:[#allocation2 + $0x1130] sm:$0xff]
    %v696 = vld [vmem:[#allocation2 + $0x1138] sm:$0xff]
    %v697 = vld [vmem:[#allocation2 + $0x1140] sm:$0xff]
    %v698 = vld [vmem:[#allocation2 + $0x1148] sm:$0xff]
    %v699 = vld [vmem:[#allocation2 + $0x1150] sm:$0xff]
    %v700 = vld [vmem:[#allocation2 + $0x1158] sm:$0xff]
    %v701 = vld [vmem:[#allocation2 + $0x1160] sm:$0xff]
    %v702 = vld [vmem:[#allocation2 + $0x1168] sm:$0xff]
    %v703 = vld [vmem:[#allocation2 + $0x1170] sm:$0xff]
    %v704 = vld [vmem:[#allocation2 + $0x1178] sm:$0xff]
    %v705 = vld [vmem:[#allocation2 + $0x1180] sm:$0xff]
    %v706 = vld [vmem:[#allocation2 + $0x1188] sm:$0xff]
    %v707 = vld [vmem:[#allocation2 + $0x1190] sm:$0xff]
    %v708 = vld [vmem:[#allocation2 + $0x1198] sm:$0xff]
    %v709 = vld [vmem:[#allocation2 + $0x11a0] sm:$0xff]
    %v710 = vld [vmem:[#allocation2 + $0x11a8] sm:$0xff]
    %v711 = vld [vmem:[#allocation2 + $0x11b0] sm:$0xff]
    %v712 = vld [vmem:[#allocation2 + $0x11b8] sm:$0xff]
    %v713 = vld [vmem:[#allocation2 + $0x11c0] sm:$0xff]
    %v714 = vld [vmem:[#allocation2 + $0x11c8] sm:$0xff]
    %v715 = vld [vmem:[#allocation2 + $0x11d0] sm:$0xff]
    %v716 = vld [vmem:[#allocation2 + $0x11d8] sm:$0xff]
    %v717 = vld [vmem:[#allocation2 + $0x11e0] sm:$0xff]
    %v718 = vld [vmem:[#allocation2 + $0x11e8] sm:$0xff]
    %v719 = vld [vmem:[#allocation2 + $0x11f0] sm:$0xff]
    %v720 = vld [vmem:[#allocation2 + $0x11f8] sm:$0xff]
    %v721 = vld [vmem:[#allocation2 + $0x1200] sm:$0xff]
    %v722 = vld [vmem:[#allocation2 + $0x1208] sm:$0xff]
    %v723 = vld [vmem:[#allocation2 + $0x1210] sm:$0xff]
    %v724 = vld [vmem:[#allocation2 + $0x1218] sm:$0xff]
    %v725 = vld [vmem:[#allocation2 + $0x1220] sm:$0xff]
    %v726 = vld [vmem:[#allocation2 + $0x1228] sm:$0xff]
    %v727 = vld [vmem:[#allocation2 + $0x1230] sm:$0xff]
    %v728 = vld [vmem:[#allocation2 + $0x1238] sm:$0xff]
    %v729 = vld [vmem:[#allocation2 + $0x1240] sm:$0xff]
    %v730 = vld [vmem:[#allocation2 + $0x1248] sm:$0xff]
    %v731 = vld [vmem:[#allocation2 + $0x1250] sm:$0xff]
    %v732 = vld [vmem:[#allocation2 + $0x1258] sm:$0xff]
    %v733 = vld [vmem:[#allocation2 + $0x1260] sm:$0xff]
    %v734 = vld [vmem:[#allocation2 + $0x1268] sm:$0xff]
    %v735 = vld [vmem:[#allocation2 + $0x1270] sm:$0xff]
    %v736 = vld [vmem:[#allocation2 + $0x1278] sm:$0xff]
    %v737 = vld [vmem:[#allocation2 + $0x1280] sm:$0xff]
    %v738 = vld [vmem:[#allocation2 + $0x1288] sm:$0xff]
    %v739 = vld [vmem:[#allocation2 + $0x1290] sm:$0xff]
    %v740 = vld [vmem:[#allocation2 + $0x1298] sm:$0xff]
    %v741 = vld [vmem:[#allocation2 + $0x12a0] sm:$0xff]
    %v742 = vld [vmem:[#allocation2 + $0x12a8] sm:$0xff]
    %v743 = vld [vmem:[#allocation2 + $0x12b0] sm:$0xff]
    %v744 = vld [vmem:[#allocation2 + $0x12b8] sm:$0xff]
    %v745 = vld [vmem:[#allocation2 + $0x12c0] sm:$0xff]
    %v746 = vld [vmem:[#allocation2 + $0x12c8] sm:$0xff]
    %v747 = vld [vmem:[#allocation2 + $0x12d0] sm:$0xff]
    %v748 = vld [vmem:[#allocation2 + $0x12d8] sm:$0xff]
    %v749 = vld [vmem:[#allocation2 + $0x12e0] sm:$0xff]
    %v750 = vld [vmem:[#allocation2 + $0x12e8] sm:$0xff]
    %v751 = vld [vmem:[#allocation2 + $0x12f0] sm:$0xff]
    %v752 = vld [vmem:[#allocation2 + $0x12f8] sm:$0xff]
    %v753 = vld [vmem:[#allocation2 + $0x1300] sm:$0xff]
    %v754 = vld [vmem:[#allocation2 + $0x1308] sm:$0xff]
    %v755 = vld [vmem:[#allocation2 + $0x1310] sm:$0xff]
    %v756 = vld [vmem:[#allocation2 + $0x1318] sm:$0xff]
    %v757 = vld [vmem:[#allocation2 + $0x1320] sm:$0xff]
    %v758 = vld [vmem:[#allocation2 + $0x1328] sm:$0xff]
    %v759 = vld [vmem:[#allocation2 + $0x1330] sm:$0xff]
    %v760 = vld [vmem:[#allocation2 + $0x1338] sm:$0xff]
    %v761 = vld [vmem:[#allocation2 + $0x1340] sm:$0xff]
    %v762 = vld [vmem:[#allocation2 + $0x1348] sm:$0xff]
    %v763 = vld [vmem:[#allocation2 + $0x1350] sm:$0xff]
    %v764 = vld [vmem:[#allocation2 + $0x1358] sm:$0xff]
    %v765 = vld [vmem:[#allocation2 + $0x1360] sm:$0xff]
    %v766 = vld [vmem:[#allocation2 + $0x1368] sm:$0xff]
    %v767 = vld [vmem:[#allocation2 + $0x1370] sm:$0xff]
    %v768 = vld [vmem:[#allocation2 + $0x1378] sm:$0xff]
    %v769 = vld [vmem:[#allocation2 + $0x1380] sm:$0xff]
    %v770 = vld [vmem:[#allocation2 + $0x1388] sm:$0xff]
    %v771 = vld [vmem:[#allocation2 + $0x1390] sm:$0xff]
    %v772 = vld [vmem:[#allocation2 + $0x1398] sm:$0xff]
    %v773 = vld [vmem:[#allocation2 + $0x13a0] sm:$0xff]
    %v774 = vld [vmem:[#allocation2 + $0x13a8] sm:$0xff]
    %v775 = vld [vmem:[#allocation2 + $0x13b0] sm:$0xff]
    %v776 = vld [vmem:[#allocation2 + $0x13b8] sm:$0xff]
    %v777 = vld [vmem:[#allocation2 + $0x13c0] sm:$0xff]
    %v778 = vld [vmem:[#allocation2 + $0x13c8] sm:$0xff]
    %v779 = vld [vmem:[#allocation2 + $0x13d0] sm:$0xff]
    %v780 = vld [vmem:[#allocation2 + $0x13d8] sm:$0xff]
    %v781 = vld [vmem:[#allocation2 + $0x13e0] sm:$0xff]
    %v782 = vld [vmem:[#allocation2 + $0x13e8] sm:$0xff]
    %v783 = vld [vmem:[#allocation2 + $0x13f0] sm:$0xff]
    %v784 = vld [vmem:[#allocation2 + $0x13f8] sm:$0xff]
    %v785 = vld [vmem:[#allocation5] sm:$0xff]
    %v786 = vld [vmem:[#allocation5 + $0x8] sm:$0xff]
    %v789 = vlaneseq
    %v790 = vshrl.u32 %v789, 7
    %v791 = vsub.s32 0, %v790
    %v792 = vrot.slane %v785, %v791
    %v793 = vlaneseq
    %v794 = vshrl.u32 %v793, 7
    %v795 = vsub.s32 1, %v794
    %v796 = vrot.slane %v785, %v795
    %v797 = vlaneseq
    %v798 = vshrl.u32 %v797, 7
    %v799 = vsub.s32 2, %v798
    %v800 = vrot.slane %v785, %v799
    %v801 = vlaneseq
    %v802 = vshrl.u32 %v801, 7
    %v803 = vsub.s32 3, %v802
    %v804 = vrot.slane %v785, %v803
    %v805 = vlaneseq
    %v806 = vshrl.u32 %v805, 7
    %v807 = vsub.s32 4, %v806
    %v808 = vrot.slane %v785, %v807
    %v809 = vlaneseq
    %v810 = vshrl.u32 %v809, 7
    %v811 = vsub.s32 5, %v810
    %v812 = vrot.slane %v785, %v811
    %v813 = vlaneseq
    %v814 = vshrl.u32 %v813, 7
    %v815 = vsub.s32 6, %v814
    %v816 = vrot.slane %v785, %v815
    %v817 = vlaneseq
    %v818 = vshrl.u32 %v817, 7
    %v819 = vsub.s32 7, %v818
    %v820 = vrot.slane %v785, %v819
    %v821 = vlaneseq
    %v822 = vshrl.u32 %v821, 7
    %v823 = vsub.s32 0, %v822
    %v824 = vrot.slane %v786, %v823
    %v825 = vlaneseq
    %v826 = vshrl.u32 %v825, 7
    %v827 = vsub.s32 1, %v826
    %v828 = vrot.slane %v786, %v827
    %v829 = vlaneseq
    %v830 = vshrl.u32 %v829, 7
    %v831 = vsub.s32 2, %v830
    %v832 = vrot.slane %v786, %v831
    %v833 = vlaneseq
    %v834 = vshrl.u32 %v833, 7
    %v835 = vsub.s32 3, %v834
    %v836 = vrot.slane %v786, %v835
    %v837 = vlaneseq
    %v838 = vshrl.u32 %v837, 7
    %v839 = vsub.s32 4, %v838
    %v840 = vrot.slane %v786, %v839
    %v841 = vlaneseq
    %v842 = vshrl.u32 %v841, 7
    %v843 = vsub.s32 5, %v842
    %v844 = vrot.slane %v786, %v843
    %v845 = vlaneseq
    %v846 = vshrl.u32 %v845, 7
    %v847 = vsub.s32 6, %v846
    %v848 = vrot.slane %v786, %v847
    %v849 = vlaneseq
    %v850 = vshrl.u32 %v849, 7
    %v851 = vsub.s32 7, %v850
    %v852 = vrot.slane %v786, %v851
    %v1509 = vunpack.c.l.b16 %v145
    %v1510 = vunpack.c.h.b16 %v145
    %v1511 = vunpack.c.l.b16 %v146
    %v1512 = vunpack.c.h.b16 %v146
    %v1513 = vunpack.c.l.b16 %v147
    %v1514 = vunpack.c.h.b16 %v147
    %v1515 = vunpack.c.l.b16 %v148
    %v1516 = vunpack.c.h.b16 %v148
    %v1517 = vunpack.c.l.b16 %v149
    %v1518 = vunpack.c.h.b16 %v149
    %v1519 = vunpack.c.l.b16 %v150
    %v1520 = vunpack.c.h.b16 %v150
    %v1521 = vunpack.c.l.b16 %v151
    %v1522 = vunpack.c.h.b16 %v151
    %v1523 = vunpack.c.l.b16 %v152
    %v1524 = vunpack.c.h.b16 %v152
    %v1525 = vunpack.c.l.b16 %v153
    %v1526 = vunpack.c.h.b16 %v153
    %v1527 = vunpack.c.l.b16 %v154
    %v1528 = vunpack.c.h.b16 %v154
    %v1529 = vunpack.c.l.b16 %v155
    %v1530 = vunpack.c.h.b16 %v155
    %v1531 = vunpack.c.l.b16 %v156
    %v1532 = vunpack.c.h.b16 %v156
    %v1533 = vunpack.c.l.b16 %v157
    %v1534 = vunpack.c.h.b16 %v157
    %v1535 = vunpack.c.l.b16 %v158
    %v1536 = vunpack.c.h.b16 %v158
    %v1537 = vunpack.c.l.b16 %v159
    %v1538 = vunpack.c.h.b16 %v159
    %v1539 = vunpack.c.l.b16 %v160
    %v1540 = vunpack.c.h.b16 %v160
    %v1541 = vunpack.c.l.b16 %v161
    %v1542 = vunpack.c.h.b16 %v161
    %v1543 = vunpack.c.l.b16 %v162
    %v1544 = vunpack.c.h.b16 %v162
    %v1545 = vunpack.c.l.b16 %v163
    %v1546 = vunpack.c.h.b16 %v163
    %v1547 = vunpack.c.l.b16 %v164
    %v1548 = vunpack.c.h.b16 %v164
    %v1549 = vunpack.c.l.b16 %v165
    %v1550 = vunpack.c.h.b16 %v165
    %v1551 = vunpack.c.l.b16 %v166
    %v1552 = vunpack.c.h.b16 %v166
    %v1553 = vunpack.c.l.b16 %v167
    %v1554 = vunpack.c.h.b16 %v167
    %v1555 = vunpack.c.l.b16 %v168
    %v1556 = vunpack.c.h.b16 %v168
    %v1557 = vunpack.c.l.b16 %v169
    %v1558 = vunpack.c.h.b16 %v169
    %v1559 = vunpack.c.l.b16 %v170
    %v1560 = vunpack.c.h.b16 %v170
    %v1561 = vunpack.c.l.b16 %v171
    %v1562 = vunpack.c.h.b16 %v171
    %v1563 = vunpack.c.l.b16 %v172
    %v1564 = vunpack.c.h.b16 %v172
    %v1565 = vunpack.c.l.b16 %v173
    %v1566 = vunpack.c.h.b16 %v173
    %v1567 = vunpack.c.l.b16 %v174
    %v1568 = vunpack.c.h.b16 %v174
    %v1569 = vunpack.c.l.b16 %v175
    %v1570 = vunpack.c.h.b16 %v175
    %v1571 = vunpack.c.l.b16 %v176
    %v1572 = vunpack.c.h.b16 %v176
    %v1573 = vunpack.c.l.b16 %v177
    %v1574 = vunpack.c.h.b16 %v177
    %v1575 = vunpack.c.l.b16 %v178
    %v1576 = vunpack.c.h.b16 %v178
    %v1577 = vunpack.c.l.b16 %v179
    %v1578 = vunpack.c.h.b16 %v179
    %v1579 = vunpack.c.l.b16 %v180
    %v1580 = vunpack.c.h.b16 %v180
    %v1581 = vunpack.c.l.b16 %v181
    %v1582 = vunpack.c.h.b16 %v181
    %v1583 = vunpack.c.l.b16 %v182
    %v1584 = vunpack.c.h.b16 %v182
    %v1585 = vunpack.c.l.b16 %v183
    %v1586 = vunpack.c.h.b16 %v183
    %v1587 = vunpack.c.l.b16 %v184
    %v1588 = vunpack.c.h.b16 %v184
    %v1589 = vunpack.c.l.b16 %v185
    %v1590 = vunpack.c.h.b16 %v185
    %v1591 = vunpack.c.l.b16 %v186
    %v1592 = vunpack.c.h.b16 %v186
    %v1593 = vunpack.c.l.b16 %v187
    %v1594 = vunpack.c.h.b16 %v187
    %v1595 = vunpack.c.l.b16 %v188
    %v1596 = vunpack.c.h.b16 %v188
    %v1597 = vunpack.c.l.b16 %v189
    %v1598 = vunpack.c.h.b16 %v189
    %v1599 = vunpack.c.l.b16 %v190
    %v1600 = vunpack.c.h.b16 %v190
    %v1601 = vunpack.c.l.b16 %v191
    %v1602 = vunpack.c.h.b16 %v191
    %v1603 = vunpack.c.l.b16 %v192
    %v1604 = vunpack.c.h.b16 %v192
    %v1605 = vunpack.c.l.b16 %v193
    %v1606 = vunpack.c.h.b16 %v193
    %v1607 = vunpack.c.l.b16 %v194
    %v1608 = vunpack.c.h.b16 %v194
    %v1609 = vunpack.c.l.b16 %v195
    %v1610 = vunpack.c.h.b16 %v195
    %v1611 = vunpack.c.l.b16 %v196
    %v1612 = vunpack.c.h.b16 %v196
    %v1613 = vunpack.c.l.b16 %v197
    %v1614 = vunpack.c.h.b16 %v197
    %v1615 = vunpack.c.l.b16 %v198
    %v1616 = vunpack.c.h.b16 %v198
    %v1617 = vunpack.c.l.b16 %v199
    %v1618 = vunpack.c.h.b16 %v199
    %v1619 = vunpack.c.l.b16 %v200
    %v1620 = vunpack.c.h.b16 %v200
    %v1621 = vunpack.c.l.b16 %v201
    %v1622 = vunpack.c.h.b16 %v201
    %v1623 = vunpack.c.l.b16 %v202
    %v1624 = vunpack.c.h.b16 %v202
    %v1625 = vunpack.c.l.b16 %v203
    %v1626 = vunpack.c.h.b16 %v203
    %v1627 = vunpack.c.l.b16 %v204
    %v1628 = vunpack.c.h.b16 %v204
    %v1629 = vunpack.c.l.b16 %v205
    %v1630 = vunpack.c.h.b16 %v205
    %v1631 = vunpack.c.l.b16 %v206
    %v1632 = vunpack.c.h.b16 %v206
    %v1633 = vunpack.c.l.b16 %v207
    %v1634 = vunpack.c.h.b16 %v207
    %v1635 = vunpack.c.l.b16 %v208
    %v1636 = vunpack.c.h.b16 %v208
    %v1637 = vunpack.c.l.b16 %v209
    %v1638 = vunpack.c.h.b16 %v209
    %v1639 = vunpack.c.l.b16 %v210
    %v1640 = vunpack.c.h.b16 %v210
    %v1641 = vunpack.c.l.b16 %v211
    %v1642 = vunpack.c.h.b16 %v211
    %v1643 = vunpack.c.l.b16 %v212
    %v1644 = vunpack.c.h.b16 %v212
    %v1645 = vunpack.c.l.b16 %v213
    %v1646 = vunpack.c.h.b16 %v213
    %v1647 = vunpack.c.l.b16 %v214
    %v1648 = vunpack.c.h.b16 %v214
    %v1649 = vunpack.c.l.b16 %v215
    %v1650 = vunpack.c.h.b16 %v215
    %v1651 = vunpack.c.l.b16 %v216
    %v1652 = vunpack.c.h.b16 %v216
    %v1653 = vunpack.c.l.b16 %v217
    %v1654 = vunpack.c.h.b16 %v217
    %v1655 = vunpack.c.l.b16 %v218
    %v1656 = vunpack.c.h.b16 %v218
    %v1657 = vunpack.c.l.b16 %v219
    %v1658 = vunpack.c.h.b16 %v219
    %v1659 = vunpack.c.l.b16 %v220
    %v1660 = vunpack.c.h.b16 %v220
    %v1661 = vunpack.c.l.b16 %v221
    %v1662 = vunpack.c.h.b16 %v221
    %v1663 = vunpack.c.l.b16 %v222
    %v1664 = vunpack.c.h.b16 %v222
    %v1665 = vunpack.c.l.b16 %v223
    %v1666 = vunpack.c.h.b16 %v223
    %v1667 = vunpack.c.l.b16 %v224
    %v1668 = vunpack.c.h.b16 %v224
    %v1669 = vunpack.c.l.b16 %v225
    %v1670 = vunpack.c.h.b16 %v225
    %v1671 = vunpack.c.l.b16 %v226
    %v1672 = vunpack.c.h.b16 %v226
    %v1673 = vunpack.c.l.b16 %v227
    %v1674 = vunpack.c.h.b16 %v227
    %v1675 = vunpack.c.l.b16 %v228
    %v1676 = vunpack.c.h.b16 %v228
    %v1677 = vunpack.c.l.b16 %v229
    %v1678 = vunpack.c.h.b16 %v229
    %v1679 = vunpack.c.l.b16 %v230
    %v1680 = vunpack.c.h.b16 %v230
    %v1681 = vunpack.c.l.b16 %v231
    %v1682 = vunpack.c.h.b16 %v231
    %v1683 = vunpack.c.l.b16 %v232
    %v1684 = vunpack.c.h.b16 %v232
    %v1685 = vunpack.c.l.b16 %v233
    %v1686 = vunpack.c.h.b16 %v233
    %v1687 = vunpack.c.l.b16 %v234
    %v1688 = vunpack.c.h.b16 %v234
    %v1689 = vunpack.c.l.b16 %v235
    %v1690 = vunpack.c.h.b16 %v235
    %v1691 = vunpack.c.l.b16 %v236
    %v1692 = vunpack.c.h.b16 %v236
    %v1693 = vunpack.c.l.b16 %v237
    %v1694 = vunpack.c.h.b16 %v237
    %v1695 = vunpack.c.l.b16 %v238
    %v1696 = vunpack.c.h.b16 %v238
    %v1697 = vunpack.c.l.b16 %v239
    %v1698 = vunpack.c.h.b16 %v239
    %v1699 = vunpack.c.l.b16 %v240
    %v1700 = vunpack.c.h.b16 %v240
    %v1701 = vunpack.c.l.b16 %v241
    %v1702 = vunpack.c.h.b16 %v241
    %v1703 = vunpack.c.l.b16 %v242
    %v1704 = vunpack.c.h.b16 %v242
    %v1705 = vunpack.c.l.b16 %v243
    %v1706 = vunpack.c.h.b16 %v243
    %v1707 = vunpack.c.l.b16 %v244
    %v1708 = vunpack.c.h.b16 %v244
    %v1709 = vunpack.c.l.b16 %v245
    %v1710 = vunpack.c.h.b16 %v245
    %v1711 = vunpack.c.l.b16 %v246
    %v1712 = vunpack.c.h.b16 %v246
    %v1713 = vunpack.c.l.b16 %v247
    %v1714 = vunpack.c.h.b16 %v247
    %v1715 = vunpack.c.l.b16 %v248
    %v1716 = vunpack.c.h.b16 %v248
    %v1717 = vunpack.c.l.b16 %v249
    %v1718 = vunpack.c.h.b16 %v249
    %v1719 = vunpack.c.l.b16 %v250
    %v1720 = vunpack.c.h.b16 %v250
    %v1721 = vunpack.c.l.b16 %v251
    %v1722 = vunpack.c.h.b16 %v251
    %v1723 = vunpack.c.l.b16 %v252
    %v1724 = vunpack.c.h.b16 %v252
    %v1725 = vunpack.c.l.b16 %v253
    %v1726 = vunpack.c.h.b16 %v253
    %v1727 = vunpack.c.l.b16 %v254
    %v1728 = vunpack.c.h.b16 %v254
    %v1729 = vunpack.c.l.b16 %v255
    %v1730 = vunpack.c.h.b16 %v255
    %v1731 = vunpack.c.l.b16 %v256
    %v1732 = vunpack.c.h.b16 %v256
    %v1733 = vunpack.c.l.b16 %v257
    %v1734 = vunpack.c.h.b16 %v257
    %v1735 = vunpack.c.l.b16 %v258
    %v1736 = vunpack.c.h.b16 %v258
    %v1737 = vunpack.c.l.b16 %v259
    %v1738 = vunpack.c.h.b16 %v259
    %v1739 = vunpack.c.l.b16 %v260
    %v1740 = vunpack.c.h.b16 %v260
    %v1741 = vunpack.c.l.b16 %v261
    %v1742 = vunpack.c.h.b16 %v261
    %v1743 = vunpack.c.l.b16 %v262
    %v1744 = vunpack.c.h.b16 %v262
    %v1745 = vunpack.c.l.b16 %v263
    %v1746 = vunpack.c.h.b16 %v263
    %v1747 = vunpack.c.l.b16 %v264
    %v1748 = vunpack.c.h.b16 %v264
    %v1749 = vunpack.c.l.b16 %v265
    %v1750 = vunpack.c.h.b16 %v265
    %v1751 = vunpack.c.l.b16 %v266
    %v1752 = vunpack.c.h.b16 %v266
    %v1753 = vunpack.c.l.b16 %v267
    %v1754 = vunpack.c.h.b16 %v267
    %v1755 = vunpack.c.l.b16 %v268
    %v1756 = vunpack.c.h.b16 %v268
    %v1757 = vunpack.c.l.b16 %v269
    %v1758 = vunpack.c.h.b16 %v269
    %v1759 = vunpack.c.l.b16 %v270
    %v1760 = vunpack.c.h.b16 %v270
    %v1761 = vunpack.c.l.b16 %v271
    %v1762 = vunpack.c.h.b16 %v271
    %v1763 = vunpack.c.l.b16 %v272
    %v1764 = vunpack.c.h.b16 %v272
    %v1765 = vunpack.c.l.b16 %v273
    %v1766 = vunpack.c.h.b16 %v273
    %v1767 = vunpack.c.l.b16 %v274
    %v1768 = vunpack.c.h.b16 %v274
    %v1769 = vunpack.c.l.b16 %v275
    %v1770 = vunpack.c.h.b16 %v275
    %v1771 = vunpack.c.l.b16 %v276
    %v1772 = vunpack.c.h.b16 %v276
    %v1773 = vunpack.c.l.b16 %v277
    %v1774 = vunpack.c.h.b16 %v277
    %v1775 = vunpack.c.l.b16 %v278
    %v1776 = vunpack.c.h.b16 %v278
    %v1777 = vunpack.c.l.b16 %v279
    %v1778 = vunpack.c.h.b16 %v279
    %v1779 = vunpack.c.l.b16 %v280
    %v1780 = vunpack.c.h.b16 %v280
    %v1781 = vunpack.c.l.b16 %v281
    %v1782 = vunpack.c.h.b16 %v281
    %v1783 = vunpack.c.l.b16 %v282
    %v1784 = vunpack.c.h.b16 %v282
    %v1785 = vunpack.c.l.b16 %v283
    %v1786 = vunpack.c.h.b16 %v283
    %v1787 = vunpack.c.l.b16 %v284
    %v1788 = vunpack.c.h.b16 %v284
    %v1789 = vunpack.c.l.b16 %v285
    %v1790 = vunpack.c.h.b16 %v285
    %v1791 = vunpack.c.l.b16 %v286
    %v1792 = vunpack.c.h.b16 %v286
    %v1793 = vunpack.c.l.b16 %v287
    %v1794 = vunpack.c.h.b16 %v287
    %v1795 = vunpack.c.l.b16 %v288
    %v1796 = vunpack.c.h.b16 %v288
    %v1797 = vunpack.c.l.b16 %v289
    %v1798 = vunpack.c.h.b16 %v289
    %v1799 = vunpack.c.l.b16 %v290
    %v1800 = vunpack.c.h.b16 %v290
    %v1801 = vunpack.c.l.b16 %v291
    %v1802 = vunpack.c.h.b16 %v291
    %v1803 = vunpack.c.l.b16 %v292
    %v1804 = vunpack.c.h.b16 %v292
    %v1805 = vunpack.c.l.b16 %v293
    %v1806 = vunpack.c.h.b16 %v293
    %v1807 = vunpack.c.l.b16 %v294
    %v1808 = vunpack.c.h.b16 %v294
    %v1809 = vunpack.c.l.b16 %v295
    %v1810 = vunpack.c.h.b16 %v295
    %v1811 = vunpack.c.l.b16 %v296
    %v1812 = vunpack.c.h.b16 %v296
    %v1813 = vunpack.c.l.b16 %v297
    %v1814 = vunpack.c.h.b16 %v297
    %v1815 = vunpack.c.l.b16 %v298
    %v1816 = vunpack.c.h.b16 %v298
    %v1817 = vunpack.c.l.b16 %v299
    %v1818 = vunpack.c.h.b16 %v299
    %v1819 = vunpack.c.l.b16 %v300
    %v1820 = vunpack.c.h.b16 %v300
    %v1821 = vunpack.c.l.b16 %v301
    %v1822 = vunpack.c.h.b16 %v301
    %v1823 = vunpack.c.l.b16 %v302
    %v1824 = vunpack.c.h.b16 %v302
    %v1825 = vunpack.c.l.b16 %v303
    %v1826 = vunpack.c.h.b16 %v303
    %v1827 = vunpack.c.l.b16 %v304
    %v1828 = vunpack.c.h.b16 %v304
    %v1829 = vunpack.c.l.b16 %v305
    %v1830 = vunpack.c.h.b16 %v305
    %v1831 = vunpack.c.l.b16 %v306
    %v1832 = vunpack.c.h.b16 %v306
    %v1833 = vunpack.c.l.b16 %v307
    %v1834 = vunpack.c.h.b16 %v307
    %v1835 = vunpack.c.l.b16 %v308
    %v1836 = vunpack.c.h.b16 %v308
    %v1837 = vunpack.c.l.b16 %v309
    %v1838 = vunpack.c.h.b16 %v309
    %v1839 = vunpack.c.l.b16 %v310
    %v1840 = vunpack.c.h.b16 %v310
    %v1841 = vunpack.c.l.b16 %v311
    %v1842 = vunpack.c.h.b16 %v311
    %v1843 = vunpack.c.l.b16 %v312
    %v1844 = vunpack.c.h.b16 %v312
    %v1845 = vunpack.c.l.b16 %v313
    %v1846 = vunpack.c.h.b16 %v313
    %v1847 = vunpack.c.l.b16 %v314
    %v1848 = vunpack.c.h.b16 %v314
    %v1849 = vunpack.c.l.b16 %v315
    %v1850 = vunpack.c.h.b16 %v315
    %v1851 = vunpack.c.l.b16 %v316
    %v1852 = vunpack.c.h.b16 %v316
    %v1853 = vunpack.c.l.b16 %v317
    %v1854 = vunpack.c.h.b16 %v317
    %v1855 = vunpack.c.l.b16 %v318
    %v1856 = vunpack.c.h.b16 %v318
    %v1857 = vunpack.c.l.b16 %v319
    %v1858 = vunpack.c.h.b16 %v319
    %v1859 = vunpack.c.l.b16 %v320
    %v1860 = vunpack.c.h.b16 %v320
    %v1861 = vunpack.c.l.b16 %v321
    %v1862 = vunpack.c.h.b16 %v321
    %v1863 = vunpack.c.l.b16 %v322
    %v1864 = vunpack.c.h.b16 %v322
    %v1865 = vunpack.c.l.b16 %v323
    %v1866 = vunpack.c.h.b16 %v323
    %v1867 = vunpack.c.l.b16 %v324
    %v1868 = vunpack.c.h.b16 %v324
    %v1869 = vunpack.c.l.b16 %v325
    %v1870 = vunpack.c.h.b16 %v325
    %v1871 = vunpack.c.l.b16 %v326
    %v1872 = vunpack.c.h.b16 %v326
    %v1873 = vunpack.c.l.b16 %v327
    %v1874 = vunpack.c.h.b16 %v327
    %v1875 = vunpack.c.l.b16 %v328
    %v1876 = vunpack.c.h.b16 %v328
    %v1877 = vunpack.c.l.b16 %v329
    %v1878 = vunpack.c.h.b16 %v329
    %v1879 = vunpack.c.l.b16 %v330
    %v1880 = vunpack.c.h.b16 %v330
    %v1881 = vunpack.c.l.b16 %v331
    %v1882 = vunpack.c.h.b16 %v331
    %v1883 = vunpack.c.l.b16 %v332
    %v1884 = vunpack.c.h.b16 %v332
    %v1885 = vunpack.c.l.b16 %v333
    %v1886 = vunpack.c.h.b16 %v333
    %v1887 = vunpack.c.l.b16 %v334
    %v1888 = vunpack.c.h.b16 %v334
    %v1889 = vunpack.c.l.b16 %v335
    %v1890 = vunpack.c.h.b16 %v335
    %v1891 = vunpack.c.l.b16 %v336
    %v1892 = vunpack.c.h.b16 %v336
    %v1893 = vunpack.c.l.b16 %v337
    %v1894 = vunpack.c.h.b16 %v337
    %v1895 = vunpack.c.l.b16 %v338
    %v1896 = vunpack.c.h.b16 %v338
    %v1897 = vunpack.c.l.b16 %v339
    %v1898 = vunpack.c.h.b16 %v339
    %v1899 = vunpack.c.l.b16 %v340
    %v1900 = vunpack.c.h.b16 %v340
    %v1901 = vunpack.c.l.b16 %v341
    %v1902 = vunpack.c.h.b16 %v341
    %v1903 = vunpack.c.l.b16 %v342
    %v1904 = vunpack.c.h.b16 %v342
    %v1905 = vunpack.c.l.b16 %v343
    %v1906 = vunpack.c.h.b16 %v343
    %v1907 = vunpack.c.l.b16 %v344
    %v1908 = vunpack.c.h.b16 %v344
    %v1909 = vunpack.c.l.b16 %v345
    %v1910 = vunpack.c.h.b16 %v345
    %v1911 = vunpack.c.l.b16 %v346
    %v1912 = vunpack.c.h.b16 %v346
    %v1913 = vunpack.c.l.b16 %v347
    %v1914 = vunpack.c.h.b16 %v347
    %v1915 = vunpack.c.l.b16 %v348
    %v1916 = vunpack.c.h.b16 %v348
    %v1917 = vunpack.c.l.b16 %v349
    %v1918 = vunpack.c.h.b16 %v349
    %v1919 = vunpack.c.l.b16 %v350
    %v1920 = vunpack.c.h.b16 %v350
    %v1921 = vunpack.c.l.b16 %v351
    %v1922 = vunpack.c.h.b16 %v351
    %v1923 = vunpack.c.l.b16 %v352
    %v1924 = vunpack.c.h.b16 %v352
    %v1925 = vunpack.c.l.b16 %v353
    %v1926 = vunpack.c.h.b16 %v353
    %v1927 = vunpack.c.l.b16 %v354
    %v1928 = vunpack.c.h.b16 %v354
    %v1929 = vunpack.c.l.b16 %v355
    %v1930 = vunpack.c.h.b16 %v355
    %v1931 = vunpack.c.l.b16 %v356
    %v1932 = vunpack.c.h.b16 %v356
    %v1933 = vunpack.c.l.b16 %v357
    %v1934 = vunpack.c.h.b16 %v357
    %v1935 = vunpack.c.l.b16 %v358
    %v1936 = vunpack.c.h.b16 %v358
    %v1937 = vunpack.c.l.b16 %v359
    %v1938 = vunpack.c.h.b16 %v359
    %v1939 = vunpack.c.l.b16 %v360
    %v1940 = vunpack.c.h.b16 %v360
    %v1941 = vunpack.c.l.b16 %v361
    %v1942 = vunpack.c.h.b16 %v361
    %v1943 = vunpack.c.l.b16 %v362
    %v1944 = vunpack.c.h.b16 %v362
    %v1945 = vunpack.c.l.b16 %v363
    %v1946 = vunpack.c.h.b16 %v363
    %v1947 = vunpack.c.l.b16 %v364
    %v1948 = vunpack.c.h.b16 %v364
    %v1949 = vunpack.c.l.b16 %v365
    %v1950 = vunpack.c.h.b16 %v365
    %v1951 = vunpack.c.l.b16 %v366
    %v1952 = vunpack.c.h.b16 %v366
    %v1953 = vunpack.c.l.b16 %v367
    %v1954 = vunpack.c.h.b16 %v367
    %v1955 = vunpack.c.l.b16 %v368
    %v1956 = vunpack.c.h.b16 %v368
    %v1957 = vunpack.c.l.b16 %v369
    %v1958 = vunpack.c.h.b16 %v369
    %v1959 = vunpack.c.l.b16 %v370
    %v1960 = vunpack.c.h.b16 %v370
    %v1961 = vunpack.c.l.b16 %v371
    %v1962 = vunpack.c.h.b16 %v371
    %v1963 = vunpack.c.l.b16 %v372
    %v1964 = vunpack.c.h.b16 %v372
    %v1965 = vunpack.c.l.b16 %v373
    %v1966 = vunpack.c.h.b16 %v373
    %v1967 = vunpack.c.l.b16 %v374
    %v1968 = vunpack.c.h.b16 %v374
    %v1969 = vunpack.c.l.b16 %v375
    %v1970 = vunpack.c.h.b16 %v375
    %v1971 = vunpack.c.l.b16 %v376
    %v1972 = vunpack.c.h.b16 %v376
    %v1973 = vunpack.c.l.b16 %v377
    %v1974 = vunpack.c.h.b16 %v377
    %v1975 = vunpack.c.l.b16 %v378
    %v1976 = vunpack.c.h.b16 %v378
    %v1977 = vunpack.c.l.b16 %v379
    %v1978 = vunpack.c.h.b16 %v379
    %v1979 = vunpack.c.l.b16 %v380
    %v1980 = vunpack.c.h.b16 %v380
    %v1981 = vunpack.c.l.b16 %v381
    %v1982 = vunpack.c.h.b16 %v381
    %v1983 = vunpack.c.l.b16 %v382
    %v1984 = vunpack.c.h.b16 %v382
    %v1985 = vunpack.c.l.b16 %v383
    %v1986 = vunpack.c.h.b16 %v383
    %v1987 = vunpack.c.l.b16 %v384
    %v1988 = vunpack.c.h.b16 %v384
    %v1989 = vunpack.c.l.b16 %v385
    %v1990 = vunpack.c.h.b16 %v385
    %v1991 = vunpack.c.l.b16 %v386
    %v1992 = vunpack.c.h.b16 %v386
    %v1993 = vunpack.c.l.b16 %v387
    %v1994 = vunpack.c.h.b16 %v387
    %v1995 = vunpack.c.l.b16 %v388
    %v1996 = vunpack.c.h.b16 %v388
    %v1997 = vunpack.c.l.b16 %v389
    %v1998 = vunpack.c.h.b16 %v389
    %v1999 = vunpack.c.l.b16 %v390
    %v2000 = vunpack.c.h.b16 %v390
    %v2001 = vunpack.c.l.b16 %v391
    %v2002 = vunpack.c.h.b16 %v391
    %v2003 = vunpack.c.l.b16 %v392
    %v2004 = vunpack.c.h.b16 %v392
    %v2005 = vunpack.c.l.b16 %v393
    %v2006 = vunpack.c.h.b16 %v393
    %v2007 = vunpack.c.l.b16 %v394
    %v2008 = vunpack.c.h.b16 %v394
    %v2009 = vunpack.c.l.b16 %v395
    %v2010 = vunpack.c.h.b16 %v395
    %v2011 = vunpack.c.l.b16 %v396
    %v2012 = vunpack.c.h.b16 %v396
    %v2013 = vunpack.c.l.b16 %v397
    %v2014 = vunpack.c.h.b16 %v397
    %v2015 = vunpack.c.l.b16 %v398
    %v2016 = vunpack.c.h.b16 %v398
    %v2017 = vunpack.c.l.b16 %v399
    %v2018 = vunpack.c.h.b16 %v399
    %v2019 = vunpack.c.l.b16 %v400
    %v2020 = vunpack.c.h.b16 %v400
    %v2021 = vunpack.c.l.b16 %v401
    %v2022 = vunpack.c.h.b16 %v401
    %v2023 = vunpack.c.l.b16 %v402
    %v2024 = vunpack.c.h.b16 %v402
    %v2025 = vunpack.c.l.b16 %v403
    %v2026 = vunpack.c.h.b16 %v403
    %v2027 = vunpack.c.l.b16 %v404
    %v2028 = vunpack.c.h.b16 %v404
    %v2029 = vunpack.c.l.b16 %v405
    %v2030 = vunpack.c.h.b16 %v405
    %v2031 = vunpack.c.l.b16 %v406
    %v2032 = vunpack.c.h.b16 %v406
    %v2033 = vunpack.c.l.b16 %v407
    %v2034 = vunpack.c.h.b16 %v407
    %v2035 = vunpack.c.l.b16 %v408
    %v2036 = vunpack.c.h.b16 %v408
    %v2037 = vunpack.c.l.b16 %v409
    %v2038 = vunpack.c.h.b16 %v409
    %v2039 = vunpack.c.l.b16 %v410
    %v2040 = vunpack.c.h.b16 %v410
    %v2041 = vunpack.c.l.b16 %v411
    %v2042 = vunpack.c.h.b16 %v411
    %v2043 = vunpack.c.l.b16 %v412
    %v2044 = vunpack.c.h.b16 %v412
    %v2045 = vunpack.c.l.b16 %v413
    %v2046 = vunpack.c.h.b16 %v413
    %v2047 = vunpack.c.l.b16 %v414
    %v2048 = vunpack.c.h.b16 %v414
    %v2049 = vunpack.c.l.b16 %v415
    %v2050 = vunpack.c.h.b16 %v415
    %v2051 = vunpack.c.l.b16 %v416
    %v2052 = vunpack.c.h.b16 %v416
    %v2053 = vunpack.c.l.b16 %v417
    %v2054 = vunpack.c.h.b16 %v417
    %v2055 = vunpack.c.l.b16 %v418
    %v2056 = vunpack.c.h.b16 %v418
    %v2057 = vunpack.c.l.b16 %v419
    %v2058 = vunpack.c.h.b16 %v419
    %v2059 = vunpack.c.l.b16 %v420
    %v2060 = vunpack.c.h.b16 %v420
    %v2061 = vunpack.c.l.b16 %v421
    %v2062 = vunpack.c.h.b16 %v421
    %v2063 = vunpack.c.l.b16 %v422
    %v2064 = vunpack.c.h.b16 %v422
    %v2065 = vunpack.c.l.b16 %v423
    %v2066 = vunpack.c.h.b16 %v423
    %v2067 = vunpack.c.l.b16 %v424
    %v2068 = vunpack.c.h.b16 %v424
    %v2069 = vunpack.c.l.b16 %v425
    %v2070 = vunpack.c.h.b16 %v425
    %v2071 = vunpack.c.l.b16 %v426
    %v2072 = vunpack.c.h.b16 %v426
    %v2073 = vunpack.c.l.b16 %v427
    %v2074 = vunpack.c.h.b16 %v427
    %v2075 = vunpack.c.l.b16 %v428
    %v2076 = vunpack.c.h.b16 %v428
    %v2077 = vunpack.c.l.b16 %v429
    %v2078 = vunpack.c.h.b16 %v429
    %v2079 = vunpack.c.l.b16 %v430
    %v2080 = vunpack.c.h.b16 %v430
    %v2081 = vunpack.c.l.b16 %v431
    %v2082 = vunpack.c.h.b16 %v431
    %v2083 = vunpack.c.l.b16 %v432
    %v2084 = vunpack.c.h.b16 %v432
    %v2085 = vunpack.c.l.b16 %v433
    %v2086 = vunpack.c.h.b16 %v433
    %v2087 = vunpack.c.l.b16 %v434
    %v2088 = vunpack.c.h.b16 %v434
    %v2089 = vunpack.c.l.b16 %v435
    %v2090 = vunpack.c.h.b16 %v435
    %v2091 = vunpack.c.l.b16 %v436
    %v2092 = vunpack.c.h.b16 %v436
    %v2093 = vunpack.c.l.b16 %v437
    %v2094 = vunpack.c.h.b16 %v437
    %v2095 = vunpack.c.l.b16 %v438
    %v2096 = vunpack.c.h.b16 %v438
    %v2097 = vunpack.c.l.b16 %v439
    %v2098 = vunpack.c.h.b16 %v439
    %v2099 = vunpack.c.l.b16 %v440
    %v2100 = vunpack.c.h.b16 %v440
    %v2101 = vunpack.c.l.b16 %v441
    %v2102 = vunpack.c.h.b16 %v441
    %v2103 = vunpack.c.l.b16 %v442
    %v2104 = vunpack.c.h.b16 %v442
    %v2105 = vunpack.c.l.b16 %v443
    %v2106 = vunpack.c.h.b16 %v443
    %v2107 = vunpack.c.l.b16 %v444
    %v2108 = vunpack.c.h.b16 %v444
    %v2109 = vunpack.c.l.b16 %v445
    %v2110 = vunpack.c.h.b16 %v445
    %v2111 = vunpack.c.l.b16 %v446
    %v2112 = vunpack.c.h.b16 %v446
    %v2113 = vunpack.c.l.b16 %v447
    %v2114 = vunpack.c.h.b16 %v447
    %v2115 = vunpack.c.l.b16 %v448
    %v2116 = vunpack.c.h.b16 %v448
    %v2117 = vunpack.c.l.b16 %v449
    %v2118 = vunpack.c.h.b16 %v449
    %v2119 = vunpack.c.l.b16 %v450
    %v2120 = vunpack.c.h.b16 %v450
    %v2121 = vunpack.c.l.b16 %v451
    %v2122 = vunpack.c.h.b16 %v451
    %v2123 = vunpack.c.l.b16 %v452
    %v2124 = vunpack.c.h.b16 %v452
    %v2125 = vunpack.c.l.b16 %v453
    %v2126 = vunpack.c.h.b16 %v453
    %v2127 = vunpack.c.l.b16 %v454
    %v2128 = vunpack.c.h.b16 %v454
    %v2129 = vunpack.c.l.b16 %v455
    %v2130 = vunpack.c.h.b16 %v455
    %v2131 = vunpack.c.l.b16 %v456
    %v2132 = vunpack.c.h.b16 %v456
    %v2133 = vunpack.c.l.b16 %v457
    %v2134 = vunpack.c.h.b16 %v457
    %v2135 = vunpack.c.l.b16 %v458
    %v2136 = vunpack.c.h.b16 %v458
    %v2137 = vunpack.c.l.b16 %v459
    %v2138 = vunpack.c.h.b16 %v459
    %v2139 = vunpack.c.l.b16 %v460
    %v2140 = vunpack.c.h.b16 %v460
    %v2141 = vunpack.c.l.b16 %v461
    %v2142 = vunpack.c.h.b16 %v461
    %v2143 = vunpack.c.l.b16 %v462
    %v2144 = vunpack.c.h.b16 %v462
    %v2145 = vunpack.c.l.b16 %v463
    %v2146 = vunpack.c.h.b16 %v463
    %v2147 = vunpack.c.l.b16 %v464
    %v2148 = vunpack.c.h.b16 %v464
    %v2149 = vunpack.c.l.b16 %v465
    %v2150 = vunpack.c.h.b16 %v465
    %v2151 = vunpack.c.l.b16 %v466
    %v2152 = vunpack.c.h.b16 %v466
    %v2153 = vunpack.c.l.b16 %v467
    %v2154 = vunpack.c.h.b16 %v467
    %v2155 = vunpack.c.l.b16 %v468
    %v2156 = vunpack.c.h.b16 %v468
    %v2157 = vunpack.c.l.b16 %v469
    %v2158 = vunpack.c.h.b16 %v469
    %v2159 = vunpack.c.l.b16 %v470
    %v2160 = vunpack.c.h.b16 %v470
    %v2161 = vunpack.c.l.b16 %v471
    %v2162 = vunpack.c.h.b16 %v471
    %v2163 = vunpack.c.l.b16 %v472
    %v2164 = vunpack.c.h.b16 %v472
    %v2165 = vunpack.c.l.b16 %v473
    %v2166 = vunpack.c.h.b16 %v473
    %v2167 = vunpack.c.l.b16 %v474
    %v2168 = vunpack.c.h.b16 %v474
    %v2169 = vunpack.c.l.b16 %v475
    %v2170 = vunpack.c.h.b16 %v475
    %v2171 = vunpack.c.l.b16 %v476
    %v2172 = vunpack.c.h.b16 %v476
    %v2173 = vunpack.c.l.b16 %v477
    %v2174 = vunpack.c.h.b16 %v477
    %v2175 = vunpack.c.l.b16 %v478
    %v2176 = vunpack.c.h.b16 %v478
    %v2177 = vunpack.c.l.b16 %v479
    %v2178 = vunpack.c.h.b16 %v479
    %v2179 = vunpack.c.l.b16 %v480
    %v2180 = vunpack.c.h.b16 %v480
    %v2181 = vunpack.c.l.b16 %v481
    %v2182 = vunpack.c.h.b16 %v481
    %v2183 = vunpack.c.l.b16 %v482
    %v2184 = vunpack.c.h.b16 %v482
    %v2185 = vunpack.c.l.b16 %v483
    %v2186 = vunpack.c.h.b16 %v483
    %v2187 = vunpack.c.l.b16 %v484
    %v2188 = vunpack.c.h.b16 %v484
    %v2189 = vunpack.c.l.b16 %v485
    %v2190 = vunpack.c.h.b16 %v485
    %v2191 = vunpack.c.l.b16 %v486
    %v2192 = vunpack.c.h.b16 %v486
    %v2193 = vunpack.c.l.b16 %v487
    %v2194 = vunpack.c.h.b16 %v487
    %v2195 = vunpack.c.l.b16 %v488
    %v2196 = vunpack.c.h.b16 %v488
    %v2197 = vunpack.c.l.b16 %v489
    %v2198 = vunpack.c.h.b16 %v489
    %v2199 = vunpack.c.l.b16 %v490
    %v2200 = vunpack.c.h.b16 %v490
    %v2201 = vunpack.c.l.b16 %v491
    %v2202 = vunpack.c.h.b16 %v491
    %v2203 = vunpack.c.l.b16 %v492
    %v2204 = vunpack.c.h.b16 %v492
    %v2205 = vunpack.c.l.b16 %v493
    %v2206 = vunpack.c.h.b16 %v493
    %v2207 = vunpack.c.l.b16 %v494
    %v2208 = vunpack.c.h.b16 %v494
    %v2209 = vunpack.c.l.b16 %v495
    %v2210 = vunpack.c.h.b16 %v495
    %v2211 = vunpack.c.l.b16 %v496
    %v2212 = vunpack.c.h.b16 %v496
    %v2213 = vunpack.c.l.b16 %v497
    %v2214 = vunpack.c.h.b16 %v497
    %v2215 = vunpack.c.l.b16 %v498
    %v2216 = vunpack.c.h.b16 %v498
    %v2217 = vunpack.c.l.b16 %v499
    %v2218 = vunpack.c.h.b16 %v499
    %v2219 = vunpack.c.l.b16 %v500
    %v2220 = vunpack.c.h.b16 %v500
    %v2221 = vunpack.c.l.b16 %v501
    %v2222 = vunpack.c.h.b16 %v501
    %v2223 = vunpack.c.l.b16 %v502
    %v2224 = vunpack.c.h.b16 %v502
    %v2225 = vunpack.c.l.b16 %v503
    %v2226 = vunpack.c.h.b16 %v503
    %v2227 = vunpack.c.l.b16 %v504
    %v2228 = vunpack.c.h.b16 %v504
    %v2229 = vunpack.c.l.b16 %v505
    %v2230 = vunpack.c.h.b16 %v505
    %v2231 = vunpack.c.l.b16 %v506
    %v2232 = vunpack.c.h.b16 %v506
    %v2233 = vunpack.c.l.b16 %v507
    %v2234 = vunpack.c.h.b16 %v507
    %v2235 = vunpack.c.l.b16 %v508
    %v2236 = vunpack.c.h.b16 %v508
    %v2237 = vunpack.c.l.b16 %v509
    %v2238 = vunpack.c.h.b16 %v509
    %v2239 = vunpack.c.l.b16 %v510
    %v2240 = vunpack.c.h.b16 %v510
    %v2241 = vunpack.c.l.b16 %v511
    %v2242 = vunpack.c.h.b16 %v511
    %v2243 = vunpack.c.l.b16 %v512
    %v2244 = vunpack.c.h.b16 %v512
    %v2245 = vunpack.c.l.b16 %v513
    %v2246 = vunpack.c.h.b16 %v513
    %v2247 = vunpack.c.l.b16 %v514
    %v2248 = vunpack.c.h.b16 %v514
    %v2249 = vunpack.c.l.b16 %v515
    %v2250 = vunpack.c.h.b16 %v515
    %v2251 = vunpack.c.l.b16 %v516
    %v2252 = vunpack.c.h.b16 %v516
    %v2253 = vunpack.c.l.b16 %v517
    %v2254 = vunpack.c.h.b16 %v517
    %v2255 = vunpack.c.l.b16 %v518
    %v2256 = vunpack.c.h.b16 %v518
    %v2257 = vunpack.c.l.b16 %v519
    %v2258 = vunpack.c.h.b16 %v519
    %v2259 = vunpack.c.l.b16 %v520
    %v2260 = vunpack.c.h.b16 %v520
    %v2261 = vunpack.c.l.b16 %v521
    %v2262 = vunpack.c.h.b16 %v521
    %v2263 = vunpack.c.l.b16 %v522
    %v2264 = vunpack.c.h.b16 %v522
    %v2265 = vunpack.c.l.b16 %v523
    %v2266 = vunpack.c.h.b16 %v523
    %v2267 = vunpack.c.l.b16 %v524
    %v2268 = vunpack.c.h.b16 %v524
    %v2269 = vunpack.c.l.b16 %v525
    %v2270 = vunpack.c.h.b16 %v525
    %v2271 = vunpack.c.l.b16 %v526
    %v2272 = vunpack.c.h.b16 %v526
    %v2273 = vunpack.c.l.b16 %v527
    %v2274 = vunpack.c.h.b16 %v527
    %v2275 = vunpack.c.l.b16 %v528
    %v2276 = vunpack.c.h.b16 %v528
    %v2277 = vunpack.c.l.b16 %v529
    %v2278 = vunpack.c.h.b16 %v529
    %v2279 = vunpack.c.l.b16 %v530
    %v2280 = vunpack.c.h.b16 %v530
    %v2281 = vunpack.c.l.b16 %v531
    %v2282 = vunpack.c.h.b16 %v531
    %v2283 = vunpack.c.l.b16 %v532
    %v2284 = vunpack.c.h.b16 %v532
    %v2285 = vunpack.c.l.b16 %v533
    %v2286 = vunpack.c.h.b16 %v533
    %v2287 = vunpack.c.l.b16 %v534
    %v2288 = vunpack.c.h.b16 %v534
    %v2289 = vunpack.c.l.b16 %v535
    %v2290 = vunpack.c.h.b16 %v535
    %v2291 = vunpack.c.l.b16 %v536
    %v2292 = vunpack.c.h.b16 %v536
    %v2293 = vunpack.c.l.b16 %v537
    %v2294 = vunpack.c.h.b16 %v537
    %v2295 = vunpack.c.l.b16 %v538
    %v2296 = vunpack.c.h.b16 %v538
    %v2297 = vunpack.c.l.b16 %v539
    %v2298 = vunpack.c.h.b16 %v539
    %v2299 = vunpack.c.l.b16 %v540
    %v2300 = vunpack.c.h.b16 %v540
    %v2301 = vunpack.c.l.b16 %v541
    %v2302 = vunpack.c.h.b16 %v541
    %v2303 = vunpack.c.l.b16 %v542
    %v2304 = vunpack.c.h.b16 %v542
    %v2305 = vunpack.c.l.b16 %v543
    %v2306 = vunpack.c.h.b16 %v543
    %v2307 = vunpack.c.l.b16 %v544
    %v2308 = vunpack.c.h.b16 %v544
    %v2309 = vunpack.c.l.b16 %v545
    %v2310 = vunpack.c.h.b16 %v545
    %v2311 = vunpack.c.l.b16 %v546
    %v2312 = vunpack.c.h.b16 %v546
    %v2313 = vunpack.c.l.b16 %v547
    %v2314 = vunpack.c.h.b16 %v547
    %v2315 = vunpack.c.l.b16 %v548
    %v2316 = vunpack.c.h.b16 %v548
    %v2317 = vunpack.c.l.b16 %v549
    %v2318 = vunpack.c.h.b16 %v549
    %v2319 = vunpack.c.l.b16 %v550
    %v2320 = vunpack.c.h.b16 %v550
    %v2321 = vunpack.c.l.b16 %v551
    %v2322 = vunpack.c.h.b16 %v551
    %v2323 = vunpack.c.l.b16 %v552
    %v2324 = vunpack.c.h.b16 %v552
    %v2325 = vunpack.c.l.b16 %v553
    %v2326 = vunpack.c.h.b16 %v553
    %v2327 = vunpack.c.l.b16 %v554
    %v2328 = vunpack.c.h.b16 %v554
    %v2329 = vunpack.c.l.b16 %v555
    %v2330 = vunpack.c.h.b16 %v555
    %v2331 = vunpack.c.l.b16 %v556
    %v2332 = vunpack.c.h.b16 %v556
    %v2333 = vunpack.c.l.b16 %v557
    %v2334 = vunpack.c.h.b16 %v557
    %v2335 = vunpack.c.l.b16 %v558
    %v2336 = vunpack.c.h.b16 %v558
    %v2337 = vunpack.c.l.b16 %v559
    %v2338 = vunpack.c.h.b16 %v559
    %v2339 = vunpack.c.l.b16 %v560
    %v2340 = vunpack.c.h.b16 %v560
    %v2341 = vunpack.c.l.b16 %v561
    %v2342 = vunpack.c.h.b16 %v561
    %v2343 = vunpack.c.l.b16 %v562
    %v2344 = vunpack.c.h.b16 %v562
    %v2345 = vunpack.c.l.b16 %v563
    %v2346 = vunpack.c.h.b16 %v563
    %v2347 = vunpack.c.l.b16 %v564
    %v2348 = vunpack.c.h.b16 %v564
    %v2349 = vunpack.c.l.b16 %v565
    %v2350 = vunpack.c.h.b16 %v565
    %v2351 = vunpack.c.l.b16 %v566
    %v2352 = vunpack.c.h.b16 %v566
    %v2353 = vunpack.c.l.b16 %v567
    %v2354 = vunpack.c.h.b16 %v567
    %v2355 = vunpack.c.l.b16 %v568
    %v2356 = vunpack.c.h.b16 %v568
    %v2357 = vunpack.c.l.b16 %v569
    %v2358 = vunpack.c.h.b16 %v569
    %v2359 = vunpack.c.l.b16 %v570
    %v2360 = vunpack.c.h.b16 %v570
    %v2361 = vunpack.c.l.b16 %v571
    %v2362 = vunpack.c.h.b16 %v571
    %v2363 = vunpack.c.l.b16 %v572
    %v2364 = vunpack.c.h.b16 %v572
    %v2365 = vunpack.c.l.b16 %v573
    %v2366 = vunpack.c.h.b16 %v573
    %v2367 = vunpack.c.l.b16 %v574
    %v2368 = vunpack.c.h.b16 %v574
    %v2369 = vunpack.c.l.b16 %v575
    %v2370 = vunpack.c.h.b16 %v575
    %v2371 = vunpack.c.l.b16 %v576
    %v2372 = vunpack.c.h.b16 %v576
    %v2373 = vunpack.c.l.b16 %v577
    %v2374 = vunpack.c.h.b16 %v577
    %v2375 = vunpack.c.l.b16 %v578
    %v2376 = vunpack.c.h.b16 %v578
    %v2377 = vunpack.c.l.b16 %v579
    %v2378 = vunpack.c.h.b16 %v579
    %v2379 = vunpack.c.l.b16 %v580
    %v2380 = vunpack.c.h.b16 %v580
    %v2381 = vunpack.c.l.b16 %v581
    %v2382 = vunpack.c.h.b16 %v581
    %v2383 = vunpack.c.l.b16 %v582
    %v2384 = vunpack.c.h.b16 %v582
    %v2385 = vunpack.c.l.b16 %v583
    %v2386 = vunpack.c.h.b16 %v583
    %v2387 = vunpack.c.l.b16 %v584
    %v2388 = vunpack.c.h.b16 %v584
    %v2389 = vunpack.c.l.b16 %v585
    %v2390 = vunpack.c.h.b16 %v585
    %v2391 = vunpack.c.l.b16 %v586
    %v2392 = vunpack.c.h.b16 %v586
    %v2393 = vunpack.c.l.b16 %v587
    %v2394 = vunpack.c.h.b16 %v587
    %v2395 = vunpack.c.l.b16 %v588
    %v2396 = vunpack.c.h.b16 %v588
    %v2397 = vunpack.c.l.b16 %v589
    %v2398 = vunpack.c.h.b16 %v589
    %v2399 = vunpack.c.l.b16 %v590
    %v2400 = vunpack.c.h.b16 %v590
    %v2401 = vunpack.c.l.b16 %v591
    %v2402 = vunpack.c.h.b16 %v591
    %v2403 = vunpack.c.l.b16 %v592
    %v2404 = vunpack.c.h.b16 %v592
    %v2405 = vunpack.c.l.b16 %v593
    %v2406 = vunpack.c.h.b16 %v593
    %v2407 = vunpack.c.l.b16 %v594
    %v2408 = vunpack.c.h.b16 %v594
    %v2409 = vunpack.c.l.b16 %v595
    %v2410 = vunpack.c.h.b16 %v595
    %v2411 = vunpack.c.l.b16 %v596
    %v2412 = vunpack.c.h.b16 %v596
    %v2413 = vunpack.c.l.b16 %v597
    %v2414 = vunpack.c.h.b16 %v597
    %v2415 = vunpack.c.l.b16 %v598
    %v2416 = vunpack.c.h.b16 %v598
    %v2417 = vunpack.c.l.b16 %v599
    %v2418 = vunpack.c.h.b16 %v599
    %v2419 = vunpack.c.l.b16 %v600
    %v2420 = vunpack.c.h.b16 %v600
    %v2421 = vunpack.c.l.b16 %v601
    %v2422 = vunpack.c.h.b16 %v601
    %v2423 = vunpack.c.l.b16 %v602
    %v2424 = vunpack.c.h.b16 %v602
    %v2425 = vunpack.c.l.b16 %v603
    %v2426 = vunpack.c.h.b16 %v603
    %v2427 = vunpack.c.l.b16 %v604
    %v2428 = vunpack.c.h.b16 %v604
    %v2429 = vunpack.c.l.b16 %v605
    %v2430 = vunpack.c.h.b16 %v605
    %v2431 = vunpack.c.l.b16 %v606
    %v2432 = vunpack.c.h.b16 %v606
    %v2433 = vunpack.c.l.b16 %v607
    %v2434 = vunpack.c.h.b16 %v607
    %v2435 = vunpack.c.l.b16 %v608
    %v2436 = vunpack.c.h.b16 %v608
    %v2437 = vunpack.c.l.b16 %v609
    %v2438 = vunpack.c.h.b16 %v609
    %v2439 = vunpack.c.l.b16 %v610
    %v2440 = vunpack.c.h.b16 %v610
    %v2441 = vunpack.c.l.b16 %v611
    %v2442 = vunpack.c.h.b16 %v611
    %v2443 = vunpack.c.l.b16 %v612
    %v2444 = vunpack.c.h.b16 %v612
    %v2445 = vunpack.c.l.b16 %v613
    %v2446 = vunpack.c.h.b16 %v613
    %v2447 = vunpack.c.l.b16 %v614
    %v2448 = vunpack.c.h.b16 %v614
    %v2449 = vunpack.c.l.b16 %v615
    %v2450 = vunpack.c.h.b16 %v615
    %v2451 = vunpack.c.l.b16 %v616
    %v2452 = vunpack.c.h.b16 %v616
    %v2453 = vunpack.c.l.b16 %v617
    %v2454 = vunpack.c.h.b16 %v617
    %v2455 = vunpack.c.l.b16 %v618
    %v2456 = vunpack.c.h.b16 %v618
    %v2457 = vunpack.c.l.b16 %v619
    %v2458 = vunpack.c.h.b16 %v619
    %v2459 = vunpack.c.l.b16 %v620
    %v2460 = vunpack.c.h.b16 %v620
    %v2461 = vunpack.c.l.b16 %v621
    %v2462 = vunpack.c.h.b16 %v621
    %v2463 = vunpack.c.l.b16 %v622
    %v2464 = vunpack.c.h.b16 %v622
    %v2465 = vunpack.c.l.b16 %v623
    %v2466 = vunpack.c.h.b16 %v623
    %v2467 = vunpack.c.l.b16 %v624
    %v2468 = vunpack.c.h.b16 %v624
    %v2469 = vunpack.c.l.b16 %v625
    %v2470 = vunpack.c.h.b16 %v625
    %v2471 = vunpack.c.l.b16 %v626
    %v2472 = vunpack.c.h.b16 %v626
    %v2473 = vunpack.c.l.b16 %v627
    %v2474 = vunpack.c.h.b16 %v627
    %v2475 = vunpack.c.l.b16 %v628
    %v2476 = vunpack.c.h.b16 %v628
    %v2477 = vunpack.c.l.b16 %v629
    %v2478 = vunpack.c.h.b16 %v629
    %v2479 = vunpack.c.l.b16 %v630
    %v2480 = vunpack.c.h.b16 %v630
    %v2481 = vunpack.c.l.b16 %v631
    %v2482 = vunpack.c.h.b16 %v631
    %v2483 = vunpack.c.l.b16 %v632
    %v2484 = vunpack.c.h.b16 %v632
    %v2485 = vunpack.c.l.b16 %v633
    %v2486 = vunpack.c.h.b16 %v633
    %v2487 = vunpack.c.l.b16 %v634
    %v2488 = vunpack.c.h.b16 %v634
    %v2489 = vunpack.c.l.b16 %v635
    %v2490 = vunpack.c.h.b16 %v635
    %v2491 = vunpack.c.l.b16 %v636
    %v2492 = vunpack.c.h.b16 %v636
    %v2493 = vunpack.c.l.b16 %v637
    %v2494 = vunpack.c.h.b16 %v637
    %v2495 = vunpack.c.l.b16 %v638
    %v2496 = vunpack.c.h.b16 %v638
    %v2497 = vunpack.c.l.b16 %v639
    %v2498 = vunpack.c.h.b16 %v639
    %v2499 = vunpack.c.l.b16 %v640
    %v2500 = vunpack.c.h.b16 %v640
    %v2501 = vunpack.c.l.b16 %v641
    %v2502 = vunpack.c.h.b16 %v641
    %v2503 = vunpack.c.l.b16 %v642
    %v2504 = vunpack.c.h.b16 %v642
    %v2505 = vunpack.c.l.b16 %v643
    %v2506 = vunpack.c.h.b16 %v643
    %v2507 = vunpack.c.l.b16 %v644
    %v2508 = vunpack.c.h.b16 %v644
    %v2509 = vunpack.c.l.b16 %v645
    %v2510 = vunpack.c.h.b16 %v645
    %v2511 = vunpack.c.l.b16 %v646
    %v2512 = vunpack.c.h.b16 %v646
    %v2513 = vunpack.c.l.b16 %v647
    %v2514 = vunpack.c.h.b16 %v647
    %v2515 = vunpack.c.l.b16 %v648
    %v2516 = vunpack.c.h.b16 %v648
    %v2517 = vunpack.c.l.b16 %v649
    %v2518 = vunpack.c.h.b16 %v649
    %v2519 = vunpack.c.l.b16 %v650
    %v2520 = vunpack.c.h.b16 %v650
    %v2521 = vunpack.c.l.b16 %v651
    %v2522 = vunpack.c.h.b16 %v651
    %v2523 = vunpack.c.l.b16 %v652
    %v2524 = vunpack.c.h.b16 %v652
    %v2525 = vunpack.c.l.b16 %v653
    %v2526 = vunpack.c.h.b16 %v653
    %v2527 = vunpack.c.l.b16 %v654
    %v2528 = vunpack.c.h.b16 %v654
    %v2529 = vunpack.c.l.b16 %v655
    %v2530 = vunpack.c.h.b16 %v655
    %v2531 = vunpack.c.l.b16 %v656
    %v2532 = vunpack.c.h.b16 %v656
    %v2533 = vunpack.c.l.b16 %v657
    %v2534 = vunpack.c.h.b16 %v657
    %v2535 = vunpack.c.l.b16 %v658
    %v2536 = vunpack.c.h.b16 %v658
    %v2537 = vunpack.c.l.b16 %v659
    %v2538 = vunpack.c.h.b16 %v659
    %v2539 = vunpack.c.l.b16 %v660
    %v2540 = vunpack.c.h.b16 %v660
    %v2541 = vunpack.c.l.b16 %v661
    %v2542 = vunpack.c.h.b16 %v661
    %v2543 = vunpack.c.l.b16 %v662
    %v2544 = vunpack.c.h.b16 %v662
    %v2545 = vunpack.c.l.b16 %v663
    %v2546 = vunpack.c.h.b16 %v663
    %v2547 = vunpack.c.l.b16 %v664
    %v2548 = vunpack.c.h.b16 %v664
    %v2549 = vunpack.c.l.b16 %v665
    %v2550 = vunpack.c.h.b16 %v665
    %v2551 = vunpack.c.l.b16 %v666
    %v2552 = vunpack.c.h.b16 %v666
    %v2553 = vunpack.c.l.b16 %v667
    %v2554 = vunpack.c.h.b16 %v667
    %v2555 = vunpack.c.l.b16 %v668
    %v2556 = vunpack.c.h.b16 %v668
    %v2557 = vunpack.c.l.b16 %v669
    %v2558 = vunpack.c.h.b16 %v669
    %v2559 = vunpack.c.l.b16 %v670
    %v2560 = vunpack.c.h.b16 %v670
    %v2561 = vunpack.c.l.b16 %v671
    %v2562 = vunpack.c.h.b16 %v671
    %v2563 = vunpack.c.l.b16 %v672
    %v2564 = vunpack.c.h.b16 %v672
    %v2565 = vunpack.c.l.b16 %v673
    %v2566 = vunpack.c.h.b16 %v673
    %v2567 = vunpack.c.l.b16 %v674
    %v2568 = vunpack.c.h.b16 %v674
    %v2569 = vunpack.c.l.b16 %v675
    %v2570 = vunpack.c.h.b16 %v675
    %v2571 = vunpack.c.l.b16 %v676
    %v2572 = vunpack.c.h.b16 %v676
    %v2573 = vunpack.c.l.b16 %v677
    %v2574 = vunpack.c.h.b16 %v677
    %v2575 = vunpack.c.l.b16 %v678
    %v2576 = vunpack.c.h.b16 %v678
    %v2577 = vunpack.c.l.b16 %v679
    %v2578 = vunpack.c.h.b16 %v679
    %v2579 = vunpack.c.l.b16 %v680
    %v2580 = vunpack.c.h.b16 %v680
    %v2581 = vunpack.c.l.b16 %v681
    %v2582 = vunpack.c.h.b16 %v681
    %v2583 = vunpack.c.l.b16 %v682
    %v2584 = vunpack.c.h.b16 %v682
    %v2585 = vunpack.c.l.b16 %v683
    %v2586 = vunpack.c.h.b16 %v683
    %v2587 = vunpack.c.l.b16 %v684
    %v2588 = vunpack.c.h.b16 %v684
    %v2589 = vunpack.c.l.b16 %v685
    %v2590 = vunpack.c.h.b16 %v685
    %v2591 = vunpack.c.l.b16 %v686
    %v2592 = vunpack.c.h.b16 %v686
    %v2593 = vunpack.c.l.b16 %v687
    %v2594 = vunpack.c.h.b16 %v687
    %v2595 = vunpack.c.l.b16 %v688
    %v2596 = vunpack.c.h.b16 %v688
    %v2597 = vunpack.c.l.b16 %v689
    %v2598 = vunpack.c.h.b16 %v689
    %v2599 = vunpack.c.l.b16 %v690
    %v2600 = vunpack.c.h.b16 %v690
    %v2601 = vunpack.c.l.b16 %v691
    %v2602 = vunpack.c.h.b16 %v691
    %v2603 = vunpack.c.l.b16 %v692
    %v2604 = vunpack.c.h.b16 %v692
    %v2605 = vunpack.c.l.b16 %v693
    %v2606 = vunpack.c.h.b16 %v693
    %v2607 = vunpack.c.l.b16 %v694
    %v2608 = vunpack.c.h.b16 %v694
    %v2609 = vunpack.c.l.b16 %v695
    %v2610 = vunpack.c.h.b16 %v695
    %v2611 = vunpack.c.l.b16 %v696
    %v2612 = vunpack.c.h.b16 %v696
    %v2613 = vunpack.c.l.b16 %v697
    %v2614 = vunpack.c.h.b16 %v697
    %v2615 = vunpack.c.l.b16 %v698
    %v2616 = vunpack.c.h.b16 %v698
    %v2617 = vunpack.c.l.b16 %v699
    %v2618 = vunpack.c.h.b16 %v699
    %v2619 = vunpack.c.l.b16 %v700
    %v2620 = vunpack.c.h.b16 %v700
    %v2621 = vunpack.c.l.b16 %v701
    %v2622 = vunpack.c.h.b16 %v701
    %v2623 = vunpack.c.l.b16 %v702
    %v2624 = vunpack.c.h.b16 %v702
    %v2625 = vunpack.c.l.b16 %v703
    %v2626 = vunpack.c.h.b16 %v703
    %v2627 = vunpack.c.l.b16 %v704
    %v2628 = vunpack.c.h.b16 %v704
    %v2629 = vunpack.c.l.b16 %v705
    %v2630 = vunpack.c.h.b16 %v705
    %v2631 = vunpack.c.l.b16 %v706
    %v2632 = vunpack.c.h.b16 %v706
    %v2633 = vunpack.c.l.b16 %v707
    %v2634 = vunpack.c.h.b16 %v707
    %v2635 = vunpack.c.l.b16 %v708
    %v2636 = vunpack.c.h.b16 %v708
    %v2637 = vunpack.c.l.b16 %v709
    %v2638 = vunpack.c.h.b16 %v709
    %v2639 = vunpack.c.l.b16 %v710
    %v2640 = vunpack.c.h.b16 %v710
    %v2641 = vunpack.c.l.b16 %v711
    %v2642 = vunpack.c.h.b16 %v711
    %v2643 = vunpack.c.l.b16 %v712
    %v2644 = vunpack.c.h.b16 %v712
    %v2645 = vunpack.c.l.b16 %v713
    %v2646 = vunpack.c.h.b16 %v713
    %v2647 = vunpack.c.l.b16 %v714
    %v2648 = vunpack.c.h.b16 %v714
    %v2649 = vunpack.c.l.b16 %v715
    %v2650 = vunpack.c.h.b16 %v715
    %v2651 = vunpack.c.l.b16 %v716
    %v2652 = vunpack.c.h.b16 %v716
    %v2653 = vunpack.c.l.b16 %v717
    %v2654 = vunpack.c.h.b16 %v717
    %v2655 = vunpack.c.l.b16 %v718
    %v2656 = vunpack.c.h.b16 %v718
    %v2657 = vunpack.c.l.b16 %v719
    %v2658 = vunpack.c.h.b16 %v719
    %v2659 = vunpack.c.l.b16 %v720
    %v2660 = vunpack.c.h.b16 %v720
    %v2661 = vunpack.c.l.b16 %v721
    %v2662 = vunpack.c.h.b16 %v721
    %v2663 = vunpack.c.l.b16 %v722
    %v2664 = vunpack.c.h.b16 %v722
    %v2665 = vunpack.c.l.b16 %v723
    %v2666 = vunpack.c.h.b16 %v723
    %v2667 = vunpack.c.l.b16 %v724
    %v2668 = vunpack.c.h.b16 %v724
    %v2669 = vunpack.c.l.b16 %v725
    %v2670 = vunpack.c.h.b16 %v725
    %v2671 = vunpack.c.l.b16 %v726
    %v2672 = vunpack.c.h.b16 %v726
    %v2673 = vunpack.c.l.b16 %v727
    %v2674 = vunpack.c.h.b16 %v727
    %v2675 = vunpack.c.l.b16 %v728
    %v2676 = vunpack.c.h.b16 %v728
    %v2677 = vunpack.c.l.b16 %v729
    %v2678 = vunpack.c.h.b16 %v729
    %v2679 = vunpack.c.l.b16 %v730
    %v2680 = vunpack.c.h.b16 %v730
    %v2681 = vunpack.c.l.b16 %v731
    %v2682 = vunpack.c.h.b16 %v731
    %v2683 = vunpack.c.l.b16 %v732
    %v2684 = vunpack.c.h.b16 %v732
    %v2685 = vunpack.c.l.b16 %v733
    %v2686 = vunpack.c.h.b16 %v733
    %v2687 = vunpack.c.l.b16 %v734
    %v2688 = vunpack.c.h.b16 %v734
    %v2689 = vunpack.c.l.b16 %v735
    %v2690 = vunpack.c.h.b16 %v735
    %v2691 = vunpack.c.l.b16 %v736
    %v2692 = vunpack.c.h.b16 %v736
    %v2693 = vunpack.c.l.b16 %v737
    %v2694 = vunpack.c.h.b16 %v737
    %v2695 = vunpack.c.l.b16 %v738
    %v2696 = vunpack.c.h.b16 %v738
    %v2697 = vunpack.c.l.b16 %v739
    %v2698 = vunpack.c.h.b16 %v739
    %v2699 = vunpack.c.l.b16 %v740
    %v2700 = vunpack.c.h.b16 %v740
    %v2701 = vunpack.c.l.b16 %v741
    %v2702 = vunpack.c.h.b16 %v741
    %v2703 = vunpack.c.l.b16 %v742
    %v2704 = vunpack.c.h.b16 %v742
    %v2705 = vunpack.c.l.b16 %v743
    %v2706 = vunpack.c.h.b16 %v743
    %v2707 = vunpack.c.l.b16 %v744
    %v2708 = vunpack.c.h.b16 %v744
    %v2709 = vunpack.c.l.b16 %v745
    %v2710 = vunpack.c.h.b16 %v745
    %v2711 = vunpack.c.l.b16 %v746
    %v2712 = vunpack.c.h.b16 %v746
    %v2713 = vunpack.c.l.b16 %v747
    %v2714 = vunpack.c.h.b16 %v747
    %v2715 = vunpack.c.l.b16 %v748
    %v2716 = vunpack.c.h.b16 %v748
    %v2717 = vunpack.c.l.b16 %v749
    %v2718 = vunpack.c.h.b16 %v749
    %v2719 = vunpack.c.l.b16 %v750
    %v2720 = vunpack.c.h.b16 %v750
    %v2721 = vunpack.c.l.b16 %v751
    %v2722 = vunpack.c.h.b16 %v751
    %v2723 = vunpack.c.l.b16 %v752
    %v2724 = vunpack.c.h.b16 %v752
    %v2725 = vunpack.c.l.b16 %v753
    %v2726 = vunpack.c.h.b16 %v753
    %v2727 = vunpack.c.l.b16 %v754
    %v2728 = vunpack.c.h.b16 %v754
    %v2729 = vunpack.c.l.b16 %v755
    %v2730 = vunpack.c.h.b16 %v755
    %v2731 = vunpack.c.l.b16 %v756
    %v2732 = vunpack.c.h.b16 %v756
    %v2733 = vunpack.c.l.b16 %v757
    %v2734 = vunpack.c.h.b16 %v757
    %v2735 = vunpack.c.l.b16 %v758
    %v2736 = vunpack.c.h.b16 %v758
    %v2737 = vunpack.c.l.b16 %v759
    %v2738 = vunpack.c.h.b16 %v759
    %v2739 = vunpack.c.l.b16 %v760
    %v2740 = vunpack.c.h.b16 %v760
    %v2741 = vunpack.c.l.b16 %v761
    %v2742 = vunpack.c.h.b16 %v761
    %v2743 = vunpack.c.l.b16 %v762
    %v2744 = vunpack.c.h.b16 %v762
    %v2745 = vunpack.c.l.b16 %v763
    %v2746 = vunpack.c.h.b16 %v763
    %v2747 = vunpack.c.l.b16 %v764
    %v2748 = vunpack.c.h.b16 %v764
    %v2749 = vunpack.c.l.b16 %v765
    %v2750 = vunpack.c.h.b16 %v765
    %v2751 = vunpack.c.l.b16 %v766
    %v2752 = vunpack.c.h.b16 %v766
    %v2753 = vunpack.c.l.b16 %v767
    %v2754 = vunpack.c.h.b16 %v767
    %v2755 = vunpack.c.l.b16 %v768
    %v2756 = vunpack.c.h.b16 %v768
    %v2757 = vunpack.c.l.b16 %v769
    %v2758 = vunpack.c.h.b16 %v769
    %v2759 = vunpack.c.l.b16 %v770
    %v2760 = vunpack.c.h.b16 %v770
    %v2761 = vunpack.c.l.b16 %v771
    %v2762 = vunpack.c.h.b16 %v771
    %v2763 = vunpack.c.l.b16 %v772
    %v2764 = vunpack.c.h.b16 %v772
    %v2765 = vunpack.c.l.b16 %v773
    %v2766 = vunpack.c.h.b16 %v773
    %v2767 = vunpack.c.l.b16 %v774
    %v2768 = vunpack.c.h.b16 %v774
    %v2769 = vunpack.c.l.b16 %v775
    %v2770 = vunpack.c.h.b16 %v775
    %v2771 = vunpack.c.l.b16 %v776
    %v2772 = vunpack.c.h.b16 %v776
    %v2773 = vunpack.c.l.b16 %v777
    %v2774 = vunpack.c.h.b16 %v777
    %v2775 = vunpack.c.l.b16 %v778
    %v2776 = vunpack.c.h.b16 %v778
    %v2777 = vunpack.c.l.b16 %v779
    %v2778 = vunpack.c.h.b16 %v779
    %v2779 = vunpack.c.l.b16 %v780
    %v2780 = vunpack.c.h.b16 %v780
    %v2781 = vunpack.c.l.b16 %v781
    %v2782 = vunpack.c.h.b16 %v781
    %v2783 = vunpack.c.l.b16 %v782
    %v2784 = vunpack.c.h.b16 %v782
    %v2785 = vunpack.c.l.b16 %v783
    %v2786 = vunpack.c.h.b16 %v783
    %v2787 = vunpack.c.l.b16 %v784
    %v2788 = vunpack.c.h.b16 %v784
    %v2789 = vpack.c.b16 %v1525, %v1509
    %v2790 = vpack.c.b16 %v1526, %v1510
    %v2791 = vpack.c.b16 %v1527, %v1511
    %v2792 = vpack.c.b16 %v1528, %v1512
    %v2793 = vpack.c.b16 %v1529, %v1513
    %v2794 = vpack.c.b16 %v1530, %v1514
    %v2795 = vpack.c.b16 %v1531, %v1515
    %v2796 = vpack.c.b16 %v1532, %v1516
    %v2797 = vpack.c.b16 %v1533, %v1517
    %v2798 = vpack.c.b16 %v1534, %v1518
    %v2799 = vpack.c.b16 %v1535, %v1519
    %v2800 = vpack.c.b16 %v1536, %v1520
    %v2801 = vpack.c.b16 %v1537, %v1521
    %v2802 = vpack.c.b16 %v1538, %v1522
    %v2803 = vpack.c.b16 %v1539, %v1523
    %v2804 = vpack.c.b16 %v1540, %v1524
    %v2805 = vpack.c.b16 %v1557, %v1541
    %v2806 = vpack.c.b16 %v1558, %v1542
    %v2807 = vpack.c.b16 %v1559, %v1543
    %v2808 = vpack.c.b16 %v1560, %v1544
    %v2809 = vpack.c.b16 %v1561, %v1545
    %v2810 = vpack.c.b16 %v1562, %v1546
    %v2811 = vpack.c.b16 %v1563, %v1547
    %v2812 = vpack.c.b16 %v1564, %v1548
    %v2813 = vpack.c.b16 %v1565, %v1549
    %v2814 = vpack.c.b16 %v1566, %v1550
    %v2815 = vpack.c.b16 %v1567, %v1551
    %v2816 = vpack.c.b16 %v1568, %v1552
    %v2817 = vpack.c.b16 %v1569, %v1553
    %v2818 = vpack.c.b16 %v1570, %v1554
    %v2819 = vpack.c.b16 %v1571, %v1555
    %v2820 = vpack.c.b16 %v1572, %v1556
    %v2821 = vpack.c.b16 %v1589, %v1573
    %v2822 = vpack.c.b16 %v1590, %v1574
    %v2823 = vpack.c.b16 %v1591, %v1575
    %v2824 = vpack.c.b16 %v1592, %v1576
    %v2825 = vpack.c.b16 %v1593, %v1577
    %v2826 = vpack.c.b16 %v1594, %v1578
    %v2827 = vpack.c.b16 %v1595, %v1579
    %v2828 = vpack.c.b16 %v1596, %v1580
    %v2829 = vpack.c.b16 %v1597, %v1581
    %v2830 = vpack.c.b16 %v1598, %v1582
    %v2831 = vpack.c.b16 %v1599, %v1583
    %v2832 = vpack.c.b16 %v1600, %v1584
    %v2833 = vpack.c.b16 %v1601, %v1585
    %v2834 = vpack.c.b16 %v1602, %v1586
    %v2835 = vpack.c.b16 %v1603, %v1587
    %v2836 = vpack.c.b16 %v1604, %v1588
    %v2837 = vpack.c.b16 %v1621, %v1605
    %v2838 = vpack.c.b16 %v1622, %v1606
    %v2839 = vpack.c.b16 %v1623, %v1607
    %v2840 = vpack.c.b16 %v1624, %v1608
    %v2841 = vpack.c.b16 %v1625, %v1609
    %v2842 = vpack.c.b16 %v1626, %v1610
    %v2843 = vpack.c.b16 %v1627, %v1611
    %v2844 = vpack.c.b16 %v1628, %v1612
    %v2845 = vpack.c.b16 %v1629, %v1613
    %v2846 = vpack.c.b16 %v1630, %v1614
    %v2847 = vpack.c.b16 %v1631, %v1615
    %v2848 = vpack.c.b16 %v1632, %v1616
    %v2849 = vpack.c.b16 %v1633, %v1617
    %v2850 = vpack.c.b16 %v1634, %v1618
    %v2851 = vpack.c.b16 %v1635, %v1619
    %v2852 = vpack.c.b16 %v1636, %v1620
    %v2853 = vpack.c.b16 %v1653, %v1637
    %v2854 = vpack.c.b16 %v1654, %v1638
    %v2855 = vpack.c.b16 %v1655, %v1639
    %v2856 = vpack.c.b16 %v1656, %v1640
    %v2857 = vpack.c.b16 %v1657, %v1641
    %v2858 = vpack.c.b16 %v1658, %v1642
    %v2859 = vpack.c.b16 %v1659, %v1643
    %v2860 = vpack.c.b16 %v1660, %v1644
    %v2861 = vpack.c.b16 %v1661, %v1645
    %v2862 = vpack.c.b16 %v1662, %v1646
    %v2863 = vpack.c.b16 %v1663, %v1647
    %v2864 = vpack.c.b16 %v1664, %v1648
    %v2865 = vpack.c.b16 %v1665, %v1649
    %v2866 = vpack.c.b16 %v1666, %v1650
    %v2867 = vpack.c.b16 %v1667, %v1651
    %v2868 = vpack.c.b16 %v1668, %v1652
    %v2869 = vpack.c.b16 %v1685, %v1669
    %v2870 = vpack.c.b16 %v1686, %v1670
    %v2871 = vpack.c.b16 %v1687, %v1671
    %v2872 = vpack.c.b16 %v1688, %v1672
    %v2873 = vpack.c.b16 %v1689, %v1673
    %v2874 = vpack.c.b16 %v1690, %v1674
    %v2875 = vpack.c.b16 %v1691, %v1675
    %v2876 = vpack.c.b16 %v1692, %v1676
    %v2877 = vpack.c.b16 %v1693, %v1677
    %v2878 = vpack.c.b16 %v1694, %v1678
    %v2879 = vpack.c.b16 %v1695, %v1679
    %v2880 = vpack.c.b16 %v1696, %v1680
    %v2881 = vpack.c.b16 %v1697, %v1681
    %v2882 = vpack.c.b16 %v1698, %v1682
    %v2883 = vpack.c.b16 %v1699, %v1683
    %v2884 = vpack.c.b16 %v1700, %v1684
    %v2885 = vpack.c.b16 %v1717, %v1701
    %v2886 = vpack.c.b16 %v1718, %v1702
    %v2887 = vpack.c.b16 %v1719, %v1703
    %v2888 = vpack.c.b16 %v1720, %v1704
    %v2889 = vpack.c.b16 %v1721, %v1705
    %v2890 = vpack.c.b16 %v1722, %v1706
    %v2891 = vpack.c.b16 %v1723, %v1707
    %v2892 = vpack.c.b16 %v1724, %v1708
    %v2893 = vpack.c.b16 %v1725, %v1709
    %v2894 = vpack.c.b16 %v1726, %v1710
    %v2895 = vpack.c.b16 %v1727, %v1711
    %v2896 = vpack.c.b16 %v1728, %v1712
    %v2897 = vpack.c.b16 %v1729, %v1713
    %v2898 = vpack.c.b16 %v1730, %v1714
    %v2899 = vpack.c.b16 %v1731, %v1715
    %v2900 = vpack.c.b16 %v1732, %v1716
    %v2901 = vpack.c.b16 %v1749, %v1733
    %v2902 = vpack.c.b16 %v1750, %v1734
    %v2903 = vpack.c.b16 %v1751, %v1735
    %v2904 = vpack.c.b16 %v1752, %v1736
    %v2905 = vpack.c.b16 %v1753, %v1737
    %v2906 = vpack.c.b16 %v1754, %v1738
    %v2907 = vpack.c.b16 %v1755, %v1739
    %v2908 = vpack.c.b16 %v1756, %v1740
    %v2909 = vpack.c.b16 %v1757, %v1741
    %v2910 = vpack.c.b16 %v1758, %v1742
    %v2911 = vpack.c.b16 %v1759, %v1743
    %v2912 = vpack.c.b16 %v1760, %v1744
    %v2913 = vpack.c.b16 %v1761, %v1745
    %v2914 = vpack.c.b16 %v1762, %v1746
    %v2915 = vpack.c.b16 %v1763, %v1747
    %v2916 = vpack.c.b16 %v1764, %v1748
    %v2917 = vpack.c.b16 %v1781, %v1765
    %v2918 = vpack.c.b16 %v1782, %v1766
    %v2919 = vpack.c.b16 %v1783, %v1767
    %v2920 = vpack.c.b16 %v1784, %v1768
    %v2921 = vpack.c.b16 %v1785, %v1769
    %v2922 = vpack.c.b16 %v1786, %v1770
    %v2923 = vpack.c.b16 %v1787, %v1771
    %v2924 = vpack.c.b16 %v1788, %v1772
    %v2925 = vpack.c.b16 %v1789, %v1773
    %v2926 = vpack.c.b16 %v1790, %v1774
    %v2927 = vpack.c.b16 %v1791, %v1775
    %v2928 = vpack.c.b16 %v1792, %v1776
    %v2929 = vpack.c.b16 %v1793, %v1777
    %v2930 = vpack.c.b16 %v1794, %v1778
    %v2931 = vpack.c.b16 %v1795, %v1779
    %v2932 = vpack.c.b16 %v1796, %v1780
    %v2933 = vpack.c.b16 %v1813, %v1797
    %v2934 = vpack.c.b16 %v1814, %v1798
    %v2935 = vpack.c.b16 %v1815, %v1799
    %v2936 = vpack.c.b16 %v1816, %v1800
    %v2937 = vpack.c.b16 %v1817, %v1801
    %v2938 = vpack.c.b16 %v1818, %v1802
    %v2939 = vpack.c.b16 %v1819, %v1803
    %v2940 = vpack.c.b16 %v1820, %v1804
    %v2941 = vpack.c.b16 %v1821, %v1805
    %v2942 = vpack.c.b16 %v1822, %v1806
    %v2943 = vpack.c.b16 %v1823, %v1807
    %v2944 = vpack.c.b16 %v1824, %v1808
    %v2945 = vpack.c.b16 %v1825, %v1809
    %v2946 = vpack.c.b16 %v1826, %v1810
    %v2947 = vpack.c.b16 %v1827, %v1811
    %v2948 = vpack.c.b16 %v1828, %v1812
    %v2949 = vpack.c.b16 %v1845, %v1829
    %v2950 = vpack.c.b16 %v1846, %v1830
    %v2951 = vpack.c.b16 %v1847, %v1831
    %v2952 = vpack.c.b16 %v1848, %v1832
    %v2953 = vpack.c.b16 %v1849, %v1833
    %v2954 = vpack.c.b16 %v1850, %v1834
    %v2955 = vpack.c.b16 %v1851, %v1835
    %v2956 = vpack.c.b16 %v1852, %v1836
    %v2957 = vpack.c.b16 %v1853, %v1837
    %v2958 = vpack.c.b16 %v1854, %v1838
    %v2959 = vpack.c.b16 %v1855, %v1839
    %v2960 = vpack.c.b16 %v1856, %v1840
    %v2961 = vpack.c.b16 %v1857, %v1841
    %v2962 = vpack.c.b16 %v1858, %v1842
    %v2963 = vpack.c.b16 %v1859, %v1843
    %v2964 = vpack.c.b16 %v1860, %v1844
    %v2965 = vpack.c.b16 %v1877, %v1861
    %v2966 = vpack.c.b16 %v1878, %v1862
    %v2967 = vpack.c.b16 %v1879, %v1863
    %v2968 = vpack.c.b16 %v1880, %v1864
    %v2969 = vpack.c.b16 %v1881, %v1865
    %v2970 = vpack.c.b16 %v1882, %v1866
    %v2971 = vpack.c.b16 %v1883, %v1867
    %v2972 = vpack.c.b16 %v1884, %v1868
    %v2973 = vpack.c.b16 %v1885, %v1869
    %v2974 = vpack.c.b16 %v1886, %v1870
    %v2975 = vpack.c.b16 %v1887, %v1871
    %v2976 = vpack.c.b16 %v1888, %v1872
    %v2977 = vpack.c.b16 %v1889, %v1873
    %v2978 = vpack.c.b16 %v1890, %v1874
    %v2979 = vpack.c.b16 %v1891, %v1875
    %v2980 = vpack.c.b16 %v1892, %v1876
    %v2981 = vpack.c.b16 %v1909, %v1893
    %v2982 = vpack.c.b16 %v1910, %v1894
    %v2983 = vpack.c.b16 %v1911, %v1895
    %v2984 = vpack.c.b16 %v1912, %v1896
    %v2985 = vpack.c.b16 %v1913, %v1897
    %v2986 = vpack.c.b16 %v1914, %v1898
    %v2987 = vpack.c.b16 %v1915, %v1899
    %v2988 = vpack.c.b16 %v1916, %v1900
    %v2989 = vpack.c.b16 %v1917, %v1901
    %v2990 = vpack.c.b16 %v1918, %v1902
    %v2991 = vpack.c.b16 %v1919, %v1903
    %v2992 = vpack.c.b16 %v1920, %v1904
    %v2993 = vpack.c.b16 %v1921, %v1905
    %v2994 = vpack.c.b16 %v1922, %v1906
    %v2995 = vpack.c.b16 %v1923, %v1907
    %v2996 = vpack.c.b16 %v1924, %v1908
    %v2997 = vpack.c.b16 %v1941, %v1925
    %v2998 = vpack.c.b16 %v1942, %v1926
    %v2999 = vpack.c.b16 %v1943, %v1927
    %v3000 = vpack.c.b16 %v1944, %v1928
    %v3001 = vpack.c.b16 %v1945, %v1929
    %v3002 = vpack.c.b16 %v1946, %v1930
    %v3003 = vpack.c.b16 %v1947, %v1931
    %v3004 = vpack.c.b16 %v1948, %v1932
    %v3005 = vpack.c.b16 %v1949, %v1933
    %v3006 = vpack.c.b16 %v1950, %v1934
    %v3007 = vpack.c.b16 %v1951, %v1935
    %v3008 = vpack.c.b16 %v1952, %v1936
    %v3009 = vpack.c.b16 %v1953, %v1937
    %v3010 = vpack.c.b16 %v1954, %v1938
    %v3011 = vpack.c.b16 %v1955, %v1939
    %v3012 = vpack.c.b16 %v1956, %v1940
    %v3013 = vpack.c.b16 %v1973, %v1957
    %v3014 = vpack.c.b16 %v1974, %v1958
    %v3015 = vpack.c.b16 %v1975, %v1959
    %v3016 = vpack.c.b16 %v1976, %v1960
    %v3017 = vpack.c.b16 %v1977, %v1961
    %v3018 = vpack.c.b16 %v1978, %v1962
    %v3019 = vpack.c.b16 %v1979, %v1963
    %v3020 = vpack.c.b16 %v1980, %v1964
    %v3021 = vpack.c.b16 %v1981, %v1965
    %v3022 = vpack.c.b16 %v1982, %v1966
    %v3023 = vpack.c.b16 %v1983, %v1967
    %v3024 = vpack.c.b16 %v1984, %v1968
    %v3025 = vpack.c.b16 %v1985, %v1969
    %v3026 = vpack.c.b16 %v1986, %v1970
    %v3027 = vpack.c.b16 %v1987, %v1971
    %v3028 = vpack.c.b16 %v1988, %v1972
    %v3029 = vpack.c.b16 %v2005, %v1989
    %v3030 = vpack.c.b16 %v2006, %v1990
    %v3031 = vpack.c.b16 %v2007, %v1991
    %v3032 = vpack.c.b16 %v2008, %v1992
    %v3033 = vpack.c.b16 %v2009, %v1993
    %v3034 = vpack.c.b16 %v2010, %v1994
    %v3035 = vpack.c.b16 %v2011, %v1995
    %v3036 = vpack.c.b16 %v2012, %v1996
    %v3037 = vpack.c.b16 %v2013, %v1997
    %v3038 = vpack.c.b16 %v2014, %v1998
    %v3039 = vpack.c.b16 %v2015, %v1999
    %v3040 = vpack.c.b16 %v2016, %v2000
    %v3041 = vpack.c.b16 %v2017, %v2001
    %v3042 = vpack.c.b16 %v2018, %v2002
    %v3043 = vpack.c.b16 %v2019, %v2003
    %v3044 = vpack.c.b16 %v2020, %v2004
    %v3045 = vpack.c.b16 %v2037, %v2021
    %v3046 = vpack.c.b16 %v2038, %v2022
    %v3047 = vpack.c.b16 %v2039, %v2023
    %v3048 = vpack.c.b16 %v2040, %v2024
    %v3049 = vpack.c.b16 %v2041, %v2025
    %v3050 = vpack.c.b16 %v2042, %v2026
    %v3051 = vpack.c.b16 %v2043, %v2027
    %v3052 = vpack.c.b16 %v2044, %v2028
    %v3053 = vpack.c.b16 %v2045, %v2029
    %v3054 = vpack.c.b16 %v2046, %v2030
    %v3055 = vpack.c.b16 %v2047, %v2031
    %v3056 = vpack.c.b16 %v2048, %v2032
    %v3057 = vpack.c.b16 %v2049, %v2033
    %v3058 = vpack.c.b16 %v2050, %v2034
    %v3059 = vpack.c.b16 %v2051, %v2035
    %v3060 = vpack.c.b16 %v2052, %v2036
    %v3061 = vpack.c.b16 %v2069, %v2053
    %v3062 = vpack.c.b16 %v2070, %v2054
    %v3063 = vpack.c.b16 %v2071, %v2055
    %v3064 = vpack.c.b16 %v2072, %v2056
    %v3065 = vpack.c.b16 %v2073, %v2057
    %v3066 = vpack.c.b16 %v2074, %v2058
    %v3067 = vpack.c.b16 %v2075, %v2059
    %v3068 = vpack.c.b16 %v2076, %v2060
    %v3069 = vpack.c.b16 %v2077, %v2061
    %v3070 = vpack.c.b16 %v2078, %v2062
    %v3071 = vpack.c.b16 %v2079, %v2063
    %v3072 = vpack.c.b16 %v2080, %v2064
    %v3073 = vpack.c.b16 %v2081, %v2065
    %v3074 = vpack.c.b16 %v2082, %v2066
    %v3075 = vpack.c.b16 %v2083, %v2067
    %v3076 = vpack.c.b16 %v2084, %v2068
    %v3077 = vpack.c.b16 %v2101, %v2085
    %v3078 = vpack.c.b16 %v2102, %v2086
    %v3079 = vpack.c.b16 %v2103, %v2087
    %v3080 = vpack.c.b16 %v2104, %v2088
    %v3081 = vpack.c.b16 %v2105, %v2089
    %v3082 = vpack.c.b16 %v2106, %v2090
    %v3083 = vpack.c.b16 %v2107, %v2091
    %v3084 = vpack.c.b16 %v2108, %v2092
    %v3085 = vpack.c.b16 %v2109, %v2093
    %v3086 = vpack.c.b16 %v2110, %v2094
    %v3087 = vpack.c.b16 %v2111, %v2095
    %v3088 = vpack.c.b16 %v2112, %v2096
    %v3089 = vpack.c.b16 %v2113, %v2097
    %v3090 = vpack.c.b16 %v2114, %v2098
    %v3091 = vpack.c.b16 %v2115, %v2099
    %v3092 = vpack.c.b16 %v2116, %v2100
    %v3093 = vpack.c.b16 %v2133, %v2117
    %v3094 = vpack.c.b16 %v2134, %v2118
    %v3095 = vpack.c.b16 %v2135, %v2119
    %v3096 = vpack.c.b16 %v2136, %v2120
    %v3097 = vpack.c.b16 %v2137, %v2121
    %v3098 = vpack.c.b16 %v2138, %v2122
    %v3099 = vpack.c.b16 %v2139, %v2123
    %v3100 = vpack.c.b16 %v2140, %v2124
    %v3101 = vpack.c.b16 %v2141, %v2125
    %v3102 = vpack.c.b16 %v2142, %v2126
    %v3103 = vpack.c.b16 %v2143, %v2127
    %v3104 = vpack.c.b16 %v2144, %v2128
    %v3105 = vpack.c.b16 %v2145, %v2129
    %v3106 = vpack.c.b16 %v2146, %v2130
    %v3107 = vpack.c.b16 %v2147, %v2131
    %v3108 = vpack.c.b16 %v2148, %v2132
    %v3109 = vpack.c.b16 %v2165, %v2149
    %v3110 = vpack.c.b16 %v2166, %v2150
    %v3111 = vpack.c.b16 %v2167, %v2151
    %v3112 = vpack.c.b16 %v2168, %v2152
    %v3113 = vpack.c.b16 %v2169, %v2153
    %v3114 = vpack.c.b16 %v2170, %v2154
    %v3115 = vpack.c.b16 %v2171, %v2155
    %v3116 = vpack.c.b16 %v2172, %v2156
    %v3117 = vpack.c.b16 %v2173, %v2157
    %v3118 = vpack.c.b16 %v2174, %v2158
    %v3119 = vpack.c.b16 %v2175, %v2159
    %v3120 = vpack.c.b16 %v2176, %v2160
    %v3121 = vpack.c.b16 %v2177, %v2161
    %v3122 = vpack.c.b16 %v2178, %v2162
    %v3123 = vpack.c.b16 %v2179, %v2163
    %v3124 = vpack.c.b16 %v2180, %v2164
    %v3125 = vpack.c.b16 %v2197, %v2181
    %v3126 = vpack.c.b16 %v2198, %v2182
    %v3127 = vpack.c.b16 %v2199, %v2183
    %v3128 = vpack.c.b16 %v2200, %v2184
    %v3129 = vpack.c.b16 %v2201, %v2185
    %v3130 = vpack.c.b16 %v2202, %v2186
    %v3131 = vpack.c.b16 %v2203, %v2187
    %v3132 = vpack.c.b16 %v2204, %v2188
    %v3133 = vpack.c.b16 %v2205, %v2189
    %v3134 = vpack.c.b16 %v2206, %v2190
    %v3135 = vpack.c.b16 %v2207, %v2191
    %v3136 = vpack.c.b16 %v2208, %v2192
    %v3137 = vpack.c.b16 %v2209, %v2193
    %v3138 = vpack.c.b16 %v2210, %v2194
    %v3139 = vpack.c.b16 %v2211, %v2195
    %v3140 = vpack.c.b16 %v2212, %v2196
    %v3141 = vpack.c.b16 %v2229, %v2213
    %v3142 = vpack.c.b16 %v2230, %v2214
    %v3143 = vpack.c.b16 %v2231, %v2215
    %v3144 = vpack.c.b16 %v2232, %v2216
    %v3145 = vpack.c.b16 %v2233, %v2217
    %v3146 = vpack.c.b16 %v2234, %v2218
    %v3147 = vpack.c.b16 %v2235, %v2219
    %v3148 = vpack.c.b16 %v2236, %v2220
    %v3149 = vpack.c.b16 %v2237, %v2221
    %v3150 = vpack.c.b16 %v2238, %v2222
    %v3151 = vpack.c.b16 %v2239, %v2223
    %v3152 = vpack.c.b16 %v2240, %v2224
    %v3153 = vpack.c.b16 %v2241, %v2225
    %v3154 = vpack.c.b16 %v2242, %v2226
    %v3155 = vpack.c.b16 %v2243, %v2227
    %v3156 = vpack.c.b16 %v2244, %v2228
    %v3157 = vpack.c.b16 %v2261, %v2245
    %v3158 = vpack.c.b16 %v2262, %v2246
    %v3159 = vpack.c.b16 %v2263, %v2247
    %v3160 = vpack.c.b16 %v2264, %v2248
    %v3161 = vpack.c.b16 %v2265, %v2249
    %v3162 = vpack.c.b16 %v2266, %v2250
    %v3163 = vpack.c.b16 %v2267, %v2251
    %v3164 = vpack.c.b16 %v2268, %v2252
    %v3165 = vpack.c.b16 %v2269, %v2253
    %v3166 = vpack.c.b16 %v2270, %v2254
    %v3167 = vpack.c.b16 %v2271, %v2255
    %v3168 = vpack.c.b16 %v2272, %v2256
    %v3169 = vpack.c.b16 %v2273, %v2257
    %v3170 = vpack.c.b16 %v2274, %v2258
    %v3171 = vpack.c.b16 %v2275, %v2259
    %v3172 = vpack.c.b16 %v2276, %v2260
    %v3173 = vpack.c.b16 %v2293, %v2277
    %v3174 = vpack.c.b16 %v2294, %v2278
    %v3175 = vpack.c.b16 %v2295, %v2279
    %v3176 = vpack.c.b16 %v2296, %v2280
    %v3177 = vpack.c.b16 %v2297, %v2281
    %v3178 = vpack.c.b16 %v2298, %v2282
    %v3179 = vpack.c.b16 %v2299, %v2283
    %v3180 = vpack.c.b16 %v2300, %v2284
    %v3181 = vpack.c.b16 %v2301, %v2285
    %v3182 = vpack.c.b16 %v2302, %v2286
    %v3183 = vpack.c.b16 %v2303, %v2287
    %v3184 = vpack.c.b16 %v2304, %v2288
    %v3185 = vpack.c.b16 %v2305, %v2289
    %v3186 = vpack.c.b16 %v2306, %v2290
    %v3187 = vpack.c.b16 %v2307, %v2291
    %v3188 = vpack.c.b16 %v2308, %v2292
    %v3189 = vpack.c.b16 %v2325, %v2309
    %v3190 = vpack.c.b16 %v2326, %v2310
    %v3191 = vpack.c.b16 %v2327, %v2311
    %v3192 = vpack.c.b16 %v2328, %v2312
    %v3193 = vpack.c.b16 %v2329, %v2313
    %v3194 = vpack.c.b16 %v2330, %v2314
    %v3195 = vpack.c.b16 %v2331, %v2315
    %v3196 = vpack.c.b16 %v2332, %v2316
    %v3197 = vpack.c.b16 %v2333, %v2317
    %v3198 = vpack.c.b16 %v2334, %v2318
    %v3199 = vpack.c.b16 %v2335, %v2319
    %v3200 = vpack.c.b16 %v2336, %v2320
    %v3201 = vpack.c.b16 %v2337, %v2321
    %v3202 = vpack.c.b16 %v2338, %v2322
    %v3203 = vpack.c.b16 %v2339, %v2323
    %v3204 = vpack.c.b16 %v2340, %v2324
    %v3205 = vpack.c.b16 %v2357, %v2341
    %v3206 = vpack.c.b16 %v2358, %v2342
    %v3207 = vpack.c.b16 %v2359, %v2343
    %v3208 = vpack.c.b16 %v2360, %v2344
    %v3209 = vpack.c.b16 %v2361, %v2345
    %v3210 = vpack.c.b16 %v2362, %v2346
    %v3211 = vpack.c.b16 %v2363, %v2347
    %v3212 = vpack.c.b16 %v2364, %v2348
    %v3213 = vpack.c.b16 %v2365, %v2349
    %v3214 = vpack.c.b16 %v2366, %v2350
    %v3215 = vpack.c.b16 %v2367, %v2351
    %v3216 = vpack.c.b16 %v2368, %v2352
    %v3217 = vpack.c.b16 %v2369, %v2353
    %v3218 = vpack.c.b16 %v2370, %v2354
    %v3219 = vpack.c.b16 %v2371, %v2355
    %v3220 = vpack.c.b16 %v2372, %v2356
    %v3221 = vpack.c.b16 %v2389, %v2373
    %v3222 = vpack.c.b16 %v2390, %v2374
    %v3223 = vpack.c.b16 %v2391, %v2375
    %v3224 = vpack.c.b16 %v2392, %v2376
    %v3225 = vpack.c.b16 %v2393, %v2377
    %v3226 = vpack.c.b16 %v2394, %v2378
    %v3227 = vpack.c.b16 %v2395, %v2379
    %v3228 = vpack.c.b16 %v2396, %v2380
    %v3229 = vpack.c.b16 %v2397, %v2381
    %v3230 = vpack.c.b16 %v2398, %v2382
    %v3231 = vpack.c.b16 %v2399, %v2383
    %v3232 = vpack.c.b16 %v2400, %v2384
    %v3233 = vpack.c.b16 %v2401, %v2385
    %v3234 = vpack.c.b16 %v2402, %v2386
    %v3235 = vpack.c.b16 %v2403, %v2387
    %v3236 = vpack.c.b16 %v2404, %v2388
    %v3237 = vpack.c.b16 %v2421, %v2405
    %v3238 = vpack.c.b16 %v2422, %v2406
    %v3239 = vpack.c.b16 %v2423, %v2407
    %v3240 = vpack.c.b16 %v2424, %v2408
    %v3241 = vpack.c.b16 %v2425, %v2409
    %v3242 = vpack.c.b16 %v2426, %v2410
    %v3243 = vpack.c.b16 %v2427, %v2411
    %v3244 = vpack.c.b16 %v2428, %v2412
    %v3245 = vpack.c.b16 %v2429, %v2413
    %v3246 = vpack.c.b16 %v2430, %v2414
    %v3247 = vpack.c.b16 %v2431, %v2415
    %v3248 = vpack.c.b16 %v2432, %v2416
    %v3249 = vpack.c.b16 %v2433, %v2417
    %v3250 = vpack.c.b16 %v2434, %v2418
    %v3251 = vpack.c.b16 %v2435, %v2419
    %v3252 = vpack.c.b16 %v2436, %v2420
    %v3253 = vpack.c.b16 %v2453, %v2437
    %v3254 = vpack.c.b16 %v2454, %v2438
    %v3255 = vpack.c.b16 %v2455, %v2439
    %v3256 = vpack.c.b16 %v2456, %v2440
    %v3257 = vpack.c.b16 %v2457, %v2441
    %v3258 = vpack.c.b16 %v2458, %v2442
    %v3259 = vpack.c.b16 %v2459, %v2443
    %v3260 = vpack.c.b16 %v2460, %v2444
    %v3261 = vpack.c.b16 %v2461, %v2445
    %v3262 = vpack.c.b16 %v2462, %v2446
    %v3263 = vpack.c.b16 %v2463, %v2447
    %v3264 = vpack.c.b16 %v2464, %v2448
    %v3265 = vpack.c.b16 %v2465, %v2449
    %v3266 = vpack.c.b16 %v2466, %v2450
    %v3267 = vpack.c.b16 %v2467, %v2451
    %v3268 = vpack.c.b16 %v2468, %v2452
    %v3269 = vpack.c.b16 %v2485, %v2469
    %v3270 = vpack.c.b16 %v2486, %v2470
    %v3271 = vpack.c.b16 %v2487, %v2471
    %v3272 = vpack.c.b16 %v2488, %v2472
    %v3273 = vpack.c.b16 %v2489, %v2473
    %v3274 = vpack.c.b16 %v2490, %v2474
    %v3275 = vpack.c.b16 %v2491, %v2475
    %v3276 = vpack.c.b16 %v2492, %v2476
    %v3277 = vpack.c.b16 %v2493, %v2477
    %v3278 = vpack.c.b16 %v2494, %v2478
    %v3279 = vpack.c.b16 %v2495, %v2479
    %v3280 = vpack.c.b16 %v2496, %v2480
    %v3281 = vpack.c.b16 %v2497, %v2481
    %v3282 = vpack.c.b16 %v2498, %v2482
    %v3283 = vpack.c.b16 %v2499, %v2483
    %v3284 = vpack.c.b16 %v2500, %v2484
    %v3285 = vpack.c.b16 %v2517, %v2501
    %v3286 = vpack.c.b16 %v2518, %v2502
    %v3287 = vpack.c.b16 %v2519, %v2503
    %v3288 = vpack.c.b16 %v2520, %v2504
    %v3289 = vpack.c.b16 %v2521, %v2505
    %v3290 = vpack.c.b16 %v2522, %v2506
    %v3291 = vpack.c.b16 %v2523, %v2507
    %v3292 = vpack.c.b16 %v2524, %v2508
    %v3293 = vpack.c.b16 %v2525, %v2509
    %v3294 = vpack.c.b16 %v2526, %v2510
    %v3295 = vpack.c.b16 %v2527, %v2511
    %v3296 = vpack.c.b16 %v2528, %v2512
    %v3297 = vpack.c.b16 %v2529, %v2513
    %v3298 = vpack.c.b16 %v2530, %v2514
    %v3299 = vpack.c.b16 %v2531, %v2515
    %v3300 = vpack.c.b16 %v2532, %v2516
    %v3301 = vpack.c.b16 %v2549, %v2533
    %v3302 = vpack.c.b16 %v2550, %v2534
    %v3303 = vpack.c.b16 %v2551, %v2535
    %v3304 = vpack.c.b16 %v2552, %v2536
    %v3305 = vpack.c.b16 %v2553, %v2537
    %v3306 = vpack.c.b16 %v2554, %v2538
    %v3307 = vpack.c.b16 %v2555, %v2539
    %v3308 = vpack.c.b16 %v2556, %v2540
    %v3309 = vpack.c.b16 %v2557, %v2541
    %v3310 = vpack.c.b16 %v2558, %v2542
    %v3311 = vpack.c.b16 %v2559, %v2543
    %v3312 = vpack.c.b16 %v2560, %v2544
    %v3313 = vpack.c.b16 %v2561, %v2545
    %v3314 = vpack.c.b16 %v2562, %v2546
    %v3315 = vpack.c.b16 %v2563, %v2547
    %v3316 = vpack.c.b16 %v2564, %v2548
    %v3317 = vpack.c.b16 %v2581, %v2565
    %v3318 = vpack.c.b16 %v2582, %v2566
    %v3319 = vpack.c.b16 %v2583, %v2567
    %v3320 = vpack.c.b16 %v2584, %v2568
    %v3321 = vpack.c.b16 %v2585, %v2569
    %v3322 = vpack.c.b16 %v2586, %v2570
    %v3323 = vpack.c.b16 %v2587, %v2571
    %v3324 = vpack.c.b16 %v2588, %v2572
    %v3325 = vpack.c.b16 %v2589, %v2573
    %v3326 = vpack.c.b16 %v2590, %v2574
    %v3327 = vpack.c.b16 %v2591, %v2575
    %v3328 = vpack.c.b16 %v2592, %v2576
    %v3329 = vpack.c.b16 %v2593, %v2577
    %v3330 = vpack.c.b16 %v2594, %v2578
    %v3331 = vpack.c.b16 %v2595, %v2579
    %v3332 = vpack.c.b16 %v2596, %v2580
    %v3333 = vpack.c.b16 %v2613, %v2597
    %v3334 = vpack.c.b16 %v2614, %v2598
    %v3335 = vpack.c.b16 %v2615, %v2599
    %v3336 = vpack.c.b16 %v2616, %v2600
    %v3337 = vpack.c.b16 %v2617, %v2601
    %v3338 = vpack.c.b16 %v2618, %v2602
    %v3339 = vpack.c.b16 %v2619, %v2603
    %v3340 = vpack.c.b16 %v2620, %v2604
    %v3341 = vpack.c.b16 %v2621, %v2605
    %v3342 = vpack.c.b16 %v2622, %v2606
    %v3343 = vpack.c.b16 %v2623, %v2607
    %v3344 = vpack.c.b16 %v2624, %v2608
    %v3345 = vpack.c.b16 %v2625, %v2609
    %v3346 = vpack.c.b16 %v2626, %v2610
    %v3347 = vpack.c.b16 %v2627, %v2611
    %v3348 = vpack.c.b16 %v2628, %v2612
    %v3349 = vpack.c.b16 %v2645, %v2629
    %v3350 = vpack.c.b16 %v2646, %v2630
    %v3351 = vpack.c.b16 %v2647, %v2631
    %v3352 = vpack.c.b16 %v2648, %v2632
    %v3353 = vpack.c.b16 %v2649, %v2633
    %v3354 = vpack.c.b16 %v2650, %v2634
    %v3355 = vpack.c.b16 %v2651, %v2635
    %v3356 = vpack.c.b16 %v2652, %v2636
    %v3357 = vpack.c.b16 %v2653, %v2637
    %v3358 = vpack.c.b16 %v2654, %v2638
    %v3359 = vpack.c.b16 %v2655, %v2639
    %v3360 = vpack.c.b16 %v2656, %v2640
    %v3361 = vpack.c.b16 %v2657, %v2641
    %v3362 = vpack.c.b16 %v2658, %v2642
    %v3363 = vpack.c.b16 %v2659, %v2643
    %v3364 = vpack.c.b16 %v2660, %v2644
    %v3365 = vpack.c.b16 %v2677, %v2661
    %v3366 = vpack.c.b16 %v2678, %v2662
    %v3367 = vpack.c.b16 %v2679, %v2663
    %v3368 = vpack.c.b16 %v2680, %v2664
    %v3369 = vpack.c.b16 %v2681, %v2665
    %v3370 = vpack.c.b16 %v2682, %v2666
    %v3371 = vpack.c.b16 %v2683, %v2667
    %v3372 = vpack.c.b16 %v2684, %v2668
    %v3373 = vpack.c.b16 %v2685, %v2669
    %v3374 = vpack.c.b16 %v2686, %v2670
    %v3375 = vpack.c.b16 %v2687, %v2671
    %v3376 = vpack.c.b16 %v2688, %v2672
    %v3377 = vpack.c.b16 %v2689, %v2673
    %v3378 = vpack.c.b16 %v2690, %v2674
    %v3379 = vpack.c.b16 %v2691, %v2675
    %v3380 = vpack.c.b16 %v2692, %v2676
    %v3381 = vpack.c.b16 %v2709, %v2693
    %v3382 = vpack.c.b16 %v2710, %v2694
    %v3383 = vpack.c.b16 %v2711, %v2695
    %v3384 = vpack.c.b16 %v2712, %v2696
    %v3385 = vpack.c.b16 %v2713, %v2697
    %v3386 = vpack.c.b16 %v2714, %v2698
    %v3387 = vpack.c.b16 %v2715, %v2699
    %v3388 = vpack.c.b16 %v2716, %v2700
    %v3389 = vpack.c.b16 %v2717, %v2701
    %v3390 = vpack.c.b16 %v2718, %v2702
    %v3391 = vpack.c.b16 %v2719, %v2703
    %v3392 = vpack.c.b16 %v2720, %v2704
    %v3393 = vpack.c.b16 %v2721, %v2705
    %v3394 = vpack.c.b16 %v2722, %v2706
    %v3395 = vpack.c.b16 %v2723, %v2707
    %v3396 = vpack.c.b16 %v2724, %v2708
    %v3397 = vpack.c.b16 %v2741, %v2725
    %v3398 = vpack.c.b16 %v2742, %v2726
    %v3399 = vpack.c.b16 %v2743, %v2727
    %v3400 = vpack.c.b16 %v2744, %v2728
    %v3401 = vpack.c.b16 %v2745, %v2729
    %v3402 = vpack.c.b16 %v2746, %v2730
    %v3403 = vpack.c.b16 %v2747, %v2731
    %v3404 = vpack.c.b16 %v2748, %v2732
    %v3405 = vpack.c.b16 %v2749, %v2733
    %v3406 = vpack.c.b16 %v2750, %v2734
    %v3407 = vpack.c.b16 %v2751, %v2735
    %v3408 = vpack.c.b16 %v2752, %v2736
    %v3409 = vpack.c.b16 %v2753, %v2737
    %v3410 = vpack.c.b16 %v2754, %v2738
    %v3411 = vpack.c.b16 %v2755, %v2739
    %v3412 = vpack.c.b16 %v2756, %v2740
    %v3413 = vpack.c.b16 %v2773, %v2757
    %v3414 = vpack.c.b16 %v2774, %v2758
    %v3415 = vpack.c.b16 %v2775, %v2759
    %v3416 = vpack.c.b16 %v2776, %v2760
    %v3417 = vpack.c.b16 %v2777, %v2761
    %v3418 = vpack.c.b16 %v2778, %v2762
    %v3419 = vpack.c.b16 %v2779, %v2763
    %v3420 = vpack.c.b16 %v2780, %v2764
    %v3421 = vpack.c.b16 %v2781, %v2765
    %v3422 = vpack.c.b16 %v2782, %v2766
    %v3423 = vpack.c.b16 %v2783, %v2767
    %v3424 = vpack.c.b16 %v2784, %v2768
    %v3425 = vpack.c.b16 %v2785, %v2769
    %v3426 = vpack.c.b16 %v2786, %v2770
    %v3427 = vpack.c.b16 %v2787, %v2771
    %v3428 = vpack.c.b16 %v2788, %v2772
    %4069 = vmatprep.subr.bf16.mxu0 %v2790
    %4070 = vmatpush1.bf16.msra.mxu0 %v2789
    %4071 = vmatprep.subr.bf16.mxu0 %v2806
    %4072 = vmatpush1.bf16.msra.mxu0 %v2805
    %4073 = vmatprep.subr.bf16.mxu0 %v2822
    %4074 = vmatpush1.bf16.msra.mxu0 %v2821
    %4075 = vmatprep.subr.bf16.mxu0 %v2838
    %4076 = vmatpush1.bf16.msra.mxu0 %v2837
    %4077 = vmatprep.subr.bf16.mxu0 %v2854
    %4078 = vmatpush1.bf16.msra.mxu0 %v2853
    %4079 = vmatprep.subr.bf16.mxu0 %v2870
    %4080 = vmatpush1.bf16.msra.mxu0 %v2869
    %4081 = vmatprep.subr.bf16.mxu0 %v2886
    %4082 = vmatpush1.bf16.msra.mxu0 %v2885
    %4083 = vmatprep.subr.bf16.mxu0 %v2902
    %4084 = vmatpush1.bf16.msra.mxu0 %v2901
    %4085 = vmatprep.subr.bf16.mxu0 %v2918
    %4086 = vmatpush1.bf16.msra.mxu0 %v2917
    %4087 = vmatprep.subr.bf16.mxu0 %v2934
    %4088 = vmatpush1.bf16.msra.mxu0 %v2933
    %4089 = vmatprep.subr.bf16.mxu0 %v2950
    %4090 = vmatpush1.bf16.msra.mxu0 %v2949
    %4091 = vmatprep.subr.bf16.mxu0 %v2966
    %4092 = vmatpush1.bf16.msra.mxu0 %v2965
    %4093 = vmatprep.subr.bf16.mxu0 %v2982
    %4094 = vmatpush1.bf16.msra.mxu0 %v2981
    %4095 = vmatprep.subr.bf16.mxu0 %v2998
    %4096 = vmatpush1.bf16.msra.mxu0 %v2997
    %4097 = vmatprep.subr.bf16.mxu0 %v3014
    %4098 = vmatpush1.bf16.msra.mxu0 %v3013
    %4099 = vmatprep.subr.bf16.mxu0 %v3030
    %4100 = vmatpush1.bf16.msra.mxu0 %v3029
    %4101 = vmatprep.mubr.bf16.mxu0 %v141
    %4102 = vmatmul.mubr.bf16.gmra.mrb[0].mxu0 %v140
    %v4103 = vpop.f32.mrb[0].mxu0
    %v4104 = vadd.f32 %v792, %v4103
    %v4105 = vpop.f32.mrb[0].mxu0
    %v4106 = vadd.f32 %v796, %v4105
    %v4107 = vpop.f32.mrb[0].mxu0
    %v4108 = vpop.f32.mrb[0].mxu0
    %4109 = vdwg.mxu0
    %4110 = vmatprep.subr.bf16.mxu0 %v3046
    %4111 = vmatpush1.bf16.msra.mxu0 %v3045
    %4112 = vmatprep.subr.bf16.mxu0 %v3062
    %4113 = vmatpush1.bf16.msra.mxu0 %v3061
    %4114 = vmatprep.subr.bf16.mxu0 %v3078
    %4115 = vmatpush1.bf16.msra.mxu0 %v3077
    %4116 = vmatprep.subr.bf16.mxu0 %v3094
    %4117 = vmatpush1.bf16.msra.mxu0 %v3093
    %4118 = vmatprep.subr.bf16.mxu0 %v3110
    %4119 = vmatpush1.bf16.msra.mxu0 %v3109
    %4120 = vmatprep.subr.bf16.mxu0 %v3126
    %4121 = vmatpush1.bf16.msra.mxu0 %v3125
    %4122 = vmatprep.subr.bf16.mxu0 %v3142
    %4123 = vmatpush1.bf16.msra.mxu0 %v3141
    %4124 = vmatprep.subr.bf16.mxu0 %v3158
    %4125 = vmatpush1.bf16.msra.mxu0 %v3157
    %4126 = vmatprep.subr.bf16.mxu0 %v3174
    %4127 = vmatpush1.bf16.msra.mxu0 %v3173
    %4128 = vmatprep.subr.bf16.mxu0 %v3190
    %4129 = vmatpush1.bf16.msra.mxu0 %v3189
    %4130 = vmatprep.subr.bf16.mxu0 %v3206
    %4131 = vmatpush1.bf16.msra.mxu0 %v3205
    %4132 = vmatprep.subr.bf16.mxu0 %v3222
    %4133 = vmatpush1.bf16.msra.mxu0 %v3221
    %4134 = vmatprep.subr.bf16.mxu0 %v3238
    %4135 = vmatpush1.bf16.msra.mxu0 %v3237
    %4136 = vmatprep.subr.bf16.mxu0 %v3254
    %4137 = vmatpush1.bf16.msra.mxu0 %v3253
    %4138 = vmatprep.subr.bf16.mxu0 %v3270
    %4139 = vmatpush1.bf16.msra.mxu0 %v3269
    %4140 = vmatprep.subr.bf16.mxu0 %v3286
    %4141 = vmatpush1.bf16.msra.mxu0 %v3285
    %4142 = vmatprep.mubr.bf16.mxu0 %v143
    %4143 = vmatmul.mubr.bf16.gmra.mrb[0].mxu0 %v142
    %v4144 = vpop.f32.mrb[0].mxu0
    %v4145 = vadd.f32 %v4104, %v4144
    %v4146 = vpop.f32.mrb[0].mxu0
    %v4147 = vadd.f32 %v4106, %v4146
    %v4148 = vpop.f32.mrb[0].mxu0
    %v4149 = vpop.f32.mrb[0].mxu0
    %4150 = vdwg.mxu0
    %4151 = vmatprep.subr.bf16.mxu0 %v3302
    %4152 = vmatpush1.bf16.msra.mxu0 %v3301
    %4153 = vmatprep.subr.bf16.mxu0 %v3318
    %4154 = vmatpush1.bf16.msra.mxu0 %v3317
    %4155 = vmatprep.subr.bf16.mxu0 %v3334
    %4156 = vmatpush1.bf16.msra.mxu0 %v3333
    %4157 = vmatprep.subr.bf16.mxu0 %v3350
    %4158 = vmatpush1.bf16.msra.mxu0 %v3349
    %4159 = vmatprep.subr.bf16.mxu0 %v3366
    %4160 = vmatpush1.bf16.msra.mxu0 %v3365
    %4161 = vmatprep.subr.bf16.mxu0 %v3382
    %4162 = vmatpush1.bf16.msra.mxu0 %v3381
    %4163 = vmatprep.subr.bf16.mxu0 %v3398
    %4164 = vmatpush1.bf16.msra.mxu0 %v3397
    %4165 = vmatprep.subr.bf16.mxu0 %v3414
    %4166 = vmatpush1.bf16.msra.mxu0 %v3413
    %4167 = vmatprep.subr.bf16.mxu0 0
    %4168 = vmatpush1.bf16.msra.mxu0 0
    %4169 = vmatprep.subr.bf16.mxu0 0
    %4170 = vmatpush1.bf16.msra.mxu0 0
    %4171 = vmatprep.subr.bf16.mxu0 0
    %4172 = vmatpush1.bf16.msra.mxu0 0
    %4173 = vmatprep.subr.bf16.mxu0 0
    %4174 = vmatpush1.bf16.msra.mxu0 0
    %4175 = vmatprep.subr.bf16.mxu0 0
    %4176 = vmatpush1.bf16.msra.mxu0 0
    %4177 = vmatprep.subr.bf16.mxu0 0
    %4178 = vmatpush1.bf16.msra.mxu0 0
    %4179 = vmatprep.subr.bf16.mxu0 0
    %4180 = vmatpush1.bf16.msra.mxu0 0
    %4181 = vmatprep.subr.bf16.mxu0 0
    %4182 = vmatpush1.bf16.msra.mxu0 0
    %4183 = vmatprep.mubr.bf16.mxu0 0
    %4184 = vmatmul.mubr.bf16.gmra.mrb[0].mxu0 %v144
    %v4185 = vpop.f32.mrb[0].mxu0
    %v4186 = vadd.f32 %v4145, %v4185
    %v4187 = vpop.f32.mrb[0].mxu0
    %v4188 = vadd.f32 %v4147, %v4187
    %v4189 = vpop.f32.mrb[0].mxu0
    %v4190 = vpop.f32.mrb[0].mxu0
    %4191 = vdwg.mxu0
    %4192 = vmatprep.subr.bf16.mxu0 %v2792
    %4193 = vmatpush1.bf16.msra.mxu0 %v2791
    %4194 = vmatprep.subr.bf16.mxu0 %v2808
    %4195 = vmatpush1.bf16.msra.mxu0 %v2807
    %4196 = vmatprep.subr.bf16.mxu0 %v2824
    %4197 = vmatpush1.bf16.msra.mxu0 %v2823
    %4198 = vmatprep.subr.bf16.mxu0 %v2840
    %4199 = vmatpush1.bf16.msra.mxu0 %v2839
    %4200 = vmatprep.subr.bf16.mxu0 %v2856
    %4201 = vmatpush1.bf16.msra.mxu0 %v2855
    %4202 = vmatprep.subr.bf16.mxu0 %v2872
    %4203 = vmatpush1.bf16.msra.mxu0 %v2871
    %4204 = vmatprep.subr.bf16.mxu0 %v2888
    %4205 = vmatpush1.bf16.msra.mxu0 %v2887
    %4206 = vmatprep.subr.bf16.mxu0 %v2904
    %4207 = vmatpush1.bf16.msra.mxu0 %v2903
    %4208 = vmatprep.subr.bf16.mxu0 %v2920
    %4209 = vmatpush1.bf16.msra.mxu0 %v2919
    %4210 = vmatprep.subr.bf16.mxu0 %v2936
    %4211 = vmatpush1.bf16.msra.mxu0 %v2935
    %4212 = vmatprep.subr.bf16.mxu0 %v2952
    %4213 = vmatpush1.bf16.msra.mxu0 %v2951
    %4214 = vmatprep.subr.bf16.mxu0 %v2968
    %4215 = vmatpush1.bf16.msra.mxu0 %v2967
    %4216 = vmatprep.subr.bf16.mxu0 %v2984
    %4217 = vmatpush1.bf16.msra.mxu0 %v2983
    %4218 = vmatprep.subr.bf16.mxu0 %v3000
    %4219 = vmatpush1.bf16.msra.mxu0 %v2999
    %4220 = vmatprep.subr.bf16.mxu0 %v3016
    %4221 = vmatpush1.bf16.msra.mxu0 %v3015
    %4222 = vmatprep.subr.bf16.mxu0 %v3032
    %4223 = vmatpush1.bf16.msra.mxu0 %v3031
    %4224 = vmatprep.mubr.bf16.mxu0 %v141
    %4225 = vmatmul.mubr.bf16.gmra.mrb[0].mxu0 %v140
    %v4226 = vpop.f32.mrb[0].mxu0
    %v4227 = vadd.f32 %v800, %v4226
    %v4228 = vpop.f32.mrb[0].mxu0
    %v4229 = vadd.f32 %v804, %v4228
    %v4230 = vpop.f32.mrb[0].mxu0
    %v4231 = vpop.f32.mrb[0].mxu0
    %4232 = vdwg.mxu0
    %4233 = vmatprep.subr.bf16.mxu0 %v3048
    %4234 = vmatpush1.bf16.msra.mxu0 %v3047
    %4235 = vmatprep.subr.bf16.mxu0 %v3064
    %4236 = vmatpush1.bf16.msra.mxu0 %v3063
    %4237 = vmatprep.subr.bf16.mxu0 %v3080
    %4238 = vmatpush1.bf16.msra.mxu0 %v3079
    %4239 = vmatprep.subr.bf16.mxu0 %v3096
    %4240 = vmatpush1.bf16.msra.mxu0 %v3095
    %4241 = vmatprep.subr.bf16.mxu0 %v3112
    %4242 = vmatpush1.bf16.msra.mxu0 %v3111
    %4243 = vmatprep.subr.bf16.mxu0 %v3128
    %4244 = vmatpush1.bf16.msra.mxu0 %v3127
    %4245 = vmatprep.subr.bf16.mxu0 %v3144
    %4246 = vmatpush1.bf16.msra.mxu0 %v3143
    %4247 = vmatprep.subr.bf16.mxu0 %v3160
    %4248 = vmatpush1.bf16.msra.mxu0 %v3159
    %4249 = vmatprep.subr.bf16.mxu0 %v3176
    %4250 = vmatpush1.bf16.msra.mxu0 %v3175
    %4251 = vmatprep.subr.bf16.mxu0 %v3192
    %4252 = vmatpush1.bf16.msra.mxu0 %v3191
    %4253 = vmatprep.subr.bf16.mxu0 %v3208
    %4254 = vmatpush1.bf16.msra.mxu0 %v3207
    %4255 = vmatprep.subr.bf16.mxu0 %v3224
    %4256 = vmatpush1.bf16.msra.mxu0 %v3223
    %4257 = vmatprep.subr.bf16.mxu0 %v3240
    %4258 = vmatpush1.bf16.msra.mxu0 %v3239
    %4259 = vmatprep.subr.bf16.mxu0 %v3256
    %4260 = vmatpush1.bf16.msra.mxu0 %v3255
    %4261 = vmatprep.subr.bf16.mxu0 %v3272
    %4262 = vmatpush1.bf16.msra.mxu0 %v3271
    %4263 = vmatprep.subr.bf16.mxu0 %v3288
    %4264 = vmatpush1.bf16.msra.mxu0 %v3287
    %4265 = vmatprep.mubr.bf16.mxu0 %v143
    %4266 = vmatmul.mubr.bf16.gmra.mrb[0].mxu0 %v142
    %v4267 = vpop.f32.mrb[0].mxu0
    %v4268 = vadd.f32 %v4227, %v4267
    %v4269 = vpop.f32.mrb[0].mxu0
    %v4270 = vadd.f32 %v4229, %v4269
    %v4271 = vpop.f32.mrb[0].mxu0
    %v4272 = vpop.f32.mrb[0].mxu0
    %4273 = vdwg.mxu0
    %4274 = vmatprep.subr.bf16.mxu0 %v3304
    %4275 = vmatpush1.bf16.msra.mxu0 %v3303
    %4276 = vmatprep.subr.bf16.mxu0 %v3320
    %4277 = vmatpush1.bf16.msra.mxu0 %v3319
    %4278 = vmatprep.subr.bf16.mxu0 %v3336
    %4279 = vmatpush1.bf16.msra.mxu0 %v3335
    %4280 = vmatprep.subr.bf16.mxu0 %v3352
    %4281 = vmatpush1.bf16.msra.mxu0 %v3351
    %4282 = vmatprep.subr.bf16.mxu0 %v3368
    %4283 = vmatpush1.bf16.msra.mxu0 %v3367
    %4284 = vmatprep.subr.bf16.mxu0 %v3384
    %4285 = vmatpush1.bf16.msra.mxu0 %v3383
    %4286 = vmatprep.subr.bf16.mxu0 %v3400
    %4287 = vmatpush1.bf16.msra.mxu0 %v3399
    %4288 = vmatprep.subr.bf16.mxu0 %v3416
    %4289 = vmatpush1.bf16.msra.mxu0 %v3415
    %4290 = vmatprep.subr.bf16.mxu0 0
    %4291 = vmatpush1.bf16.msra.mxu0 0
    %4292 = vmatprep.subr.bf16.mxu0 0
    %4293 = vmatpush1.bf16.msra.mxu0 0
    %4294 = vmatprep.subr.bf16.mxu0 0
    %4295 = vmatpush1.bf16.msra.mxu0 0
    %4296 = vmatprep.subr.bf16.mxu0 0
    %4297 = vmatpush1.bf16.msra.mxu0 0
    %4298 = vmatprep.subr.bf16.mxu0 0
    %4299 = vmatpush1.bf16.msra.mxu0 0
    %4300 = vmatprep.subr.bf16.mxu0 0
    %4301 = vmatpush1.bf16.msra.mxu0 0
    %4302 = vmatprep.subr.bf16.mxu0 0
    %4303 = vmatpush1.bf16.msra.mxu0 0
    %4304 = vmatprep.subr.bf16.mxu0 0
    %4305 = vmatpush1.bf16.msra.mxu0 0
    %4306 = vmatprep.mubr.bf16.mxu0 0
    %4307 = vmatmul.mubr.bf16.gmra.mrb[0].mxu0 %v144
    %v4308 = vpop.f32.mrb[0].mxu0
    %v4309 = vadd.f32 %v4268, %v4308
    %v4310 = vpop.f32.mrb[0].mxu0
    %v4311 = vadd.f32 %v4270, %v4310
    %v4312 = vpop.f32.mrb[0].mxu0
    %v4313 = vpop.f32.mrb[0].mxu0
    %4314 = vdwg.mxu0
    %4315 = vmatprep.subr.bf16.mxu0 %v2794
    %4316 = vmatpush1.bf16.msra.mxu0 %v2793
    %4317 = vmatprep.subr.bf16.mxu0 %v2810
    %4318 = vmatpush1.bf16.msra.mxu0 %v2809
    %4319 = vmatprep.subr.bf16.mxu0 %v2826
    %4320 = vmatpush1.bf16.msra.mxu0 %v2825
    %4321 = vmatprep.subr.bf16.mxu0 %v2842
    %4322 = vmatpush1.bf16.msra.mxu0 %v2841
    %4323 = vmatprep.subr.bf16.mxu0 %v2858
    %4324 = vmatpush1.bf16.msra.mxu0 %v2857
    %4325 = vmatprep.subr.bf16.mxu0 %v2874
    %4326 = vmatpush1.bf16.msra.mxu0 %v2873
    %4327 = vmatprep.subr.bf16.mxu0 %v2890
    %4328 = vmatpush1.bf16.msra.mxu0 %v2889
    %4329 = vmatprep.subr.bf16.mxu0 %v2906
    %4330 = vmatpush1.bf16.msra.mxu0 %v2905
    %4331 = vmatprep.subr.bf16.mxu0 %v2922
    %4332 = vmatpush1.bf16.msra.mxu0 %v2921
    %4333 = vmatprep.subr.bf16.mxu0 %v2938
    %4334 = vmatpush1.bf16.msra.mxu0 %v2937
    %4335 = vmatprep.subr.bf16.mxu0 %v2954
    %4336 = vmatpush1.bf16.msra.mxu0 %v2953
    %4337 = vmatprep.subr.bf16.mxu0 %v2970
    %4338 = vmatpush1.bf16.msra.mxu0 %v2969
    %4339 = vmatprep.subr.bf16.mxu0 %v2986
    %4340 = vmatpush1.bf16.msra.mxu0 %v2985
    %4341 = vmatprep.subr.bf16.mxu0 %v3002
    %4342 = vmatpush1.bf16.msra.mxu0 %v3001
    %4343 = vmatprep.subr.bf16.mxu0 %v3018
    %4344 = vmatpush1.bf16.msra.mxu0 %v3017
    %4345 = vmatprep.subr.bf16.mxu0 %v3034
    %4346 = vmatpush1.bf16.msra.mxu0 %v3033
    %4347 = vmatprep.mubr.bf16.mxu0 %v141
    %4348 = vmatmul.mubr.bf16.gmra.mrb[0].mxu0 %v140
    %v4349 = vpop.f32.mrb[0].mxu0
    %v4350 = vadd.f32 %v808, %v4349
    %v4351 = vpop.f32.mrb[0].mxu0
    %v4352 = vadd.f32 %v812, %v4351
    %v4353 = vpop.f32.mrb[0].mxu0
    %v4354 = vpop.f32.mrb[0].mxu0
    %4355 = vdwg.mxu0
    %4356 = vmatprep.subr.bf16.mxu0 %v3050
    %4357 = vmatpush1.bf16.msra.mxu0 %v3049
    %4358 = vmatprep.subr.bf16.mxu0 %v3066
    %4359 = vmatpush1.bf16.msra.mxu0 %v3065
    %4360 = vmatprep.subr.bf16.mxu0 %v3082
    %4361 = vmatpush1.bf16.msra.mxu0 %v3081
    %4362 = vmatprep.subr.bf16.mxu0 %v3098
    %4363 = vmatpush1.bf16.msra.mxu0 %v3097
    %4364 = vmatprep.subr.bf16.mxu0 %v3114
    %4365 = vmatpush1.bf16.msra.mxu0 %v3113
    %4366 = vmatprep.subr.bf16.mxu0 %v3130
    %4367 = vmatpush1.bf16.msra.mxu0 %v3129
    %4368 = vmatprep.subr.bf16.mxu0 %v3146
    %4369 = vmatpush1.bf16.msra.mxu0 %v3145
    %4370 = vmatprep.subr.bf16.mxu0 %v3162
    %4371 = vmatpush1.bf16.msra.mxu0 %v3161
    %4372 = vmatprep.subr.bf16.mxu0 %v3178
    %4373 = vmatpush1.bf16.msra.mxu0 %v3177
    %4374 = vmatprep.subr.bf16.mxu0 %v3194
    %4375 = vmatpush1.bf16.msra.mxu0 %v3193
    %4376 = vmatprep.subr.bf16.mxu0 %v3210
    %4377 = vmatpush1.bf16.msra.mxu0 %v3209
    %4378 = vmatprep.subr.bf16.mxu0 %v3226
    %4379 = vmatpush1.bf16.msra.mxu0 %v3225
    %4380 = vmatprep.subr.bf16.mxu0 %v3242
    %4381 = vmatpush1.bf16.msra.mxu0 %v3241
    %4382 = vmatprep.subr.bf16.mxu0 %v3258
    %4383 = vmatpush1.bf16.msra.mxu0 %v3257
    %4384 = vmatprep.subr.bf16.mxu0 %v3274
    %4385 = vmatpush1.bf16.msra.mxu0 %v3273
    %4386 = vmatprep.subr.bf16.mxu0 %v3290
    %4387 = vmatpush1.bf16.msra.mxu0 %v3289
    %4388 = vmatprep.mubr.bf16.mxu0 %v143
    %4389 = vmatmul.mubr.bf16.gmra.mrb[0].mxu0 %v142
    %v4390 = vpop.f32.mrb[0].mxu0
    %v4391 = vadd.f32 %v4350, %v4390
    %v4392 = vpop.f32.mrb[0].mxu0
    %v4393 = vadd.f32 %v4352, %v4392
    %v4394 = vpop.f32.mrb[0].mxu0
    %v4395 = vpop.f32.mrb[0].mxu0
    %4396 = vdwg.mxu0
    %4397 = vmatprep.subr.bf16.mxu0 %v3306
    %4398 = vmatpush1.bf16.msra.mxu0 %v3305
    %4399 = vmatprep.subr.bf16.mxu0 %v3322
    %4400 = vmatpush1.bf16.msra.mxu0 %v3321
    %4401 = vmatprep.subr.bf16.mxu0 %v3338
    %4402 = vmatpush1.bf16.msra.mxu0 %v3337
    %4403 = vmatprep.subr.bf16.mxu0 %v3354
    %4404 = vmatpush1.bf16.msra.mxu0 %v3353
    %4405 = vmatprep.subr.bf16.mxu0 %v3370
    %4406 = vmatpush1.bf16.msra.mxu0 %v3369
    %4407 = vmatprep.subr.bf16.mxu0 %v3386
    %4408 = vmatpush1.bf16.msra.mxu0 %v3385
    %4409 = vmatprep.subr.bf16.mxu0 %v3402
    %4410 = vmatpush1.bf16.msra.mxu0 %v3401
    %4411 = vmatprep.subr.bf16.mxu0 %v3418
    %4412 = vmatpush1.bf16.msra.mxu0 %v3417
    %4413 = vmatprep.subr.bf16.mxu0 0
    %4414 = vmatpush1.bf16.msra.mxu0 0
    %4415 = vmatprep.subr.bf16.mxu0 0
    %4416 = vmatpush1.bf16.msra.mxu0 0
    %4417 = vmatprep.subr.bf16.mxu0 0
    %4418 = vmatpush1.bf16.msra.mxu0 0
    %4419 = vmatprep.subr.bf16.mxu0 0
    %4420 = vmatpush1.bf16.msra.mxu0 0
    %4421 = vmatprep.subr.bf16.mxu0 0
    %4422 = vmatpush1.bf16.msra.mxu0 0
    %4423 = vmatprep.subr.bf16.mxu0 0
    %4424 = vmatpush1.bf16.msra.mxu0 0
    %4425 = vmatprep.subr.bf16.mxu0 0
    %4426 = vmatpush1.bf16.msra.mxu0 0
    %4427 = vmatprep.subr.bf16.mxu0 0
    %4428 = vmatpush1.bf16.msra.mxu0 0
    %4429 = vmatprep.mubr.bf16.mxu0 0
    %4430 = vmatmul.mubr.bf16.gmra.mrb[0].mxu0 %v144
    %v4431 = vpop.f32.mrb[0].mxu0
    %v4432 = vadd.f32 %v4391, %v4431
    %v4433 = vpop.f32.mrb[0].mxu0
    %v4434 = vadd.f32 %v4393, %v4433
    %v4435 = vpop.f32.mrb[0].mxu0
    %v4436 = vpop.f32.mrb[0].mxu0
    %4437 = vdwg.mxu0
    %4438 = vmatprep.subr.bf16.mxu0 %v2796
    %4439 = vmatpush1.bf16.msra.mxu0 %v2795
    %4440 = vmatprep.subr.bf16.mxu0 %v2812
    %4441 = vmatpush1.bf16.msra.mxu0 %v2811
    %4442 = vmatprep.subr.bf16.mxu0 %v2828
    %4443 = vmatpush1.bf16.msra.mxu0 %v2827
    %4444 = vmatprep.subr.bf16.mxu0 %v2844
    %4445 = vmatpush1.bf16.msra.mxu0 %v2843
    %4446 = vmatprep.subr.bf16.mxu0 %v2860
    %4447 = vmatpush1.bf16.msra.mxu0 %v2859
    %4448 = vmatprep.subr.bf16.mxu0 %v2876
    %4449 = vmatpush1.bf16.msra.mxu0 %v2875
    %4450 = vmatprep.subr.bf16.mxu0 %v2892
    %4451 = vmatpush1.bf16.msra.mxu0 %v2891
    %4452 = vmatprep.subr.bf16.mxu0 %v2908
    %4453 = vmatpush1.bf16.msra.mxu0 %v2907
    %4454 = vmatprep.subr.bf16.mxu0 %v2924
    %4455 = vmatpush1.bf16.msra.mxu0 %v2923
    %4456 = vmatprep.subr.bf16.mxu0 %v2940
    %4457 = vmatpush1.bf16.msra.mxu0 %v2939
    %4458 = vmatprep.subr.bf16.mxu0 %v2956
    %4459 = vmatpush1.bf16.msra.mxu0 %v2955
    %4460 = vmatprep.subr.bf16.mxu0 %v2972
    %4461 = vmatpush1.bf16.msra.mxu0 %v2971
    %4462 = vmatprep.subr.bf16.mxu0 %v2988
    %4463 = vmatpush1.bf16.msra.mxu0 %v2987
    %4464 = vmatprep.subr.bf16.mxu0 %v3004
    %4465 = vmatpush1.bf16.msra.mxu0 %v3003
    %4466 = vmatprep.subr.bf16.mxu0 %v3020
    %4467 = vmatpush1.bf16.msra.mxu0 %v3019
    %4468 = vmatprep.subr.bf16.mxu0 %v3036
    %4469 = vmatpush1.bf16.msra.mxu0 %v3035
    %4470 = vmatprep.mubr.bf16.mxu0 %v141
    %4471 = vmatmul.mubr.bf16.gmra.mrb[0].mxu0 %v140
    %v4472 = vpop.f32.mrb[0].mxu0
    %v4473 = vadd.f32 %v816, %v4472
    %v4474 = vpop.f32.mrb[0].mxu0
    %v4475 = vadd.f32 %v820, %v4474
    %v4476 = vpop.f32.mrb[0].mxu0
    %v4477 = vpop.f32.mrb[0].mxu0
    %4478 = vdwg.mxu0
    %4479 = vmatprep.subr.bf16.mxu0 %v3052
    %4480 = vmatpush1.bf16.msra.mxu0 %v3051
    %4481 = vmatprep.subr.bf16.mxu0 %v3068
    %4482 = vmatpush1.bf16.msra.mxu0 %v3067
    %4483 = vmatprep.subr.bf16.mxu0 %v3084
    %4484 = vmatpush1.bf16.msra.mxu0 %v3083
    %4485 = vmatprep.subr.bf16.mxu0 %v3100
    %4486 = vmatpush1.bf16.msra.mxu0 %v3099
    %4487 = vmatprep.subr.bf16.mxu0 %v3116
    %4488 = vmatpush1.bf16.msra.mxu0 %v3115
    %4489 = vmatprep.subr.bf16.mxu0 %v3132
    %4490 = vmatpush1.bf16.msra.mxu0 %v3131
    %4491 = vmatprep.subr.bf16.mxu0 %v3148
    %4492 = vmatpush1.bf16.msra.mxu0 %v3147
    %4493 = vmatprep.subr.bf16.mxu0 %v3164
    %4494 = vmatpush1.bf16.msra.mxu0 %v3163
    %4495 = vmatprep.subr.bf16.mxu0 %v3180
    %4496 = vmatpush1.bf16.msra.mxu0 %v3179
    %4497 = vmatprep.subr.bf16.mxu0 %v3196
    %4498 = vmatpush1.bf16.msra.mxu0 %v3195
    %4499 = vmatprep.subr.bf16.mxu0 %v3212
    %4500 = vmatpush1.bf16.msra.mxu0 %v3211
    %4501 = vmatprep.subr.bf16.mxu0 %v3228
    %4502 = vmatpush1.bf16.msra.mxu0 %v3227
    %4503 = vmatprep.subr.bf16.mxu0 %v3244
    %4504 = vmatpush1.bf16.msra.mxu0 %v3243
    %4505 = vmatprep.subr.bf16.mxu0 %v3260
    %4506 = vmatpush1.bf16.msra.mxu0 %v3259
    %4507 = vmatprep.subr.bf16.mxu0 %v3276
    %4508 = vmatpush1.bf16.msra.mxu0 %v3275
    %4509 = vmatprep.subr.bf16.mxu0 %v3292
    %4510 = vmatpush1.bf16.msra.mxu0 %v3291
    %4511 = vmatprep.mubr.bf16.mxu0 %v143
    %4512 = vmatmul.mubr.bf16.gmra.mrb[0].mxu0 %v142
    %v4513 = vpop.f32.mrb[0].mxu0
    %v4514 = vadd.f32 %v4473, %v4513
    %v4515 = vpop.f32.mrb[0].mxu0
    %v4516 = vadd.f32 %v4475, %v4515
    %v4517 = vpop.f32.mrb[0].mxu0
    %v4518 = vpop.f32.mrb[0].mxu0
    %4519 = vdwg.mxu0
    %4520 = vmatprep.subr.bf16.mxu0 %v3308
    %4521 = vmatpush1.bf16.msra.mxu0 %v3307
    %4522 = vmatprep.subr.bf16.mxu0 %v3324
    %4523 = vmatpush1.bf16.msra.mxu0 %v3323
    %4524 = vmatprep.subr.bf16.mxu0 %v3340
    %4525 = vmatpush1.bf16.msra.mxu0 %v3339
    %4526 = vmatprep.subr.bf16.mxu0 %v3356
    %4527 = vmatpush1.bf16.msra.mxu0 %v3355
    %4528 = vmatprep.subr.bf16.mxu0 %v3372
    %4529 = vmatpush1.bf16.msra.mxu0 %v3371
    %4530 = vmatprep.subr.bf16.mxu0 %v3388
    %4531 = vmatpush1.bf16.msra.mxu0 %v3387
    %4532 = vmatprep.subr.bf16.mxu0 %v3404
    %4533 = vmatpush1.bf16.msra.mxu0 %v3403
    %4534 = vmatprep.subr.bf16.mxu0 %v3420
    %4535 = vmatpush1.bf16.msra.mxu0 %v3419
    %4536 = vmatprep.subr.bf16.mxu0 0
    %4537 = vmatpush1.bf16.msra.mxu0 0
    %4538 = vmatprep.subr.bf16.mxu0 0
    %4539 = vmatpush1.bf16.msra.mxu0 0
    %4540 = vmatprep.subr.bf16.mxu0 0
    %4541 = vmatpush1.bf16.msra.mxu0 0
    %4542 = vmatprep.subr.bf16.mxu0 0
    %4543 = vmatpush1.bf16.msra.mxu0 0
    %4544 = vmatprep.subr.bf16.mxu0 0
    %4545 = vmatpush1.bf16.msra.mxu0 0
    %4546 = vmatprep.subr.bf16.mxu0 0
    %4547 = vmatpush1.bf16.msra.mxu0 0
    %4548 = vmatprep.subr.bf16.mxu0 0
    %4549 = vmatpush1.bf16.msra.mxu0 0
    %4550 = vmatprep.subr.bf16.mxu0 0
    %4551 = vmatpush1.bf16.msra.mxu0 0
    %4552 = vmatprep.mubr.bf16.mxu0 0
    %4553 = vmatmul.mubr.bf16.gmra.mrb[0].mxu0 %v144
    %v4554 = vpop.f32.mrb[0].mxu0
    %v4555 = vadd.f32 %v4514, %v4554
    %v4556 = vpop.f32.mrb[0].mxu0
    %v4557 = vadd.f32 %v4516, %v4556
    %v4558 = vpop.f32.mrb[0].mxu0
    %v4559 = vpop.f32.mrb[0].mxu0
    %4560 = vdwg.mxu0
    %4561 = vmatprep.subr.bf16.mxu0 %v2798
    %4562 = vmatpush1.bf16.msra.mxu0 %v2797
    %4563 = vmatprep.subr.bf16.mxu0 %v2814
    %4564 = vmatpush1.bf16.msra.mxu0 %v2813
    %4565 = vmatprep.subr.bf16.mxu0 %v2830
    %4566 = vmatpush1.bf16.msra.mxu0 %v2829
    %4567 = vmatprep.subr.bf16.mxu0 %v2846
    %4568 = vmatpush1.bf16.msra.mxu0 %v2845
    %4569 = vmatprep.subr.bf16.mxu0 %v2862
    %4570 = vmatpush1.bf16.msra.mxu0 %v2861
    %4571 = vmatprep.subr.bf16.mxu0 %v2878
    %4572 = vmatpush1.bf16.msra.mxu0 %v2877
    %4573 = vmatprep.subr.bf16.mxu0 %v2894
    %4574 = vmatpush1.bf16.msra.mxu0 %v2893
    %4575 = vmatprep.subr.bf16.mxu0 %v2910
    %4576 = vmatpush1.bf16.msra.mxu0 %v2909
    %4577 = vmatprep.subr.bf16.mxu0 %v2926
    %4578 = vmatpush1.bf16.msra.mxu0 %v2925
    %4579 = vmatprep.subr.bf16.mxu0 %v2942
    %4580 = vmatpush1.bf16.msra.mxu0 %v2941
    %4581 = vmatprep.subr.bf16.mxu0 %v2958
    %4582 = vmatpush1.bf16.msra.mxu0 %v2957
    %4583 = vmatprep.subr.bf16.mxu0 %v2974
    %4584 = vmatpush1.bf16.msra.mxu0 %v2973
    %4585 = vmatprep.subr.bf16.mxu0 %v2990
    %4586 = vmatpush1.bf16.msra.mxu0 %v2989
    %4587 = vmatprep.subr.bf16.mxu0 %v3006
    %4588 = vmatpush1.bf16.msra.mxu0 %v3005
    %4589 = vmatprep.subr.bf16.mxu0 %v3022
    %4590 = vmatpush1.bf16.msra.mxu0 %v3021
    %4591 = vmatprep.subr.bf16.mxu0 %v3038
    %4592 = vmatpush1.bf16.msra.mxu0 %v3037
    %4593 = vmatprep.mubr.bf16.mxu0 %v141
    %4594 = vmatmul.mubr.bf16.gmra.mrb[0].mxu0 %v140
    %v4595 = vpop.f32.mrb[0].mxu0
    %v4596 = vadd.f32 %v824, %v4595
    %v4597 = vpop.f32.mrb[0].mxu0
    %v4598 = vadd.f32 %v828, %v4597
    %v4599 = vpop.f32.mrb[0].mxu0
    %v4600 = vpop.f32.mrb[0].mxu0
    %4601 = vdwg.mxu0
    %4602 = vmatprep.subr.bf16.mxu0 %v3054
    %4603 = vmatpush1.bf16.msra.mxu0 %v3053
    %4604 = vmatprep.subr.bf16.mxu0 %v3070
    %4605 = vmatpush1.bf16.msra.mxu0 %v3069
    %4606 = vmatprep.subr.bf16.mxu0 %v3086
    %4607 = vmatpush1.bf16.msra.mxu0 %v3085
    %4608 = vmatprep.subr.bf16.mxu0 %v3102
    %4609 = vmatpush1.bf16.msra.mxu0 %v3101
    %4610 = vmatprep.subr.bf16.mxu0 %v3118
    %4611 = vmatpush1.bf16.msra.mxu0 %v3117
    %4612 = vmatprep.subr.bf16.mxu0 %v3134
    %4613 = vmatpush1.bf16.msra.mxu0 %v3133
    %4614 = vmatprep.subr.bf16.mxu0 %v3150
    %4615 = vmatpush1.bf16.msra.mxu0 %v3149
    %4616 = vmatprep.subr.bf16.mxu0 %v3166
    %4617 = vmatpush1.bf16.msra.mxu0 %v3165
    %4618 = vmatprep.subr.bf16.mxu0 %v3182
    %4619 = vmatpush1.bf16.msra.mxu0 %v3181
    %4620 = vmatprep.subr.bf16.mxu0 %v3198
    %4621 = vmatpush1.bf16.msra.mxu0 %v3197
    %4622 = vmatprep.subr.bf16.mxu0 %v3214
    %4623 = vmatpush1.bf16.msra.mxu0 %v3213
    %4624 = vmatprep.subr.bf16.mxu0 %v3230
    %4625 = vmatpush1.bf16.msra.mxu0 %v3229
    %4626 = vmatprep.subr.bf16.mxu0 %v3246
    %4627 = vmatpush1.bf16.msra.mxu0 %v3245
    %4628 = vmatprep.subr.bf16.mxu0 %v3262
    %4629 = vmatpush1.bf16.msra.mxu0 %v3261
    %4630 = vmatprep.subr.bf16.mxu0 %v3278
    %4631 = vmatpush1.bf16.msra.mxu0 %v3277
    %4632 = vmatprep.subr.bf16.mxu0 %v3294
    %4633 = vmatpush1.bf16.msra.mxu0 %v3293
    %4634 = vmatprep.mubr.bf16.mxu0 %v143
    %4635 = vmatmul.mubr.bf16.gmra.mrb[0].mxu0 %v142
    %v4636 = vpop.f32.mrb[0].mxu0
    %v4637 = vadd.f32 %v4596, %v4636
    %v4638 = vpop.f32.mrb[0].mxu0
    %v4639 = vadd.f32 %v4598, %v4638
    %v4640 = vpop.f32.mrb[0].mxu0
    %v4641 = vpop.f32.mrb[0].mxu0
    %4642 = vdwg.mxu0
    %4643 = vmatprep.subr.bf16.mxu0 %v3310
    %4644 = vmatpush1.bf16.msra.mxu0 %v3309
    %4645 = vmatprep.subr.bf16.mxu0 %v3326
    %4646 = vmatpush1.bf16.msra.mxu0 %v3325
    %4647 = vmatprep.subr.bf16.mxu0 %v3342
    %4648 = vmatpush1.bf16.msra.mxu0 %v3341
    %4649 = vmatprep.subr.bf16.mxu0 %v3358
    %4650 = vmatpush1.bf16.msra.mxu0 %v3357
    %4651 = vmatprep.subr.bf16.mxu0 %v3374
    %4652 = vmatpush1.bf16.msra.mxu0 %v3373
    %4653 = vmatprep.subr.bf16.mxu0 %v3390
    %4654 = vmatpush1.bf16.msra.mxu0 %v3389
    %4655 = vmatprep.subr.bf16.mxu0 %v3406
    %4656 = vmatpush1.bf16.msra.mxu0 %v3405
    %4657 = vmatprep.subr.bf16.mxu0 %v3422
    %4658 = vmatpush1.bf16.msra.mxu0 %v3421
    %4659 = vmatprep.subr.bf16.mxu0 0
    %4660 = vmatpush1.bf16.msra.mxu0 0
    %4661 = vmatprep.subr.bf16.mxu0 0
    %4662 = vmatpush1.bf16.msra.mxu0 0
    %4663 = vmatprep.subr.bf16.mxu0 0
    %4664 = vmatpush1.bf16.msra.mxu0 0
    %4665 = vmatprep.subr.bf16.mxu0 0
    %4666 = vmatpush1.bf16.msra.mxu0 0
    %4667 = vmatprep.subr.bf16.mxu0 0
    %4668 = vmatpush1.bf16.msra.mxu0 0
    %4669 = vmatprep.subr.bf16.mxu0 0
    %4670 = vmatpush1.bf16.msra.mxu0 0
    %4671 = vmatprep.subr.bf16.mxu0 0
    %4672 = vmatpush1.bf16.msra.mxu0 0
    %4673 = vmatprep.subr.bf16.mxu0 0
    %4674 = vmatpush1.bf16.msra.mxu0 0
    %4675 = vmatprep.mubr.bf16.mxu0 0
    %4676 = vmatmul.mubr.bf16.gmra.mrb[0].mxu0 %v144
    %v4677 = vpop.f32.mrb[0].mxu0
    %v4678 = vadd.f32 %v4637, %v4677
    %v4679 = vpop.f32.mrb[0].mxu0
    %v4680 = vadd.f32 %v4639, %v4679
    %v4681 = vpop.f32.mrb[0].mxu0
    %v4682 = vpop.f32.mrb[0].mxu0
    %4683 = vdwg.mxu0
    %4684 = vmatprep.subr.bf16.mxu0 %v2800
    %4685 = vmatpush1.bf16.msra.mxu0 %v2799
    %4686 = vmatprep.subr.bf16.mxu0 %v2816
    %4687 = vmatpush1.bf16.msra.mxu0 %v2815
    %4688 = vmatprep.subr.bf16.mxu0 %v2832
    %4689 = vmatpush1.bf16.msra.mxu0 %v2831
    %4690 = vmatprep.subr.bf16.mxu0 %v2848
    %4691 = vmatpush1.bf16.msra.mxu0 %v2847
    %4692 = vmatprep.subr.bf16.mxu0 %v2864
    %4693 = vmatpush1.bf16.msra.mxu0 %v2863
    %4694 = vmatprep.subr.bf16.mxu0 %v2880
    %4695 = vmatpush1.bf16.msra.mxu0 %v2879
    %4696 = vmatprep.subr.bf16.mxu0 %v2896
    %4697 = vmatpush1.bf16.msra.mxu0 %v2895
    %4698 = vmatprep.subr.bf16.mxu0 %v2912
    %4699 = vmatpush1.bf16.msra.mxu0 %v2911
    %4700 = vmatprep.subr.bf16.mxu0 %v2928
    %4701 = vmatpush1.bf16.msra.mxu0 %v2927
    %4702 = vmatprep.subr.bf16.mxu0 %v2944
    %4703 = vmatpush1.bf16.msra.mxu0 %v2943
    %4704 = vmatprep.subr.bf16.mxu0 %v2960
    %4705 = vmatpush1.bf16.msra.mxu0 %v2959
    %4706 = vmatprep.subr.bf16.mxu0 %v2976
    %4707 = vmatpush1.bf16.msra.mxu0 %v2975
    %4708 = vmatprep.subr.bf16.mxu0 %v2992
    %4709 = vmatpush1.bf16.msra.mxu0 %v2991
    %4710 = vmatprep.subr.bf16.mxu0 %v3008
    %4711 = vmatpush1.bf16.msra.mxu0 %v3007
    %4712 = vmatprep.subr.bf16.mxu0 %v3024
    %4713 = vmatpush1.bf16.msra.mxu0 %v3023
    %4714 = vmatprep.subr.bf16.mxu0 %v3040
    %4715 = vmatpush1.bf16.msra.mxu0 %v3039
    %4716 = vmatprep.mubr.bf16.mxu0 %v141
    %4717 = vmatmul.mubr.bf16.gmra.mrb[0].mxu0 %v140
    %v4718 = vpop.f32.mrb[0].mxu0
    %v4719 = vadd.f32 %v832, %v4718
    %v4720 = vpop.f32.mrb[0].mxu0
    %v4721 = vadd.f32 %v836, %v4720
    %v4722 = vpop.f32.mrb[0].mxu0
    %v4723 = vpop.f32.mrb[0].mxu0
    %4724 = vdwg.mxu0
    %4725 = vmatprep.subr.bf16.mxu0 %v3056
    %4726 = vmatpush1.bf16.msra.mxu0 %v3055
    %4727 = vmatprep.subr.bf16.mxu0 %v3072
    %4728 = vmatpush1.bf16.msra.mxu0 %v3071
    %4729 = vmatprep.subr.bf16.mxu0 %v3088
    %4730 = vmatpush1.bf16.msra.mxu0 %v3087
    %4731 = vmatprep.subr.bf16.mxu0 %v3104
    %4732 = vmatpush1.bf16.msra.mxu0 %v3103
    %4733 = vmatprep.subr.bf16.mxu0 %v3120
    %4734 = vmatpush1.bf16.msra.mxu0 %v3119
    %4735 = vmatprep.subr.bf16.mxu0 %v3136
    %4736 = vmatpush1.bf16.msra.mxu0 %v3135
    %4737 = vmatprep.subr.bf16.mxu0 %v3152
    %4738 = vmatpush1.bf16.msra.mxu0 %v3151
    %4739 = vmatprep.subr.bf16.mxu0 %v3168
    %4740 = vmatpush1.bf16.msra.mxu0 %v3167
    %4741 = vmatprep.subr.bf16.mxu0 %v3184
    %4742 = vmatpush1.bf16.msra.mxu0 %v3183
    %4743 = vmatprep.subr.bf16.mxu0 %v3200
    %4744 = vmatpush1.bf16.msra.mxu0 %v3199
    %4745 = vmatprep.subr.bf16.mxu0 %v3216
    %4746 = vmatpush1.bf16.msra.mxu0 %v3215
    %4747 = vmatprep.subr.bf16.mxu0 %v3232
    %4748 = vmatpush1.bf16.msra.mxu0 %v3231
    %4749 = vmatprep.subr.bf16.mxu0 %v3248
    %4750 = vmatpush1.bf16.msra.mxu0 %v3247
    %4751 = vmatprep.subr.bf16.mxu0 %v3264
    %4752 = vmatpush1.bf16.msra.mxu0 %v3263
    %4753 = vmatprep.subr.bf16.mxu0 %v3280
    %4754 = vmatpush1.bf16.msra.mxu0 %v3279
    %4755 = vmatprep.subr.bf16.mxu0 %v3296
    %4756 = vmatpush1.bf16.msra.mxu0 %v3295
    %4757 = vmatprep.mubr.bf16.mxu0 %v143
    %4758 = vmatmul.mubr.bf16.gmra.mrb[0].mxu0 %v142
    %v4759 = vpop.f32.mrb[0].mxu0
    %v4760 = vadd.f32 %v4719, %v4759
    %v4761 = vpop.f32.mrb[0].mxu0
    %v4762 = vadd.f32 %v4721, %v4761
    %v4763 = vpop.f32.mrb[0].mxu0
    %v4764 = vpop.f32.mrb[0].mxu0
    %4765 = vdwg.mxu0
    %4766 = vmatprep.subr.bf16.mxu0 %v3312
    %4767 = vmatpush1.bf16.msra.mxu0 %v3311
    %4768 = vmatprep.subr.bf16.mxu0 %v3328
    %4769 = vmatpush1.bf16.msra.mxu0 %v3327
    %4770 = vmatprep.subr.bf16.mxu0 %v3344
    %4771 = vmatpush1.bf16.msra.mxu0 %v3343
    %4772 = vmatprep.subr.bf16.mxu0 %v3360
    %4773 = vmatpush1.bf16.msra.mxu0 %v3359
    %4774 = vmatprep.subr.bf16.mxu0 %v3376
    %4775 = vmatpush1.bf16.msra.mxu0 %v3375
    %4776 = vmatprep.subr.bf16.mxu0 %v3392
    %4777 = vmatpush1.bf16.msra.mxu0 %v3391
    %4778 = vmatprep.subr.bf16.mxu0 %v3408
    %4779 = vmatpush1.bf16.msra.mxu0 %v3407
    %4780 = vmatprep.subr.bf16.mxu0 %v3424
    %4781 = vmatpush1.bf16.msra.mxu0 %v3423
    %4782 = vmatprep.subr.bf16.mxu0 0
    %4783 = vmatpush1.bf16.msra.mxu0 0
    %4784 = vmatprep.subr.bf16.mxu0 0
    %4785 = vmatpush1.bf16.msra.mxu0 0
    %4786 = vmatprep.subr.bf16.mxu0 0
    %4787 = vmatpush1.bf16.msra.mxu0 0
    %4788 = vmatprep.subr.bf16.mxu0 0
    %4789 = vmatpush1.bf16.msra.mxu0 0
    %4790 = vmatprep.subr.bf16.mxu0 0
    %4791 = vmatpush1.bf16.msra.mxu0 0
    %4792 = vmatprep.subr.bf16.mxu0 0
    %4793 = vmatpush1.bf16.msra.mxu0 0
    %4794 = vmatprep.subr.bf16.mxu0 0
    %4795 = vmatpush1.bf16.msra.mxu0 0
    %4796 = vmatprep.subr.bf16.mxu0 0
    %4797 = vmatpush1.bf16.msra.mxu0 0
    %4798 = vmatprep.mubr.bf16.mxu0 0
    %4799 = vmatmul.mubr.bf16.gmra.mrb[0].mxu0 %v144
    %v4800 = vpop.f32.mrb[0].mxu0
    %v4801 = vadd.f32 %v4760, %v4800
    %v4802 = vpop.f32.mrb[0].mxu0
    %v4803 = vadd.f32 %v4762, %v4802
    %v4804 = vpop.f32.mrb[0].mxu0
    %v4805 = vpop.f32.mrb[0].mxu0
    %4806 = vdwg.mxu0
    %4807 = vmatprep.subr.bf16.mxu0 %v2802
    %4808 = vmatpush1.bf16.msra.mxu0 %v2801
    %4809 = vmatprep.subr.bf16.mxu0 %v2818
    %4810 = vmatpush1.bf16.msra.mxu0 %v2817
    %4811 = vmatprep.subr.bf16.mxu0 %v2834
    %4812 = vmatpush1.bf16.msra.mxu0 %v2833
    %4813 = vmatprep.subr.bf16.mxu0 %v2850
    %4814 = vmatpush1.bf16.msra.mxu0 %v2849
    %4815 = vmatprep.subr.bf16.mxu0 %v2866
    %4816 = vmatpush1.bf16.msra.mxu0 %v2865
    %4817 = vmatprep.subr.bf16.mxu0 %v2882
    %4818 = vmatpush1.bf16.msra.mxu0 %v2881
    %4819 = vmatprep.subr.bf16.mxu0 %v2898
    %4820 = vmatpush1.bf16.msra.mxu0 %v2897
    %4821 = vmatprep.subr.bf16.mxu0 %v2914
    %4822 = vmatpush1.bf16.msra.mxu0 %v2913
    %4823 = vmatprep.subr.bf16.mxu0 %v2930
    %4824 = vmatpush1.bf16.msra.mxu0 %v2929
    %4825 = vmatprep.subr.bf16.mxu0 %v2946
    %4826 = vmatpush1.bf16.msra.mxu0 %v2945
    %4827 = vmatprep.subr.bf16.mxu0 %v2962
    %4828 = vmatpush1.bf16.msra.mxu0 %v2961
    %4829 = vmatprep.subr.bf16.mxu0 %v2978
    %4830 = vmatpush1.bf16.msra.mxu0 %v2977
    %4831 = vmatprep.subr.bf16.mxu0 %v2994
    %4832 = vmatpush1.bf16.msra.mxu0 %v2993
    %4833 = vmatprep.subr.bf16.mxu0 %v3010
    %4834 = vmatpush1.bf16.msra.mxu0 %v3009
    %4835 = vmatprep.subr.bf16.mxu0 %v3026
    %4836 = vmatpush1.bf16.msra.mxu0 %v3025
    %4837 = vmatprep.subr.bf16.mxu0 %v3042
    %4838 = vmatpush1.bf16.msra.mxu0 %v3041
    %4839 = vmatprep.mubr.bf16.mxu0 %v141
    %4840 = vmatmul.mubr.bf16.gmra.mrb[0].mxu0 %v140
    %v4841 = vpop.f32.mrb[0].mxu0
    %v4842 = vadd.f32 %v840, %v4841
    %v4843 = vpop.f32.mrb[0].mxu0
    %v4844 = vadd.f32 %v844, %v4843
    %v4845 = vpop.f32.mrb[0].mxu0
    %v4846 = vpop.f32.mrb[0].mxu0
    %4847 = vdwg.mxu0
    %4848 = vmatprep.subr.bf16.mxu0 %v3058
    %4849 = vmatpush1.bf16.msra.mxu0 %v3057
    %4850 = vmatprep.subr.bf16.mxu0 %v3074
    %4851 = vmatpush1.bf16.msra.mxu0 %v3073
    %4852 = vmatprep.subr.bf16.mxu0 %v3090
    %4853 = vmatpush1.bf16.msra.mxu0 %v3089
    %4854 = vmatprep.subr.bf16.mxu0 %v3106
    %4855 = vmatpush1.bf16.msra.mxu0 %v3105
    %4856 = vmatprep.subr.bf16.mxu0 %v3122
    %4857 = vmatpush1.bf16.msra.mxu0 %v3121
    %4858 = vmatprep.subr.bf16.mxu0 %v3138
    %4859 = vmatpush1.bf16.msra.mxu0 %v3137
    %4860 = vmatprep.subr.bf16.mxu0 %v3154
    %4861 = vmatpush1.bf16.msra.mxu0 %v3153
    %4862 = vmatprep.subr.bf16.mxu0 %v3170
    %4863 = vmatpush1.bf16.msra.mxu0 %v3169
    %4864 = vmatprep.subr.bf16.mxu0 %v3186
    %4865 = vmatpush1.bf16.msra.mxu0 %v3185
    %4866 = vmatprep.subr.bf16.mxu0 %v3202
    %4867 = vmatpush1.bf16.msra.mxu0 %v3201
    %4868 = vmatprep.subr.bf16.mxu0 %v3218
    %4869 = vmatpush1.bf16.msra.mxu0 %v3217
    %4870 = vmatprep.subr.bf16.mxu0 %v3234
    %4871 = vmatpush1.bf16.msra.mxu0 %v3233
    %4872 = vmatprep.subr.bf16.mxu0 %v3250
    %4873 = vmatpush1.bf16.msra.mxu0 %v3249
    %4874 = vmatprep.subr.bf16.mxu0 %v3266
    %4875 = vmatpush1.bf16.msra.mxu0 %v3265
    %4876 = vmatprep.subr.bf16.mxu0 %v3282
    %4877 = vmatpush1.bf16.msra.mxu0 %v3281
    %4878 = vmatprep.subr.bf16.mxu0 %v3298
    %4879 = vmatpush1.bf16.msra.mxu0 %v3297
    %4880 = vmatprep.mubr.bf16.mxu0 %v143
    %4881 = vmatmul.mubr.bf16.gmra.mrb[0].mxu0 %v142
    %v4882 = vpop.f32.mrb[0].mxu0
    %v4883 = vadd.f32 %v4842, %v4882
    %v4884 = vpop.f32.mrb[0].mxu0
    %v4885 = vadd.f32 %v4844, %v4884
    %v4886 = vpop.f32.mrb[0].mxu0
    %v4887 = vpop.f32.mrb[0].mxu0
    %4888 = vdwg.mxu0
    %4889 = vmatprep.subr.bf16.mxu0 %v3314
    %4890 = vmatpush1.bf16.msra.mxu0 %v3313
    %4891 = vmatprep.subr.bf16.mxu0 %v3330
    %4892 = vmatpush1.bf16.msra.mxu0 %v3329
    %4893 = vmatprep.subr.bf16.mxu0 %v3346
    %4894 = vmatpush1.bf16.msra.mxu0 %v3345
    %4895 = vmatprep.subr.bf16.mxu0 %v3362
    %4896 = vmatpush1.bf16.msra.mxu0 %v3361
    %4897 = vmatprep.subr.bf16.mxu0 %v3378
    %4898 = vmatpush1.bf16.msra.mxu0 %v3377
    %4899 = vmatprep.subr.bf16.mxu0 %v3394
    %4900 = vmatpush1.bf16.msra.mxu0 %v3393
    %4901 = vmatprep.subr.bf16.mxu0 %v3410
    %4902 = vmatpush1.bf16.msra.mxu0 %v3409
    %4903 = vmatprep.subr.bf16.mxu0 %v3426
    %4904 = vmatpush1.bf16.msra.mxu0 %v3425
    %4905 = vmatprep.subr.bf16.mxu0 0
    %4906 = vmatpush1.bf16.msra.mxu0 0
    %4907 = vmatprep.subr.bf16.mxu0 0
    %4908 = vmatpush1.bf16.msra.mxu0 0
    %4909 = vmatprep.subr.bf16.mxu0 0
    %4910 = vmatpush1.bf16.msra.mxu0 0
    %4911 = vmatprep.subr.bf16.mxu0 0
    %4912 = vmatpush1.bf16.msra.mxu0 0
    %4913 = vmatprep.subr.bf16.mxu0 0
    %4914 = vmatpush1.bf16.msra.mxu0 0
    %4915 = vmatprep.subr.bf16.mxu0 0
    %4916 = vmatpush1.bf16.msra.mxu0 0
    %4917 = vmatprep.subr.bf16.mxu0 0
    %4918 = vmatpush1.bf16.msra.mxu0 0
    %4919 = vmatprep.subr.bf16.mxu0 0
    %4920 = vmatpush1.bf16.msra.mxu0 0
    %4921 = vmatprep.mubr.bf16.mxu0 0
    %4922 = vmatmul.mubr.bf16.gmra.mrb[0].mxu0 %v144
    %v4923 = vpop.f32.mrb[0].mxu0
    %v4924 = vadd.f32 %v4883, %v4923
    %v4925 = vpop.f32.mrb[0].mxu0
    %v4926 = vadd.f32 %v4885, %v4925
    %v4927 = vpop.f32.mrb[0].mxu0
    %v4928 = vpop.f32.mrb[0].mxu0
    %4929 = vdwg.mxu0
    %4930 = vmatprep.subr.bf16.mxu0 %v2804
    %4931 = vmatpush1.bf16.msra.mxu0 %v2803
    %4932 = vmatprep.subr.bf16.mxu0 %v2820
    %4933 = vmatpush1.bf16.msra.mxu0 %v2819
    %4934 = vmatprep.subr.bf16.mxu0 %v2836
    %4935 = vmatpush1.bf16.msra.mxu0 %v2835
    %4936 = vmatprep.subr.bf16.mxu0 %v2852
    %4937 = vmatpush1.bf16.msra.mxu0 %v2851
    %4938 = vmatprep.subr.bf16.mxu0 %v2868
    %4939 = vmatpush1.bf16.msra.mxu0 %v2867
    %4940 = vmatprep.subr.bf16.mxu0 %v2884
    %4941 = vmatpush1.bf16.msra.mxu0 %v2883
    %4942 = vmatprep.subr.bf16.mxu0 %v2900
    %4943 = vmatpush1.bf16.msra.mxu0 %v2899
    %4944 = vmatprep.subr.bf16.mxu0 %v2916
    %4945 = vmatpush1.bf16.msra.mxu0 %v2915
    %4946 = vmatprep.subr.bf16.mxu0 %v2932
    %4947 = vmatpush1.bf16.msra.mxu0 %v2931
    %4948 = vmatprep.subr.bf16.mxu0 %v2948
    %4949 = vmatpush1.bf16.msra.mxu0 %v2947
    %4950 = vmatprep.subr.bf16.mxu0 %v2964
    %4951 = vmatpush1.bf16.msra.mxu0 %v2963
    %4952 = vmatprep.subr.bf16.mxu0 %v2980
    %4953 = vmatpush1.bf16.msra.mxu0 %v2979
    %4954 = vmatprep.subr.bf16.mxu0 %v2996
    %4955 = vmatpush1.bf16.msra.mxu0 %v2995
    %4956 = vmatprep.subr.bf16.mxu0 %v3012
    %4957 = vmatpush1.bf16.msra.mxu0 %v3011
    %4958 = vmatprep.subr.bf16.mxu0 %v3028
    %4959 = vmatpush1.bf16.msra.mxu0 %v3027
    %4960 = vmatprep.subr.bf16.mxu0 %v3044
    %4961 = vmatpush1.bf16.msra.mxu0 %v3043
    %4962 = vmatprep.mubr.bf16.mxu0 %v141
    %4963 = vmatmul.mubr.bf16.gmra.mrb[0].mxu0 %v140
    %v4964 = vpop.f32.mrb[0].mxu0
    %v4965 = vadd.f32 %v848, %v4964
    %v4966 = vpop.f32.mrb[0].mxu0
    %v4967 = vadd.f32 %v852, %v4966
    %v4968 = vpop.f32.mrb[0].mxu0
    %v4969 = vpop.f32.mrb[0].mxu0
    %4970 = vdwg.mxu0
    %4971 = vmatprep.subr.bf16.mxu0 %v3060
    %4972 = vmatpush1.bf16.msra.mxu0 %v3059
    %4973 = vmatprep.subr.bf16.mxu0 %v3076
    %4974 = vmatpush1.bf16.msra.mxu0 %v3075
    %4975 = vmatprep.subr.bf16.mxu0 %v3092
    %4976 = vmatpush1.bf16.msra.mxu0 %v3091
    %4977 = vmatprep.subr.bf16.mxu0 %v3108
    %4978 = vmatpush1.bf16.msra.mxu0 %v3107
    %4979 = vmatprep.subr.bf16.mxu0 %v3124
    %4980 = vmatpush1.bf16.msra.mxu0 %v3123
    %4981 = vmatprep.subr.bf16.mxu0 %v3140
    %4982 = vmatpush1.bf16.msra.mxu0 %v3139
    %4983 = vmatprep.subr.bf16.mxu0 %v3156
    %4984 = vmatpush1.bf16.msra.mxu0 %v3155
    %4985 = vmatprep.subr.bf16.mxu0 %v3172
    %4986 = vmatpush1.bf16.msra.mxu0 %v3171
    %4987 = vmatprep.subr.bf16.mxu0 %v3188
    %4988 = vmatpush1.bf16.msra.mxu0 %v3187
    %4989 = vmatprep.subr.bf16.mxu0 %v3204
    %4990 = vmatpush1.bf16.msra.mxu0 %v3203
    %4991 = vmatprep.subr.bf16.mxu0 %v3220
    %4992 = vmatpush1.bf16.msra.mxu0 %v3219
    %4993 = vmatprep.subr.bf16.mxu0 %v3236
    %4994 = vmatpush1.bf16.msra.mxu0 %v3235
    %4995 = vmatprep.subr.bf16.mxu0 %v3252
    %4996 = vmatpush1.bf16.msra.mxu0 %v3251
    %4997 = vmatprep.subr.bf16.mxu0 %v3268
    %4998 = vmatpush1.bf16.msra.mxu0 %v3267
    %4999 = vmatprep.subr.bf16.mxu0 %v3284
    %5000 = vmatpush1.bf16.msra.mxu0 %v3283
    %5001 = vmatprep.subr.bf16.mxu0 %v3300
    %5002 = vmatpush1.bf16.msra.mxu0 %v3299
    %5003 = vmatprep.mubr.bf16.mxu0 %v143
    %5004 = vmatmul.mubr.bf16.gmra.mrb[0].mxu0 %v142
    %v5005 = vpop.f32.mrb[0].mxu0
    %v5006 = vadd.f32 %v4965, %v5005
    %v5007 = vpop.f32.mrb[0].mxu0
    %v5008 = vadd.f32 %v4967, %v5007
    %v5009 = vpop.f32.mrb[0].mxu0
    %v5010 = vpop.f32.mrb[0].mxu0
    %5011 = vdwg.mxu0
    %5012 = vmatprep.subr.bf16.mxu0 %v3316
    %5013 = vmatpush1.bf16.msra.mxu0 %v3315
    %5014 = vmatprep.subr.bf16.mxu0 %v3332
    %5015 = vmatpush1.bf16.msra.mxu0 %v3331
    %5016 = vmatprep.subr.bf16.mxu0 %v3348
    %5017 = vmatpush1.bf16.msra.mxu0 %v3347
    %5018 = vmatprep.subr.bf16.mxu0 %v3364
    %5019 = vmatpush1.bf16.msra.mxu0 %v3363
    %5020 = vmatprep.subr.bf16.mxu0 %v3380
    %5021 = vmatpush1.bf16.msra.mxu0 %v3379
    %5022 = vmatprep.subr.bf16.mxu0 %v3396
    %5023 = vmatpush1.bf16.msra.mxu0 %v3395
    %5024 = vmatprep.subr.bf16.mxu0 %v3412
    %5025 = vmatpush1.bf16.msra.mxu0 %v3411
    %5026 = vmatprep.subr.bf16.mxu0 %v3428
    %5027 = vmatpush1.bf16.msra.mxu0 %v3427
    %5028 = vmatprep.subr.bf16.mxu0 0
    %5029 = vmatpush1.bf16.msra.mxu0 0
    %5030 = vmatprep.subr.bf16.mxu0 0
    %5031 = vmatpush1.bf16.msra.mxu0 0
    %5032 = vmatprep.subr.bf16.mxu0 0
    %5033 = vmatpush1.bf16.msra.mxu0 0
    %5034 = vmatprep.subr.bf16.mxu0 0
    %5035 = vmatpush1.bf16.msra.mxu0 0
    %5036 = vmatprep.subr.bf16.mxu0 0
    %5037 = vmatpush1.bf16.msra.mxu0 0
    %5038 = vmatprep.subr.bf16.mxu0 0
    %5039 = vmatpush1.bf16.msra.mxu0 0
    %5040 = vmatprep.subr.bf16.mxu0 0
    %5041 = vmatpush1.bf16.msra.mxu0 0
    %5042 = vmatprep.subr.bf16.mxu0 0
    %5043 = vmatpush1.bf16.msra.mxu0 0
    %5044 = vmatprep.mubr.bf16.mxu0 0
    %5045 = vmatmul.mubr.bf16.gmra.mrb[0].mxu0 %v144
    %v5046 = vpop.f32.mrb[0].mxu0
    %v5047 = vadd.f32 %v5006, %v5046
    %v5048 = vpop.f32.mrb[0].mxu0
    %v5049 = vadd.f32 %v5008, %v5048
    %v5050 = vpop.f32.mrb[0].mxu0
    %v5051 = vpop.f32.mrb[0].mxu0
    %5052 = vdwg.mxu0
    %v5053 = vmax.f32 %v4186, 0.0
    %v5054 = vmax.f32 %v4188, 0.0
    %v5055 = vmax.f32 %v4309, 0.0
    %v5056 = vmax.f32 %v4311, 0.0
    %v5057 = vmax.f32 %v4432, 0.0
    %v5058 = vmax.f32 %v4434, 0.0
    %v5059 = vmax.f32 %v4555, 0.0
    %v5060 = vmax.f32 %v4557, 0.0
    %v5061 = vmax.f32 %v4678, 0.0
    %v5062 = vmax.f32 %v4680, 0.0
    %v5063 = vmax.f32 %v4801, 0.0
    %v5064 = vmax.f32 %v4803, 0.0
    %v5065 = vmax.f32 %v4924, 0.0
    %v5066 = vmax.f32 %v4926, 0.0
    %v5067 = vmax.f32 %v5047, 0.0
    %v5068 = vmax.f32 %v5049, 0.0
    %v5069 = vpack.c.bf16 %v5053, %v5053
    %v5070 = vpack.c.bf16 %v5054, %v5054
    %v5071 = vpack.c.bf16 %v5055, %v5055
    %v5072 = vpack.c.bf16 %v5056, %v5056
    %v5073 = vpack.c.bf16 %v5057, %v5057
    %v5074 = vpack.c.bf16 %v5058, %v5058
    %v5075 = vpack.c.bf16 %v5059, %v5059
    %v5076 = vpack.c.bf16 %v5060, %v5060
    %v5077 = vpack.c.bf16 %v5061, %v5061
    %v5078 = vpack.c.bf16 %v5062, %v5062
    %v5079 = vpack.c.bf16 %v5063, %v5063
    %v5080 = vpack.c.bf16 %v5064, %v5064
    %v5081 = vpack.c.bf16 %v5065, %v5065
    %v5082 = vpack.c.bf16 %v5066, %v5066
    %v5083 = vpack.c.bf16 %v5067, %v5067
    %v5084 = vpack.c.bf16 %v5068, %v5068
    %v5085 = vld [vmem:[#allocation7] sm:$0xff]
    %v5086 = vld [vmem:[#allocation7 + $0x8] sm:$0xff]
    %v5087 = vld [vmem:[#allocation7 + $0x10] sm:$0xff]
    %v5088 = vld [vmem:[#allocation7 + $0x18] sm:$0xff]
    %v5089 = vld [vmem:[#allocation7 + $0x20] sm:$0xff]
    %v5090 = vld [vmem:[#allocation7 + $0x28] sm:$0xff]
    %v5091 = vld [vmem:[#allocation7 + $0x30] sm:$0xff]
    %v5092 = vld [vmem:[#allocation7 + $0x38] sm:$0xff]
    %v5093 = vld [vmem:[#allocation7 + $0x40] sm:$0xff]
    %v5094 = vld [vmem:[#allocation7 + $0x48] sm:$0xff]
    %v5095 = vld [vmem:[#allocation7 + $0x50] sm:$0xff]
    %v5096 = vld [vmem:[#allocation7 + $0x58] sm:$0xff]
    %v5097 = vld [vmem:[#allocation7 + $0x60] sm:$0xff]
    %v5098 = vld [vmem:[#allocation7 + $0x68] sm:$0xff]
    %v5099 = vld [vmem:[#allocation7 + $0x70] sm:$0xff]
    %v5100 = vld [vmem:[#allocation7 + $0x78] sm:$0xff]
    %v5101 = vld [vmem:[#allocation7 + $0x80] sm:$0xff]
    %v5102 = vld [vmem:[#allocation7 + $0x88] sm:$0xff]
    %v5103 = vld [vmem:[#allocation7 + $0x90] sm:$0xff]
    %v5104 = vld [vmem:[#allocation7 + $0x98] sm:$0xff]
    %v5105 = vld [vmem:[#allocation7 + $0xa0] sm:$0xff]
    %v5106 = vld [vmem:[#allocation7 + $0xa8] sm:$0xff]
    %v5107 = vld [vmem:[#allocation7 + $0xb0] sm:$0xff]
    %v5108 = vld [vmem:[#allocation7 + $0xb8] sm:$0xff]
    %v5109 = vld [vmem:[#allocation7 + $0xc0] sm:$0xff]
    %v5110 = vld [vmem:[#allocation7 + $0xc8] sm:$0xff]
    %v5111 = vld [vmem:[#allocation7 + $0xd0] sm:$0xff]
    %v5112 = vld [vmem:[#allocation7 + $0xd8] sm:$0xff]
    %v5113 = vld [vmem:[#allocation7 + $0xe0] sm:$0xff]
    %v5114 = vld [vmem:[#allocation7 + $0xe8] sm:$0xff]
    %v5115 = vld [vmem:[#allocation7 + $0xf0] sm:$0xff]
    %v5116 = vld [vmem:[#allocation7 + $0xf8] sm:$0xff]
    %v5117 = vld [vmem:[#allocation7 + $0x100] sm:$0xff]
    %v5118 = vld [vmem:[#allocation7 + $0x108] sm:$0xff]
    %v5119 = vld [vmem:[#allocation7 + $0x110] sm:$0xff]
    %v5120 = vld [vmem:[#allocation7 + $0x118] sm:$0xff]
    %v5121 = vld [vmem:[#allocation7 + $0x120] sm:$0xff]
    %v5122 = vld [vmem:[#allocation7 + $0x128] sm:$0xff]
    %v5123 = vld [vmem:[#allocation7 + $0x130] sm:$0xff]
    %v5124 = vld [vmem:[#allocation7 + $0x138] sm:$0xff]
    %v5125 = vld [vmem:[#allocation7 + $0x140] sm:$0xff]
    %v5126 = vld [vmem:[#allocation7 + $0x148] sm:$0xff]
    %v5127 = vld [vmem:[#allocation7 + $0x150] sm:$0xff]
    %v5128 = vld [vmem:[#allocation7 + $0x158] sm:$0xff]
    %v5129 = vld [vmem:[#allocation7 + $0x160] sm:$0xff]
    %v5130 = vld [vmem:[#allocation7 + $0x168] sm:$0xff]
    %v5131 = vld [vmem:[#allocation7 + $0x170] sm:$0xff]
    %v5132 = vld [vmem:[#allocation7 + $0x178] sm:$0xff]
    %v5133 = vld [vmem:[#allocation7 + $0x180] sm:$0xff]
    %v5134 = vld [vmem:[#allocation7 + $0x188] sm:$0xff]
    %v5135 = vld [vmem:[#allocation7 + $0x190] sm:$0xff]
    %v5136 = vld [vmem:[#allocation7 + $0x198] sm:$0xff]
    %v5137 = vld [vmem:[#allocation7 + $0x1a0] sm:$0xff]
    %v5138 = vld [vmem:[#allocation7 + $0x1a8] sm:$0xff]
    %v5139 = vld [vmem:[#allocation7 + $0x1b0] sm:$0xff]
    %v5140 = vld [vmem:[#allocation7 + $0x1b8] sm:$0xff]
    %v5141 = vld [vmem:[#allocation7 + $0x1c0] sm:$0xff]
    %v5142 = vld [vmem:[#allocation7 + $0x1c8] sm:$0xff]
    %v5143 = vld [vmem:[#allocation7 + $0x1d0] sm:$0xff]
    %v5144 = vld [vmem:[#allocation7 + $0x1d8] sm:$0xff]
    %v5145 = vld [vmem:[#allocation7 + $0x1e0] sm:$0xff]
    %v5146 = vld [vmem:[#allocation7 + $0x1e8] sm:$0xff]
    %v5147 = vld [vmem:[#allocation7 + $0x1f0] sm:$0xff]
    %v5148 = vld [vmem:[#allocation7 + $0x1f8] sm:$0xff]
    %v5149 = vld [vmem:[#allocation7 + $0x200] sm:$0xff]
    %v5150 = vld [vmem:[#allocation7 + $0x208] sm:$0xff]
    %v5151 = vld [vmem:[#allocation7 + $0x210] sm:$0xff]
    %v5152 = vld [vmem:[#allocation7 + $0x218] sm:$0xff]
    %v5153 = vld [vmem:[#allocation7 + $0x220] sm:$0xff]
    %v5154 = vld [vmem:[#allocation7 + $0x228] sm:$0xff]
    %v5155 = vld [vmem:[#allocation7 + $0x230] sm:$0xff]
    %v5156 = vld [vmem:[#allocation7 + $0x238] sm:$0xff]
    %v5157 = vld [vmem:[#allocation7 + $0x240] sm:$0xff]
    %v5158 = vld [vmem:[#allocation7 + $0x248] sm:$0xff]
    %v5159 = vld [vmem:[#allocation7 + $0x250] sm:$0xff]
    %v5160 = vld [vmem:[#allocation7 + $0x258] sm:$0xff]
    %v5161 = vld [vmem:[#allocation7 + $0x260] sm:$0xff]
    %v5162 = vld [vmem:[#allocation7 + $0x268] sm:$0xff]
    %v5163 = vld [vmem:[#allocation7 + $0x270] sm:$0xff]
    %v5164 = vld [vmem:[#allocation7 + $0x278] sm:$0xff]
    %v5165 = vld [vmem:[#allocation7 + $0x280] sm:$0xff]
    %v5166 = vld [vmem:[#allocation7 + $0x288] sm:$0xff]
    %v5167 = vld [vmem:[#allocation7 + $0x290] sm:$0xff]
    %v5168 = vld [vmem:[#allocation7 + $0x298] sm:$0xff]
    %v5169 = vld [vmem:[#allocation7 + $0x2a0] sm:$0xff]
    %v5170 = vld [vmem:[#allocation7 + $0x2a8] sm:$0xff]
    %v5171 = vld [vmem:[#allocation7 + $0x2b0] sm:$0xff]
    %v5172 = vld [vmem:[#allocation7 + $0x2b8] sm:$0xff]
    %v5173 = vld [vmem:[#allocation7 + $0x2c0] sm:$0xff]
    %v5174 = vld [vmem:[#allocation7 + $0x2c8] sm:$0xff]
    %v5175 = vld [vmem:[#allocation7 + $0x2d0] sm:$0xff]
    %v5176 = vld [vmem:[#allocation7 + $0x2d8] sm:$0xff]
    %v5177 = vld [vmem:[#allocation7 + $0x2e0] sm:$0xff]
    %v5178 = vld [vmem:[#allocation7 + $0x2e8] sm:$0xff]
    %v5179 = vld [vmem:[#allocation7 + $0x2f0] sm:$0xff]
    %v5180 = vld [vmem:[#allocation7 + $0x2f8] sm:$0xff]
    %v5181 = vld [vmem:[#allocation7 + $0x300] sm:$0xff]
    %v5182 = vld [vmem:[#allocation7 + $0x308] sm:$0xff]
    %v5183 = vld [vmem:[#allocation7 + $0x310] sm:$0xff]
    %v5184 = vld [vmem:[#allocation7 + $0x318] sm:$0xff]
    %v5185 = vld [vmem:[#allocation7 + $0x320] sm:$0xff]
    %v5186 = vld [vmem:[#allocation7 + $0x328] sm:$0xff]
    %v5187 = vld [vmem:[#allocation7 + $0x330] sm:$0xff]
    %v5188 = vld [vmem:[#allocation7 + $0x338] sm:$0xff]
    %v5189 = vld [vmem:[#allocation7 + $0x340] sm:$0xff]
    %v5190 = vld [vmem:[#allocation7 + $0x348] sm:$0xff]
    %v5191 = vld [vmem:[#allocation7 + $0x350] sm:$0xff]
    %v5192 = vld [vmem:[#allocation7 + $0x358] sm:$0xff]
    %v5193 = vld [vmem:[#allocation7 + $0x360] sm:$0xff]
    %v5194 = vld [vmem:[#allocation7 + $0x368] sm:$0xff]
    %v5195 = vld [vmem:[#allocation7 + $0x370] sm:$0xff]
    %v5196 = vld [vmem:[#allocation7 + $0x378] sm:$0xff]
    %v5197 = vld [vmem:[#allocation7 + $0x380] sm:$0xff]
    %v5198 = vld [vmem:[#allocation7 + $0x388] sm:$0xff]
    %v5199 = vld [vmem:[#allocation7 + $0x390] sm:$0xff]
    %v5200 = vld [vmem:[#allocation7 + $0x398] sm:$0xff]
    %v5201 = vld [vmem:[#allocation7 + $0x3a0] sm:$0xff]
    %v5202 = vld [vmem:[#allocation7 + $0x3a8] sm:$0xff]
    %v5203 = vld [vmem:[#allocation7 + $0x3b0] sm:$0xff]
    %v5204 = vld [vmem:[#allocation7 + $0x3b8] sm:$0xff]
    %v5205 = vld [vmem:[#allocation7 + $0x3c0] sm:$0xff]
    %v5206 = vld [vmem:[#allocation7 + $0x3c8] sm:$0xff]
    %v5207 = vld [vmem:[#allocation7 + $0x3d0] sm:$0xff]
    %v5208 = vld [vmem:[#allocation7 + $0x3d8] sm:$0xff]
    %v5209 = vld [vmem:[#allocation7 + $0x3e0] sm:$0xff]
    %v5210 = vld [vmem:[#allocation7 + $0x3e8] sm:$0xff]
    %v5211 = vld [vmem:[#allocation7 + $0x3f0] sm:$0xff]
    %v5212 = vld [vmem:[#allocation7 + $0x3f8] sm:$0xff]
    %v5213 = vld [vmem:[#allocation7 + $0x400] sm:$0xff]
    %v5214 = vld [vmem:[#allocation7 + $0x408] sm:$0xff]
    %v5215 = vld [vmem:[#allocation7 + $0x410] sm:$0xff]
    %v5216 = vld [vmem:[#allocation7 + $0x418] sm:$0xff]
    %v5217 = vld [vmem:[#allocation7 + $0x420] sm:$0xff]
    %v5218 = vld [vmem:[#allocation7 + $0x428] sm:$0xff]
    %v5219 = vld [vmem:[#allocation7 + $0x430] sm:$0xff]
    %v5220 = vld [vmem:[#allocation7 + $0x438] sm:$0xff]
    %v5221 = vld [vmem:[#allocation7 + $0x440] sm:$0xff]
    %v5222 = vld [vmem:[#allocation7 + $0x448] sm:$0xff]
    %v5223 = vld [vmem:[#allocation7 + $0x450] sm:$0xff]
    %v5224 = vld [vmem:[#allocation7 + $0x458] sm:$0xff]
    %v5225 = vld [vmem:[#allocation7 + $0x460] sm:$0xff]
    %v5226 = vld [vmem:[#allocation7 + $0x468] sm:$0xff]
    %v5227 = vld [vmem:[#allocation7 + $0x470] sm:$0xff]
    %v5228 = vld [vmem:[#allocation7 + $0x478] sm:$0xff]
    %v5229 = vld [vmem:[#allocation7 + $0x480] sm:$0xff]
    %v5230 = vld [vmem:[#allocation7 + $0x488] sm:$0xff]
    %v5231 = vld [vmem:[#allocation7 + $0x490] sm:$0xff]
    %v5232 = vld [vmem:[#allocation7 + $0x498] sm:$0xff]
    %v5233 = vld [vmem:[#allocation7 + $0x4a0] sm:$0xff]
    %v5234 = vld [vmem:[#allocation7 + $0x4a8] sm:$0xff]
    %v5235 = vld [vmem:[#allocation7 + $0x4b0] sm:$0xff]
    %v5236 = vld [vmem:[#allocation7 + $0x4b8] sm:$0xff]
    %v5237 = vld [vmem:[#allocation7 + $0x4c0] sm:$0xff]
    %v5238 = vld [vmem:[#allocation7 + $0x4c8] sm:$0xff]
    %v5239 = vld [vmem:[#allocation7 + $0x4d0] sm:$0xff]
    %v5240 = vld [vmem:[#allocation7 + $0x4d8] sm:$0xff]
    %v5241 = vld [vmem:[#allocation7 + $0x4e0] sm:$0xff]
    %v5242 = vld [vmem:[#allocation7 + $0x4e8] sm:$0xff]
    %v5243 = vld [vmem:[#allocation7 + $0x4f0] sm:$0xff]
    %v5244 = vld [vmem:[#allocation7 + $0x4f8] sm:$0xff]
    %v5245 = vld [vmem:[#allocation7 + $0x500] sm:$0xff]
    %v5246 = vld [vmem:[#allocation7 + $0x508] sm:$0xff]
    %v5247 = vld [vmem:[#allocation7 + $0x510] sm:$0xff]
    %v5248 = vld [vmem:[#allocation7 + $0x518] sm:$0xff]
    %v5249 = vld [vmem:[#allocation7 + $0x520] sm:$0xff]
    %v5250 = vld [vmem:[#allocation7 + $0x528] sm:$0xff]
    %v5251 = vld [vmem:[#allocation7 + $0x530] sm:$0xff]
    %v5252 = vld [vmem:[#allocation7 + $0x538] sm:$0xff]
    %v5253 = vld [vmem:[#allocation7 + $0x540] sm:$0xff]
    %v5254 = vld [vmem:[#allocation7 + $0x548] sm:$0xff]
    %v5255 = vld [vmem:[#allocation7 + $0x550] sm:$0xff]
    %v5256 = vld [vmem:[#allocation7 + $0x558] sm:$0xff]
    %v5257 = vld [vmem:[#allocation7 + $0x560] sm:$0xff]
    %v5258 = vld [vmem:[#allocation7 + $0x568] sm:$0xff]
    %v5259 = vld [vmem:[#allocation7 + $0x570] sm:$0xff]
    %v5260 = vld [vmem:[#allocation7 + $0x578] sm:$0xff]
    %v5261 = vld [vmem:[#allocation7 + $0x580] sm:$0xff]
    %v5262 = vld [vmem:[#allocation7 + $0x588] sm:$0xff]
    %v5263 = vld [vmem:[#allocation7 + $0x590] sm:$0xff]
    %v5264 = vld [vmem:[#allocation7 + $0x598] sm:$0xff]
    %v5265 = vld [vmem:[#allocation7 + $0x5a0] sm:$0xff]
    %v5266 = vld [vmem:[#allocation7 + $0x5a8] sm:$0xff]
    %v5267 = vld [vmem:[#allocation7 + $0x5b0] sm:$0xff]
    %v5268 = vld [vmem:[#allocation7 + $0x5b8] sm:$0xff]
    %v5269 = vld [vmem:[#allocation7 + $0x5c0] sm:$0xff]
    %v5270 = vld [vmem:[#allocation7 + $0x5c8] sm:$0xff]
    %v5271 = vld [vmem:[#allocation7 + $0x5d0] sm:$0xff]
    %v5272 = vld [vmem:[#allocation7 + $0x5d8] sm:$0xff]
    %v5273 = vld [vmem:[#allocation7 + $0x5e0] sm:$0xff]
    %v5274 = vld [vmem:[#allocation7 + $0x5e8] sm:$0xff]
    %v5275 = vld [vmem:[#allocation7 + $0x5f0] sm:$0xff]
    %v5276 = vld [vmem:[#allocation7 + $0x5f8] sm:$0xff]
    %v5277 = vld [vmem:[#allocation7 + $0x600] sm:$0xff]
    %v5278 = vld [vmem:[#allocation7 + $0x608] sm:$0xff]
    %v5279 = vld [vmem:[#allocation7 + $0x610] sm:$0xff]
    %v5280 = vld [vmem:[#allocation7 + $0x618] sm:$0xff]
    %v5281 = vld [vmem:[#allocation7 + $0x620] sm:$0xff]
    %v5282 = vld [vmem:[#allocation7 + $0x628] sm:$0xff]
    %v5283 = vld [vmem:[#allocation7 + $0x630] sm:$0xff]
    %v5284 = vld [vmem:[#allocation7 + $0x638] sm:$0xff]
    %v5285 = vld [vmem:[#allocation7 + $0x640] sm:$0xff]
    %v5286 = vld [vmem:[#allocation7 + $0x648] sm:$0xff]
    %v5287 = vld [vmem:[#allocation7 + $0x650] sm:$0xff]
    %v5288 = vld [vmem:[#allocation7 + $0x658] sm:$0xff]
    %v5289 = vld [vmem:[#allocation7 + $0x660] sm:$0xff]
    %v5290 = vld [vmem:[#allocation7 + $0x668] sm:$0xff]
    %v5291 = vld [vmem:[#allocation7 + $0x670] sm:$0xff]
    %v5292 = vld [vmem:[#allocation7 + $0x678] sm:$0xff]
    %v5293 = vld [vmem:[#allocation7 + $0x680] sm:$0xff]
    %v5294 = vld [vmem:[#allocation7 + $0x688] sm:$0xff]
    %v5295 = vld [vmem:[#allocation7 + $0x690] sm:$0xff]
    %v5296 = vld [vmem:[#allocation7 + $0x698] sm:$0xff]
    %v5297 = vld [vmem:[#allocation7 + $0x6a0] sm:$0xff]
    %v5298 = vld [vmem:[#allocation7 + $0x6a8] sm:$0xff]
    %v5299 = vld [vmem:[#allocation7 + $0x6b0] sm:$0xff]
    %v5300 = vld [vmem:[#allocation7 + $0x6b8] sm:$0xff]
    %v5301 = vld [vmem:[#allocation7 + $0x6c0] sm:$0xff]
    %v5302 = vld [vmem:[#allocation7 + $0x6c8] sm:$0xff]
    %v5303 = vld [vmem:[#allocation7 + $0x6d0] sm:$0xff]
    %v5304 = vld [vmem:[#allocation7 + $0x6d8] sm:$0xff]
    %v5305 = vld [vmem:[#allocation7 + $0x6e0] sm:$0xff]
    %v5306 = vld [vmem:[#allocation7 + $0x6e8] sm:$0xff]
    %v5307 = vld [vmem:[#allocation7 + $0x6f0] sm:$0xff]
    %v5308 = vld [vmem:[#allocation7 + $0x6f8] sm:$0xff]
    %v5309 = vld [vmem:[#allocation7 + $0x700] sm:$0xff]
    %v5310 = vld [vmem:[#allocation7 + $0x708] sm:$0xff]
    %v5311 = vld [vmem:[#allocation7 + $0x710] sm:$0xff]
    %v5312 = vld [vmem:[#allocation7 + $0x718] sm:$0xff]
    %v5313 = vld [vmem:[#allocation7 + $0x720] sm:$0xff]
    %v5314 = vld [vmem:[#allocation7 + $0x728] sm:$0xff]
    %v5315 = vld [vmem:[#allocation7 + $0x730] sm:$0xff]
    %v5316 = vld [vmem:[#allocation7 + $0x738] sm:$0xff]
    %v5317 = vld [vmem:[#allocation7 + $0x740] sm:$0xff]
    %v5318 = vld [vmem:[#allocation7 + $0x748] sm:$0xff]
    %v5319 = vld [vmem:[#allocation7 + $0x750] sm:$0xff]
    %v5320 = vld [vmem:[#allocation7 + $0x758] sm:$0xff]
    %v5321 = vld [vmem:[#allocation7 + $0x760] sm:$0xff]
    %v5322 = vld [vmem:[#allocation7 + $0x768] sm:$0xff]
    %v5323 = vld [vmem:[#allocation7 + $0x770] sm:$0xff]
    %v5324 = vld [vmem:[#allocation7 + $0x778] sm:$0xff]
    %v5325 = vld [vmem:[#allocation7 + $0x780] sm:$0xff]
    %v5326 = vld [vmem:[#allocation7 + $0x788] sm:$0xff]
    %v5327 = vld [vmem:[#allocation7 + $0x790] sm:$0xff]
    %v5328 = vld [vmem:[#allocation7 + $0x798] sm:$0xff]
    %v5329 = vld [vmem:[#allocation7 + $0x7a0] sm:$0xff]
    %v5330 = vld [vmem:[#allocation7 + $0x7a8] sm:$0xff]
    %v5331 = vld [vmem:[#allocation7 + $0x7b0] sm:$0xff]
    %v5332 = vld [vmem:[#allocation7 + $0x7b8] sm:$0xff]
    %v5333 = vld [vmem:[#allocation7 + $0x7c0] sm:$0xff]
    %v5334 = vld [vmem:[#allocation7 + $0x7c8] sm:$0xff]
    %v5335 = vld [vmem:[#allocation7 + $0x7d0] sm:$0xff]
    %v5336 = vld [vmem:[#allocation7 + $0x7d8] sm:$0xff]
    %v5337 = vld [vmem:[#allocation7 + $0x7e0] sm:$0xff]
    %v5338 = vld [vmem:[#allocation7 + $0x7e8] sm:$0xff]
    %v5339 = vld [vmem:[#allocation7 + $0x7f0] sm:$0xff]
    %v5340 = vld [vmem:[#allocation7 + $0x7f8] sm:$0xff]
    %v5341 = vld [vmem:[#allocation7 + $0x800] sm:$0xff]
    %v5342 = vld [vmem:[#allocation7 + $0x808] sm:$0xff]
    %v5343 = vld [vmem:[#allocation7 + $0x810] sm:$0xff]
    %v5344 = vld [vmem:[#allocation7 + $0x818] sm:$0xff]
    %v5345 = vld [vmem:[#allocation7 + $0x820] sm:$0xff]
    %v5346 = vld [vmem:[#allocation7 + $0x828] sm:$0xff]
    %v5347 = vld [vmem:[#allocation7 + $0x830] sm:$0xff]
    %v5348 = vld [vmem:[#allocation7 + $0x838] sm:$0xff]
    %v5349 = vld [vmem:[#allocation7 + $0x840] sm:$0xff]
    %v5350 = vld [vmem:[#allocation7 + $0x848] sm:$0xff]
    %v5351 = vld [vmem:[#allocation7 + $0x850] sm:$0xff]
    %v5352 = vld [vmem:[#allocation7 + $0x858] sm:$0xff]
    %v5353 = vld [vmem:[#allocation7 + $0x860] sm:$0xff]
    %v5354 = vld [vmem:[#allocation7 + $0x868] sm:$0xff]
    %v5355 = vld [vmem:[#allocation7 + $0x870] sm:$0xff]
    %v5356 = vld [vmem:[#allocation7 + $0x878] sm:$0xff]
    %v5357 = vld [vmem:[#allocation7 + $0x880] sm:$0xff]
    %v5358 = vld [vmem:[#allocation7 + $0x888] sm:$0xff]
    %v5359 = vld [vmem:[#allocation7 + $0x890] sm:$0xff]
    %v5360 = vld [vmem:[#allocation7 + $0x898] sm:$0xff]
    %v5361 = vld [vmem:[#allocation7 + $0x8a0] sm:$0xff]
    %v5362 = vld [vmem:[#allocation7 + $0x8a8] sm:$0xff]
    %v5363 = vld [vmem:[#allocation7 + $0x8b0] sm:$0xff]
    %v5364 = vld [vmem:[#allocation7 + $0x8b8] sm:$0xff]
    %v5365 = vld [vmem:[#allocation7 + $0x8c0] sm:$0xff]
    %v5366 = vld [vmem:[#allocation7 + $0x8c8] sm:$0xff]
    %v5367 = vld [vmem:[#allocation7 + $0x8d0] sm:$0xff]
    %v5368 = vld [vmem:[#allocation7 + $0x8d8] sm:$0xff]
    %v5369 = vld [vmem:[#allocation7 + $0x8e0] sm:$0xff]
    %v5370 = vld [vmem:[#allocation7 + $0x8e8] sm:$0xff]
    %v5371 = vld [vmem:[#allocation7 + $0x8f0] sm:$0xff]
    %v5372 = vld [vmem:[#allocation7 + $0x8f8] sm:$0xff]
    %v5373 = vld [vmem:[#allocation7 + $0x900] sm:$0xff]
    %v5374 = vld [vmem:[#allocation7 + $0x908] sm:$0xff]
    %v5375 = vld [vmem:[#allocation7 + $0x910] sm:$0xff]
    %v5376 = vld [vmem:[#allocation7 + $0x918] sm:$0xff]
    %v5377 = vld [vmem:[#allocation7 + $0x920] sm:$0xff]
    %v5378 = vld [vmem:[#allocation7 + $0x928] sm:$0xff]
    %v5379 = vld [vmem:[#allocation7 + $0x930] sm:$0xff]
    %v5380 = vld [vmem:[#allocation7 + $0x938] sm:$0xff]
    %v5381 = vld [vmem:[#allocation7 + $0x940] sm:$0xff]
    %v5382 = vld [vmem:[#allocation7 + $0x948] sm:$0xff]
    %v5383 = vld [vmem:[#allocation7 + $0x950] sm:$0xff]
    %v5384 = vld [vmem:[#allocation7 + $0x958] sm:$0xff]
    %v5385 = vld [vmem:[#allocation7 + $0x960] sm:$0xff]
    %v5386 = vld [vmem:[#allocation7 + $0x968] sm:$0xff]
    %v5387 = vld [vmem:[#allocation7 + $0x970] sm:$0xff]
    %v5388 = vld [vmem:[#allocation7 + $0x978] sm:$0xff]
    %v5389 = vld [vmem:[#allocation7 + $0x980] sm:$0xff]
    %v5390 = vld [vmem:[#allocation7 + $0x988] sm:$0xff]
    %v5391 = vld [vmem:[#allocation7 + $0x990] sm:$0xff]
    %v5392 = vld [vmem:[#allocation7 + $0x998] sm:$0xff]
    %v5393 = vld [vmem:[#allocation7 + $0x9a0] sm:$0xff]
    %v5394 = vld [vmem:[#allocation7 + $0x9a8] sm:$0xff]
    %v5395 = vld [vmem:[#allocation7 + $0x9b0] sm:$0xff]
    %v5396 = vld [vmem:[#allocation7 + $0x9b8] sm:$0xff]
    %v5397 = vld [vmem:[#allocation7 + $0x9c0] sm:$0xff]
    %v5398 = vld [vmem:[#allocation7 + $0x9c8] sm:$0xff]
    %v5399 = vld [vmem:[#allocation7 + $0x9d0] sm:$0xff]
    %v5400 = vld [vmem:[#allocation7 + $0x9d8] sm:$0xff]
    %v5401 = vld [vmem:[#allocation7 + $0x9e0] sm:$0xff]
    %v5402 = vld [vmem:[#allocation7 + $0x9e8] sm:$0xff]
    %v5403 = vld [vmem:[#allocation7 + $0x9f0] sm:$0xff]
    %v5404 = vld [vmem:[#allocation7 + $0x9f8] sm:$0xff]
    %v5405 = vld [vmem:[#allocation7 + $0xa00] sm:$0xff]
    %v5406 = vld [vmem:[#allocation7 + $0xa08] sm:$0xff]
    %v5407 = vld [vmem:[#allocation7 + $0xa10] sm:$0xff]
    %v5408 = vld [vmem:[#allocation7 + $0xa18] sm:$0xff]
    %v5409 = vld [vmem:[#allocation7 + $0xa20] sm:$0xff]
    %v5410 = vld [vmem:[#allocation7 + $0xa28] sm:$0xff]
    %v5411 = vld [vmem:[#allocation7 + $0xa30] sm:$0xff]
    %v5412 = vld [vmem:[#allocation7 + $0xa38] sm:$0xff]
    %v5413 = vld [vmem:[#allocation7 + $0xa40] sm:$0xff]
    %v5414 = vld [vmem:[#allocation7 + $0xa48] sm:$0xff]
    %v5415 = vld [vmem:[#allocation7 + $0xa50] sm:$0xff]
    %v5416 = vld [vmem:[#allocation7 + $0xa58] sm:$0xff]
    %v5417 = vld [vmem:[#allocation7 + $0xa60] sm:$0xff]
    %v5418 = vld [vmem:[#allocation7 + $0xa68] sm:$0xff]
    %v5419 = vld [vmem:[#allocation7 + $0xa70] sm:$0xff]
    %v5420 = vld [vmem:[#allocation7 + $0xa78] sm:$0xff]
    %v5421 = vld [vmem:[#allocation7 + $0xa80] sm:$0xff]
    %v5422 = vld [vmem:[#allocation7 + $0xa88] sm:$0xff]
    %v5423 = vld [vmem:[#allocation7 + $0xa90] sm:$0xff]
    %v5424 = vld [vmem:[#allocation7 + $0xa98] sm:$0xff]
    %v5425 = vld [vmem:[#allocation7 + $0xaa0] sm:$0xff]
    %v5426 = vld [vmem:[#allocation7 + $0xaa8] sm:$0xff]
    %v5427 = vld [vmem:[#allocation7 + $0xab0] sm:$0xff]
    %v5428 = vld [vmem:[#allocation7 + $0xab8] sm:$0xff]
    %v5429 = vld [vmem:[#allocation7 + $0xac0] sm:$0xff]
    %v5430 = vld [vmem:[#allocation7 + $0xac8] sm:$0xff]
    %v5431 = vld [vmem:[#allocation7 + $0xad0] sm:$0xff]
    %v5432 = vld [vmem:[#allocation7 + $0xad8] sm:$0xff]
    %v5433 = vld [vmem:[#allocation7 + $0xae0] sm:$0xff]
    %v5434 = vld [vmem:[#allocation7 + $0xae8] sm:$0xff]
    %v5435 = vld [vmem:[#allocation7 + $0xaf0] sm:$0xff]
    %v5436 = vld [vmem:[#allocation7 + $0xaf8] sm:$0xff]
    %v5437 = vld [vmem:[#allocation7 + $0xb00] sm:$0xff]
    %v5438 = vld [vmem:[#allocation7 + $0xb08] sm:$0xff]
    %v5439 = vld [vmem:[#allocation7 + $0xb10] sm:$0xff]
    %v5440 = vld [vmem:[#allocation7 + $0xb18] sm:$0xff]
    %v5441 = vld [vmem:[#allocation7 + $0xb20] sm:$0xff]
    %v5442 = vld [vmem:[#allocation7 + $0xb28] sm:$0xff]
    %v5443 = vld [vmem:[#allocation7 + $0xb30] sm:$0xff]
    %v5444 = vld [vmem:[#allocation7 + $0xb38] sm:$0xff]
    %v5445 = vld [vmem:[#allocation7 + $0xb40] sm:$0xff]
    %v5446 = vld [vmem:[#allocation7 + $0xb48] sm:$0xff]
    %v5447 = vld [vmem:[#allocation7 + $0xb50] sm:$0xff]
    %v5448 = vld [vmem:[#allocation7 + $0xb58] sm:$0xff]
    %v5449 = vld [vmem:[#allocation7 + $0xb60] sm:$0xff]
    %v5450 = vld [vmem:[#allocation7 + $0xb68] sm:$0xff]
    %v5451 = vld [vmem:[#allocation7 + $0xb70] sm:$0xff]
    %v5452 = vld [vmem:[#allocation7 + $0xb78] sm:$0xff]
    %v5453 = vld [vmem:[#allocation7 + $0xb80] sm:$0xff]
    %v5454 = vld [vmem:[#allocation7 + $0xb88] sm:$0xff]
    %v5455 = vld [vmem:[#allocation7 + $0xb90] sm:$0xff]
    %v5456 = vld [vmem:[#allocation7 + $0xb98] sm:$0xff]
    %v5457 = vld [vmem:[#allocation7 + $0xba0] sm:$0xff]
    %v5458 = vld [vmem:[#allocation7 + $0xba8] sm:$0xff]
    %v5459 = vld [vmem:[#allocation7 + $0xbb0] sm:$0xff]
    %v5460 = vld [vmem:[#allocation7 + $0xbb8] sm:$0xff]
    %v5461 = vld [vmem:[#allocation7 + $0xbc0] sm:$0xff]
    %v5462 = vld [vmem:[#allocation7 + $0xbc8] sm:$0xff]
    %v5463 = vld [vmem:[#allocation7 + $0xbd0] sm:$0xff]
    %v5464 = vld [vmem:[#allocation7 + $0xbd8] sm:$0xff]
    %v5465 = vld [vmem:[#allocation7 + $0xbe0] sm:$0xff]
    %v5466 = vld [vmem:[#allocation7 + $0xbe8] sm:$0xff]
    %v5467 = vld [vmem:[#allocation7 + $0xbf0] sm:$0xff]
    %v5468 = vld [vmem:[#allocation7 + $0xbf8] sm:$0xff]
    %v5469 = vld [vmem:[#allocation7 + $0xc00] sm:$0xff]
    %v5470 = vld [vmem:[#allocation7 + $0xc08] sm:$0xff]
    %v5471 = vld [vmem:[#allocation7 + $0xc10] sm:$0xff]
    %v5472 = vld [vmem:[#allocation7 + $0xc18] sm:$0xff]
    %v5473 = vld [vmem:[#allocation7 + $0xc20] sm:$0xff]
    %v5474 = vld [vmem:[#allocation7 + $0xc28] sm:$0xff]
    %v5475 = vld [vmem:[#allocation7 + $0xc30] sm:$0xff]
    %v5476 = vld [vmem:[#allocation7 + $0xc38] sm:$0xff]
    %v5477 = vld [vmem:[#allocation7 + $0xc40] sm:$0xff]
    %v5478 = vld [vmem:[#allocation7 + $0xc48] sm:$0xff]
    %v5479 = vld [vmem:[#allocation7 + $0xc50] sm:$0xff]
    %v5480 = vld [vmem:[#allocation7 + $0xc58] sm:$0xff]
    %v5481 = vld [vmem:[#allocation7 + $0xc60] sm:$0xff]
    %v5482 = vld [vmem:[#allocation7 + $0xc68] sm:$0xff]
    %v5483 = vld [vmem:[#allocation7 + $0xc70] sm:$0xff]
    %v5484 = vld [vmem:[#allocation7 + $0xc78] sm:$0xff]
    %v5485 = vld [vmem:[#allocation7 + $0xc80] sm:$0xff]
    %v5486 = vld [vmem:[#allocation7 + $0xc88] sm:$0xff]
    %v5487 = vld [vmem:[#allocation7 + $0xc90] sm:$0xff]
    %v5488 = vld [vmem:[#allocation7 + $0xc98] sm:$0xff]
    %v5489 = vld [vmem:[#allocation7 + $0xca0] sm:$0xff]
    %v5490 = vld [vmem:[#allocation7 + $0xca8] sm:$0xff]
    %v5491 = vld [vmem:[#allocation7 + $0xcb0] sm:$0xff]
    %v5492 = vld [vmem:[#allocation7 + $0xcb8] sm:$0xff]
    %v5493 = vld [vmem:[#allocation7 + $0xcc0] sm:$0xff]
    %v5494 = vld [vmem:[#allocation7 + $0xcc8] sm:$0xff]
    %v5495 = vld [vmem:[#allocation7 + $0xcd0] sm:$0xff]
    %v5496 = vld [vmem:[#allocation7 + $0xcd8] sm:$0xff]
    %v5497 = vld [vmem:[#allocation7 + $0xce0] sm:$0xff]
    %v5498 = vld [vmem:[#allocation7 + $0xce8] sm:$0xff]
    %v5499 = vld [vmem:[#allocation7 + $0xcf0] sm:$0xff]
    %v5500 = vld [vmem:[#allocation7 + $0xcf8] sm:$0xff]
    %v5501 = vld [vmem:[#allocation7 + $0xd00] sm:$0xff]
    %v5502 = vld [vmem:[#allocation7 + $0xd08] sm:$0xff]
    %v5503 = vld [vmem:[#allocation7 + $0xd10] sm:$0xff]
    %v5504 = vld [vmem:[#allocation7 + $0xd18] sm:$0xff]
    %v5505 = vld [vmem:[#allocation7 + $0xd20] sm:$0xff]
    %v5506 = vld [vmem:[#allocation7 + $0xd28] sm:$0xff]
    %v5507 = vld [vmem:[#allocation7 + $0xd30] sm:$0xff]
    %v5508 = vld [vmem:[#allocation7 + $0xd38] sm:$0xff]
    %v5509 = vld [vmem:[#allocation7 + $0xd40] sm:$0xff]
    %v5510 = vld [vmem:[#allocation7 + $0xd48] sm:$0xff]
    %v5511 = vld [vmem:[#allocation7 + $0xd50] sm:$0xff]
    %v5512 = vld [vmem:[#allocation7 + $0xd58] sm:$0xff]
    %v5513 = vld [vmem:[#allocation7 + $0xd60] sm:$0xff]
    %v5514 = vld [vmem:[#allocation7 + $0xd68] sm:$0xff]
    %v5515 = vld [vmem:[#allocation7 + $0xd70] sm:$0xff]
    %v5516 = vld [vmem:[#allocation7 + $0xd78] sm:$0xff]
    %v5517 = vld [vmem:[#allocation7 + $0xd80] sm:$0xff]
    %v5518 = vld [vmem:[#allocation7 + $0xd88] sm:$0xff]
    %v5519 = vld [vmem:[#allocation7 + $0xd90] sm:$0xff]
    %v5520 = vld [vmem:[#allocation7 + $0xd98] sm:$0xff]
    %v5521 = vld [vmem:[#allocation7 + $0xda0] sm:$0xff]
    %v5522 = vld [vmem:[#allocation7 + $0xda8] sm:$0xff]
    %v5523 = vld [vmem:[#allocation7 + $0xdb0] sm:$0xff]
    %v5524 = vld [vmem:[#allocation7 + $0xdb8] sm:$0xff]
    %v5525 = vld [vmem:[#allocation7 + $0xdc0] sm:$0xff]
    %v5526 = vld [vmem:[#allocation7 + $0xdc8] sm:$0xff]
    %v5527 = vld [vmem:[#allocation7 + $0xdd0] sm:$0xff]
    %v5528 = vld [vmem:[#allocation7 + $0xdd8] sm:$0xff]
    %v5529 = vld [vmem:[#allocation7 + $0xde0] sm:$0xff]
    %v5530 = vld [vmem:[#allocation7 + $0xde8] sm:$0xff]
    %v5531 = vld [vmem:[#allocation7 + $0xdf0] sm:$0xff]
    %v5532 = vld [vmem:[#allocation7 + $0xdf8] sm:$0xff]
    %v5533 = vld [vmem:[#allocation7 + $0xe00] sm:$0xff]
    %v5534 = vld [vmem:[#allocation7 + $0xe08] sm:$0xff]
    %v5535 = vld [vmem:[#allocation7 + $0xe10] sm:$0xff]
    %v5536 = vld [vmem:[#allocation7 + $0xe18] sm:$0xff]
    %v5537 = vld [vmem:[#allocation7 + $0xe20] sm:$0xff]
    %v5538 = vld [vmem:[#allocation7 + $0xe28] sm:$0xff]
    %v5539 = vld [vmem:[#allocation7 + $0xe30] sm:$0xff]
    %v5540 = vld [vmem:[#allocation7 + $0xe38] sm:$0xff]
    %v5541 = vld [vmem:[#allocation7 + $0xe40] sm:$0xff]
    %v5542 = vld [vmem:[#allocation7 + $0xe48] sm:$0xff]
    %v5543 = vld [vmem:[#allocation7 + $0xe50] sm:$0xff]
    %v5544 = vld [vmem:[#allocation7 + $0xe58] sm:$0xff]
    %v5545 = vld [vmem:[#allocation7 + $0xe60] sm:$0xff]
    %v5546 = vld [vmem:[#allocation7 + $0xe68] sm:$0xff]
    %v5547 = vld [vmem:[#allocation7 + $0xe70] sm:$0xff]
    %v5548 = vld [vmem:[#allocation7 + $0xe78] sm:$0xff]
    %v5549 = vld [vmem:[#allocation7 + $0xe80] sm:$0xff]
    %v5550 = vld [vmem:[#allocation7 + $0xe88] sm:$0xff]
    %v5551 = vld [vmem:[#allocation7 + $0xe90] sm:$0xff]
    %v5552 = vld [vmem:[#allocation7 + $0xe98] sm:$0xff]
    %v5553 = vld [vmem:[#allocation7 + $0xea0] sm:$0xff]
    %v5554 = vld [vmem:[#allocation7 + $0xea8] sm:$0xff]
    %v5555 = vld [vmem:[#allocation7 + $0xeb0] sm:$0xff]
    %v5556 = vld [vmem:[#allocation7 + $0xeb8] sm:$0xff]
    %v5557 = vld [vmem:[#allocation7 + $0xec0] sm:$0xff]
    %v5558 = vld [vmem:[#allocation7 + $0xec8] sm:$0xff]
    %v5559 = vld [vmem:[#allocation7 + $0xed0] sm:$0xff]
    %v5560 = vld [vmem:[#allocation7 + $0xed8] sm:$0xff]
    %v5561 = vld [vmem:[#allocation7 + $0xee0] sm:$0xff]
    %v5562 = vld [vmem:[#allocation7 + $0xee8] sm:$0xff]
    %v5563 = vld [vmem:[#allocation7 + $0xef0] sm:$0xff]
    %v5564 = vld [vmem:[#allocation7 + $0xef8] sm:$0xff]
    %v5565 = vld [vmem:[#allocation7 + $0xf00] sm:$0xff]
    %v5566 = vld [vmem:[#allocation7 + $0xf08] sm:$0xff]
    %v5567 = vld [vmem:[#allocation7 + $0xf10] sm:$0xff]
    %v5568 = vld [vmem:[#allocation7 + $0xf18] sm:$0xff]
    %v5569 = vld [vmem:[#allocation7 + $0xf20] sm:$0xff]
    %v5570 = vld [vmem:[#allocation7 + $0xf28] sm:$0xff]
    %v5571 = vld [vmem:[#allocation7 + $0xf30] sm:$0xff]
    %v5572 = vld [vmem:[#allocation7 + $0xf38] sm:$0xff]
    %v5573 = vld [vmem:[#allocation7 + $0xf40] sm:$0xff]
    %v5574 = vld [vmem:[#allocation7 + $0xf48] sm:$0xff]
    %v5575 = vld [vmem:[#allocation7 + $0xf50] sm:$0xff]
    %v5576 = vld [vmem:[#allocation7 + $0xf58] sm:$0xff]
    %v5577 = vld [vmem:[#allocation7 + $0xf60] sm:$0xff]
    %v5578 = vld [vmem:[#allocation7 + $0xf68] sm:$0xff]
    %v5579 = vld [vmem:[#allocation7 + $0xf70] sm:$0xff]
    %v5580 = vld [vmem:[#allocation7 + $0xf78] sm:$0xff]
    %v5581 = vld [vmem:[#allocation7 + $0xf80] sm:$0xff]
    %v5582 = vld [vmem:[#allocation7 + $0xf88] sm:$0xff]
    %v5583 = vld [vmem:[#allocation7 + $0xf90] sm:$0xff]
    %v5584 = vld [vmem:[#allocation7 + $0xf98] sm:$0xff]
    %v5585 = vld [vmem:[#allocation7 + $0xfa0] sm:$0xff]
    %v5586 = vld [vmem:[#allocation7 + $0xfa8] sm:$0xff]
    %v5587 = vld [vmem:[#allocation7 + $0xfb0] sm:$0xff]
    %v5588 = vld [vmem:[#allocation7 + $0xfb8] sm:$0xff]
    %v5589 = vld [vmem:[#allocation7 + $0xfc0] sm:$0xff]
    %v5590 = vld [vmem:[#allocation7 + $0xfc8] sm:$0xff]
    %v5591 = vld [vmem:[#allocation7 + $0xfd0] sm:$0xff]
    %v5592 = vld [vmem:[#allocation7 + $0xfd8] sm:$0xff]
    %v5593 = vld [vmem:[#allocation7 + $0xfe0] sm:$0xff]
    %v5594 = vld [vmem:[#allocation7 + $0xfe8] sm:$0xff]
    %v5595 = vld [vmem:[#allocation7 + $0xff0] sm:$0xff]
    %v5596 = vld [vmem:[#allocation7 + $0xff8] sm:$0xff]
    %v5597 = vld [vmem:[#allocation7 + $0x1000] sm:$0xff]
    %v5598 = vld [vmem:[#allocation7 + $0x1008] sm:$0xff]
    %v5599 = vld [vmem:[#allocation7 + $0x1010] sm:$0xff]
    %v5600 = vld [vmem:[#allocation7 + $0x1018] sm:$0xff]
    %v5601 = vld [vmem:[#allocation7 + $0x1020] sm:$0xff]
    %v5602 = vld [vmem:[#allocation7 + $0x1028] sm:$0xff]
    %v5603 = vld [vmem:[#allocation7 + $0x1030] sm:$0xff]
    %v5604 = vld [vmem:[#allocation7 + $0x1038] sm:$0xff]
    %v5605 = vld [vmem:[#allocation7 + $0x1040] sm:$0xff]
    %v5606 = vld [vmem:[#allocation7 + $0x1048] sm:$0xff]
    %v5607 = vld [vmem:[#allocation7 + $0x1050] sm:$0xff]
    %v5608 = vld [vmem:[#allocation7 + $0x1058] sm:$0xff]
    %v5609 = vld [vmem:[#allocation7 + $0x1060] sm:$0xff]
    %v5610 = vld [vmem:[#allocation7 + $0x1068] sm:$0xff]
    %v5611 = vld [vmem:[#allocation7 + $0x1070] sm:$0xff]
    %v5612 = vld [vmem:[#allocation7 + $0x1078] sm:$0xff]
    %v5613 = vld [vmem:[#allocation7 + $0x1080] sm:$0xff]
    %v5614 = vld [vmem:[#allocation7 + $0x1088] sm:$0xff]
    %v5615 = vld [vmem:[#allocation7 + $0x1090] sm:$0xff]
    %v5616 = vld [vmem:[#allocation7 + $0x1098] sm:$0xff]
    %v5617 = vld [vmem:[#allocation7 + $0x10a0] sm:$0xff]
    %v5618 = vld [vmem:[#allocation7 + $0x10a8] sm:$0xff]
    %v5619 = vld [vmem:[#allocation7 + $0x10b0] sm:$0xff]
    %v5620 = vld [vmem:[#allocation7 + $0x10b8] sm:$0xff]
    %v5621 = vld [vmem:[#allocation7 + $0x10c0] sm:$0xff]
    %v5622 = vld [vmem:[#allocation7 + $0x10c8] sm:$0xff]
    %v5623 = vld [vmem:[#allocation7 + $0x10d0] sm:$0xff]
    %v5624 = vld [vmem:[#allocation7 + $0x10d8] sm:$0xff]
    %v5625 = vld [vmem:[#allocation7 + $0x10e0] sm:$0xff]
    %v5626 = vld [vmem:[#allocation7 + $0x10e8] sm:$0xff]
    %v5627 = vld [vmem:[#allocation7 + $0x10f0] sm:$0xff]
    %v5628 = vld [vmem:[#allocation7 + $0x10f8] sm:$0xff]
    %v5629 = vld [vmem:[#allocation7 + $0x1100] sm:$0xff]
    %v5630 = vld [vmem:[#allocation7 + $0x1108] sm:$0xff]
    %v5631 = vld [vmem:[#allocation7 + $0x1110] sm:$0xff]
    %v5632 = vld [vmem:[#allocation7 + $0x1118] sm:$0xff]
    %v5633 = vld [vmem:[#allocation7 + $0x1120] sm:$0xff]
    %v5634 = vld [vmem:[#allocation7 + $0x1128] sm:$0xff]
    %v5635 = vld [vmem:[#allocation7 + $0x1130] sm:$0xff]
    %v5636 = vld [vmem:[#allocation7 + $0x1138] sm:$0xff]
    %v5637 = vld [vmem:[#allocation7 + $0x1140] sm:$0xff]
    %v5638 = vld [vmem:[#allocation7 + $0x1148] sm:$0xff]
    %v5639 = vld [vmem:[#allocation7 + $0x1150] sm:$0xff]
    %v5640 = vld [vmem:[#allocation7 + $0x1158] sm:$0xff]
    %v5641 = vld [vmem:[#allocation7 + $0x1160] sm:$0xff]
    %v5642 = vld [vmem:[#allocation7 + $0x1168] sm:$0xff]
    %v5643 = vld [vmem:[#allocation7 + $0x1170] sm:$0xff]
    %v5644 = vld [vmem:[#allocation7 + $0x1178] sm:$0xff]
    %v5645 = vld [vmem:[#allocation7 + $0x1180] sm:$0xff]
    %v5646 = vld [vmem:[#allocation7 + $0x1188] sm:$0xff]
    %v5647 = vld [vmem:[#allocation7 + $0x1190] sm:$0xff]
    %v5648 = vld [vmem:[#allocation7 + $0x1198] sm:$0xff]
    %v5649 = vld [vmem:[#allocation7 + $0x11a0] sm:$0xff]
    %v5650 = vld [vmem:[#allocation7 + $0x11a8] sm:$0xff]
    %v5651 = vld [vmem:[#allocation7 + $0x11b0] sm:$0xff]
    %v5652 = vld [vmem:[#allocation7 + $0x11b8] sm:$0xff]
    %v5653 = vld [vmem:[#allocation7 + $0x11c0] sm:$0xff]
    %v5654 = vld [vmem:[#allocation7 + $0x11c8] sm:$0xff]
    %v5655 = vld [vmem:[#allocation7 + $0x11d0] sm:$0xff]
    %v5656 = vld [vmem:[#allocation7 + $0x11d8] sm:$0xff]
    %v5657 = vld [vmem:[#allocation7 + $0x11e0] sm:$0xff]
    %v5658 = vld [vmem:[#allocation7 + $0x11e8] sm:$0xff]
    %v5659 = vld [vmem:[#allocation7 + $0x11f0] sm:$0xff]
    %v5660 = vld [vmem:[#allocation7 + $0x11f8] sm:$0xff]
    %v5661 = vld [vmem:[#allocation7 + $0x1200] sm:$0xff]
    %v5662 = vld [vmem:[#allocation7 + $0x1208] sm:$0xff]
    %v5663 = vld [vmem:[#allocation7 + $0x1210] sm:$0xff]
    %v5664 = vld [vmem:[#allocation7 + $0x1218] sm:$0xff]
    %v5665 = vld [vmem:[#allocation7 + $0x1220] sm:$0xff]
    %v5666 = vld [vmem:[#allocation7 + $0x1228] sm:$0xff]
    %v5667 = vld [vmem:[#allocation7 + $0x1230] sm:$0xff]
    %v5668 = vld [vmem:[#allocation7 + $0x1238] sm:$0xff]
    %v5669 = vld [vmem:[#allocation7 + $0x1240] sm:$0xff]
    %v5670 = vld [vmem:[#allocation7 + $0x1248] sm:$0xff]
    %v5671 = vld [vmem:[#allocation7 + $0x1250] sm:$0xff]
    %v5672 = vld [vmem:[#allocation7 + $0x1258] sm:$0xff]
    %v5673 = vld [vmem:[#allocation7 + $0x1260] sm:$0xff]
    %v5674 = vld [vmem:[#allocation7 + $0x1268] sm:$0xff]
    %v5675 = vld [vmem:[#allocation7 + $0x1270] sm:$0xff]
    %v5676 = vld [vmem:[#allocation7 + $0x1278] sm:$0xff]
    %v5677 = vld [vmem:[#allocation7 + $0x1280] sm:$0xff]
    %v5678 = vld [vmem:[#allocation7 + $0x1288] sm:$0xff]
    %v5679 = vld [vmem:[#allocation7 + $0x1290] sm:$0xff]
    %v5680 = vld [vmem:[#allocation7 + $0x1298] sm:$0xff]
    %v5681 = vld [vmem:[#allocation7 + $0x12a0] sm:$0xff]
    %v5682 = vld [vmem:[#allocation7 + $0x12a8] sm:$0xff]
    %v5683 = vld [vmem:[#allocation7 + $0x12b0] sm:$0xff]
    %v5684 = vld [vmem:[#allocation7 + $0x12b8] sm:$0xff]
    %v5685 = vld [vmem:[#allocation7 + $0x12c0] sm:$0xff]
    %v5686 = vld [vmem:[#allocation7 + $0x12c8] sm:$0xff]
    %v5687 = vld [vmem:[#allocation7 + $0x12d0] sm:$0xff]
    %v5688 = vld [vmem:[#allocation7 + $0x12d8] sm:$0xff]
    %v5689 = vld [vmem:[#allocation7 + $0x12e0] sm:$0xff]
    %v5690 = vld [vmem:[#allocation7 + $0x12e8] sm:$0xff]
    %v5691 = vld [vmem:[#allocation7 + $0x12f0] sm:$0xff]
    %v5692 = vld [vmem:[#allocation7 + $0x12f8] sm:$0xff]
    %v5693 = vld [vmem:[#allocation7 + $0x1300] sm:$0xff]
    %v5694 = vld [vmem:[#allocation7 + $0x1308] sm:$0xff]
    %v5695 = vld [vmem:[#allocation7 + $0x1310] sm:$0xff]
    %v5696 = vld [vmem:[#allocation7 + $0x1318] sm:$0xff]
    %v5697 = vld [vmem:[#allocation7 + $0x1320] sm:$0xff]
    %v5698 = vld [vmem:[#allocation7 + $0x1328] sm:$0xff]
    %v5699 = vld [vmem:[#allocation7 + $0x1330] sm:$0xff]
    %v5700 = vld [vmem:[#allocation7 + $0x1338] sm:$0xff]
    %v5701 = vld [vmem:[#allocation7 + $0x1340] sm:$0xff]
    %v5702 = vld [vmem:[#allocation7 + $0x1348] sm:$0xff]
    %v5703 = vld [vmem:[#allocation7 + $0x1350] sm:$0xff]
    %v5704 = vld [vmem:[#allocation7 + $0x1358] sm:$0xff]
    %v5705 = vld [vmem:[#allocation7 + $0x1360] sm:$0xff]
    %v5706 = vld [vmem:[#allocation7 + $0x1368] sm:$0xff]
    %v5707 = vld [vmem:[#allocation7 + $0x1370] sm:$0xff]
    %v5708 = vld [vmem:[#allocation7 + $0x1378] sm:$0xff]
    %v5709 = vld [vmem:[#allocation7 + $0x1380] sm:$0xff]
    %v5710 = vld [vmem:[#allocation7 + $0x1388] sm:$0xff]
    %v5711 = vld [vmem:[#allocation7 + $0x1390] sm:$0xff]
    %v5712 = vld [vmem:[#allocation7 + $0x1398] sm:$0xff]
    %v5713 = vld [vmem:[#allocation7 + $0x13a0] sm:$0xff]
    %v5714 = vld [vmem:[#allocation7 + $0x13a8] sm:$0xff]
    %v5715 = vld [vmem:[#allocation7 + $0x13b0] sm:$0xff]
    %v5716 = vld [vmem:[#allocation7 + $0x13b8] sm:$0xff]
    %v5717 = vld [vmem:[#allocation7 + $0x13c0] sm:$0xff]
    %v5718 = vld [vmem:[#allocation7 + $0x13c8] sm:$0xff]
    %v5719 = vld [vmem:[#allocation7 + $0x13d0] sm:$0xff]
    %v5720 = vld [vmem:[#allocation7 + $0x13d8] sm:$0xff]
    %v5721 = vld [vmem:[#allocation7 + $0x13e0] sm:$0xff]
    %v5722 = vld [vmem:[#allocation7 + $0x13e8] sm:$0xff]
    %v5723 = vld [vmem:[#allocation7 + $0x13f0] sm:$0xff]
    %v5724 = vld [vmem:[#allocation7 + $0x13f8] sm:$0xff]
    %v5725 = vld [vmem:[#allocation7 + $0x1400] sm:$0xff]
    %v5726 = vld [vmem:[#allocation7 + $0x1408] sm:$0xff]
    %v5727 = vld [vmem:[#allocation7 + $0x1410] sm:$0xff]
    %v5728 = vld [vmem:[#allocation7 + $0x1418] sm:$0xff]
    %v5729 = vld [vmem:[#allocation7 + $0x1420] sm:$0xff]
    %v5730 = vld [vmem:[#allocation7 + $0x1428] sm:$0xff]
    %v5731 = vld [vmem:[#allocation7 + $0x1430] sm:$0xff]
    %v5732 = vld [vmem:[#allocation7 + $0x1438] sm:$0xff]
    %v5733 = vld [vmem:[#allocation7 + $0x1440] sm:$0xff]
    %v5734 = vld [vmem:[#allocation7 + $0x1448] sm:$0xff]
    %v5735 = vld [vmem:[#allocation7 + $0x1450] sm:$0xff]
    %v5736 = vld [vmem:[#allocation7 + $0x1458] sm:$0xff]
    %v5737 = vld [vmem:[#allocation7 + $0x1460] sm:$0xff]
    %v5738 = vld [vmem:[#allocation7 + $0x1468] sm:$0xff]
    %v5739 = vld [vmem:[#allocation7 + $0x1470] sm:$0xff]
    %v5740 = vld [vmem:[#allocation7 + $0x1478] sm:$0xff]
    %v5741 = vld [vmem:[#allocation7 + $0x1480] sm:$0xff]
    %v5742 = vld [vmem:[#allocation7 + $0x1488] sm:$0xff]
    %v5743 = vld [vmem:[#allocation7 + $0x1490] sm:$0xff]
    %v5744 = vld [vmem:[#allocation7 + $0x1498] sm:$0xff]
    %v5745 = vld [vmem:[#allocation7 + $0x14a0] sm:$0xff]
    %v5746 = vld [vmem:[#allocation7 + $0x14a8] sm:$0xff]
    %v5747 = vld [vmem:[#allocation7 + $0x14b0] sm:$0xff]
    %v5748 = vld [vmem:[#allocation7 + $0x14b8] sm:$0xff]
    %v5749 = vld [vmem:[#allocation7 + $0x14c0] sm:$0xff]
    %v5750 = vld [vmem:[#allocation7 + $0x14c8] sm:$0xff]
    %v5751 = vld [vmem:[#allocation7 + $0x14d0] sm:$0xff]
    %v5752 = vld [vmem:[#allocation7 + $0x14d8] sm:$0xff]
    %v5753 = vld [vmem:[#allocation7 + $0x14e0] sm:$0xff]
    %v5754 = vld [vmem:[#allocation7 + $0x14e8] sm:$0xff]
    %v5755 = vld [vmem:[#allocation7 + $0x14f0] sm:$0xff]
    %v5756 = vld [vmem:[#allocation7 + $0x14f8] sm:$0xff]
    %v5757 = vld [vmem:[#allocation7 + $0x1500] sm:$0xff]
    %v5758 = vld [vmem:[#allocation7 + $0x1508] sm:$0xff]
    %v5759 = vld [vmem:[#allocation7 + $0x1510] sm:$0xff]
    %v5760 = vld [vmem:[#allocation7 + $0x1518] sm:$0xff]
    %v5761 = vld [vmem:[#allocation7 + $0x1520] sm:$0xff]
    %v5762 = vld [vmem:[#allocation7 + $0x1528] sm:$0xff]
    %v5763 = vld [vmem:[#allocation7 + $0x1530] sm:$0xff]
    %v5764 = vld [vmem:[#allocation7 + $0x1538] sm:$0xff]
    %v5765 = vld [vmem:[#allocation7 + $0x1540] sm:$0xff]
    %v5766 = vld [vmem:[#allocation7 + $0x1548] sm:$0xff]
    %v5767 = vld [vmem:[#allocation7 + $0x1550] sm:$0xff]
    %v5768 = vld [vmem:[#allocation7 + $0x1558] sm:$0xff]
    %v5769 = vld [vmem:[#allocation7 + $0x1560] sm:$0xff]
    %v5770 = vld [vmem:[#allocation7 + $0x1568] sm:$0xff]
    %v5771 = vld [vmem:[#allocation7 + $0x1570] sm:$0xff]
    %v5772 = vld [vmem:[#allocation7 + $0x1578] sm:$0xff]
    %v5773 = vld [vmem:[#allocation7 + $0x1580] sm:$0xff]
    %v5774 = vld [vmem:[#allocation7 + $0x1588] sm:$0xff]
    %v5775 = vld [vmem:[#allocation7 + $0x1590] sm:$0xff]
    %v5776 = vld [vmem:[#allocation7 + $0x1598] sm:$0xff]
    %v5777 = vld [vmem:[#allocation7 + $0x15a0] sm:$0xff]
    %v5778 = vld [vmem:[#allocation7 + $0x15a8] sm:$0xff]
    %v5779 = vld [vmem:[#allocation7 + $0x15b0] sm:$0xff]
    %v5780 = vld [vmem:[#allocation7 + $0x15b8] sm:$0xff]
    %v5781 = vld [vmem:[#allocation7 + $0x15c0] sm:$0xff]
    %v5782 = vld [vmem:[#allocation7 + $0x15c8] sm:$0xff]
    %v5783 = vld [vmem:[#allocation7 + $0x15d0] sm:$0xff]
    %v5784 = vld [vmem:[#allocation7 + $0x15d8] sm:$0xff]
    %v5785 = vld [vmem:[#allocation7 + $0x15e0] sm:$0xff]
    %v5786 = vld [vmem:[#allocation7 + $0x15e8] sm:$0xff]
    %v5787 = vld [vmem:[#allocation7 + $0x15f0] sm:$0xff]
    %v5788 = vld [vmem:[#allocation7 + $0x15f8] sm:$0xff]
    %v5789 = vld [vmem:[#allocation7 + $0x1600] sm:$0xff]
    %v5790 = vld [vmem:[#allocation7 + $0x1608] sm:$0xff]
    %v5791 = vld [vmem:[#allocation7 + $0x1610] sm:$0xff]
    %v5792 = vld [vmem:[#allocation7 + $0x1618] sm:$0xff]
    %v5793 = vld [vmem:[#allocation7 + $0x1620] sm:$0xff]
    %v5794 = vld [vmem:[#allocation7 + $0x1628] sm:$0xff]
    %v5795 = vld [vmem:[#allocation7 + $0x1630] sm:$0xff]
    %v5796 = vld [vmem:[#allocation7 + $0x1638] sm:$0xff]
    %v5797 = vld [vmem:[#allocation7 + $0x1640] sm:$0xff]
    %v5798 = vld [vmem:[#allocation7 + $0x1648] sm:$0xff]
    %v5799 = vld [vmem:[#allocation7 + $0x1650] sm:$0xff]
    %v5800 = vld [vmem:[#allocation7 + $0x1658] sm:$0xff]
    %v5801 = vld [vmem:[#allocation7 + $0x1660] sm:$0xff]
    %v5802 = vld [vmem:[#allocation7 + $0x1668] sm:$0xff]
    %v5803 = vld [vmem:[#allocation7 + $0x1670] sm:$0xff]
    %v5804 = vld [vmem:[#allocation7 + $0x1678] sm:$0xff]
    %v5805 = vld [vmem:[#allocation7 + $0x1680] sm:$0xff]
    %v5806 = vld [vmem:[#allocation7 + $0x1688] sm:$0xff]
    %v5807 = vld [vmem:[#allocation7 + $0x1690] sm:$0xff]
    %v5808 = vld [vmem:[#allocation7 + $0x1698] sm:$0xff]
    %v5809 = vld [vmem:[#allocation7 + $0x16a0] sm:$0xff]
    %v5810 = vld [vmem:[#allocation7 + $0x16a8] sm:$0xff]
    %v5811 = vld [vmem:[#allocation7 + $0x16b0] sm:$0xff]
    %v5812 = vld [vmem:[#allocation7 + $0x16b8] sm:$0xff]
    %v5813 = vld [vmem:[#allocation7 + $0x16c0] sm:$0xff]
    %v5814 = vld [vmem:[#allocation7 + $0x16c8] sm:$0xff]
    %v5815 = vld [vmem:[#allocation7 + $0x16d0] sm:$0xff]
    %v5816 = vld [vmem:[#allocation7 + $0x16d8] sm:$0xff]
    %v5817 = vld [vmem:[#allocation7 + $0x16e0] sm:$0xff]
    %v5818 = vld [vmem:[#allocation7 + $0x16e8] sm:$0xff]
    %v5819 = vld [vmem:[#allocation7 + $0x16f0] sm:$0xff]
    %v5820 = vld [vmem:[#allocation7 + $0x16f8] sm:$0xff]
    %v5821 = vld [vmem:[#allocation7 + $0x1700] sm:$0xff]
    %v5822 = vld [vmem:[#allocation7 + $0x1708] sm:$0xff]
    %v5823 = vld [vmem:[#allocation7 + $0x1710] sm:$0xff]
    %v5824 = vld [vmem:[#allocation7 + $0x1718] sm:$0xff]
    %v5825 = vld [vmem:[#allocation7 + $0x1720] sm:$0xff]
    %v5826 = vld [vmem:[#allocation7 + $0x1728] sm:$0xff]
    %v5827 = vld [vmem:[#allocation7 + $0x1730] sm:$0xff]
    %v5828 = vld [vmem:[#allocation7 + $0x1738] sm:$0xff]
    %v5829 = vld [vmem:[#allocation7 + $0x1740] sm:$0xff]
    %v5830 = vld [vmem:[#allocation7 + $0x1748] sm:$0xff]
    %v5831 = vld [vmem:[#allocation7 + $0x1750] sm:$0xff]
    %v5832 = vld [vmem:[#allocation7 + $0x1758] sm:$0xff]
    %v5833 = vld [vmem:[#allocation7 + $0x1760] sm:$0xff]
    %v5834 = vld [vmem:[#allocation7 + $0x1768] sm:$0xff]
    %v5835 = vld [vmem:[#allocation7 + $0x1770] sm:$0xff]
    %v5836 = vld [vmem:[#allocation7 + $0x1778] sm:$0xff]
    %v5837 = vld [vmem:[#allocation7 + $0x1780] sm:$0xff]
    %v5838 = vld [vmem:[#allocation7 + $0x1788] sm:$0xff]
    %v5839 = vld [vmem:[#allocation7 + $0x1790] sm:$0xff]
    %v5840 = vld [vmem:[#allocation7 + $0x1798] sm:$0xff]
    %v5841 = vld [vmem:[#allocation7 + $0x17a0] sm:$0xff]
    %v5842 = vld [vmem:[#allocation7 + $0x17a8] sm:$0xff]
    %v5843 = vld [vmem:[#allocation7 + $0x17b0] sm:$0xff]
    %v5844 = vld [vmem:[#allocation7 + $0x17b8] sm:$0xff]
    %v5845 = vld [vmem:[#allocation7 + $0x17c0] sm:$0xff]
    %v5846 = vld [vmem:[#allocation7 + $0x17c8] sm:$0xff]
    %v5847 = vld [vmem:[#allocation7 + $0x17d0] sm:$0xff]
    %v5848 = vld [vmem:[#allocation7 + $0x17d8] sm:$0xff]
    %v5849 = vld [vmem:[#allocation7 + $0x17e0] sm:$0xff]
    %v5850 = vld [vmem:[#allocation7 + $0x17e8] sm:$0xff]
    %v5851 = vld [vmem:[#allocation7 + $0x17f0] sm:$0xff]
    %v5852 = vld [vmem:[#allocation7 + $0x17f8] sm:$0xff]
    %v5853 = vld [vmem:[#allocation7 + $0x1800] sm:$0xff]
    %v5854 = vld [vmem:[#allocation7 + $0x1808] sm:$0xff]
    %v5855 = vld [vmem:[#allocation7 + $0x1810] sm:$0xff]
    %v5856 = vld [vmem:[#allocation7 + $0x1818] sm:$0xff]
    %v5857 = vld [vmem:[#allocation7 + $0x1820] sm:$0xff]
    %v5858 = vld [vmem:[#allocation7 + $0x1828] sm:$0xff]
    %v5859 = vld [vmem:[#allocation7 + $0x1830] sm:$0xff]
    %v5860 = vld [vmem:[#allocation7 + $0x1838] sm:$0xff]
    %v5861 = vld [vmem:[#allocation7 + $0x1840] sm:$0xff]
    %v5862 = vld [vmem:[#allocation7 + $0x1848] sm:$0xff]
    %v5863 = vld [vmem:[#allocation7 + $0x1850] sm:$0xff]
    %v5864 = vld [vmem:[#allocation7 + $0x1858] sm:$0xff]
    %v5865 = vld [vmem:[#allocation7 + $0x1860] sm:$0xff]
    %v5866 = vld [vmem:[#allocation7 + $0x1868] sm:$0xff]
    %v5867 = vld [vmem:[#allocation7 + $0x1870] sm:$0xff]
    %v5868 = vld [vmem:[#allocation7 + $0x1878] sm:$0xff]
    %v5869 = vld [vmem:[#allocation7 + $0x1880] sm:$0xff]
    %v5870 = vld [vmem:[#allocation7 + $0x1888] sm:$0xff]
    %v5871 = vld [vmem:[#allocation7 + $0x1890] sm:$0xff]
    %v5872 = vld [vmem:[#allocation7 + $0x1898] sm:$0xff]
    %v5873 = vld [vmem:[#allocation7 + $0x18a0] sm:$0xff]
    %v5874 = vld [vmem:[#allocation7 + $0x18a8] sm:$0xff]
    %v5875 = vld [vmem:[#allocation7 + $0x18b0] sm:$0xff]
    %v5876 = vld [vmem:[#allocation7 + $0x18b8] sm:$0xff]
    %v5877 = vld [vmem:[#allocation7 + $0x18c0] sm:$0xff]
    %v5878 = vld [vmem:[#allocation7 + $0x18c8] sm:$0xff]
    %v5879 = vld [vmem:[#allocation7 + $0x18d0] sm:$0xff]
    %v5880 = vld [vmem:[#allocation7 + $0x18d8] sm:$0xff]
    %v5881 = vld [vmem:[#allocation7 + $0x18e0] sm:$0xff]
    %v5882 = vld [vmem:[#allocation7 + $0x18e8] sm:$0xff]
    %v5883 = vld [vmem:[#allocation7 + $0x18f0] sm:$0xff]
    %v5884 = vld [vmem:[#allocation7 + $0x18f8] sm:$0xff]
    %v5885 = vld [vmem:[#allocation7 + $0x1900] sm:$0xff]
    %v5886 = vld [vmem:[#allocation7 + $0x1908] sm:$0xff]
    %v5887 = vld [vmem:[#allocation7 + $0x1910] sm:$0xff]
    %v5888 = vld [vmem:[#allocation7 + $0x1918] sm:$0xff]
    %v5889 = vld [vmem:[#allocation7 + $0x1920] sm:$0xff]
    %v5890 = vld [vmem:[#allocation7 + $0x1928] sm:$0xff]
    %v5891 = vld [vmem:[#allocation7 + $0x1930] sm:$0xff]
    %v5892 = vld [vmem:[#allocation7 + $0x1938] sm:$0xff]
    %v5893 = vld [vmem:[#allocation7 + $0x1940] sm:$0xff]
    %v5894 = vld [vmem:[#allocation7 + $0x1948] sm:$0xff]
    %v5895 = vld [vmem:[#allocation7 + $0x1950] sm:$0xff]
    %v5896 = vld [vmem:[#allocation7 + $0x1958] sm:$0xff]
    %v5897 = vld [vmem:[#allocation7 + $0x1960] sm:$0xff]
    %v5898 = vld [vmem:[#allocation7 + $0x1968] sm:$0xff]
    %v5899 = vld [vmem:[#allocation7 + $0x1970] sm:$0xff]
    %v5900 = vld [vmem:[#allocation7 + $0x1978] sm:$0xff]
    %v5901 = vld [vmem:[#allocation7 + $0x1980] sm:$0xff]
    %v5902 = vld [vmem:[#allocation7 + $0x1988] sm:$0xff]
    %v5903 = vld [vmem:[#allocation7 + $0x1990] sm:$0xff]
    %v5904 = vld [vmem:[#allocation7 + $0x1998] sm:$0xff]
    %v5905 = vld [vmem:[#allocation7 + $0x19a0] sm:$0xff]
    %v5906 = vld [vmem:[#allocation7 + $0x19a8] sm:$0xff]
    %v5907 = vld [vmem:[#allocation7 + $0x19b0] sm:$0xff]
    %v5908 = vld [vmem:[#allocation7 + $0x19b8] sm:$0xff]
    %v5909 = vld [vmem:[#allocation7 + $0x19c0] sm:$0xff]
    %v5910 = vld [vmem:[#allocation7 + $0x19c8] sm:$0xff]
    %v5911 = vld [vmem:[#allocation7 + $0x19d0] sm:$0xff]
    %v5912 = vld [vmem:[#allocation7 + $0x19d8] sm:$0xff]
    %v5913 = vld [vmem:[#allocation7 + $0x19e0] sm:$0xff]
    %v5914 = vld [vmem:[#allocation7 + $0x19e8] sm:$0xff]
    %v5915 = vld [vmem:[#allocation7 + $0x19f0] sm:$0xff]
    %v5916 = vld [vmem:[#allocation7 + $0x19f8] sm:$0xff]
    %v5917 = vld [vmem:[#allocation7 + $0x1a00] sm:$0xff]
    %v5918 = vld [vmem:[#allocation7 + $0x1a08] sm:$0xff]
    %v5919 = vld [vmem:[#allocation7 + $0x1a10] sm:$0xff]
    %v5920 = vld [vmem:[#allocation7 + $0x1a18] sm:$0xff]
    %v5921 = vld [vmem:[#allocation7 + $0x1a20] sm:$0xff]
    %v5922 = vld [vmem:[#allocation7 + $0x1a28] sm:$0xff]
    %v5923 = vld [vmem:[#allocation7 + $0x1a30] sm:$0xff]
    %v5924 = vld [vmem:[#allocation7 + $0x1a38] sm:$0xff]
    %v5925 = vld [vmem:[#allocation7 + $0x1a40] sm:$0xff]
    %v5926 = vld [vmem:[#allocation7 + $0x1a48] sm:$0xff]
    %v5927 = vld [vmem:[#allocation7 + $0x1a50] sm:$0xff]
    %v5928 = vld [vmem:[#allocation7 + $0x1a58] sm:$0xff]
    %v5929 = vld [vmem:[#allocation7 + $0x1a60] sm:$0xff]
    %v5930 = vld [vmem:[#allocation7 + $0x1a68] sm:$0xff]
    %v5931 = vld [vmem:[#allocation7 + $0x1a70] sm:$0xff]
    %v5932 = vld [vmem:[#allocation7 + $0x1a78] sm:$0xff]
    %v5933 = vld [vmem:[#allocation7 + $0x1a80] sm:$0xff]
    %v5934 = vld [vmem:[#allocation7 + $0x1a88] sm:$0xff]
    %v5935 = vld [vmem:[#allocation7 + $0x1a90] sm:$0xff]
    %v5936 = vld [vmem:[#allocation7 + $0x1a98] sm:$0xff]
    %v5937 = vld [vmem:[#allocation7 + $0x1aa0] sm:$0xff]
    %v5938 = vld [vmem:[#allocation7 + $0x1aa8] sm:$0xff]
    %v5939 = vld [vmem:[#allocation7 + $0x1ab0] sm:$0xff]
    %v5940 = vld [vmem:[#allocation7 + $0x1ab8] sm:$0xff]
    %v5941 = vld [vmem:[#allocation7 + $0x1ac0] sm:$0xff]
    %v5942 = vld [vmem:[#allocation7 + $0x1ac8] sm:$0xff]
    %v5943 = vld [vmem:[#allocation7 + $0x1ad0] sm:$0xff]
    %v5944 = vld [vmem:[#allocation7 + $0x1ad8] sm:$0xff]
    %v5945 = vld [vmem:[#allocation7 + $0x1ae0] sm:$0xff]
    %v5946 = vld [vmem:[#allocation7 + $0x1ae8] sm:$0xff]
    %v5947 = vld [vmem:[#allocation7 + $0x1af0] sm:$0xff]
    %v5948 = vld [vmem:[#allocation7 + $0x1af8] sm:$0xff]
    %v5949 = vld [vmem:[#allocation7 + $0x1b00] sm:$0xff]
    %v5950 = vld [vmem:[#allocation7 + $0x1b08] sm:$0xff]
    %v5951 = vld [vmem:[#allocation7 + $0x1b10] sm:$0xff]
    %v5952 = vld [vmem:[#allocation7 + $0x1b18] sm:$0xff]
    %v5953 = vld [vmem:[#allocation7 + $0x1b20] sm:$0xff]
    %v5954 = vld [vmem:[#allocation7 + $0x1b28] sm:$0xff]
    %v5955 = vld [vmem:[#allocation7 + $0x1b30] sm:$0xff]
    %v5956 = vld [vmem:[#allocation7 + $0x1b38] sm:$0xff]
    %v5957 = vld [vmem:[#allocation7 + $0x1b40] sm:$0xff]
    %v5958 = vld [vmem:[#allocation7 + $0x1b48] sm:$0xff]
    %v5959 = vld [vmem:[#allocation7 + $0x1b50] sm:$0xff]
    %v5960 = vld [vmem:[#allocation7 + $0x1b58] sm:$0xff]
    %v5961 = vld [vmem:[#allocation7 + $0x1b60] sm:$0xff]
    %v5962 = vld [vmem:[#allocation7 + $0x1b68] sm:$0xff]
    %v5963 = vld [vmem:[#allocation7 + $0x1b70] sm:$0xff]
    %v5964 = vld [vmem:[#allocation7 + $0x1b78] sm:$0xff]
    %v5965 = vld [vmem:[#allocation7 + $0x1b80] sm:$0xff]
    %v5966 = vld [vmem:[#allocation7 + $0x1b88] sm:$0xff]
    %v5967 = vld [vmem:[#allocation7 + $0x1b90] sm:$0xff]
    %v5968 = vld [vmem:[#allocation7 + $0x1b98] sm:$0xff]
    %v5969 = vld [vmem:[#allocation7 + $0x1ba0] sm:$0xff]
    %v5970 = vld [vmem:[#allocation7 + $0x1ba8] sm:$0xff]
    %v5971 = vld [vmem:[#allocation7 + $0x1bb0] sm:$0xff]
    %v5972 = vld [vmem:[#allocation7 + $0x1bb8] sm:$0xff]
    %v5973 = vld [vmem:[#allocation7 + $0x1bc0] sm:$0xff]
    %v5974 = vld [vmem:[#allocation7 + $0x1bc8] sm:$0xff]
    %v5975 = vld [vmem:[#allocation7 + $0x1bd0] sm:$0xff]
    %v5976 = vld [vmem:[#allocation7 + $0x1bd8] sm:$0xff]
    %v5977 = vld [vmem:[#allocation7 + $0x1be0] sm:$0xff]
    %v5978 = vld [vmem:[#allocation7 + $0x1be8] sm:$0xff]
    %v5979 = vld [vmem:[#allocation7 + $0x1bf0] sm:$0xff]
    %v5980 = vld [vmem:[#allocation7 + $0x1bf8] sm:$0xff]
    %v5981 = vld [vmem:[#allocation7 + $0x1c00] sm:$0xff]
    %v5982 = vld [vmem:[#allocation7 + $0x1c08] sm:$0xff]
    %v5983 = vld [vmem:[#allocation7 + $0x1c10] sm:$0xff]
    %v5984 = vld [vmem:[#allocation7 + $0x1c18] sm:$0xff]
    %v5985 = vld [vmem:[#allocation7 + $0x1c20] sm:$0xff]
    %v5986 = vld [vmem:[#allocation7 + $0x1c28] sm:$0xff]
    %v5987 = vld [vmem:[#allocation7 + $0x1c30] sm:$0xff]
    %v5988 = vld [vmem:[#allocation7 + $0x1c38] sm:$0xff]
    %v5989 = vld [vmem:[#allocation7 + $0x1c40] sm:$0xff]
    %v5990 = vld [vmem:[#allocation7 + $0x1c48] sm:$0xff]
    %v5991 = vld [vmem:[#allocation7 + $0x1c50] sm:$0xff]
    %v5992 = vld [vmem:[#allocation7 + $0x1c58] sm:$0xff]
    %v5993 = vld [vmem:[#allocation7 + $0x1c60] sm:$0xff]
    %v5994 = vld [vmem:[#allocation7 + $0x1c68] sm:$0xff]
    %v5995 = vld [vmem:[#allocation7 + $0x1c70] sm:$0xff]
    %v5996 = vld [vmem:[#allocation7 + $0x1c78] sm:$0xff]
    %v5997 = vld [vmem:[#allocation7 + $0x1c80] sm:$0xff]
    %v5998 = vld [vmem:[#allocation7 + $0x1c88] sm:$0xff]
    %v5999 = vld [vmem:[#allocation7 + $0x1c90] sm:$0xff]
    %v6000 = vld [vmem:[#allocation7 + $0x1c98] sm:$0xff]
    %v6001 = vld [vmem:[#allocation7 + $0x1ca0] sm:$0xff]
    %v6002 = vld [vmem:[#allocation7 + $0x1ca8] sm:$0xff]
    %v6003 = vld [vmem:[#allocation7 + $0x1cb0] sm:$0xff]
    %v6004 = vld [vmem:[#allocation7 + $0x1cb8] sm:$0xff]
    %v6005 = vld [vmem:[#allocation7 + $0x1cc0] sm:$0xff]
    %v6006 = vld [vmem:[#allocation7 + $0x1cc8] sm:$0xff]
    %v6007 = vld [vmem:[#allocation7 + $0x1cd0] sm:$0xff]
    %v6008 = vld [vmem:[#allocation7 + $0x1cd8] sm:$0xff]
    %v6009 = vld [vmem:[#allocation7 + $0x1ce0] sm:$0xff]
    %v6010 = vld [vmem:[#allocation7 + $0x1ce8] sm:$0xff]
    %v6011 = vld [vmem:[#allocation7 + $0x1cf0] sm:$0xff]
    %v6012 = vld [vmem:[#allocation7 + $0x1cf8] sm:$0xff]
    %v6013 = vld [vmem:[#allocation7 + $0x1d00] sm:$0xff]
    %v6014 = vld [vmem:[#allocation7 + $0x1d08] sm:$0xff]
    %v6015 = vld [vmem:[#allocation7 + $0x1d10] sm:$0xff]
    %v6016 = vld [vmem:[#allocation7 + $0x1d18] sm:$0xff]
    %v6017 = vld [vmem:[#allocation7 + $0x1d20] sm:$0xff]
    %v6018 = vld [vmem:[#allocation7 + $0x1d28] sm:$0xff]
    %v6019 = vld [vmem:[#allocation7 + $0x1d30] sm:$0xff]
    %v6020 = vld [vmem:[#allocation7 + $0x1d38] sm:$0xff]
    %v6021 = vld [vmem:[#allocation7 + $0x1d40] sm:$0xff]
    %v6022 = vld [vmem:[#allocation7 + $0x1d48] sm:$0xff]
    %v6023 = vld [vmem:[#allocation7 + $0x1d50] sm:$0xff]
    %v6024 = vld [vmem:[#allocation7 + $0x1d58] sm:$0xff]
    %v6025 = vld [vmem:[#allocation7 + $0x1d60] sm:$0xff]
    %v6026 = vld [vmem:[#allocation7 + $0x1d68] sm:$0xff]
    %v6027 = vld [vmem:[#allocation7 + $0x1d70] sm:$0xff]
    %v6028 = vld [vmem:[#allocation7 + $0x1d78] sm:$0xff]
    %v6029 = vld [vmem:[#allocation7 + $0x1d80] sm:$0xff]
    %v6030 = vld [vmem:[#allocation7 + $0x1d88] sm:$0xff]
    %v6031 = vld [vmem:[#allocation7 + $0x1d90] sm:$0xff]
    %v6032 = vld [vmem:[#allocation7 + $0x1d98] sm:$0xff]
    %v6033 = vld [vmem:[#allocation7 + $0x1da0] sm:$0xff]
    %v6034 = vld [vmem:[#allocation7 + $0x1da8] sm:$0xff]
    %v6035 = vld [vmem:[#allocation7 + $0x1db0] sm:$0xff]
    %v6036 = vld [vmem:[#allocation7 + $0x1db8] sm:$0xff]
    %v6037 = vld [vmem:[#allocation7 + $0x1dc0] sm:$0xff]
    %v6038 = vld [vmem:[#allocation7 + $0x1dc8] sm:$0xff]
    %v6039 = vld [vmem:[#allocation7 + $0x1dd0] sm:$0xff]
    %v6040 = vld [vmem:[#allocation7 + $0x1dd8] sm:$0xff]
    %v6041 = vld [vmem:[#allocation7 + $0x1de0] sm:$0xff]
    %v6042 = vld [vmem:[#allocation7 + $0x1de8] sm:$0xff]
    %v6043 = vld [vmem:[#allocation7 + $0x1df0] sm:$0xff]
    %v6044 = vld [vmem:[#allocation7 + $0x1df8] sm:$0xff]
    %v6045 = vld [vmem:[#allocation7 + $0x1e00] sm:$0xff]
    %v6046 = vld [vmem:[#allocation7 + $0x1e08] sm:$0xff]
    %v6047 = vld [vmem:[#allocation7 + $0x1e10] sm:$0xff]
    %v6048 = vld [vmem:[#allocation7 + $0x1e18] sm:$0xff]
    %v6049 = vld [vmem:[#allocation7 + $0x1e20] sm:$0xff]
    %v6050 = vld [vmem:[#allocation7 + $0x1e28] sm:$0xff]
    %v6051 = vld [vmem:[#allocation7 + $0x1e30] sm:$0xff]
    %v6052 = vld [vmem:[#allocation7 + $0x1e38] sm:$0xff]
    %v6053 = vld [vmem:[#allocation7 + $0x1e40] sm:$0xff]
    %v6054 = vld [vmem:[#allocation7 + $0x1e48] sm:$0xff]
    %v6055 = vld [vmem:[#allocation7 + $0x1e50] sm:$0xff]
    %v6056 = vld [vmem:[#allocation7 + $0x1e58] sm:$0xff]
    %v6057 = vld [vmem:[#allocation7 + $0x1e60] sm:$0xff]
    %v6058 = vld [vmem:[#allocation7 + $0x1e68] sm:$0xff]
    %v6059 = vld [vmem:[#allocation7 + $0x1e70] sm:$0xff]
    %v6060 = vld [vmem:[#allocation7 + $0x1e78] sm:$0xff]
    %v6061 = vld [vmem:[#allocation7 + $0x1e80] sm:$0xff]
    %v6062 = vld [vmem:[#allocation7 + $0x1e88] sm:$0xff]
    %v6063 = vld [vmem:[#allocation7 + $0x1e90] sm:$0xff]
    %v6064 = vld [vmem:[#allocation7 + $0x1e98] sm:$0xff]
    %v6065 = vld [vmem:[#allocation7 + $0x1ea0] sm:$0xff]
    %v6066 = vld [vmem:[#allocation7 + $0x1ea8] sm:$0xff]
    %v6067 = vld [vmem:[#allocation7 + $0x1eb0] sm:$0xff]
    %v6068 = vld [vmem:[#allocation7 + $0x1eb8] sm:$0xff]
    %v6069 = vld [vmem:[#allocation7 + $0x1ec0] sm:$0xff]
    %v6070 = vld [vmem:[#allocation7 + $0x1ec8] sm:$0xff]
    %v6071 = vld [vmem:[#allocation7 + $0x1ed0] sm:$0xff]
    %v6072 = vld [vmem:[#allocation7 + $0x1ed8] sm:$0xff]
    %v6073 = vld [vmem:[#allocation7 + $0x1ee0] sm:$0xff]
    %v6074 = vld [vmem:[#allocation7 + $0x1ee8] sm:$0xff]
    %v6075 = vld [vmem:[#allocation7 + $0x1ef0] sm:$0xff]
    %v6076 = vld [vmem:[#allocation7 + $0x1ef8] sm:$0xff]
    %v6077 = vld [vmem:[#allocation7 + $0x1f00] sm:$0xff]
    %v6078 = vld [vmem:[#allocation7 + $0x1f08] sm:$0xff]
    %v6079 = vld [vmem:[#allocation7 + $0x1f10] sm:$0xff]
    %v6080 = vld [vmem:[#allocation7 + $0x1f18] sm:$0xff]
    %v6081 = vld [vmem:[#allocation7 + $0x1f20] sm:$0xff]
    %v6082 = vld [vmem:[#allocation7 + $0x1f28] sm:$0xff]
    %v6083 = vld [vmem:[#allocation7 + $0x1f30] sm:$0xff]
    %v6084 = vld [vmem:[#allocation7 + $0x1f38] sm:$0xff]
    %v6085 = vld [vmem:[#allocation7 + $0x1f40] sm:$0xff]
    %v6086 = vld [vmem:[#allocation7 + $0x1f48] sm:$0xff]
    %v6087 = vld [vmem:[#allocation7 + $0x1f50] sm:$0xff]
    %v6088 = vld [vmem:[#allocation7 + $0x1f58] sm:$0xff]
    %v6089 = vld [vmem:[#allocation7 + $0x1f60] sm:$0xff]
    %v6090 = vld [vmem:[#allocation7 + $0x1f68] sm:$0xff]
    %v6091 = vld [vmem:[#allocation7 + $0x1f70] sm:$0xff]
    %v6092 = vld [vmem:[#allocation7 + $0x1f78] sm:$0xff]
    %v6093 = vld [vmem:[#allocation7 + $0x1f80] sm:$0xff]
    %v6094 = vld [vmem:[#allocation7 + $0x1f88] sm:$0xff]
    %v6095 = vld [vmem:[#allocation7 + $0x1f90] sm:$0xff]
    %v6096 = vld [vmem:[#allocation7 + $0x1f98] sm:$0xff]
    %v6097 = vld [vmem:[#allocation7 + $0x1fa0] sm:$0xff]
    %v6098 = vld [vmem:[#allocation7 + $0x1fa8] sm:$0xff]
    %v6099 = vld [vmem:[#allocation7 + $0x1fb0] sm:$0xff]
    %v6100 = vld [vmem:[#allocation7 + $0x1fb8] sm:$0xff]
    %v6101 = vld [vmem:[#allocation7 + $0x1fc0] sm:$0xff]
    %v6102 = vld [vmem:[#allocation7 + $0x1fc8] sm:$0xff]
    %v6103 = vld [vmem:[#allocation7 + $0x1fd0] sm:$0xff]
    %v6104 = vld [vmem:[#allocation7 + $0x1fd8] sm:$0xff]
    %v6105 = vld [vmem:[#allocation7 + $0x1fe0] sm:$0xff]
    %v6106 = vld [vmem:[#allocation7 + $0x1fe8] sm:$0xff]
    %v6107 = vld [vmem:[#allocation7 + $0x1ff0] sm:$0xff]
    %v6108 = vld [vmem:[#allocation7 + $0x1ff8] sm:$0xff]
    %v6109 = vld [vmem:[#allocation8] sm:$0xff]
    %v6111 = vlaneseq
    %v6112 = vshrl.u32 %v6111, 7
    %v6113 = vsub.s32 0, %v6112
    %v6114 = vrot.slane %v6109, %v6113
    %v6115 = vlaneseq
    %v6116 = vshrl.u32 %v6115, 7
    %v6117 = vsub.s32 1, %v6116
    %v6118 = vrot.slane %v6109, %v6117
    %v6119 = vlaneseq
    %v6120 = vshrl.u32 %v6119, 7
    %v6121 = vsub.s32 2, %v6120
    %v6122 = vrot.slane %v6109, %v6121
    %v6123 = vlaneseq
    %v6124 = vshrl.u32 %v6123, 7
    %v6125 = vsub.s32 3, %v6124
    %v6126 = vrot.slane %v6109, %v6125
    %v6127 = vlaneseq
    %v6128 = vshrl.u32 %v6127, 7
    %v6129 = vsub.s32 4, %v6128
    %v6130 = vrot.slane %v6109, %v6129
    %v6131 = vlaneseq
    %v6132 = vshrl.u32 %v6131, 7
    %v6133 = vsub.s32 5, %v6132
    %v6134 = vrot.slane %v6109, %v6133
    %v6135 = vlaneseq
    %v6136 = vshrl.u32 %v6135, 7
    %v6137 = vsub.s32 6, %v6136
    %v6138 = vrot.slane %v6109, %v6137
    %v6139 = vlaneseq
    %v6140 = vshrl.u32 %v6139, 7
    %v6141 = vsub.s32 7, %v6140
    %v6142 = vrot.slane %v6109, %v6141
    %v7175 = vunpack.c.l.b16 %v5085
    %v7176 = vunpack.c.h.b16 %v5085
    %v7177 = vunpack.c.l.b16 %v5086
    %v7178 = vunpack.c.h.b16 %v5086
    %v7179 = vunpack.c.l.b16 %v5087
    %v7180 = vunpack.c.h.b16 %v5087
    %v7181 = vunpack.c.l.b16 %v5088
    %v7182 = vunpack.c.h.b16 %v5088
    %v7183 = vunpack.c.l.b16 %v5089
    %v7184 = vunpack.c.h.b16 %v5089
    %v7185 = vunpack.c.l.b16 %v5090
    %v7186 = vunpack.c.h.b16 %v5090
    %v7187 = vunpack.c.l.b16 %v5091
    %v7188 = vunpack.c.h.b16 %v5091
    %v7189 = vunpack.c.l.b16 %v5092
    %v7190 = vunpack.c.h.b16 %v5092
    %v7191 = vunpack.c.l.b16 %v5093
    %v7192 = vunpack.c.h.b16 %v5093
    %v7193 = vunpack.c.l.b16 %v5094
    %v7194 = vunpack.c.h.b16 %v5094
    %v7195 = vunpack.c.l.b16 %v5095
    %v7196 = vunpack.c.h.b16 %v5095
    %v7197 = vunpack.c.l.b16 %v5096
    %v7198 = vunpack.c.h.b16 %v5096
    %v7199 = vunpack.c.l.b16 %v5097
    %v7200 = vunpack.c.h.b16 %v5097
    %v7201 = vunpack.c.l.b16 %v5098
    %v7202 = vunpack.c.h.b16 %v5098
    %v7203 = vunpack.c.l.b16 %v5099
    %v7204 = vunpack.c.h.b16 %v5099
    %v7205 = vunpack.c.l.b16 %v5100
    %v7206 = vunpack.c.h.b16 %v5100
    %v7207 = vunpack.c.l.b16 %v5101
    %v7208 = vunpack.c.h.b16 %v5101
    %v7209 = vunpack.c.l.b16 %v5102
    %v7210 = vunpack.c.h.b16 %v5102
    %v7211 = vunpack.c.l.b16 %v5103
    %v7212 = vunpack.c.h.b16 %v5103
    %v7213 = vunpack.c.l.b16 %v5104
    %v7214 = vunpack.c.h.b16 %v5104
    %v7215 = vunpack.c.l.b16 %v5105
    %v7216 = vunpack.c.h.b16 %v5105
    %v7217 = vunpack.c.l.b16 %v5106
    %v7218 = vunpack.c.h.b16 %v5106
    %v7219 = vunpack.c.l.b16 %v5107
    %v7220 = vunpack.c.h.b16 %v5107
    %v7221 = vunpack.c.l.b16 %v5108
    %v7222 = vunpack.c.h.b16 %v5108
    %v7223 = vunpack.c.l.b16 %v5109
    %v7224 = vunpack.c.h.b16 %v5109
    %v7225 = vunpack.c.l.b16 %v5110
    %v7226 = vunpack.c.h.b16 %v5110
    %v7227 = vunpack.c.l.b16 %v5111
    %v7228 = vunpack.c.h.b16 %v5111
    %v7229 = vunpack.c.l.b16 %v5112
    %v7230 = vunpack.c.h.b16 %v5112
    %v7231 = vunpack.c.l.b16 %v5113
    %v7232 = vunpack.c.h.b16 %v5113
    %v7233 = vunpack.c.l.b16 %v5114
    %v7234 = vunpack.c.h.b16 %v5114
    %v7235 = vunpack.c.l.b16 %v5115
    %v7236 = vunpack.c.h.b16 %v5115
    %v7237 = vunpack.c.l.b16 %v5116
    %v7238 = vunpack.c.h.b16 %v5116
    %v7239 = vunpack.c.l.b16 %v5117
    %v7240 = vunpack.c.h.b16 %v5117
    %v7241 = vunpack.c.l.b16 %v5118
    %v7242 = vunpack.c.h.b16 %v5118
    %v7243 = vunpack.c.l.b16 %v5119
    %v7244 = vunpack.c.h.b16 %v5119
    %v7245 = vunpack.c.l.b16 %v5120
    %v7246 = vunpack.c.h.b16 %v5120
    %v7247 = vunpack.c.l.b16 %v5121
    %v7248 = vunpack.c.h.b16 %v5121
    %v7249 = vunpack.c.l.b16 %v5122
    %v7250 = vunpack.c.h.b16 %v5122
    %v7251 = vunpack.c.l.b16 %v5123
    %v7252 = vunpack.c.h.b16 %v5123
    %v7253 = vunpack.c.l.b16 %v5124
    %v7254 = vunpack.c.h.b16 %v5124
    %v7255 = vunpack.c.l.b16 %v5125
    %v7256 = vunpack.c.h.b16 %v5125
    %v7257 = vunpack.c.l.b16 %v5126
    %v7258 = vunpack.c.h.b16 %v5126
    %v7259 = vunpack.c.l.b16 %v5127
    %v7260 = vunpack.c.h.b16 %v5127
    %v7261 = vunpack.c.l.b16 %v5128
    %v7262 = vunpack.c.h.b16 %v5128
    %v7263 = vunpack.c.l.b16 %v5129
    %v7264 = vunpack.c.h.b16 %v5129
    %v7265 = vunpack.c.l.b16 %v5130
    %v7266 = vunpack.c.h.b16 %v5130
    %v7267 = vunpack.c.l.b16 %v5131
    %v7268 = vunpack.c.h.b16 %v5131
    %v7269 = vunpack.c.l.b16 %v5132
    %v7270 = vunpack.c.h.b16 %v5132
    %v7271 = vunpack.c.l.b16 %v5133
    %v7272 = vunpack.c.h.b16 %v5133
    %v7273 = vunpack.c.l.b16 %v5134
    %v7274 = vunpack.c.h.b16 %v5134
    %v7275 = vunpack.c.l.b16 %v5135
    %v7276 = vunpack.c.h.b16 %v5135
    %v7277 = vunpack.c.l.b16 %v5136
    %v7278 = vunpack.c.h.b16 %v5136
    %v7279 = vunpack.c.l.b16 %v5137
    %v7280 = vunpack.c.h.b16 %v5137
    %v7281 = vunpack.c.l.b16 %v5138
    %v7282 = vunpack.c.h.b16 %v5138
    %v7283 = vunpack.c.l.b16 %v5139
    %v7284 = vunpack.c.h.b16 %v5139
    %v7285 = vunpack.c.l.b16 %v5140
    %v7286 = vunpack.c.h.b16 %v5140
    %v7287 = vunpack.c.l.b16 %v5141
    %v7288 = vunpack.c.h.b16 %v5141
    %v7289 = vunpack.c.l.b16 %v5142
    %v7290 = vunpack.c.h.b16 %v5142
    %v7291 = vunpack.c.l.b16 %v5143
    %v7292 = vunpack.c.h.b16 %v5143
    %v7293 = vunpack.c.l.b16 %v5144
    %v7294 = vunpack.c.h.b16 %v5144
    %v7295 = vunpack.c.l.b16 %v5145
    %v7296 = vunpack.c.h.b16 %v5145
    %v7297 = vunpack.c.l.b16 %v5146
    %v7298 = vunpack.c.h.b16 %v5146
    %v7299 = vunpack.c.l.b16 %v5147
    %v7300 = vunpack.c.h.b16 %v5147
    %v7301 = vunpack.c.l.b16 %v5148
    %v7302 = vunpack.c.h.b16 %v5148
    %v7303 = vunpack.c.l.b16 %v5149
    %v7304 = vunpack.c.h.b16 %v5149
    %v7305 = vunpack.c.l.b16 %v5150
    %v7306 = vunpack.c.h.b16 %v5150
    %v7307 = vunpack.c.l.b16 %v5151
    %v7308 = vunpack.c.h.b16 %v5151
    %v7309 = vunpack.c.l.b16 %v5152
    %v7310 = vunpack.c.h.b16 %v5152
    %v7311 = vunpack.c.l.b16 %v5153
    %v7312 = vunpack.c.h.b16 %v5153
    %v7313 = vunpack.c.l.b16 %v5154
    %v7314 = vunpack.c.h.b16 %v5154
    %v7315 = vunpack.c.l.b16 %v5155
    %v7316 = vunpack.c.h.b16 %v5155
    %v7317 = vunpack.c.l.b16 %v5156
    %v7318 = vunpack.c.h.b16 %v5156
    %v7319 = vunpack.c.l.b16 %v5157
    %v7320 = vunpack.c.h.b16 %v5157
    %v7321 = vunpack.c.l.b16 %v5158
    %v7322 = vunpack.c.h.b16 %v5158
    %v7323 = vunpack.c.l.b16 %v5159
    %v7324 = vunpack.c.h.b16 %v5159
    %v7325 = vunpack.c.l.b16 %v5160
    %v7326 = vunpack.c.h.b16 %v5160
    %v7327 = vunpack.c.l.b16 %v5161
    %v7328 = vunpack.c.h.b16 %v5161
    %v7329 = vunpack.c.l.b16 %v5162
    %v7330 = vunpack.c.h.b16 %v5162
    %v7331 = vunpack.c.l.b16 %v5163
    %v7332 = vunpack.c.h.b16 %v5163
    %v7333 = vunpack.c.l.b16 %v5164
    %v7334 = vunpack.c.h.b16 %v5164
    %v7335 = vunpack.c.l.b16 %v5165
    %v7336 = vunpack.c.h.b16 %v5165
    %v7337 = vunpack.c.l.b16 %v5166
    %v7338 = vunpack.c.h.b16 %v5166
    %v7339 = vunpack.c.l.b16 %v5167
    %v7340 = vunpack.c.h.b16 %v5167
    %v7341 = vunpack.c.l.b16 %v5168
    %v7342 = vunpack.c.h.b16 %v5168
    %v7343 = vunpack.c.l.b16 %v5169
    %v7344 = vunpack.c.h.b16 %v5169
    %v7345 = vunpack.c.l.b16 %v5170
    %v7346 = vunpack.c.h.b16 %v5170
    %v7347 = vunpack.c.l.b16 %v5171
    %v7348 = vunpack.c.h.b16 %v5171
    %v7349 = vunpack.c.l.b16 %v5172
    %v7350 = vunpack.c.h.b16 %v5172
    %v7351 = vunpack.c.l.b16 %v5173
    %v7352 = vunpack.c.h.b16 %v5173
    %v7353 = vunpack.c.l.b16 %v5174
    %v7354 = vunpack.c.h.b16 %v5174
    %v7355 = vunpack.c.l.b16 %v5175
    %v7356 = vunpack.c.h.b16 %v5175
    %v7357 = vunpack.c.l.b16 %v5176
    %v7358 = vunpack.c.h.b16 %v5176
    %v7359 = vunpack.c.l.b16 %v5177
    %v7360 = vunpack.c.h.b16 %v5177
    %v7361 = vunpack.c.l.b16 %v5178
    %v7362 = vunpack.c.h.b16 %v5178
    %v7363 = vunpack.c.l.b16 %v5179
    %v7364 = vunpack.c.h.b16 %v5179
    %v7365 = vunpack.c.l.b16 %v5180
    %v7366 = vunpack.c.h.b16 %v5180
    %v7367 = vunpack.c.l.b16 %v5181
    %v7368 = vunpack.c.h.b16 %v5181
    %v7369 = vunpack.c.l.b16 %v5182
    %v7370 = vunpack.c.h.b16 %v5182
    %v7371 = vunpack.c.l.b16 %v5183
    %v7372 = vunpack.c.h.b16 %v5183
    %v7373 = vunpack.c.l.b16 %v5184
    %v7374 = vunpack.c.h.b16 %v5184
    %v7375 = vunpack.c.l.b16 %v5185
    %v7376 = vunpack.c.h.b16 %v5185
    %v7377 = vunpack.c.l.b16 %v5186
    %v7378 = vunpack.c.h.b16 %v5186
    %v7379 = vunpack.c.l.b16 %v5187
    %v7380 = vunpack.c.h.b16 %v5187
    %v7381 = vunpack.c.l.b16 %v5188
    %v7382 = vunpack.c.h.b16 %v5188
    %v7383 = vunpack.c.l.b16 %v5189
    %v7384 = vunpack.c.h.b16 %v5189
    %v7385 = vunpack.c.l.b16 %v5190
    %v7386 = vunpack.c.h.b16 %v5190
    %v7387 = vunpack.c.l.b16 %v5191
    %v7388 = vunpack.c.h.b16 %v5191
    %v7389 = vunpack.c.l.b16 %v5192
    %v7390 = vunpack.c.h.b16 %v5192
    %v7391 = vunpack.c.l.b16 %v5193
    %v7392 = vunpack.c.h.b16 %v5193
    %v7393 = vunpack.c.l.b16 %v5194
    %v7394 = vunpack.c.h.b16 %v5194
    %v7395 = vunpack.c.l.b16 %v5195
    %v7396 = vunpack.c.h.b16 %v5195
    %v7397 = vunpack.c.l.b16 %v5196
    %v7398 = vunpack.c.h.b16 %v5196
    %v7399 = vunpack.c.l.b16 %v5197
    %v7400 = vunpack.c.h.b16 %v5197
    %v7401 = vunpack.c.l.b16 %v5198
    %v7402 = vunpack.c.h.b16 %v5198
    %v7403 = vunpack.c.l.b16 %v5199
    %v7404 = vunpack.c.h.b16 %v5199
    %v7405 = vunpack.c.l.b16 %v5200
    %v7406 = vunpack.c.h.b16 %v5200
    %v7407 = vunpack.c.l.b16 %v5201
    %v7408 = vunpack.c.h.b16 %v5201
    %v7409 = vunpack.c.l.b16 %v5202
    %v7410 = vunpack.c.h.b16 %v5202
    %v7411 = vunpack.c.l.b16 %v5203
    %v7412 = vunpack.c.h.b16 %v5203
    %v7413 = vunpack.c.l.b16 %v5204
    %v7414 = vunpack.c.h.b16 %v5204
    %v7415 = vunpack.c.l.b16 %v5205
    %v7416 = vunpack.c.h.b16 %v5205
    %v7417 = vunpack.c.l.b16 %v5206
    %v7418 = vunpack.c.h.b16 %v5206
    %v7419 = vunpack.c.l.b16 %v5207
    %v7420 = vunpack.c.h.b16 %v5207
    %v7421 = vunpack.c.l.b16 %v5208
    %v7422 = vunpack.c.h.b16 %v5208
    %v7423 = vunpack.c.l.b16 %v5209
    %v7424 = vunpack.c.h.b16 %v5209
    %v7425 = vunpack.c.l.b16 %v5210
    %v7426 = vunpack.c.h.b16 %v5210
    %v7427 = vunpack.c.l.b16 %v5211
    %v7428 = vunpack.c.h.b16 %v5211
    %v7429 = vunpack.c.l.b16 %v5212
    %v7430 = vunpack.c.h.b16 %v5212
    %v7431 = vunpack.c.l.b16 %v5213
    %v7432 = vunpack.c.h.b16 %v5213
    %v7433 = vunpack.c.l.b16 %v5214
    %v7434 = vunpack.c.h.b16 %v5214
    %v7435 = vunpack.c.l.b16 %v5215
    %v7436 = vunpack.c.h.b16 %v5215
    %v7437 = vunpack.c.l.b16 %v5216
    %v7438 = vunpack.c.h.b16 %v5216
    %v7439 = vunpack.c.l.b16 %v5217
    %v7440 = vunpack.c.h.b16 %v5217
    %v7441 = vunpack.c.l.b16 %v5218
    %v7442 = vunpack.c.h.b16 %v5218
    %v7443 = vunpack.c.l.b16 %v5219
    %v7444 = vunpack.c.h.b16 %v5219
    %v7445 = vunpack.c.l.b16 %v5220
    %v7446 = vunpack.c.h.b16 %v5220
    %v7447 = vunpack.c.l.b16 %v5221
    %v7448 = vunpack.c.h.b16 %v5221
    %v7449 = vunpack.c.l.b16 %v5222
    %v7450 = vunpack.c.h.b16 %v5222
    %v7451 = vunpack.c.l.b16 %v5223
    %v7452 = vunpack.c.h.b16 %v5223
    %v7453 = vunpack.c.l.b16 %v5224
    %v7454 = vunpack.c.h.b16 %v5224
    %v7455 = vunpack.c.l.b16 %v5225
    %v7456 = vunpack.c.h.b16 %v5225
    %v7457 = vunpack.c.l.b16 %v5226
    %v7458 = vunpack.c.h.b16 %v5226
    %v7459 = vunpack.c.l.b16 %v5227
    %v7460 = vunpack.c.h.b16 %v5227
    %v7461 = vunpack.c.l.b16 %v5228
    %v7462 = vunpack.c.h.b16 %v5228
    %v7463 = vunpack.c.l.b16 %v5229
    %v7464 = vunpack.c.h.b16 %v5229
    %v7465 = vunpack.c.l.b16 %v5230
    %v7466 = vunpack.c.h.b16 %v5230
    %v7467 = vunpack.c.l.b16 %v5231
    %v7468 = vunpack.c.h.b16 %v5231
    %v7469 = vunpack.c.l.b16 %v5232
    %v7470 = vunpack.c.h.b16 %v5232
    %v7471 = vunpack.c.l.b16 %v5233
    %v7472 = vunpack.c.h.b16 %v5233
    %v7473 = vunpack.c.l.b16 %v5234
    %v7474 = vunpack.c.h.b16 %v5234
    %v7475 = vunpack.c.l.b16 %v5235
    %v7476 = vunpack.c.h.b16 %v5235
    %v7477 = vunpack.c.l.b16 %v5236
    %v7478 = vunpack.c.h.b16 %v5236
    %v7479 = vunpack.c.l.b16 %v5237
    %v7480 = vunpack.c.h.b16 %v5237
    %v7481 = vunpack.c.l.b16 %v5238
    %v7482 = vunpack.c.h.b16 %v5238
    %v7483 = vunpack.c.l.b16 %v5239
    %v7484 = vunpack.c.h.b16 %v5239
    %v7485 = vunpack.c.l.b16 %v5240
    %v7486 = vunpack.c.h.b16 %v5240
    %v7487 = vunpack.c.l.b16 %v5241
    %v7488 = vunpack.c.h.b16 %v5241
    %v7489 = vunpack.c.l.b16 %v5242
    %v7490 = vunpack.c.h.b16 %v5242
    %v7491 = vunpack.c.l.b16 %v5243
    %v7492 = vunpack.c.h.b16 %v5243
    %v7493 = vunpack.c.l.b16 %v5244
    %v7494 = vunpack.c.h.b16 %v5244
    %v7495 = vunpack.c.l.b16 %v5245
    %v7496 = vunpack.c.h.b16 %v5245
    %v7497 = vunpack.c.l.b16 %v5246
    %v7498 = vunpack.c.h.b16 %v5246
    %v7499 = vunpack.c.l.b16 %v5247
    %v7500 = vunpack.c.h.b16 %v5247
    %v7501 = vunpack.c.l.b16 %v5248
    %v7502 = vunpack.c.h.b16 %v5248
    %v7503 = vunpack.c.l.b16 %v5249
    %v7504 = vunpack.c.h.b16 %v5249
    %v7505 = vunpack.c.l.b16 %v5250
    %v7506 = vunpack.c.h.b16 %v5250
    %v7507 = vunpack.c.l.b16 %v5251
    %v7508 = vunpack.c.h.b16 %v5251
    %v7509 = vunpack.c.l.b16 %v5252
    %v7510 = vunpack.c.h.b16 %v5252
    %v7511 = vunpack.c.l.b16 %v5253
    %v7512 = vunpack.c.h.b16 %v5253
    %v7513 = vunpack.c.l.b16 %v5254
    %v7514 = vunpack.c.h.b16 %v5254
    %v7515 = vunpack.c.l.b16 %v5255
    %v7516 = vunpack.c.h.b16 %v5255
    %v7517 = vunpack.c.l.b16 %v5256
    %v7518 = vunpack.c.h.b16 %v5256
    %v7519 = vunpack.c.l.b16 %v5257
    %v7520 = vunpack.c.h.b16 %v5257
    %v7521 = vunpack.c.l.b16 %v5258
    %v7522 = vunpack.c.h.b16 %v5258
    %v7523 = vunpack.c.l.b16 %v5259
    %v7524 = vunpack.c.h.b16 %v5259
    %v7525 = vunpack.c.l.b16 %v5260
    %v7526 = vunpack.c.h.b16 %v5260
    %v7527 = vunpack.c.l.b16 %v5261
    %v7528 = vunpack.c.h.b16 %v5261
    %v7529 = vunpack.c.l.b16 %v5262
    %v7530 = vunpack.c.h.b16 %v5262
    %v7531 = vunpack.c.l.b16 %v5263
    %v7532 = vunpack.c.h.b16 %v5263
    %v7533 = vunpack.c.l.b16 %v5264
    %v7534 = vunpack.c.h.b16 %v5264
    %v7535 = vunpack.c.l.b16 %v5265
    %v7536 = vunpack.c.h.b16 %v5265
    %v7537 = vunpack.c.l.b16 %v5266
    %v7538 = vunpack.c.h.b16 %v5266
    %v7539 = vunpack.c.l.b16 %v5267
    %v7540 = vunpack.c.h.b16 %v5267
    %v7541 = vunpack.c.l.b16 %v5268
    %v7542 = vunpack.c.h.b16 %v5268
    %v7543 = vunpack.c.l.b16 %v5269
    %v7544 = vunpack.c.h.b16 %v5269
    %v7545 = vunpack.c.l.b16 %v5270
    %v7546 = vunpack.c.h.b16 %v5270
    %v7547 = vunpack.c.l.b16 %v5271
    %v7548 = vunpack.c.h.b16 %v5271
    %v7549 = vunpack.c.l.b16 %v5272
    %v7550 = vunpack.c.h.b16 %v5272
    %v7551 = vunpack.c.l.b16 %v5273
    %v7552 = vunpack.c.h.b16 %v5273
    %v7553 = vunpack.c.l.b16 %v5274
    %v7554 = vunpack.c.h.b16 %v5274
    %v7555 = vunpack.c.l.b16 %v5275
    %v7556 = vunpack.c.h.b16 %v5275
    %v7557 = vunpack.c.l.b16 %v5276
    %v7558 = vunpack.c.h.b16 %v5276
    %v7559 = vunpack.c.l.b16 %v5277
    %v7560 = vunpack.c.h.b16 %v5277
    %v7561 = vunpack.c.l.b16 %v5278
    %v7562 = vunpack.c.h.b16 %v5278
    %v7563 = vunpack.c.l.b16 %v5279
    %v7564 = vunpack.c.h.b16 %v5279
    %v7565 = vunpack.c.l.b16 %v5280
    %v7566 = vunpack.c.h.b16 %v5280
    %v7567 = vunpack.c.l.b16 %v5281
    %v7568 = vunpack.c.h.b16 %v5281
    %v7569 = vunpack.c.l.b16 %v5282
    %v7570 = vunpack.c.h.b16 %v5282
    %v7571 = vunpack.c.l.b16 %v5283
    %v7572 = vunpack.c.h.b16 %v5283
    %v7573 = vunpack.c.l.b16 %v5284
    %v7574 = vunpack.c.h.b16 %v5284
    %v7575 = vunpack.c.l.b16 %v5285
    %v7576 = vunpack.c.h.b16 %v5285
    %v7577 = vunpack.c.l.b16 %v5286
    %v7578 = vunpack.c.h.b16 %v5286
    %v7579 = vunpack.c.l.b16 %v5287
    %v7580 = vunpack.c.h.b16 %v5287
    %v7581 = vunpack.c.l.b16 %v5288
    %v7582 = vunpack.c.h.b16 %v5288
    %v7583 = vunpack.c.l.b16 %v5289
    %v7584 = vunpack.c.h.b16 %v5289
    %v7585 = vunpack.c.l.b16 %v5290
    %v7586 = vunpack.c.h.b16 %v5290
    %v7587 = vunpack.c.l.b16 %v5291
    %v7588 = vunpack.c.h.b16 %v5291
    %v7589 = vunpack.c.l.b16 %v5292
    %v7590 = vunpack.c.h.b16 %v5292
    %v7591 = vunpack.c.l.b16 %v5293
    %v7592 = vunpack.c.h.b16 %v5293
    %v7593 = vunpack.c.l.b16 %v5294
    %v7594 = vunpack.c.h.b16 %v5294
    %v7595 = vunpack.c.l.b16 %v5295
    %v7596 = vunpack.c.h.b16 %v5295
    %v7597 = vunpack.c.l.b16 %v5296
    %v7598 = vunpack.c.h.b16 %v5296
    %v7599 = vunpack.c.l.b16 %v5297
    %v7600 = vunpack.c.h.b16 %v5297
    %v7601 = vunpack.c.l.b16 %v5298
    %v7602 = vunpack.c.h.b16 %v5298
    %v7603 = vunpack.c.l.b16 %v5299
    %v7604 = vunpack.c.h.b16 %v5299
    %v7605 = vunpack.c.l.b16 %v5300
    %v7606 = vunpack.c.h.b16 %v5300
    %v7607 = vunpack.c.l.b16 %v5301
    %v7608 = vunpack.c.h.b16 %v5301
    %v7609 = vunpack.c.l.b16 %v5302
    %v7610 = vunpack.c.h.b16 %v5302
    %v7611 = vunpack.c.l.b16 %v5303
    %v7612 = vunpack.c.h.b16 %v5303
    %v7613 = vunpack.c.l.b16 %v5304
    %v7614 = vunpack.c.h.b16 %v5304
    %v7615 = vunpack.c.l.b16 %v5305
    %v7616 = vunpack.c.h.b16 %v5305
    %v7617 = vunpack.c.l.b16 %v5306
    %v7618 = vunpack.c.h.b16 %v5306
    %v7619 = vunpack.c.l.b16 %v5307
    %v7620 = vunpack.c.h.b16 %v5307
    %v7621 = vunpack.c.l.b16 %v5308
    %v7622 = vunpack.c.h.b16 %v5308
    %v7623 = vunpack.c.l.b16 %v5309
    %v7624 = vunpack.c.h.b16 %v5309
    %v7625 = vunpack.c.l.b16 %v5310
    %v7626 = vunpack.c.h.b16 %v5310
    %v7627 = vunpack.c.l.b16 %v5311
    %v7628 = vunpack.c.h.b16 %v5311
    %v7629 = vunpack.c.l.b16 %v5312
    %v7630 = vunpack.c.h.b16 %v5312
    %v7631 = vunpack.c.l.b16 %v5313
    %v7632 = vunpack.c.h.b16 %v5313
    %v7633 = vunpack.c.l.b16 %v5314
    %v7634 = vunpack.c.h.b16 %v5314
    %v7635 = vunpack.c.l.b16 %v5315
    %v7636 = vunpack.c.h.b16 %v5315
    %v7637 = vunpack.c.l.b16 %v5316
    %v7638 = vunpack.c.h.b16 %v5316
    %v7639 = vunpack.c.l.b16 %v5317
    %v7640 = vunpack.c.h.b16 %v5317
    %v7641 = vunpack.c.l.b16 %v5318
    %v7642 = vunpack.c.h.b16 %v5318
    %v7643 = vunpack.c.l.b16 %v5319
    %v7644 = vunpack.c.h.b16 %v5319
    %v7645 = vunpack.c.l.b16 %v5320
    %v7646 = vunpack.c.h.b16 %v5320
    %v7647 = vunpack.c.l.b16 %v5321
    %v7648 = vunpack.c.h.b16 %v5321
    %v7649 = vunpack.c.l.b16 %v5322
    %v7650 = vunpack.c.h.b16 %v5322
    %v7651 = vunpack.c.l.b16 %v5323
    %v7652 = vunpack.c.h.b16 %v5323
    %v7653 = vunpack.c.l.b16 %v5324
    %v7654 = vunpack.c.h.b16 %v5324
    %v7655 = vunpack.c.l.b16 %v5325
    %v7656 = vunpack.c.h.b16 %v5325
    %v7657 = vunpack.c.l.b16 %v5326
    %v7658 = vunpack.c.h.b16 %v5326
    %v7659 = vunpack.c.l.b16 %v5327
    %v7660 = vunpack.c.h.b16 %v5327
    %v7661 = vunpack.c.l.b16 %v5328
    %v7662 = vunpack.c.h.b16 %v5328
    %v7663 = vunpack.c.l.b16 %v5329
    %v7664 = vunpack.c.h.b16 %v5329
    %v7665 = vunpack.c.l.b16 %v5330
    %v7666 = vunpack.c.h.b16 %v5330
    %v7667 = vunpack.c.l.b16 %v5331
    %v7668 = vunpack.c.h.b16 %v5331
    %v7669 = vunpack.c.l.b16 %v5332
    %v7670 = vunpack.c.h.b16 %v5332
    %v7671 = vunpack.c.l.b16 %v5333
    %v7672 = vunpack.c.h.b16 %v5333
    %v7673 = vunpack.c.l.b16 %v5334
    %v7674 = vunpack.c.h.b16 %v5334
    %v7675 = vunpack.c.l.b16 %v5335
    %v7676 = vunpack.c.h.b16 %v5335
    %v7677 = vunpack.c.l.b16 %v5336
    %v7678 = vunpack.c.h.b16 %v5336
    %v7679 = vunpack.c.l.b16 %v5337
    %v7680 = vunpack.c.h.b16 %v5337
    %v7681 = vunpack.c.l.b16 %v5338
    %v7682 = vunpack.c.h.b16 %v5338
    %v7683 = vunpack.c.l.b16 %v5339
    %v7684 = vunpack.c.h.b16 %v5339
    %v7685 = vunpack.c.l.b16 %v5340
    %v7686 = vunpack.c.h.b16 %v5340
    %v7687 = vunpack.c.l.b16 %v5341
    %v7688 = vunpack.c.h.b16 %v5341
    %v7689 = vunpack.c.l.b16 %v5342
    %v7690 = vunpack.c.h.b16 %v5342
    %v7691 = vunpack.c.l.b16 %v5343
    %v7692 = vunpack.c.h.b16 %v5343
    %v7693 = vunpack.c.l.b16 %v5344
    %v7694 = vunpack.c.h.b16 %v5344
    %v7695 = vunpack.c.l.b16 %v5345
    %v7696 = vunpack.c.h.b16 %v5345
    %v7697 = vunpack.c.l.b16 %v5346
    %v7698 = vunpack.c.h.b16 %v5346
    %v7699 = vunpack.c.l.b16 %v5347
    %v7700 = vunpack.c.h.b16 %v5347
    %v7701 = vunpack.c.l.b16 %v5348
    %v7702 = vunpack.c.h.b16 %v5348
    %v7703 = vunpack.c.l.b16 %v5349
    %v7704 = vunpack.c.h.b16 %v5349
    %v7705 = vunpack.c.l.b16 %v5350
    %v7706 = vunpack.c.h.b16 %v5350
    %v7707 = vunpack.c.l.b16 %v5351
    %v7708 = vunpack.c.h.b16 %v5351
    %v7709 = vunpack.c.l.b16 %v5352
    %v7710 = vunpack.c.h.b16 %v5352
    %v7711 = vunpack.c.l.b16 %v5353
    %v7712 = vunpack.c.h.b16 %v5353
    %v7713 = vunpack.c.l.b16 %v5354
    %v7714 = vunpack.c.h.b16 %v5354
    %v7715 = vunpack.c.l.b16 %v5355
    %v7716 = vunpack.c.h.b16 %v5355
    %v7717 = vunpack.c.l.b16 %v5356
    %v7718 = vunpack.c.h.b16 %v5356
    %v7719 = vunpack.c.l.b16 %v5357
    %v7720 = vunpack.c.h.b16 %v5357
    %v7721 = vunpack.c.l.b16 %v5358
    %v7722 = vunpack.c.h.b16 %v5358
    %v7723 = vunpack.c.l.b16 %v5359
    %v7724 = vunpack.c.h.b16 %v5359
    %v7725 = vunpack.c.l.b16 %v5360
    %v7726 = vunpack.c.h.b16 %v5360
    %v7727 = vunpack.c.l.b16 %v5361
    %v7728 = vunpack.c.h.b16 %v5361
    %v7729 = vunpack.c.l.b16 %v5362
    %v7730 = vunpack.c.h.b16 %v5362
    %v7731 = vunpack.c.l.b16 %v5363
    %v7732 = vunpack.c.h.b16 %v5363
    %v7733 = vunpack.c.l.b16 %v5364
    %v7734 = vunpack.c.h.b16 %v5364
    %v7735 = vunpack.c.l.b16 %v5365
    %v7736 = vunpack.c.h.b16 %v5365
    %v7737 = vunpack.c.l.b16 %v5366
    %v7738 = vunpack.c.h.b16 %v5366
    %v7739 = vunpack.c.l.b16 %v5367
    %v7740 = vunpack.c.h.b16 %v5367
    %v7741 = vunpack.c.l.b16 %v5368
    %v7742 = vunpack.c.h.b16 %v5368
    %v7743 = vunpack.c.l.b16 %v5369
    %v7744 = vunpack.c.h.b16 %v5369
    %v7745 = vunpack.c.l.b16 %v5370
    %v7746 = vunpack.c.h.b16 %v5370
    %v7747 = vunpack.c.l.b16 %v5371
    %v7748 = vunpack.c.h.b16 %v5371
    %v7749 = vunpack.c.l.b16 %v5372
    %v7750 = vunpack.c.h.b16 %v5372
    %v7751 = vunpack.c.l.b16 %v5373
    %v7752 = vunpack.c.h.b16 %v5373
    %v7753 = vunpack.c.l.b16 %v5374
    %v7754 = vunpack.c.h.b16 %v5374
    %v7755 = vunpack.c.l.b16 %v5375
    %v7756 = vunpack.c.h.b16 %v5375
    %v7757 = vunpack.c.l.b16 %v5376
    %v7758 = vunpack.c.h.b16 %v5376
    %v7759 = vunpack.c.l.b16 %v5377
    %v7760 = vunpack.c.h.b16 %v5377
    %v7761 = vunpack.c.l.b16 %v5378
    %v7762 = vunpack.c.h.b16 %v5378
    %v7763 = vunpack.c.l.b16 %v5379
    %v7764 = vunpack.c.h.b16 %v5379
    %v7765 = vunpack.c.l.b16 %v5380
    %v7766 = vunpack.c.h.b16 %v5380
    %v7767 = vunpack.c.l.b16 %v5381
    %v7768 = vunpack.c.h.b16 %v5381
    %v7769 = vunpack.c.l.b16 %v5382
    %v7770 = vunpack.c.h.b16 %v5382
    %v7771 = vunpack.c.l.b16 %v5383
    %v7772 = vunpack.c.h.b16 %v5383
    %v7773 = vunpack.c.l.b16 %v5384
    %v7774 = vunpack.c.h.b16 %v5384
    %v7775 = vunpack.c.l.b16 %v5385
    %v7776 = vunpack.c.h.b16 %v5385
    %v7777 = vunpack.c.l.b16 %v5386
    %v7778 = vunpack.c.h.b16 %v5386
    %v7779 = vunpack.c.l.b16 %v5387
    %v7780 = vunpack.c.h.b16 %v5387
    %v7781 = vunpack.c.l.b16 %v5388
    %v7782 = vunpack.c.h.b16 %v5388
    %v7783 = vunpack.c.l.b16 %v5389
    %v7784 = vunpack.c.h.b16 %v5389
    %v7785 = vunpack.c.l.b16 %v5390
    %v7786 = vunpack.c.h.b16 %v5390
    %v7787 = vunpack.c.l.b16 %v5391
    %v7788 = vunpack.c.h.b16 %v5391
    %v7789 = vunpack.c.l.b16 %v5392
    %v7790 = vunpack.c.h.b16 %v5392
    %v7791 = vunpack.c.l.b16 %v5393
    %v7792 = vunpack.c.h.b16 %v5393
    %v7793 = vunpack.c.l.b16 %v5394
    %v7794 = vunpack.c.h.b16 %v5394
    %v7795 = vunpack.c.l.b16 %v5395
    %v7796 = vunpack.c.h.b16 %v5395
    %v7797 = vunpack.c.l.b16 %v5396
    %v7798 = vunpack.c.h.b16 %v5396
    %v7799 = vunpack.c.l.b16 %v5397
    %v7800 = vunpack.c.h.b16 %v5397
    %v7801 = vunpack.c.l.b16 %v5398
    %v7802 = vunpack.c.h.b16 %v5398
    %v7803 = vunpack.c.l.b16 %v5399
    %v7804 = vunpack.c.h.b16 %v5399
    %v7805 = vunpack.c.l.b16 %v5400
    %v7806 = vunpack.c.h.b16 %v5400
    %v7807 = vunpack.c.l.b16 %v5401
    %v7808 = vunpack.c.h.b16 %v5401
    %v7809 = vunpack.c.l.b16 %v5402
    %v7810 = vunpack.c.h.b16 %v5402
    %v7811 = vunpack.c.l.b16 %v5403
    %v7812 = vunpack.c.h.b16 %v5403
    %v7813 = vunpack.c.l.b16 %v5404
    %v7814 = vunpack.c.h.b16 %v5404
    %v7815 = vunpack.c.l.b16 %v5405
    %v7816 = vunpack.c.h.b16 %v5405
    %v7817 = vunpack.c.l.b16 %v5406
    %v7818 = vunpack.c.h.b16 %v5406
    %v7819 = vunpack.c.l.b16 %v5407
    %v7820 = vunpack.c.h.b16 %v5407
    %v7821 = vunpack.c.l.b16 %v5408
    %v7822 = vunpack.c.h.b16 %v5408
    %v7823 = vunpack.c.l.b16 %v5409
    %v7824 = vunpack.c.h.b16 %v5409
    %v7825 = vunpack.c.l.b16 %v5410
    %v7826 = vunpack.c.h.b16 %v5410
    %v7827 = vunpack.c.l.b16 %v5411
    %v7828 = vunpack.c.h.b16 %v5411
    %v7829 = vunpack.c.l.b16 %v5412
    %v7830 = vunpack.c.h.b16 %v5412
    %v7831 = vunpack.c.l.b16 %v5413
    %v7832 = vunpack.c.h.b16 %v5413
    %v7833 = vunpack.c.l.b16 %v5414
    %v7834 = vunpack.c.h.b16 %v5414
    %v7835 = vunpack.c.l.b16 %v5415
    %v7836 = vunpack.c.h.b16 %v5415
    %v7837 = vunpack.c.l.b16 %v5416
    %v7838 = vunpack.c.h.b16 %v5416
    %v7839 = vunpack.c.l.b16 %v5417
    %v7840 = vunpack.c.h.b16 %v5417
    %v7841 = vunpack.c.l.b16 %v5418
    %v7842 = vunpack.c.h.b16 %v5418
    %v7843 = vunpack.c.l.b16 %v5419
    %v7844 = vunpack.c.h.b16 %v5419
    %v7845 = vunpack.c.l.b16 %v5420
    %v7846 = vunpack.c.h.b16 %v5420
    %v7847 = vunpack.c.l.b16 %v5421
    %v7848 = vunpack.c.h.b16 %v5421
    %v7849 = vunpack.c.l.b16 %v5422
    %v7850 = vunpack.c.h.b16 %v5422
    %v7851 = vunpack.c.l.b16 %v5423
    %v7852 = vunpack.c.h.b16 %v5423
    %v7853 = vunpack.c.l.b16 %v5424
    %v7854 = vunpack.c.h.b16 %v5424
    %v7855 = vunpack.c.l.b16 %v5425
    %v7856 = vunpack.c.h.b16 %v5425
    %v7857 = vunpack.c.l.b16 %v5426
    %v7858 = vunpack.c.h.b16 %v5426
    %v7859 = vunpack.c.l.b16 %v5427
    %v7860 = vunpack.c.h.b16 %v5427
    %v7861 = vunpack.c.l.b16 %v5428
    %v7862 = vunpack.c.h.b16 %v5428
    %v7863 = vunpack.c.l.b16 %v5429
    %v7864 = vunpack.c.h.b16 %v5429
    %v7865 = vunpack.c.l.b16 %v5430
    %v7866 = vunpack.c.h.b16 %v5430
    %v7867 = vunpack.c.l.b16 %v5431
    %v7868 = vunpack.c.h.b16 %v5431
    %v7869 = vunpack.c.l.b16 %v5432
    %v7870 = vunpack.c.h.b16 %v5432
    %v7871 = vunpack.c.l.b16 %v5433
    %v7872 = vunpack.c.h.b16 %v5433
    %v7873 = vunpack.c.l.b16 %v5434
    %v7874 = vunpack.c.h.b16 %v5434
    %v7875 = vunpack.c.l.b16 %v5435
    %v7876 = vunpack.c.h.b16 %v5435
    %v7877 = vunpack.c.l.b16 %v5436
    %v7878 = vunpack.c.h.b16 %v5436
    %v7879 = vunpack.c.l.b16 %v5437
    %v7880 = vunpack.c.h.b16 %v5437
    %v7881 = vunpack.c.l.b16 %v5438
    %v7882 = vunpack.c.h.b16 %v5438
    %v7883 = vunpack.c.l.b16 %v5439
    %v7884 = vunpack.c.h.b16 %v5439
    %v7885 = vunpack.c.l.b16 %v5440
    %v7886 = vunpack.c.h.b16 %v5440
    %v7887 = vunpack.c.l.b16 %v5441
    %v7888 = vunpack.c.h.b16 %v5441
    %v7889 = vunpack.c.l.b16 %v5442
    %v7890 = vunpack.c.h.b16 %v5442
    %v7891 = vunpack.c.l.b16 %v5443
    %v7892 = vunpack.c.h.b16 %v5443
    %v7893 = vunpack.c.l.b16 %v5444
    %v7894 = vunpack.c.h.b16 %v5444
    %v7895 = vunpack.c.l.b16 %v5445
    %v7896 = vunpack.c.h.b16 %v5445
    %v7897 = vunpack.c.l.b16 %v5446
    %v7898 = vunpack.c.h.b16 %v5446
    %v7899 = vunpack.c.l.b16 %v5447
    %v7900 = vunpack.c.h.b16 %v5447
    %v7901 = vunpack.c.l.b16 %v5448
    %v7902 = vunpack.c.h.b16 %v5448
    %v7903 = vunpack.c.l.b16 %v5449
    %v7904 = vunpack.c.h.b16 %v5449
    %v7905 = vunpack.c.l.b16 %v5450
    %v7906 = vunpack.c.h.b16 %v5450
    %v7907 = vunpack.c.l.b16 %v5451
    %v7908 = vunpack.c.h.b16 %v5451
    %v7909 = vunpack.c.l.b16 %v5452
    %v7910 = vunpack.c.h.b16 %v5452
    %v7911 = vunpack.c.l.b16 %v5453
    %v7912 = vunpack.c.h.b16 %v5453
    %v7913 = vunpack.c.l.b16 %v5454
    %v7914 = vunpack.c.h.b16 %v5454
    %v7915 = vunpack.c.l.b16 %v5455
    %v7916 = vunpack.c.h.b16 %v5455
    %v7917 = vunpack.c.l.b16 %v5456
    %v7918 = vunpack.c.h.b16 %v5456
    %v7919 = vunpack.c.l.b16 %v5457
    %v7920 = vunpack.c.h.b16 %v5457
    %v7921 = vunpack.c.l.b16 %v5458
    %v7922 = vunpack.c.h.b16 %v5458
    %v7923 = vunpack.c.l.b16 %v5459
    %v7924 = vunpack.c.h.b16 %v5459
    %v7925 = vunpack.c.l.b16 %v5460
    %v7926 = vunpack.c.h.b16 %v5460
    %v7927 = vunpack.c.l.b16 %v5461
    %v7928 = vunpack.c.h.b16 %v5461
    %v7929 = vunpack.c.l.b16 %v5462
    %v7930 = vunpack.c.h.b16 %v5462
    %v7931 = vunpack.c.l.b16 %v5463
    %v7932 = vunpack.c.h.b16 %v5463
    %v7933 = vunpack.c.l.b16 %v5464
    %v7934 = vunpack.c.h.b16 %v5464
    %v7935 = vunpack.c.l.b16 %v5465
    %v7936 = vunpack.c.h.b16 %v5465
    %v7937 = vunpack.c.l.b16 %v5466
    %v7938 = vunpack.c.h.b16 %v5466
    %v7939 = vunpack.c.l.b16 %v5467
    %v7940 = vunpack.c.h.b16 %v5467
    %v7941 = vunpack.c.l.b16 %v5468
    %v7942 = vunpack.c.h.b16 %v5468
    %v7943 = vunpack.c.l.b16 %v5469
    %v7944 = vunpack.c.h.b16 %v5469
    %v7945 = vunpack.c.l.b16 %v5470
    %v7946 = vunpack.c.h.b16 %v5470
    %v7947 = vunpack.c.l.b16 %v5471
    %v7948 = vunpack.c.h.b16 %v5471
    %v7949 = vunpack.c.l.b16 %v5472
    %v7950 = vunpack.c.h.b16 %v5472
    %v7951 = vunpack.c.l.b16 %v5473
    %v7952 = vunpack.c.h.b16 %v5473
    %v7953 = vunpack.c.l.b16 %v5474
    %v7954 = vunpack.c.h.b16 %v5474
    %v7955 = vunpack.c.l.b16 %v5475
    %v7956 = vunpack.c.h.b16 %v5475
    %v7957 = vunpack.c.l.b16 %v5476
    %v7958 = vunpack.c.h.b16 %v5476
    %v7959 = vunpack.c.l.b16 %v5477
    %v7960 = vunpack.c.h.b16 %v5477
    %v7961 = vunpack.c.l.b16 %v5478
    %v7962 = vunpack.c.h.b16 %v5478
    %v7963 = vunpack.c.l.b16 %v5479
    %v7964 = vunpack.c.h.b16 %v5479
    %v7965 = vunpack.c.l.b16 %v5480
    %v7966 = vunpack.c.h.b16 %v5480
    %v7967 = vunpack.c.l.b16 %v5481
    %v7968 = vunpack.c.h.b16 %v5481
    %v7969 = vunpack.c.l.b16 %v5482
    %v7970 = vunpack.c.h.b16 %v5482
    %v7971 = vunpack.c.l.b16 %v5483
    %v7972 = vunpack.c.h.b16 %v5483
    %v7973 = vunpack.c.l.b16 %v5484
    %v7974 = vunpack.c.h.b16 %v5484
    %v7975 = vunpack.c.l.b16 %v5485
    %v7976 = vunpack.c.h.b16 %v5485
    %v7977 = vunpack.c.l.b16 %v5486
    %v7978 = vunpack.c.h.b16 %v5486
    %v7979 = vunpack.c.l.b16 %v5487
    %v7980 = vunpack.c.h.b16 %v5487
    %v7981 = vunpack.c.l.b16 %v5488
    %v7982 = vunpack.c.h.b16 %v5488
    %v7983 = vunpack.c.l.b16 %v5489
    %v7984 = vunpack.c.h.b16 %v5489
    %v7985 = vunpack.c.l.b16 %v5490
    %v7986 = vunpack.c.h.b16 %v5490
    %v7987 = vunpack.c.l.b16 %v5491
    %v7988 = vunpack.c.h.b16 %v5491
    %v7989 = vunpack.c.l.b16 %v5492
    %v7990 = vunpack.c.h.b16 %v5492
    %v7991 = vunpack.c.l.b16 %v5493
    %v7992 = vunpack.c.h.b16 %v5493
    %v7993 = vunpack.c.l.b16 %v5494
    %v7994 = vunpack.c.h.b16 %v5494
    %v7995 = vunpack.c.l.b16 %v5495
    %v7996 = vunpack.c.h.b16 %v5495
    %v7997 = vunpack.c.l.b16 %v5496
    %v7998 = vunpack.c.h.b16 %v5496
    %v7999 = vunpack.c.l.b16 %v5497
    %v8000 = vunpack.c.h.b16 %v5497
    %v8001 = vunpack.c.l.b16 %v5498
    %v8002 = vunpack.c.h.b16 %v5498
    %v8003 = vunpack.c.l.b16 %v5499
    %v8004 = vunpack.c.h.b16 %v5499
    %v8005 = vunpack.c.l.b16 %v5500
    %v8006 = vunpack.c.h.b16 %v5500
    %v8007 = vunpack.c.l.b16 %v5501
    %v8008 = vunpack.c.h.b16 %v5501
    %v8009 = vunpack.c.l.b16 %v5502
    %v8010 = vunpack.c.h.b16 %v5502
    %v8011 = vunpack.c.l.b16 %v5503
    %v8012 = vunpack.c.h.b16 %v5503
    %v8013 = vunpack.c.l.b16 %v5504
    %v8014 = vunpack.c.h.b16 %v5504
    %v8015 = vunpack.c.l.b16 %v5505
    %v8016 = vunpack.c.h.b16 %v5505
    %v8017 = vunpack.c.l.b16 %v5506
    %v8018 = vunpack.c.h.b16 %v5506
    %v8019 = vunpack.c.l.b16 %v5507
    %v8020 = vunpack.c.h.b16 %v5507
    %v8021 = vunpack.c.l.b16 %v5508
    %v8022 = vunpack.c.h.b16 %v5508
    %v8023 = vunpack.c.l.b16 %v5509
    %v8024 = vunpack.c.h.b16 %v5509
    %v8025 = vunpack.c.l.b16 %v5510
    %v8026 = vunpack.c.h.b16 %v5510
    %v8027 = vunpack.c.l.b16 %v5511
    %v8028 = vunpack.c.h.b16 %v5511
    %v8029 = vunpack.c.l.b16 %v5512
    %v8030 = vunpack.c.h.b16 %v5512
    %v8031 = vunpack.c.l.b16 %v5513
    %v8032 = vunpack.c.h.b16 %v5513
    %v8033 = vunpack.c.l.b16 %v5514
    %v8034 = vunpack.c.h.b16 %v5514
    %v8035 = vunpack.c.l.b16 %v5515
    %v8036 = vunpack.c.h.b16 %v5515
    %v8037 = vunpack.c.l.b16 %v5516
    %v8038 = vunpack.c.h.b16 %v5516
    %v8039 = vunpack.c.l.b16 %v5517
    %v8040 = vunpack.c.h.b16 %v5517
    %v8041 = vunpack.c.l.b16 %v5518
    %v8042 = vunpack.c.h.b16 %v5518
    %v8043 = vunpack.c.l.b16 %v5519
    %v8044 = vunpack.c.h.b16 %v5519
    %v8045 = vunpack.c.l.b16 %v5520
    %v8046 = vunpack.c.h.b16 %v5520
    %v8047 = vunpack.c.l.b16 %v5521
    %v8048 = vunpack.c.h.b16 %v5521
    %v8049 = vunpack.c.l.b16 %v5522
    %v8050 = vunpack.c.h.b16 %v5522
    %v8051 = vunpack.c.l.b16 %v5523
    %v8052 = vunpack.c.h.b16 %v5523
    %v8053 = vunpack.c.l.b16 %v5524
    %v8054 = vunpack.c.h.b16 %v5524
    %v8055 = vunpack.c.l.b16 %v5525
    %v8056 = vunpack.c.h.b16 %v5525
    %v8057 = vunpack.c.l.b16 %v5526
    %v8058 = vunpack.c.h.b16 %v5526
    %v8059 = vunpack.c.l.b16 %v5527
    %v8060 = vunpack.c.h.b16 %v5527
    %v8061 = vunpack.c.l.b16 %v5528
    %v8062 = vunpack.c.h.b16 %v5528
    %v8063 = vunpack.c.l.b16 %v5529
    %v8064 = vunpack.c.h.b16 %v5529
    %v8065 = vunpack.c.l.b16 %v5530
    %v8066 = vunpack.c.h.b16 %v5530
    %v8067 = vunpack.c.l.b16 %v5531
    %v8068 = vunpack.c.h.b16 %v5531
    %v8069 = vunpack.c.l.b16 %v5532
    %v8070 = vunpack.c.h.b16 %v5532
    %v8071 = vunpack.c.l.b16 %v5533
    %v8072 = vunpack.c.h.b16 %v5533
    %v8073 = vunpack.c.l.b16 %v5534
    %v8074 = vunpack.c.h.b16 %v5534
    %v8075 = vunpack.c.l.b16 %v5535
    %v8076 = vunpack.c.h.b16 %v5535
    %v8077 = vunpack.c.l.b16 %v5536
    %v8078 = vunpack.c.h.b16 %v5536
    %v8079 = vunpack.c.l.b16 %v5537
    %v8080 = vunpack.c.h.b16 %v5537
    %v8081 = vunpack.c.l.b16 %v5538
    %v8082 = vunpack.c.h.b16 %v5538
    %v8083 = vunpack.c.l.b16 %v5539
    %v8084 = vunpack.c.h.b16 %v5539
    %v8085 = vunpack.c.l.b16 %v5540
    %v8086 = vunpack.c.h.b16 %v5540
    %v8087 = vunpack.c.l.b16 %v5541
    %v8088 = vunpack.c.h.b16 %v5541
    %v8089 = vunpack.c.l.b16 %v5542
    %v8090 = vunpack.c.h.b16 %v5542
    %v8091 = vunpack.c.l.b16 %v5543
    %v8092 = vunpack.c.h.b16 %v5543
    %v8093 = vunpack.c.l.b16 %v5544
    %v8094 = vunpack.c.h.b16 %v5544
    %v8095 = vunpack.c.l.b16 %v5545
    %v8096 = vunpack.c.h.b16 %v5545
    %v8097 = vunpack.c.l.b16 %v5546
    %v8098 = vunpack.c.h.b16 %v5546
    %v8099 = vunpack.c.l.b16 %v5547
    %v8100 = vunpack.c.h.b16 %v5547
    %v8101 = vunpack.c.l.b16 %v5548
    %v8102 = vunpack.c.h.b16 %v5548
    %v8103 = vunpack.c.l.b16 %v5549
    %v8104 = vunpack.c.h.b16 %v5549
    %v8105 = vunpack.c.l.b16 %v5550
    %v8106 = vunpack.c.h.b16 %v5550
    %v8107 = vunpack.c.l.b16 %v5551
    %v8108 = vunpack.c.h.b16 %v5551
    %v8109 = vunpack.c.l.b16 %v5552
    %v8110 = vunpack.c.h.b16 %v5552
    %v8111 = vunpack.c.l.b16 %v5553
    %v8112 = vunpack.c.h.b16 %v5553
    %v8113 = vunpack.c.l.b16 %v5554
    %v8114 = vunpack.c.h.b16 %v5554
    %v8115 = vunpack.c.l.b16 %v5555
    %v8116 = vunpack.c.h.b16 %v5555
    %v8117 = vunpack.c.l.b16 %v5556
    %v8118 = vunpack.c.h.b16 %v5556
    %v8119 = vunpack.c.l.b16 %v5557
    %v8120 = vunpack.c.h.b16 %v5557
    %v8121 = vunpack.c.l.b16 %v5558
    %v8122 = vunpack.c.h.b16 %v5558
    %v8123 = vunpack.c.l.b16 %v5559
    %v8124 = vunpack.c.h.b16 %v5559
    %v8125 = vunpack.c.l.b16 %v5560
    %v8126 = vunpack.c.h.b16 %v5560
    %v8127 = vunpack.c.l.b16 %v5561
    %v8128 = vunpack.c.h.b16 %v5561
    %v8129 = vunpack.c.l.b16 %v5562
    %v8130 = vunpack.c.h.b16 %v5562
    %v8131 = vunpack.c.l.b16 %v5563
    %v8132 = vunpack.c.h.b16 %v5563
    %v8133 = vunpack.c.l.b16 %v5564
    %v8134 = vunpack.c.h.b16 %v5564
    %v8135 = vunpack.c.l.b16 %v5565
    %v8136 = vunpack.c.h.b16 %v5565
    %v8137 = vunpack.c.l.b16 %v5566
    %v8138 = vunpack.c.h.b16 %v5566
    %v8139 = vunpack.c.l.b16 %v5567
    %v8140 = vunpack.c.h.b16 %v5567
    %v8141 = vunpack.c.l.b16 %v5568
    %v8142 = vunpack.c.h.b16 %v5568
    %v8143 = vunpack.c.l.b16 %v5569
    %v8144 = vunpack.c.h.b16 %v5569
    %v8145 = vunpack.c.l.b16 %v5570
    %v8146 = vunpack.c.h.b16 %v5570
    %v8147 = vunpack.c.l.b16 %v5571
    %v8148 = vunpack.c.h.b16 %v5571
    %v8149 = vunpack.c.l.b16 %v5572
    %v8150 = vunpack.c.h.b16 %v5572
    %v8151 = vunpack.c.l.b16 %v5573
    %v8152 = vunpack.c.h.b16 %v5573
    %v8153 = vunpack.c.l.b16 %v5574
    %v8154 = vunpack.c.h.b16 %v5574
    %v8155 = vunpack.c.l.b16 %v5575
    %v8156 = vunpack.c.h.b16 %v5575
    %v8157 = vunpack.c.l.b16 %v5576
    %v8158 = vunpack.c.h.b16 %v5576
    %v8159 = vunpack.c.l.b16 %v5577
    %v8160 = vunpack.c.h.b16 %v5577
    %v8161 = vunpack.c.l.b16 %v5578
    %v8162 = vunpack.c.h.b16 %v5578
    %v8163 = vunpack.c.l.b16 %v5579
    %v8164 = vunpack.c.h.b16 %v5579
    %v8165 = vunpack.c.l.b16 %v5580
    %v8166 = vunpack.c.h.b16 %v5580
    %v8167 = vunpack.c.l.b16 %v5581
    %v8168 = vunpack.c.h.b16 %v5581
    %v8169 = vunpack.c.l.b16 %v5582
    %v8170 = vunpack.c.h.b16 %v5582
    %v8171 = vunpack.c.l.b16 %v5583
    %v8172 = vunpack.c.h.b16 %v5583
    %v8173 = vunpack.c.l.b16 %v5584
    %v8174 = vunpack.c.h.b16 %v5584
    %v8175 = vunpack.c.l.b16 %v5585
    %v8176 = vunpack.c.h.b16 %v5585
    %v8177 = vunpack.c.l.b16 %v5586
    %v8178 = vunpack.c.h.b16 %v5586
    %v8179 = vunpack.c.l.b16 %v5587
    %v8180 = vunpack.c.h.b16 %v5587
    %v8181 = vunpack.c.l.b16 %v5588
    %v8182 = vunpack.c.h.b16 %v5588
    %v8183 = vunpack.c.l.b16 %v5589
    %v8184 = vunpack.c.h.b16 %v5589
    %v8185 = vunpack.c.l.b16 %v5590
    %v8186 = vunpack.c.h.b16 %v5590
    %v8187 = vunpack.c.l.b16 %v5591
    %v8188 = vunpack.c.h.b16 %v5591
    %v8189 = vunpack.c.l.b16 %v5592
    %v8190 = vunpack.c.h.b16 %v5592
    %v8191 = vunpack.c.l.b16 %v5593
    %v8192 = vunpack.c.h.b16 %v5593
    %v8193 = vunpack.c.l.b16 %v5594
    %v8194 = vunpack.c.h.b16 %v5594
    %v8195 = vunpack.c.l.b16 %v5595
    %v8196 = vunpack.c.h.b16 %v5595
    %v8197 = vunpack.c.l.b16 %v5596
    %v8198 = vunpack.c.h.b16 %v5596
    %v8199 = vunpack.c.l.b16 %v5597
    %v8200 = vunpack.c.h.b16 %v5597
    %v8201 = vunpack.c.l.b16 %v5598
    %v8202 = vunpack.c.h.b16 %v5598
    %v8203 = vunpack.c.l.b16 %v5599
    %v8204 = vunpack.c.h.b16 %v5599
    %v8205 = vunpack.c.l.b16 %v5600
    %v8206 = vunpack.c.h.b16 %v5600
    %v8207 = vunpack.c.l.b16 %v5601
    %v8208 = vunpack.c.h.b16 %v5601
    %v8209 = vunpack.c.l.b16 %v5602
    %v8210 = vunpack.c.h.b16 %v5602
    %v8211 = vunpack.c.l.b16 %v5603
    %v8212 = vunpack.c.h.b16 %v5603
    %v8213 = vunpack.c.l.b16 %v5604
    %v8214 = vunpack.c.h.b16 %v5604
    %v8215 = vunpack.c.l.b16 %v5605
    %v8216 = vunpack.c.h.b16 %v5605
    %v8217 = vunpack.c.l.b16 %v5606
    %v8218 = vunpack.c.h.b16 %v5606
    %v8219 = vunpack.c.l.b16 %v5607
    %v8220 = vunpack.c.h.b16 %v5607
    %v8221 = vunpack.c.l.b16 %v5608
    %v8222 = vunpack.c.h.b16 %v5608
    %v8223 = vunpack.c.l.b16 %v5609
    %v8224 = vunpack.c.h.b16 %v5609
    %v8225 = vunpack.c.l.b16 %v5610
    %v8226 = vunpack.c.h.b16 %v5610
    %v8227 = vunpack.c.l.b16 %v5611
    %v8228 = vunpack.c.h.b16 %v5611
    %v8229 = vunpack.c.l.b16 %v5612
    %v8230 = vunpack.c.h.b16 %v5612
    %v8231 = vunpack.c.l.b16 %v5613
    %v8232 = vunpack.c.h.b16 %v5613
    %v8233 = vunpack.c.l.b16 %v5614
    %v8234 = vunpack.c.h.b16 %v5614
    %v8235 = vunpack.c.l.b16 %v5615
    %v8236 = vunpack.c.h.b16 %v5615
    %v8237 = vunpack.c.l.b16 %v5616
    %v8238 = vunpack.c.h.b16 %v5616
    %v8239 = vunpack.c.l.b16 %v5617
    %v8240 = vunpack.c.h.b16 %v5617
    %v8241 = vunpack.c.l.b16 %v5618
    %v8242 = vunpack.c.h.b16 %v5618
    %v8243 = vunpack.c.l.b16 %v5619
    %v8244 = vunpack.c.h.b16 %v5619
    %v8245 = vunpack.c.l.b16 %v5620
    %v8246 = vunpack.c.h.b16 %v5620
    %v8247 = vunpack.c.l.b16 %v5621
    %v8248 = vunpack.c.h.b16 %v5621
    %v8249 = vunpack.c.l.b16 %v5622
    %v8250 = vunpack.c.h.b16 %v5622
    %v8251 = vunpack.c.l.b16 %v5623
    %v8252 = vunpack.c.h.b16 %v5623
    %v8253 = vunpack.c.l.b16 %v5624
    %v8254 = vunpack.c.h.b16 %v5624
    %v8255 = vunpack.c.l.b16 %v5625
    %v8256 = vunpack.c.h.b16 %v5625
    %v8257 = vunpack.c.l.b16 %v5626
    %v8258 = vunpack.c.h.b16 %v5626
    %v8259 = vunpack.c.l.b16 %v5627
    %v8260 = vunpack.c.h.b16 %v5627
    %v8261 = vunpack.c.l.b16 %v5628
    %v8262 = vunpack.c.h.b16 %v5628
    %v8263 = vunpack.c.l.b16 %v5629
    %v8264 = vunpack.c.h.b16 %v5629
    %v8265 = vunpack.c.l.b16 %v5630
    %v8266 = vunpack.c.h.b16 %v5630
    %v8267 = vunpack.c.l.b16 %v5631
    %v8268 = vunpack.c.h.b16 %v5631
    %v8269 = vunpack.c.l.b16 %v5632
    %v8270 = vunpack.c.h.b16 %v5632
    %v8271 = vunpack.c.l.b16 %v5633
    %v8272 = vunpack.c.h.b16 %v5633
    %v8273 = vunpack.c.l.b16 %v5634
    %v8274 = vunpack.c.h.b16 %v5634
    %v8275 = vunpack.c.l.b16 %v5635
    %v8276 = vunpack.c.h.b16 %v5635
    %v8277 = vunpack.c.l.b16 %v5636
    %v8278 = vunpack.c.h.b16 %v5636
    %v8279 = vunpack.c.l.b16 %v5637
    %v8280 = vunpack.c.h.b16 %v5637
    %v8281 = vunpack.c.l.b16 %v5638
    %v8282 = vunpack.c.h.b16 %v5638
    %v8283 = vunpack.c.l.b16 %v5639
    %v8284 = vunpack.c.h.b16 %v5639
    %v8285 = vunpack.c.l.b16 %v5640
    %v8286 = vunpack.c.h.b16 %v5640
    %v8287 = vunpack.c.l.b16 %v5641
    %v8288 = vunpack.c.h.b16 %v5641
    %v8289 = vunpack.c.l.b16 %v5642
    %v8290 = vunpack.c.h.b16 %v5642
    %v8291 = vunpack.c.l.b16 %v5643
    %v8292 = vunpack.c.h.b16 %v5643
    %v8293 = vunpack.c.l.b16 %v5644
    %v8294 = vunpack.c.h.b16 %v5644
    %v8295 = vunpack.c.l.b16 %v5645
    %v8296 = vunpack.c.h.b16 %v5645
    %v8297 = vunpack.c.l.b16 %v5646
    %v8298 = vunpack.c.h.b16 %v5646
    %v8299 = vunpack.c.l.b16 %v5647
    %v8300 = vunpack.c.h.b16 %v5647
    %v8301 = vunpack.c.l.b16 %v5648
    %v8302 = vunpack.c.h.b16 %v5648
    %v8303 = vunpack.c.l.b16 %v5649
    %v8304 = vunpack.c.h.b16 %v5649
    %v8305 = vunpack.c.l.b16 %v5650
    %v8306 = vunpack.c.h.b16 %v5650
    %v8307 = vunpack.c.l.b16 %v5651
    %v8308 = vunpack.c.h.b16 %v5651
    %v8309 = vunpack.c.l.b16 %v5652
    %v8310 = vunpack.c.h.b16 %v5652
    %v8311 = vunpack.c.l.b16 %v5653
    %v8312 = vunpack.c.h.b16 %v5653
    %v8313 = vunpack.c.l.b16 %v5654
    %v8314 = vunpack.c.h.b16 %v5654
    %v8315 = vunpack.c.l.b16 %v5655
    %v8316 = vunpack.c.h.b16 %v5655
    %v8317 = vunpack.c.l.b16 %v5656
    %v8318 = vunpack.c.h.b16 %v5656
    %v8319 = vunpack.c.l.b16 %v5657
    %v8320 = vunpack.c.h.b16 %v5657
    %v8321 = vunpack.c.l.b16 %v5658
    %v8322 = vunpack.c.h.b16 %v5658
    %v8323 = vunpack.c.l.b16 %v5659
    %v8324 = vunpack.c.h.b16 %v5659
    %v8325 = vunpack.c.l.b16 %v5660
    %v8326 = vunpack.c.h.b16 %v5660
    %v8327 = vunpack.c.l.b16 %v5661
    %v8328 = vunpack.c.h.b16 %v5661
    %v8329 = vunpack.c.l.b16 %v5662
    %v8330 = vunpack.c.h.b16 %v5662
    %v8331 = vunpack.c.l.b16 %v5663
    %v8332 = vunpack.c.h.b16 %v5663
    %v8333 = vunpack.c.l.b16 %v5664
    %v8334 = vunpack.c.h.b16 %v5664
    %v8335 = vunpack.c.l.b16 %v5665
    %v8336 = vunpack.c.h.b16 %v5665
    %v8337 = vunpack.c.l.b16 %v5666
    %v8338 = vunpack.c.h.b16 %v5666
    %v8339 = vunpack.c.l.b16 %v5667
    %v8340 = vunpack.c.h.b16 %v5667
    %v8341 = vunpack.c.l.b16 %v5668
    %v8342 = vunpack.c.h.b16 %v5668
    %v8343 = vunpack.c.l.b16 %v5669
    %v8344 = vunpack.c.h.b16 %v5669
    %v8345 = vunpack.c.l.b16 %v5670
    %v8346 = vunpack.c.h.b16 %v5670
    %v8347 = vunpack.c.l.b16 %v5671
    %v8348 = vunpack.c.h.b16 %v5671
    %v8349 = vunpack.c.l.b16 %v5672
    %v8350 = vunpack.c.h.b16 %v5672
    %v8351 = vunpack.c.l.b16 %v5673
    %v8352 = vunpack.c.h.b16 %v5673
    %v8353 = vunpack.c.l.b16 %v5674
    %v8354 = vunpack.c.h.b16 %v5674
    %v8355 = vunpack.c.l.b16 %v5675
    %v8356 = vunpack.c.h.b16 %v5675
    %v8357 = vunpack.c.l.b16 %v5676
    %v8358 = vunpack.c.h.b16 %v5676
    %v8359 = vunpack.c.l.b16 %v5677
    %v8360 = vunpack.c.h.b16 %v5677
    %v8361 = vunpack.c.l.b16 %v5678
    %v8362 = vunpack.c.h.b16 %v5678
    %v8363 = vunpack.c.l.b16 %v5679
    %v8364 = vunpack.c.h.b16 %v5679
    %v8365 = vunpack.c.l.b16 %v5680
    %v8366 = vunpack.c.h.b16 %v5680
    %v8367 = vunpack.c.l.b16 %v5681
    %v8368 = vunpack.c.h.b16 %v5681
    %v8369 = vunpack.c.l.b16 %v5682
    %v8370 = vunpack.c.h.b16 %v5682
    %v8371 = vunpack.c.l.b16 %v5683
    %v8372 = vunpack.c.h.b16 %v5683
    %v8373 = vunpack.c.l.b16 %v5684
    %v8374 = vunpack.c.h.b16 %v5684
    %v8375 = vunpack.c.l.b16 %v5685
    %v8376 = vunpack.c.h.b16 %v5685
    %v8377 = vunpack.c.l.b16 %v5686
    %v8378 = vunpack.c.h.b16 %v5686
    %v8379 = vunpack.c.l.b16 %v5687
    %v8380 = vunpack.c.h.b16 %v5687
    %v8381 = vunpack.c.l.b16 %v5688
    %v8382 = vunpack.c.h.b16 %v5688
    %v8383 = vunpack.c.l.b16 %v5689
    %v8384 = vunpack.c.h.b16 %v5689
    %v8385 = vunpack.c.l.b16 %v5690
    %v8386 = vunpack.c.h.b16 %v5690
    %v8387 = vunpack.c.l.b16 %v5691
    %v8388 = vunpack.c.h.b16 %v5691
    %v8389 = vunpack.c.l.b16 %v5692
    %v8390 = vunpack.c.h.b16 %v5692
    %v8391 = vunpack.c.l.b16 %v5693
    %v8392 = vunpack.c.h.b16 %v5693
    %v8393 = vunpack.c.l.b16 %v5694
    %v8394 = vunpack.c.h.b16 %v5694
    %v8395 = vunpack.c.l.b16 %v5695
    %v8396 = vunpack.c.h.b16 %v5695
    %v8397 = vunpack.c.l.b16 %v5696
    %v8398 = vunpack.c.h.b16 %v5696
    %v8399 = vunpack.c.l.b16 %v5697
    %v8400 = vunpack.c.h.b16 %v5697
    %v8401 = vunpack.c.l.b16 %v5698
    %v8402 = vunpack.c.h.b16 %v5698
    %v8403 = vunpack.c.l.b16 %v5699
    %v8404 = vunpack.c.h.b16 %v5699
    %v8405 = vunpack.c.l.b16 %v5700
    %v8406 = vunpack.c.h.b16 %v5700
    %v8407 = vunpack.c.l.b16 %v5701
    %v8408 = vunpack.c.h.b16 %v5701
    %v8409 = vunpack.c.l.b16 %v5702
    %v8410 = vunpack.c.h.b16 %v5702
    %v8411 = vunpack.c.l.b16 %v5703
    %v8412 = vunpack.c.h.b16 %v5703
    %v8413 = vunpack.c.l.b16 %v5704
    %v8414 = vunpack.c.h.b16 %v5704
    %v8415 = vunpack.c.l.b16 %v5705
    %v8416 = vunpack.c.h.b16 %v5705
    %v8417 = vunpack.c.l.b16 %v5706
    %v8418 = vunpack.c.h.b16 %v5706
    %v8419 = vunpack.c.l.b16 %v5707
    %v8420 = vunpack.c.h.b16 %v5707
    %v8421 = vunpack.c.l.b16 %v5708
    %v8422 = vunpack.c.h.b16 %v5708
    %v8423 = vunpack.c.l.b16 %v5709
    %v8424 = vunpack.c.h.b16 %v5709
    %v8425 = vunpack.c.l.b16 %v5710
    %v8426 = vunpack.c.h.b16 %v5710
    %v8427 = vunpack.c.l.b16 %v5711
    %v8428 = vunpack.c.h.b16 %v5711
    %v8429 = vunpack.c.l.b16 %v5712
    %v8430 = vunpack.c.h.b16 %v5712
    %v8431 = vunpack.c.l.b16 %v5713
    %v8432 = vunpack.c.h.b16 %v5713
    %v8433 = vunpack.c.l.b16 %v5714
    %v8434 = vunpack.c.h.b16 %v5714
    %v8435 = vunpack.c.l.b16 %v5715
    %v8436 = vunpack.c.h.b16 %v5715
    %v8437 = vunpack.c.l.b16 %v5716
    %v8438 = vunpack.c.h.b16 %v5716
    %v8439 = vunpack.c.l.b16 %v5717
    %v8440 = vunpack.c.h.b16 %v5717
    %v8441 = vunpack.c.l.b16 %v5718
    %v8442 = vunpack.c.h.b16 %v5718
    %v8443 = vunpack.c.l.b16 %v5719
    %v8444 = vunpack.c.h.b16 %v5719
    %v8445 = vunpack.c.l.b16 %v5720
    %v8446 = vunpack.c.h.b16 %v5720
    %v8447 = vunpack.c.l.b16 %v5721
    %v8448 = vunpack.c.h.b16 %v5721
    %v8449 = vunpack.c.l.b16 %v5722
    %v8450 = vunpack.c.h.b16 %v5722
    %v8451 = vunpack.c.l.b16 %v5723
    %v8452 = vunpack.c.h.b16 %v5723
    %v8453 = vunpack.c.l.b16 %v5724
    %v8454 = vunpack.c.h.b16 %v5724
    %v8455 = vunpack.c.l.b16 %v5725
    %v8456 = vunpack.c.h.b16 %v5725
    %v8457 = vunpack.c.l.b16 %v5726
    %v8458 = vunpack.c.h.b16 %v5726
    %v8459 = vunpack.c.l.b16 %v5727
    %v8460 = vunpack.c.h.b16 %v5727
    %v8461 = vunpack.c.l.b16 %v5728
    %v8462 = vunpack.c.h.b16 %v5728
    %v8463 = vunpack.c.l.b16 %v5729
    %v8464 = vunpack.c.h.b16 %v5729
    %v8465 = vunpack.c.l.b16 %v5730
    %v8466 = vunpack.c.h.b16 %v5730
    %v8467 = vunpack.c.l.b16 %v5731
    %v8468 = vunpack.c.h.b16 %v5731
    %v8469 = vunpack.c.l.b16 %v5732
    %v8470 = vunpack.c.h.b16 %v5732
    %v8471 = vunpack.c.l.b16 %v5733
    %v8472 = vunpack.c.h.b16 %v5733
    %v8473 = vunpack.c.l.b16 %v5734
    %v8474 = vunpack.c.h.b16 %v5734
    %v8475 = vunpack.c.l.b16 %v5735
    %v8476 = vunpack.c.h.b16 %v5735
    %v8477 = vunpack.c.l.b16 %v5736
    %v8478 = vunpack.c.h.b16 %v5736
    %v8479 = vunpack.c.l.b16 %v5737
    %v8480 = vunpack.c.h.b16 %v5737
    %v8481 = vunpack.c.l.b16 %v5738
    %v8482 = vunpack.c.h.b16 %v5738
    %v8483 = vunpack.c.l.b16 %v5739
    %v8484 = vunpack.c.h.b16 %v5739
    %v8485 = vunpack.c.l.b16 %v5740
    %v8486 = vunpack.c.h.b16 %v5740
    %v8487 = vunpack.c.l.b16 %v5741
    %v8488 = vunpack.c.h.b16 %v5741
    %v8489 = vunpack.c.l.b16 %v5742
    %v8490 = vunpack.c.h.b16 %v5742
    %v8491 = vunpack.c.l.b16 %v5743
    %v8492 = vunpack.c.h.b16 %v5743
    %v8493 = vunpack.c.l.b16 %v5744
    %v8494 = vunpack.c.h.b16 %v5744
    %v8495 = vunpack.c.l.b16 %v5745
    %v8496 = vunpack.c.h.b16 %v5745
    %v8497 = vunpack.c.l.b16 %v5746
    %v8498 = vunpack.c.h.b16 %v5746
    %v8499 = vunpack.c.l.b16 %v5747
    %v8500 = vunpack.c.h.b16 %v5747
    %v8501 = vunpack.c.l.b16 %v5748
    %v8502 = vunpack.c.h.b16 %v5748
    %v8503 = vunpack.c.l.b16 %v5749
    %v8504 = vunpack.c.h.b16 %v5749
    %v8505 = vunpack.c.l.b16 %v5750
    %v8506 = vunpack.c.h.b16 %v5750
    %v8507 = vunpack.c.l.b16 %v5751
    %v8508 = vunpack.c.h.b16 %v5751
    %v8509 = vunpack.c.l.b16 %v5752
    %v8510 = vunpack.c.h.b16 %v5752
    %v8511 = vunpack.c.l.b16 %v5753
    %v8512 = vunpack.c.h.b16 %v5753
    %v8513 = vunpack.c.l.b16 %v5754
    %v8514 = vunpack.c.h.b16 %v5754
    %v8515 = vunpack.c.l.b16 %v5755
    %v8516 = vunpack.c.h.b16 %v5755
    %v8517 = vunpack.c.l.b16 %v5756
    %v8518 = vunpack.c.h.b16 %v5756
    %v8519 = vunpack.c.l.b16 %v5757
    %v8520 = vunpack.c.h.b16 %v5757
    %v8521 = vunpack.c.l.b16 %v5758
    %v8522 = vunpack.c.h.b16 %v5758
    %v8523 = vunpack.c.l.b16 %v5759
    %v8524 = vunpack.c.h.b16 %v5759
    %v8525 = vunpack.c.l.b16 %v5760
    %v8526 = vunpack.c.h.b16 %v5760
    %v8527 = vunpack.c.l.b16 %v5761
    %v8528 = vunpack.c.h.b16 %v5761
    %v8529 = vunpack.c.l.b16 %v5762
    %v8530 = vunpack.c.h.b16 %v5762
    %v8531 = vunpack.c.l.b16 %v5763
    %v8532 = vunpack.c.h.b16 %v5763
    %v8533 = vunpack.c.l.b16 %v5764
    %v8534 = vunpack.c.h.b16 %v5764
    %v8535 = vunpack.c.l.b16 %v5765
    %v8536 = vunpack.c.h.b16 %v5765
    %v8537 = vunpack.c.l.b16 %v5766
    %v8538 = vunpack.c.h.b16 %v5766
    %v8539 = vunpack.c.l.b16 %v5767
    %v8540 = vunpack.c.h.b16 %v5767
    %v8541 = vunpack.c.l.b16 %v5768
    %v8542 = vunpack.c.h.b16 %v5768
    %v8543 = vunpack.c.l.b16 %v5769
    %v8544 = vunpack.c.h.b16 %v5769
    %v8545 = vunpack.c.l.b16 %v5770
    %v8546 = vunpack.c.h.b16 %v5770
    %v8547 = vunpack.c.l.b16 %v5771
    %v8548 = vunpack.c.h.b16 %v5771
    %v8549 = vunpack.c.l.b16 %v5772
    %v8550 = vunpack.c.h.b16 %v5772
    %v8551 = vunpack.c.l.b16 %v5773
    %v8552 = vunpack.c.h.b16 %v5773
    %v8553 = vunpack.c.l.b16 %v5774
    %v8554 = vunpack.c.h.b16 %v5774
    %v8555 = vunpack.c.l.b16 %v5775
    %v8556 = vunpack.c.h.b16 %v5775
    %v8557 = vunpack.c.l.b16 %v5776
    %v8558 = vunpack.c.h.b16 %v5776
    %v8559 = vunpack.c.l.b16 %v5777
    %v8560 = vunpack.c.h.b16 %v5777
    %v8561 = vunpack.c.l.b16 %v5778
    %v8562 = vunpack.c.h.b16 %v5778
    %v8563 = vunpack.c.l.b16 %v5779
    %v8564 = vunpack.c.h.b16 %v5779
    %v8565 = vunpack.c.l.b16 %v5780
    %v8566 = vunpack.c.h.b16 %v5780
    %v8567 = vunpack.c.l.b16 %v5781
    %v8568 = vunpack.c.h.b16 %v5781
    %v8569 = vunpack.c.l.b16 %v5782
    %v8570 = vunpack.c.h.b16 %v5782
    %v8571 = vunpack.c.l.b16 %v5783
    %v8572 = vunpack.c.h.b16 %v5783
    %v8573 = vunpack.c.l.b16 %v5784
    %v8574 = vunpack.c.h.b16 %v5784
    %v8575 = vunpack.c.l.b16 %v5785
    %v8576 = vunpack.c.h.b16 %v5785
    %v8577 = vunpack.c.l.b16 %v5786
    %v8578 = vunpack.c.h.b16 %v5786
    %v8579 = vunpack.c.l.b16 %v5787
    %v8580 = vunpack.c.h.b16 %v5787
    %v8581 = vunpack.c.l.b16 %v5788
    %v8582 = vunpack.c.h.b16 %v5788
    %v8583 = vunpack.c.l.b16 %v5789
    %v8584 = vunpack.c.h.b16 %v5789
    %v8585 = vunpack.c.l.b16 %v5790
    %v8586 = vunpack.c.h.b16 %v5790
    %v8587 = vunpack.c.l.b16 %v5791
    %v8588 = vunpack.c.h.b16 %v5791
    %v8589 = vunpack.c.l.b16 %v5792
    %v8590 = vunpack.c.h.b16 %v5792
    %v8591 = vunpack.c.l.b16 %v5793
    %v8592 = vunpack.c.h.b16 %v5793
    %v8593 = vunpack.c.l.b16 %v5794
    %v8594 = vunpack.c.h.b16 %v5794
    %v8595 = vunpack.c.l.b16 %v5795
    %v8596 = vunpack.c.h.b16 %v5795
    %v8597 = vunpack.c.l.b16 %v5796
    %v8598 = vunpack.c.h.b16 %v5796
    %v8599 = vunpack.c.l.b16 %v5797
    %v8600 = vunpack.c.h.b16 %v5797
    %v8601 = vunpack.c.l.b16 %v5798
    %v8602 = vunpack.c.h.b16 %v5798
    %v8603 = vunpack.c.l.b16 %v5799
    %v8604 = vunpack.c.h.b16 %v5799
    %v8605 = vunpack.c.l.b16 %v5800
    %v8606 = vunpack.c.h.b16 %v5800
    %v8607 = vunpack.c.l.b16 %v5801
    %v8608 = vunpack.c.h.b16 %v5801
    %v8609 = vunpack.c.l.b16 %v5802
    %v8610 = vunpack.c.h.b16 %v5802
    %v8611 = vunpack.c.l.b16 %v5803
    %v8612 = vunpack.c.h.b16 %v5803
    %v8613 = vunpack.c.l.b16 %v5804
    %v8614 = vunpack.c.h.b16 %v5804
    %v8615 = vunpack.c.l.b16 %v5805
    %v8616 = vunpack.c.h.b16 %v5805
    %v8617 = vunpack.c.l.b16 %v5806
    %v8618 = vunpack.c.h.b16 %v5806
    %v8619 = vunpack.c.l.b16 %v5807
    %v8620 = vunpack.c.h.b16 %v5807
    %v8621 = vunpack.c.l.b16 %v5808
    %v8622 = vunpack.c.h.b16 %v5808
    %v8623 = vunpack.c.l.b16 %v5809
    %v8624 = vunpack.c.h.b16 %v5809
    %v8625 = vunpack.c.l.b16 %v5810
    %v8626 = vunpack.c.h.b16 %v5810
    %v8627 = vunpack.c.l.b16 %v5811
    %v8628 = vunpack.c.h.b16 %v5811
    %v8629 = vunpack.c.l.b16 %v5812
    %v8630 = vunpack.c.h.b16 %v5812
    %v8631 = vunpack.c.l.b16 %v5813
    %v8632 = vunpack.c.h.b16 %v5813
    %v8633 = vunpack.c.l.b16 %v5814
    %v8634 = vunpack.c.h.b16 %v5814
    %v8635 = vunpack.c.l.b16 %v5815
    %v8636 = vunpack.c.h.b16 %v5815
    %v8637 = vunpack.c.l.b16 %v5816
    %v8638 = vunpack.c.h.b16 %v5816
    %v8639 = vunpack.c.l.b16 %v5817
    %v8640 = vunpack.c.h.b16 %v5817
    %v8641 = vunpack.c.l.b16 %v5818
    %v8642 = vunpack.c.h.b16 %v5818
    %v8643 = vunpack.c.l.b16 %v5819
    %v8644 = vunpack.c.h.b16 %v5819
    %v8645 = vunpack.c.l.b16 %v5820
    %v8646 = vunpack.c.h.b16 %v5820
    %v8647 = vunpack.c.l.b16 %v5821
    %v8648 = vunpack.c.h.b16 %v5821
    %v8649 = vunpack.c.l.b16 %v5822
    %v8650 = vunpack.c.h.b16 %v5822
    %v8651 = vunpack.c.l.b16 %v5823
    %v8652 = vunpack.c.h.b16 %v5823
    %v8653 = vunpack.c.l.b16 %v5824
    %v8654 = vunpack.c.h.b16 %v5824
    %v8655 = vunpack.c.l.b16 %v5825
    %v8656 = vunpack.c.h.b16 %v5825
    %v8657 = vunpack.c.l.b16 %v5826
    %v8658 = vunpack.c.h.b16 %v5826
    %v8659 = vunpack.c.l.b16 %v5827
    %v8660 = vunpack.c.h.b16 %v5827
    %v8661 = vunpack.c.l.b16 %v5828
    %v8662 = vunpack.c.h.b16 %v5828
    %v8663 = vunpack.c.l.b16 %v5829
    %v8664 = vunpack.c.h.b16 %v5829
    %v8665 = vunpack.c.l.b16 %v5830
    %v8666 = vunpack.c.h.b16 %v5830
    %v8667 = vunpack.c.l.b16 %v5831
    %v8668 = vunpack.c.h.b16 %v5831
    %v8669 = vunpack.c.l.b16 %v5832
    %v8670 = vunpack.c.h.b16 %v5832
    %v8671 = vunpack.c.l.b16 %v5833
    %v8672 = vunpack.c.h.b16 %v5833
    %v8673 = vunpack.c.l.b16 %v5834
    %v8674 = vunpack.c.h.b16 %v5834
    %v8675 = vunpack.c.l.b16 %v5835
    %v8676 = vunpack.c.h.b16 %v5835
    %v8677 = vunpack.c.l.b16 %v5836
    %v8678 = vunpack.c.h.b16 %v5836
    %v8679 = vunpack.c.l.b16 %v5837
    %v8680 = vunpack.c.h.b16 %v5837
    %v8681 = vunpack.c.l.b16 %v5838
    %v8682 = vunpack.c.h.b16 %v5838
    %v8683 = vunpack.c.l.b16 %v5839
    %v8684 = vunpack.c.h.b16 %v5839
    %v8685 = vunpack.c.l.b16 %v5840
    %v8686 = vunpack.c.h.b16 %v5840
    %v8687 = vunpack.c.l.b16 %v5841
    %v8688 = vunpack.c.h.b16 %v5841
    %v8689 = vunpack.c.l.b16 %v5842
    %v8690 = vunpack.c.h.b16 %v5842
    %v8691 = vunpack.c.l.b16 %v5843
    %v8692 = vunpack.c.h.b16 %v5843
    %v8693 = vunpack.c.l.b16 %v5844
    %v8694 = vunpack.c.h.b16 %v5844
    %v8695 = vunpack.c.l.b16 %v5845
    %v8696 = vunpack.c.h.b16 %v5845
    %v8697 = vunpack.c.l.b16 %v5846
    %v8698 = vunpack.c.h.b16 %v5846
    %v8699 = vunpack.c.l.b16 %v5847
    %v8700 = vunpack.c.h.b16 %v5847
    %v8701 = vunpack.c.l.b16 %v5848
    %v8702 = vunpack.c.h.b16 %v5848
    %v8703 = vunpack.c.l.b16 %v5849
    %v8704 = vunpack.c.h.b16 %v5849
    %v8705 = vunpack.c.l.b16 %v5850
    %v8706 = vunpack.c.h.b16 %v5850
    %v8707 = vunpack.c.l.b16 %v5851
    %v8708 = vunpack.c.h.b16 %v5851
    %v8709 = vunpack.c.l.b16 %v5852
    %v8710 = vunpack.c.h.b16 %v5852
    %v8711 = vunpack.c.l.b16 %v5853
    %v8712 = vunpack.c.h.b16 %v5853
    %v8713 = vunpack.c.l.b16 %v5854
    %v8714 = vunpack.c.h.b16 %v5854
    %v8715 = vunpack.c.l.b16 %v5855
    %v8716 = vunpack.c.h.b16 %v5855
    %v8717 = vunpack.c.l.b16 %v5856
    %v8718 = vunpack.c.h.b16 %v5856
    %v8719 = vunpack.c.l.b16 %v5857
    %v8720 = vunpack.c.h.b16 %v5857
    %v8721 = vunpack.c.l.b16 %v5858
    %v8722 = vunpack.c.h.b16 %v5858
    %v8723 = vunpack.c.l.b16 %v5859
    %v8724 = vunpack.c.h.b16 %v5859
    %v8725 = vunpack.c.l.b16 %v5860
    %v8726 = vunpack.c.h.b16 %v5860
    %v8727 = vunpack.c.l.b16 %v5861
    %v8728 = vunpack.c.h.b16 %v5861
    %v8729 = vunpack.c.l.b16 %v5862
    %v8730 = vunpack.c.h.b16 %v5862
    %v8731 = vunpack.c.l.b16 %v5863
    %v8732 = vunpack.c.h.b16 %v5863
    %v8733 = vunpack.c.l.b16 %v5864
    %v8734 = vunpack.c.h.b16 %v5864
    %v8735 = vunpack.c.l.b16 %v5865
    %v8736 = vunpack.c.h.b16 %v5865
    %v8737 = vunpack.c.l.b16 %v5866
    %v8738 = vunpack.c.h.b16 %v5866
    %v8739 = vunpack.c.l.b16 %v5867
    %v8740 = vunpack.c.h.b16 %v5867
    %v8741 = vunpack.c.l.b16 %v5868
    %v8742 = vunpack.c.h.b16 %v5868
    %v8743 = vunpack.c.l.b16 %v5869
    %v8744 = vunpack.c.h.b16 %v5869
    %v8745 = vunpack.c.l.b16 %v5870
    %v8746 = vunpack.c.h.b16 %v5870
    %v8747 = vunpack.c.l.b16 %v5871
    %v8748 = vunpack.c.h.b16 %v5871
    %v8749 = vunpack.c.l.b16 %v5872
    %v8750 = vunpack.c.h.b16 %v5872
    %v8751 = vunpack.c.l.b16 %v5873
    %v8752 = vunpack.c.h.b16 %v5873
    %v8753 = vunpack.c.l.b16 %v5874
    %v8754 = vunpack.c.h.b16 %v5874
    %v8755 = vunpack.c.l.b16 %v5875
    %v8756 = vunpack.c.h.b16 %v5875
    %v8757 = vunpack.c.l.b16 %v5876
    %v8758 = vunpack.c.h.b16 %v5876
    %v8759 = vunpack.c.l.b16 %v5877
    %v8760 = vunpack.c.h.b16 %v5877
    %v8761 = vunpack.c.l.b16 %v5878
    %v8762 = vunpack.c.h.b16 %v5878
    %v8763 = vunpack.c.l.b16 %v5879
    %v8764 = vunpack.c.h.b16 %v5879
    %v8765 = vunpack.c.l.b16 %v5880
    %v8766 = vunpack.c.h.b16 %v5880
    %v8767 = vunpack.c.l.b16 %v5881
    %v8768 = vunpack.c.h.b16 %v5881
    %v8769 = vunpack.c.l.b16 %v5882
    %v8770 = vunpack.c.h.b16 %v5882
    %v8771 = vunpack.c.l.b16 %v5883
    %v8772 = vunpack.c.h.b16 %v5883
    %v8773 = vunpack.c.l.b16 %v5884
    %v8774 = vunpack.c.h.b16 %v5884
    %v8775 = vunpack.c.l.b16 %v5885
    %v8776 = vunpack.c.h.b16 %v5885
    %v8777 = vunpack.c.l.b16 %v5886
    %v8778 = vunpack.c.h.b16 %v5886
    %v8779 = vunpack.c.l.b16 %v5887
    %v8780 = vunpack.c.h.b16 %v5887
    %v8781 = vunpack.c.l.b16 %v5888
    %v8782 = vunpack.c.h.b16 %v5888
    %v8783 = vunpack.c.l.b16 %v5889
    %v8784 = vunpack.c.h.b16 %v5889
    %v8785 = vunpack.c.l.b16 %v5890
    %v8786 = vunpack.c.h.b16 %v5890
    %v8787 = vunpack.c.l.b16 %v5891
    %v8788 = vunpack.c.h.b16 %v5891
    %v8789 = vunpack.c.l.b16 %v5892
    %v8790 = vunpack.c.h.b16 %v5892
    %v8791 = vunpack.c.l.b16 %v5893
    %v8792 = vunpack.c.h.b16 %v5893
    %v8793 = vunpack.c.l.b16 %v5894
    %v8794 = vunpack.c.h.b16 %v5894
    %v8795 = vunpack.c.l.b16 %v5895
    %v8796 = vunpack.c.h.b16 %v5895
    %v8797 = vunpack.c.l.b16 %v5896
    %v8798 = vunpack.c.h.b16 %v5896
    %v8799 = vunpack.c.l.b16 %v5897
    %v8800 = vunpack.c.h.b16 %v5897
    %v8801 = vunpack.c.l.b16 %v5898
    %v8802 = vunpack.c.h.b16 %v5898
    %v8803 = vunpack.c.l.b16 %v5899
    %v8804 = vunpack.c.h.b16 %v5899
    %v8805 = vunpack.c.l.b16 %v5900
    %v8806 = vunpack.c.h.b16 %v5900
    %v8807 = vunpack.c.l.b16 %v5901
    %v8808 = vunpack.c.h.b16 %v5901
    %v8809 = vunpack.c.l.b16 %v5902
    %v8810 = vunpack.c.h.b16 %v5902
    %v8811 = vunpack.c.l.b16 %v5903
    %v8812 = vunpack.c.h.b16 %v5903
    %v8813 = vunpack.c.l.b16 %v5904
    %v8814 = vunpack.c.h.b16 %v5904
    %v8815 = vunpack.c.l.b16 %v5905
    %v8816 = vunpack.c.h.b16 %v5905
    %v8817 = vunpack.c.l.b16 %v5906
    %v8818 = vunpack.c.h.b16 %v5906
    %v8819 = vunpack.c.l.b16 %v5907
    %v8820 = vunpack.c.h.b16 %v5907
    %v8821 = vunpack.c.l.b16 %v5908
    %v8822 = vunpack.c.h.b16 %v5908
    %v8823 = vunpack.c.l.b16 %v5909
    %v8824 = vunpack.c.h.b16 %v5909
    %v8825 = vunpack.c.l.b16 %v5910
    %v8826 = vunpack.c.h.b16 %v5910
    %v8827 = vunpack.c.l.b16 %v5911
    %v8828 = vunpack.c.h.b16 %v5911
    %v8829 = vunpack.c.l.b16 %v5912
    %v8830 = vunpack.c.h.b16 %v5912
    %v8831 = vunpack.c.l.b16 %v5913
    %v8832 = vunpack.c.h.b16 %v5913
    %v8833 = vunpack.c.l.b16 %v5914
    %v8834 = vunpack.c.h.b16 %v5914
    %v8835 = vunpack.c.l.b16 %v5915
    %v8836 = vunpack.c.h.b16 %v5915
    %v8837 = vunpack.c.l.b16 %v5916
    %v8838 = vunpack.c.h.b16 %v5916
    %v8839 = vunpack.c.l.b16 %v5917
    %v8840 = vunpack.c.h.b16 %v5917
    %v8841 = vunpack.c.l.b16 %v5918
    %v8842 = vunpack.c.h.b16 %v5918
    %v8843 = vunpack.c.l.b16 %v5919
    %v8844 = vunpack.c.h.b16 %v5919
    %v8845 = vunpack.c.l.b16 %v5920
    %v8846 = vunpack.c.h.b16 %v5920
    %v8847 = vunpack.c.l.b16 %v5921
    %v8848 = vunpack.c.h.b16 %v5921
    %v8849 = vunpack.c.l.b16 %v5922
    %v8850 = vunpack.c.h.b16 %v5922
    %v8851 = vunpack.c.l.b16 %v5923
    %v8852 = vunpack.c.h.b16 %v5923
    %v8853 = vunpack.c.l.b16 %v5924
    %v8854 = vunpack.c.h.b16 %v5924
    %v8855 = vunpack.c.l.b16 %v5925
    %v8856 = vunpack.c.h.b16 %v5925
    %v8857 = vunpack.c.l.b16 %v5926
    %v8858 = vunpack.c.h.b16 %v5926
    %v8859 = vunpack.c.l.b16 %v5927
    %v8860 = vunpack.c.h.b16 %v5927
    %v8861 = vunpack.c.l.b16 %v5928
    %v8862 = vunpack.c.h.b16 %v5928
    %v8863 = vunpack.c.l.b16 %v5929
    %v8864 = vunpack.c.h.b16 %v5929
    %v8865 = vunpack.c.l.b16 %v5930
    %v8866 = vunpack.c.h.b16 %v5930
    %v8867 = vunpack.c.l.b16 %v5931
    %v8868 = vunpack.c.h.b16 %v5931
    %v8869 = vunpack.c.l.b16 %v5932
    %v8870 = vunpack.c.h.b16 %v5932
    %v8871 = vunpack.c.l.b16 %v5933
    %v8872 = vunpack.c.h.b16 %v5933
    %v8873 = vunpack.c.l.b16 %v5934
    %v8874 = vunpack.c.h.b16 %v5934
    %v8875 = vunpack.c.l.b16 %v5935
    %v8876 = vunpack.c.h.b16 %v5935
    %v8877 = vunpack.c.l.b16 %v5936
    %v8878 = vunpack.c.h.b16 %v5936
    %v8879 = vunpack.c.l.b16 %v5937
    %v8880 = vunpack.c.h.b16 %v5937
    %v8881 = vunpack.c.l.b16 %v5938
    %v8882 = vunpack.c.h.b16 %v5938
    %v8883 = vunpack.c.l.b16 %v5939
    %v8884 = vunpack.c.h.b16 %v5939
    %v8885 = vunpack.c.l.b16 %v5940
    %v8886 = vunpack.c.h.b16 %v5940
    %v8887 = vunpack.c.l.b16 %v5941
    %v8888 = vunpack.c.h.b16 %v5941
    %v8889 = vunpack.c.l.b16 %v5942
    %v8890 = vunpack.c.h.b16 %v5942
    %v8891 = vunpack.c.l.b16 %v5943
    %v8892 = vunpack.c.h.b16 %v5943
    %v8893 = vunpack.c.l.b16 %v5944
    %v8894 = vunpack.c.h.b16 %v5944
    %v8895 = vunpack.c.l.b16 %v5945
    %v8896 = vunpack.c.h.b16 %v5945
    %v8897 = vunpack.c.l.b16 %v5946
    %v8898 = vunpack.c.h.b16 %v5946
    %v8899 = vunpack.c.l.b16 %v5947
    %v8900 = vunpack.c.h.b16 %v5947
    %v8901 = vunpack.c.l.b16 %v5948
    %v8902 = vunpack.c.h.b16 %v5948
    %v8903 = vunpack.c.l.b16 %v5949
    %v8904 = vunpack.c.h.b16 %v5949
    %v8905 = vunpack.c.l.b16 %v5950
    %v8906 = vunpack.c.h.b16 %v5950
    %v8907 = vunpack.c.l.b16 %v5951
    %v8908 = vunpack.c.h.b16 %v5951
    %v8909 = vunpack.c.l.b16 %v5952
    %v8910 = vunpack.c.h.b16 %v5952
    %v8911 = vunpack.c.l.b16 %v5953
    %v8912 = vunpack.c.h.b16 %v5953
    %v8913 = vunpack.c.l.b16 %v5954
    %v8914 = vunpack.c.h.b16 %v5954
    %v8915 = vunpack.c.l.b16 %v5955
    %v8916 = vunpack.c.h.b16 %v5955
    %v8917 = vunpack.c.l.b16 %v5956
    %v8918 = vunpack.c.h.b16 %v5956
    %v8919 = vunpack.c.l.b16 %v5957
    %v8920 = vunpack.c.h.b16 %v5957
    %v8921 = vunpack.c.l.b16 %v5958
    %v8922 = vunpack.c.h.b16 %v5958
    %v8923 = vunpack.c.l.b16 %v5959
    %v8924 = vunpack.c.h.b16 %v5959
    %v8925 = vunpack.c.l.b16 %v5960
    %v8926 = vunpack.c.h.b16 %v5960
    %v8927 = vunpack.c.l.b16 %v5961
    %v8928 = vunpack.c.h.b16 %v5961
    %v8929 = vunpack.c.l.b16 %v5962
    %v8930 = vunpack.c.h.b16 %v5962
    %v8931 = vunpack.c.l.b16 %v5963
    %v8932 = vunpack.c.h.b16 %v5963
    %v8933 = vunpack.c.l.b16 %v5964
    %v8934 = vunpack.c.h.b16 %v5964
    %v8935 = vunpack.c.l.b16 %v5965
    %v8936 = vunpack.c.h.b16 %v5965
    %v8937 = vunpack.c.l.b16 %v5966
    %v8938 = vunpack.c.h.b16 %v5966
    %v8939 = vunpack.c.l.b16 %v5967
    %v8940 = vunpack.c.h.b16 %v5967
    %v8941 = vunpack.c.l.b16 %v5968
    %v8942 = vunpack.c.h.b16 %v5968
    %v8943 = vunpack.c.l.b16 %v5969
    %v8944 = vunpack.c.h.b16 %v5969
    %v8945 = vunpack.c.l.b16 %v5970
    %v8946 = vunpack.c.h.b16 %v5970
    %v8947 = vunpack.c.l.b16 %v5971
    %v8948 = vunpack.c.h.b16 %v5971
    %v8949 = vunpack.c.l.b16 %v5972
    %v8950 = vunpack.c.h.b16 %v5972
    %v8951 = vunpack.c.l.b16 %v5973
    %v8952 = vunpack.c.h.b16 %v5973
    %v8953 = vunpack.c.l.b16 %v5974
    %v8954 = vunpack.c.h.b16 %v5974
    %v8955 = vunpack.c.l.b16 %v5975
    %v8956 = vunpack.c.h.b16 %v5975
    %v8957 = vunpack.c.l.b16 %v5976
    %v8958 = vunpack.c.h.b16 %v5976
    %v8959 = vunpack.c.l.b16 %v5977
    %v8960 = vunpack.c.h.b16 %v5977
    %v8961 = vunpack.c.l.b16 %v5978
    %v8962 = vunpack.c.h.b16 %v5978
    %v8963 = vunpack.c.l.b16 %v5979
    %v8964 = vunpack.c.h.b16 %v5979
    %v8965 = vunpack.c.l.b16 %v5980
    %v8966 = vunpack.c.h.b16 %v5980
    %v8967 = vunpack.c.l.b16 %v5981
    %v8968 = vunpack.c.h.b16 %v5981
    %v8969 = vunpack.c.l.b16 %v5982
    %v8970 = vunpack.c.h.b16 %v5982
    %v8971 = vunpack.c.l.b16 %v5983
    %v8972 = vunpack.c.h.b16 %v5983
    %v8973 = vunpack.c.l.b16 %v5984
    %v8974 = vunpack.c.h.b16 %v5984
    %v8975 = vunpack.c.l.b16 %v5985
    %v8976 = vunpack.c.h.b16 %v5985
    %v8977 = vunpack.c.l.b16 %v5986
    %v8978 = vunpack.c.h.b16 %v5986
    %v8979 = vunpack.c.l.b16 %v5987
    %v8980 = vunpack.c.h.b16 %v5987
    %v8981 = vunpack.c.l.b16 %v5988
    %v8982 = vunpack.c.h.b16 %v5988
    %v8983 = vunpack.c.l.b16 %v5989
    %v8984 = vunpack.c.h.b16 %v5989
    %v8985 = vunpack.c.l.b16 %v5990
    %v8986 = vunpack.c.h.b16 %v5990
    %v8987 = vunpack.c.l.b16 %v5991
    %v8988 = vunpack.c.h.b16 %v5991
    %v8989 = vunpack.c.l.b16 %v5992
    %v8990 = vunpack.c.h.b16 %v5992
    %v8991 = vunpack.c.l.b16 %v5993
    %v8992 = vunpack.c.h.b16 %v5993
    %v8993 = vunpack.c.l.b16 %v5994
    %v8994 = vunpack.c.h.b16 %v5994
    %v8995 = vunpack.c.l.b16 %v5995
    %v8996 = vunpack.c.h.b16 %v5995
    %v8997 = vunpack.c.l.b16 %v5996
    %v8998 = vunpack.c.h.b16 %v5996
    %v8999 = vunpack.c.l.b16 %v5997
    %v9000 = vunpack.c.h.b16 %v5997
    %v9001 = vunpack.c.l.b16 %v5998
    %v9002 = vunpack.c.h.b16 %v5998
    %v9003 = vunpack.c.l.b16 %v5999
    %v9004 = vunpack.c.h.b16 %v5999
    %v9005 = vunpack.c.l.b16 %v6000
    %v9006 = vunpack.c.h.b16 %v6000
    %v9007 = vunpack.c.l.b16 %v6001
    %v9008 = vunpack.c.h.b16 %v6001
    %v9009 = vunpack.c.l.b16 %v6002
    %v9010 = vunpack.c.h.b16 %v6002
    %v9011 = vunpack.c.l.b16 %v6003
    %v9012 = vunpack.c.h.b16 %v6003
    %v9013 = vunpack.c.l.b16 %v6004
    %v9014 = vunpack.c.h.b16 %v6004
    %v9015 = vunpack.c.l.b16 %v6005
    %v9016 = vunpack.c.h.b16 %v6005
    %v9017 = vunpack.c.l.b16 %v6006
    %v9018 = vunpack.c.h.b16 %v6006
    %v9019 = vunpack.c.l.b16 %v6007
    %v9020 = vunpack.c.h.b16 %v6007
    %v9021 = vunpack.c.l.b16 %v6008
    %v9022 = vunpack.c.h.b16 %v6008
    %v9023 = vunpack.c.l.b16 %v6009
    %v9024 = vunpack.c.h.b16 %v6009
    %v9025 = vunpack.c.l.b16 %v6010
    %v9026 = vunpack.c.h.b16 %v6010
    %v9027 = vunpack.c.l.b16 %v6011
    %v9028 = vunpack.c.h.b16 %v6011
    %v9029 = vunpack.c.l.b16 %v6012
    %v9030 = vunpack.c.h.b16 %v6012
    %v9031 = vunpack.c.l.b16 %v6013
    %v9032 = vunpack.c.h.b16 %v6013
    %v9033 = vunpack.c.l.b16 %v6014
    %v9034 = vunpack.c.h.b16 %v6014
    %v9035 = vunpack.c.l.b16 %v6015
    %v9036 = vunpack.c.h.b16 %v6015
    %v9037 = vunpack.c.l.b16 %v6016
    %v9038 = vunpack.c.h.b16 %v6016
    %v9039 = vunpack.c.l.b16 %v6017
    %v9040 = vunpack.c.h.b16 %v6017
    %v9041 = vunpack.c.l.b16 %v6018
    %v9042 = vunpack.c.h.b16 %v6018
    %v9043 = vunpack.c.l.b16 %v6019
    %v9044 = vunpack.c.h.b16 %v6019
    %v9045 = vunpack.c.l.b16 %v6020
    %v9046 = vunpack.c.h.b16 %v6020
    %v9047 = vunpack.c.l.b16 %v6021
    %v9048 = vunpack.c.h.b16 %v6021
    %v9049 = vunpack.c.l.b16 %v6022
    %v9050 = vunpack.c.h.b16 %v6022
    %v9051 = vunpack.c.l.b16 %v6023
    %v9052 = vunpack.c.h.b16 %v6023
    %v9053 = vunpack.c.l.b16 %v6024
    %v9054 = vunpack.c.h.b16 %v6024
    %v9055 = vunpack.c.l.b16 %v6025
    %v9056 = vunpack.c.h.b16 %v6025
    %v9057 = vunpack.c.l.b16 %v6026
    %v9058 = vunpack.c.h.b16 %v6026
    %v9059 = vunpack.c.l.b16 %v6027
    %v9060 = vunpack.c.h.b16 %v6027
    %v9061 = vunpack.c.l.b16 %v6028
    %v9062 = vunpack.c.h.b16 %v6028
    %v9063 = vunpack.c.l.b16 %v6029
    %v9064 = vunpack.c.h.b16 %v6029
    %v9065 = vunpack.c.l.b16 %v6030
    %v9066 = vunpack.c.h.b16 %v6030
    %v9067 = vunpack.c.l.b16 %v6031
    %v9068 = vunpack.c.h.b16 %v6031
    %v9069 = vunpack.c.l.b16 %v6032
    %v9070 = vunpack.c.h.b16 %v6032
    %v9071 = vunpack.c.l.b16 %v6033
    %v9072 = vunpack.c.h.b16 %v6033
    %v9073 = vunpack.c.l.b16 %v6034
    %v9074 = vunpack.c.h.b16 %v6034
    %v9075 = vunpack.c.l.b16 %v6035
    %v9076 = vunpack.c.h.b16 %v6035
    %v9077 = vunpack.c.l.b16 %v6036
    %v9078 = vunpack.c.h.b16 %v6036
    %v9079 = vunpack.c.l.b16 %v6037
    %v9080 = vunpack.c.h.b16 %v6037
    %v9081 = vunpack.c.l.b16 %v6038
    %v9082 = vunpack.c.h.b16 %v6038
    %v9083 = vunpack.c.l.b16 %v6039
    %v9084 = vunpack.c.h.b16 %v6039
    %v9085 = vunpack.c.l.b16 %v6040
    %v9086 = vunpack.c.h.b16 %v6040
    %v9087 = vunpack.c.l.b16 %v6041
    %v9088 = vunpack.c.h.b16 %v6041
    %v9089 = vunpack.c.l.b16 %v6042
    %v9090 = vunpack.c.h.b16 %v6042
    %v9091 = vunpack.c.l.b16 %v6043
    %v9092 = vunpack.c.h.b16 %v6043
    %v9093 = vunpack.c.l.b16 %v6044
    %v9094 = vunpack.c.h.b16 %v6044
    %v9095 = vunpack.c.l.b16 %v6045
    %v9096 = vunpack.c.h.b16 %v6045
    %v9097 = vunpack.c.l.b16 %v6046
    %v9098 = vunpack.c.h.b16 %v6046
    %v9099 = vunpack.c.l.b16 %v6047
    %v9100 = vunpack.c.h.b16 %v6047
    %v9101 = vunpack.c.l.b16 %v6048
    %v9102 = vunpack.c.h.b16 %v6048
    %v9103 = vunpack.c.l.b16 %v6049
    %v9104 = vunpack.c.h.b16 %v6049
    %v9105 = vunpack.c.l.b16 %v6050
    %v9106 = vunpack.c.h.b16 %v6050
    %v9107 = vunpack.c.l.b16 %v6051
    %v9108 = vunpack.c.h.b16 %v6051
    %v9109 = vunpack.c.l.b16 %v6052
    %v9110 = vunpack.c.h.b16 %v6052
    %v9111 = vunpack.c.l.b16 %v6053
    %v9112 = vunpack.c.h.b16 %v6053
    %v9113 = vunpack.c.l.b16 %v6054
    %v9114 = vunpack.c.h.b16 %v6054
    %v9115 = vunpack.c.l.b16 %v6055
    %v9116 = vunpack.c.h.b16 %v6055
    %v9117 = vunpack.c.l.b16 %v6056
    %v9118 = vunpack.c.h.b16 %v6056
    %v9119 = vunpack.c.l.b16 %v6057
    %v9120 = vunpack.c.h.b16 %v6057
    %v9121 = vunpack.c.l.b16 %v6058
    %v9122 = vunpack.c.h.b16 %v6058
    %v9123 = vunpack.c.l.b16 %v6059
    %v9124 = vunpack.c.h.b16 %v6059
    %v9125 = vunpack.c.l.b16 %v6060
    %v9126 = vunpack.c.h.b16 %v6060
    %v9127 = vunpack.c.l.b16 %v6061
    %v9128 = vunpack.c.h.b16 %v6061
    %v9129 = vunpack.c.l.b16 %v6062
    %v9130 = vunpack.c.h.b16 %v6062
    %v9131 = vunpack.c.l.b16 %v6063
    %v9132 = vunpack.c.h.b16 %v6063
    %v9133 = vunpack.c.l.b16 %v6064
    %v9134 = vunpack.c.h.b16 %v6064
    %v9135 = vunpack.c.l.b16 %v6065
    %v9136 = vunpack.c.h.b16 %v6065
    %v9137 = vunpack.c.l.b16 %v6066
    %v9138 = vunpack.c.h.b16 %v6066
    %v9139 = vunpack.c.l.b16 %v6067
    %v9140 = vunpack.c.h.b16 %v6067
    %v9141 = vunpack.c.l.b16 %v6068
    %v9142 = vunpack.c.h.b16 %v6068
    %v9143 = vunpack.c.l.b16 %v6069
    %v9144 = vunpack.c.h.b16 %v6069
    %v9145 = vunpack.c.l.b16 %v6070
    %v9146 = vunpack.c.h.b16 %v6070
    %v9147 = vunpack.c.l.b16 %v6071
    %v9148 = vunpack.c.h.b16 %v6071
    %v9149 = vunpack.c.l.b16 %v6072
    %v9150 = vunpack.c.h.b16 %v6072
    %v9151 = vunpack.c.l.b16 %v6073
    %v9152 = vunpack.c.h.b16 %v6073
    %v9153 = vunpack.c.l.b16 %v6074
    %v9154 = vunpack.c.h.b16 %v6074
    %v9155 = vunpack.c.l.b16 %v6075
    %v9156 = vunpack.c.h.b16 %v6075
    %v9157 = vunpack.c.l.b16 %v6076
    %v9158 = vunpack.c.h.b16 %v6076
    %v9159 = vunpack.c.l.b16 %v6077
    %v9160 = vunpack.c.h.b16 %v6077
    %v9161 = vunpack.c.l.b16 %v6078
    %v9162 = vunpack.c.h.b16 %v6078
    %v9163 = vunpack.c.l.b16 %v6079
    %v9164 = vunpack.c.h.b16 %v6079
    %v9165 = vunpack.c.l.b16 %v6080
    %v9166 = vunpack.c.h.b16 %v6080
    %v9167 = vunpack.c.l.b16 %v6081
    %v9168 = vunpack.c.h.b16 %v6081
    %v9169 = vunpack.c.l.b16 %v6082
    %v9170 = vunpack.c.h.b16 %v6082
    %v9171 = vunpack.c.l.b16 %v6083
    %v9172 = vunpack.c.h.b16 %v6083
    %v9173 = vunpack.c.l.b16 %v6084
    %v9174 = vunpack.c.h.b16 %v6084
    %v9175 = vunpack.c.l.b16 %v6085
    %v9176 = vunpack.c.h.b16 %v6085
    %v9177 = vunpack.c.l.b16 %v6086
    %v9178 = vunpack.c.h.b16 %v6086
    %v9179 = vunpack.c.l.b16 %v6087
    %v9180 = vunpack.c.h.b16 %v6087
    %v9181 = vunpack.c.l.b16 %v6088
    %v9182 = vunpack.c.h.b16 %v6088
    %v9183 = vunpack.c.l.b16 %v6089
    %v9184 = vunpack.c.h.b16 %v6089
    %v9185 = vunpack.c.l.b16 %v6090
    %v9186 = vunpack.c.h.b16 %v6090
    %v9187 = vunpack.c.l.b16 %v6091
    %v9188 = vunpack.c.h.b16 %v6091
    %v9189 = vunpack.c.l.b16 %v6092
    %v9190 = vunpack.c.h.b16 %v6092
    %v9191 = vunpack.c.l.b16 %v6093
    %v9192 = vunpack.c.h.b16 %v6093
    %v9193 = vunpack.c.l.b16 %v6094
    %v9194 = vunpack.c.h.b16 %v6094
    %v9195 = vunpack.c.l.b16 %v6095
    %v9196 = vunpack.c.h.b16 %v6095
    %v9197 = vunpack.c.l.b16 %v6096
    %v9198 = vunpack.c.h.b16 %v6096
    %v9199 = vunpack.c.l.b16 %v6097
    %v9200 = vunpack.c.h.b16 %v6097
    %v9201 = vunpack.c.l.b16 %v6098
    %v9202 = vunpack.c.h.b16 %v6098
    %v9203 = vunpack.c.l.b16 %v6099
    %v9204 = vunpack.c.h.b16 %v6099
    %v9205 = vunpack.c.l.b16 %v6100
    %v9206 = vunpack.c.h.b16 %v6100
    %v9207 = vunpack.c.l.b16 %v6101
    %v9208 = vunpack.c.h.b16 %v6101
    %v9209 = vunpack.c.l.b16 %v6102
    %v9210 = vunpack.c.h.b16 %v6102
    %v9211 = vunpack.c.l.b16 %v6103
    %v9212 = vunpack.c.h.b16 %v6103
    %v9213 = vunpack.c.l.b16 %v6104
    %v9214 = vunpack.c.h.b16 %v6104
    %v9215 = vunpack.c.l.b16 %v6105
    %v9216 = vunpack.c.h.b16 %v6105
    %v9217 = vunpack.c.l.b16 %v6106
    %v9218 = vunpack.c.h.b16 %v6106
    %v9219 = vunpack.c.l.b16 %v6107
    %v9220 = vunpack.c.h.b16 %v6107
    %v9221 = vunpack.c.l.b16 %v6108
    %v9222 = vunpack.c.h.b16 %v6108
    %v9223 = vpack.c.b16 %v7183, %v7175
    %v9224 = vpack.c.b16 %v7184, %v7176
    %v9225 = vpack.c.b16 %v7185, %v7177
    %v9226 = vpack.c.b16 %v7186, %v7178
    %v9227 = vpack.c.b16 %v7187, %v7179
    %v9228 = vpack.c.b16 %v7188, %v7180
    %v9229 = vpack.c.b16 %v7189, %v7181
    %v9230 = vpack.c.b16 %v7190, %v7182
    %v9231 = vpack.c.b16 %v7199, %v7191
    %v9232 = vpack.c.b16 %v7200, %v7192
    %v9233 = vpack.c.b16 %v7201, %v7193
    %v9234 = vpack.c.b16 %v7202, %v7194
    %v9235 = vpack.c.b16 %v7203, %v7195
    %v9236 = vpack.c.b16 %v7204, %v7196
    %v9237 = vpack.c.b16 %v7205, %v7197
    %v9238 = vpack.c.b16 %v7206, %v7198
    %v9239 = vpack.c.b16 %v7215, %v7207
    %v9240 = vpack.c.b16 %v7216, %v7208
    %v9241 = vpack.c.b16 %v7217, %v7209
    %v9242 = vpack.c.b16 %v7218, %v7210
    %v9243 = vpack.c.b16 %v7219, %v7211
    %v9244 = vpack.c.b16 %v7220, %v7212
    %v9245 = vpack.c.b16 %v7221, %v7213
    %v9246 = vpack.c.b16 %v7222, %v7214
    %v9247 = vpack.c.b16 %v7231, %v7223
    %v9248 = vpack.c.b16 %v7232, %v7224
    %v9249 = vpack.c.b16 %v7233, %v7225
    %v9250 = vpack.c.b16 %v7234, %v7226
    %v9251 = vpack.c.b16 %v7235, %v7227
    %v9252 = vpack.c.b16 %v7236, %v7228
    %v9253 = vpack.c.b16 %v7237, %v7229
    %v9254 = vpack.c.b16 %v7238, %v7230
    %v9255 = vpack.c.b16 %v7247, %v7239
    %v9256 = vpack.c.b16 %v7248, %v7240
    %v9257 = vpack.c.b16 %v7249, %v7241
    %v9258 = vpack.c.b16 %v7250, %v7242
    %v9259 = vpack.c.b16 %v7251, %v7243
    %v9260 = vpack.c.b16 %v7252, %v7244
    %v9261 = vpack.c.b16 %v7253, %v7245
    %v9262 = vpack.c.b16 %v7254, %v7246
    %v9263 = vpack.c.b16 %v7263, %v7255
    %v9264 = vpack.c.b16 %v7264, %v7256
    %v9265 = vpack.c.b16 %v7265, %v7257
    %v9266 = vpack.c.b16 %v7266, %v7258
    %v9267 = vpack.c.b16 %v7267, %v7259
    %v9268 = vpack.c.b16 %v7268, %v7260
    %v9269 = vpack.c.b16 %v7269, %v7261
    %v9270 = vpack.c.b16 %v7270, %v7262
    %v9271 = vpack.c.b16 %v7279, %v7271
    %v9272 = vpack.c.b16 %v7280, %v7272
    %v9273 = vpack.c.b16 %v7281, %v7273
    %v9274 = vpack.c.b16 %v7282, %v7274
    %v9275 = vpack.c.b16 %v7283, %v7275
    %v9276 = vpack.c.b16 %v7284, %v7276
    %v9277 = vpack.c.b16 %v7285, %v7277
    %v9278 = vpack.c.b16 %v7286, %v7278
    %v9279 = vpack.c.b16 %v7295, %v7287
    %v9280 = vpack.c.b16 %v7296, %v7288
    %v9281 = vpack.c.b16 %v7297, %v7289
    %v9282 = vpack.c.b16 %v7298, %v7290
    %v9283 = vpack.c.b16 %v7299, %v7291
    %v9284 = vpack.c.b16 %v7300, %v7292
    %v9285 = vpack.c.b16 %v7301, %v7293
    %v9286 = vpack.c.b16 %v7302, %v7294
    %v9287 = vpack.c.b16 %v7311, %v7303
    %v9288 = vpack.c.b16 %v7312, %v7304
    %v9289 = vpack.c.b16 %v7313, %v7305
    %v9290 = vpack.c.b16 %v7314, %v7306
    %v9291 = vpack.c.b16 %v7315, %v7307
    %v9292 = vpack.c.b16 %v7316, %v7308
    %v9293 = vpack.c.b16 %v7317, %v7309
    %v9294 = vpack.c.b16 %v7318, %v7310
    %v9295 = vpack.c.b16 %v7327, %v7319
    %v9296 = vpack.c.b16 %v7328, %v7320
    %v9297 = vpack.c.b16 %v7329, %v7321
    %v9298 = vpack.c.b16 %v7330, %v7322
    %v9299 = vpack.c.b16 %v7331, %v7323
    %v9300 = vpack.c.b16 %v7332, %v7324
    %v9301 = vpack.c.b16 %v7333, %v7325
    %v9302 = vpack.c.b16 %v7334, %v7326
    %v9303 = vpack.c.b16 %v7343, %v7335
    %v9304 = vpack.c.b16 %v7344, %v7336
    %v9305 = vpack.c.b16 %v7345, %v7337
    %v9306 = vpack.c.b16 %v7346, %v7338
    %v9307 = vpack.c.b16 %v7347, %v7339
    %v9308 = vpack.c.b16 %v7348, %v7340
    %v9309 = vpack.c.b16 %v7349, %v7341
    %v9310 = vpack.c.b16 %v7350, %v7342
    %v9311 = vpack.c.b16 %v7359, %v7351
    %v9312 = vpack.c.b16 %v7360, %v7352
    %v9313 = vpack.c.b16 %v7361, %v7353
    %v9314 = vpack.c.b16 %v7362, %v7354
    %v9315 = vpack.c.b16 %v7363, %v7355
    %v9316 = vpack.c.b16 %v7364, %v7356
    %v9317 = vpack.c.b16 %v7365, %v7357
    %v9318 = vpack.c.b16 %v7366, %v7358
    %v9319 = vpack.c.b16 %v7375, %v7367
    %v9320 = vpack.c.b16 %v7376, %v7368
    %v9321 = vpack.c.b16 %v7377, %v7369
    %v9322 = vpack.c.b16 %v7378, %v7370
    %v9323 = vpack.c.b16 %v7379, %v7371
    %v9324 = vpack.c.b16 %v7380, %v7372
    %v9325 = vpack.c.b16 %v7381, %v7373
    %v9326 = vpack.c.b16 %v7382, %v7374
    %v9327 = vpack.c.b16 %v7391, %v7383
    %v9328 = vpack.c.b16 %v7392, %v7384
    %v9329 = vpack.c.b16 %v7393, %v7385
    %v9330 = vpack.c.b16 %v7394, %v7386
    %v9331 = vpack.c.b16 %v7395, %v7387
    %v9332 = vpack.c.b16 %v7396, %v7388
    %v9333 = vpack.c.b16 %v7397, %v7389
    %v9334 = vpack.c.b16 %v7398, %v7390
    %v9335 = vpack.c.b16 %v7407, %v7399
    %v9336 = vpack.c.b16 %v7408, %v7400
    %v9337 = vpack.c.b16 %v7409, %v7401
    %v9338 = vpack.c.b16 %v7410, %v7402
    %v9339 = vpack.c.b16 %v7411, %v7403
    %v9340 = vpack.c.b16 %v7412, %v7404
    %v9341 = vpack.c.b16 %v7413, %v7405
    %v9342 = vpack.c.b16 %v7414, %v7406
    %v9343 = vpack.c.b16 %v7423, %v7415
    %v9344 = vpack.c.b16 %v7424, %v7416
    %v9345 = vpack.c.b16 %v7425, %v7417
    %v9346 = vpack.c.b16 %v7426, %v7418
    %v9347 = vpack.c.b16 %v7427, %v7419
    %v9348 = vpack.c.b16 %v7428, %v7420
    %v9349 = vpack.c.b16 %v7429, %v7421
    %v9350 = vpack.c.b16 %v7430, %v7422
    %v9351 = vpack.c.b16 %v7439, %v7431
    %v9352 = vpack.c.b16 %v7440, %v7432
    %v9353 = vpack.c.b16 %v7441, %v7433
    %v9354 = vpack.c.b16 %v7442, %v7434
    %v9355 = vpack.c.b16 %v7443, %v7435
    %v9356 = vpack.c.b16 %v7444, %v7436
    %v9357 = vpack.c.b16 %v7445, %v7437
    %v9358 = vpack.c.b16 %v7446, %v7438
    %v9359 = vpack.c.b16 %v7455, %v7447
    %v9360 = vpack.c.b16 %v7456, %v7448
    %v9361 = vpack.c.b16 %v7457, %v7449
    %v9362 = vpack.c.b16 %v7458, %v7450
    %v9363 = vpack.c.b16 %v7459, %v7451
    %v9364 = vpack.c.b16 %v7460, %v7452
    %v9365 = vpack.c.b16 %v7461, %v7453
    %v9366 = vpack.c.b16 %v7462, %v7454
    %v9367 = vpack.c.b16 %v7471, %v7463
    %v9368 = vpack.c.b16 %v7472, %v7464
    %v9369 = vpack.c.b16 %v7473, %v7465
    %v9370 = vpack.c.b16 %v7474, %v7466
    %v9371 = vpack.c.b16 %v7475, %v7467
    %v9372 = vpack.c.b16 %v7476, %v7468
    %v9373 = vpack.c.b16 %v7477, %v7469
    %v9374 = vpack.c.b16 %v7478, %v7470
    %v9375 = vpack.c.b16 %v7487, %v7479
    %v9376 = vpack.c.b16 %v7488, %v7480
    %v9377 = vpack.c.b16 %v7489, %v7481
    %v9378 = vpack.c.b16 %v7490, %v7482
    %v9379 = vpack.c.b16 %v7491, %v7483
    %v9380 = vpack.c.b16 %v7492, %v7484
    %v9381 = vpack.c.b16 %v7493, %v7485
    %v9382 = vpack.c.b16 %v7494, %v7486
    %v9383 = vpack.c.b16 %v7503, %v7495
    %v9384 = vpack.c.b16 %v7504, %v7496
    %v9385 = vpack.c.b16 %v7505, %v7497
    %v9386 = vpack.c.b16 %v7506, %v7498
    %v9387 = vpack.c.b16 %v7507, %v7499
    %v9388 = vpack.c.b16 %v7508, %v7500
    %v9389 = vpack.c.b16 %v7509, %v7501
    %v9390 = vpack.c.b16 %v7510, %v7502
    %v9391 = vpack.c.b16 %v7519, %v7511
    %v9392 = vpack.c.b16 %v7520, %v7512
    %v9393 = vpack.c.b16 %v7521, %v7513
    %v9394 = vpack.c.b16 %v7522, %v7514
    %v9395 = vpack.c.b16 %v7523, %v7515
    %v9396 = vpack.c.b16 %v7524, %v7516
    %v9397 = vpack.c.b16 %v7525, %v7517
    %v9398 = vpack.c.b16 %v7526, %v7518
    %v9399 = vpack.c.b16 %v7535, %v7527
    %v9400 = vpack.c.b16 %v7536, %v7528
    %v9401 = vpack.c.b16 %v7537, %v7529
    %v9402 = vpack.c.b16 %v7538, %v7530
    %v9403 = vpack.c.b16 %v7539, %v7531
    %v9404 = vpack.c.b16 %v7540, %v7532
    %v9405 = vpack.c.b16 %v7541, %v7533
    %v9406 = vpack.c.b16 %v7542, %v7534
    %v9407 = vpack.c.b16 %v7551, %v7543
    %v9408 = vpack.c.b16 %v7552, %v7544
    %v9409 = vpack.c.b16 %v7553, %v7545
    %v9410 = vpack.c.b16 %v7554, %v7546
    %v9411 = vpack.c.b16 %v7555, %v7547
    %v9412 = vpack.c.b16 %v7556, %v7548
    %v9413 = vpack.c.b16 %v7557, %v7549
    %v9414 = vpack.c.b16 %v7558, %v7550
    %v9415 = vpack.c.b16 %v7567, %v7559
    %v9416 = vpack.c.b16 %v7568, %v7560
    %v9417 = vpack.c.b16 %v7569, %v7561
    %v9418 = vpack.c.b16 %v7570, %v7562
    %v9419 = vpack.c.b16 %v7571, %v7563
    %v9420 = vpack.c.b16 %v7572, %v7564
    %v9421 = vpack.c.b16 %v7573, %v7565
    %v9422 = vpack.c.b16 %v7574, %v7566
    %v9423 = vpack.c.b16 %v7583, %v7575
    %v9424 = vpack.c.b16 %v7584, %v7576
    %v9425 = vpack.c.b16 %v7585, %v7577
    %v9426 = vpack.c.b16 %v7586, %v7578
    %v9427 = vpack.c.b16 %v7587, %v7579
    %v9428 = vpack.c.b16 %v7588, %v7580
    %v9429 = vpack.c.b16 %v7589, %v7581
    %v9430 = vpack.c.b16 %v7590, %v7582
    %v9431 = vpack.c.b16 %v7599, %v7591
    %v9432 = vpack.c.b16 %v7600, %v7592
    %v9433 = vpack.c.b16 %v7601, %v7593
    %v9434 = vpack.c.b16 %v7602, %v7594
    %v9435 = vpack.c.b16 %v7603, %v7595
    %v9436 = vpack.c.b16 %v7604, %v7596
    %v9437 = vpack.c.b16 %v7605, %v7597
    %v9438 = vpack.c.b16 %v7606, %v7598
    %v9439 = vpack.c.b16 %v7615, %v7607
    %v9440 = vpack.c.b16 %v7616, %v7608
    %v9441 = vpack.c.b16 %v7617, %v7609
    %v9442 = vpack.c.b16 %v7618, %v7610
    %v9443 = vpack.c.b16 %v7619, %v7611
    %v9444 = vpack.c.b16 %v7620, %v7612
    %v9445 = vpack.c.b16 %v7621, %v7613
    %v9446 = vpack.c.b16 %v7622, %v7614
    %v9447 = vpack.c.b16 %v7631, %v7623
    %v9448 = vpack.c.b16 %v7632, %v7624
    %v9449 = vpack.c.b16 %v7633, %v7625
    %v9450 = vpack.c.b16 %v7634, %v7626
    %v9451 = vpack.c.b16 %v7635, %v7627
    %v9452 = vpack.c.b16 %v7636, %v7628
    %v9453 = vpack.c.b16 %v7637, %v7629
    %v9454 = vpack.c.b16 %v7638, %v7630
    %v9455 = vpack.c.b16 %v7647, %v7639
    %v9456 = vpack.c.b16 %v7648, %v7640
    %v9457 = vpack.c.b16 %v7649, %v7641
    %v9458 = vpack.c.b16 %v7650, %v7642
    %v9459 = vpack.c.b16 %v7651, %v7643
    %v9460 = vpack.c.b16 %v7652, %v7644
    %v9461 = vpack.c.b16 %v7653, %v7645
    %v9462 = vpack.c.b16 %v7654, %v7646
    %v9463 = vpack.c.b16 %v7663, %v7655
    %v9464 = vpack.c.b16 %v7664, %v7656
    %v9465 = vpack.c.b16 %v7665, %v7657
    %v9466 = vpack.c.b16 %v7666, %v7658
    %v9467 = vpack.c.b16 %v7667, %v7659
    %v9468 = vpack.c.b16 %v7668, %v7660
    %v9469 = vpack.c.b16 %v7669, %v7661
    %v9470 = vpack.c.b16 %v7670, %v7662
    %v9471 = vpack.c.b16 %v7679, %v7671
    %v9472 = vpack.c.b16 %v7680, %v7672
    %v9473 = vpack.c.b16 %v7681, %v7673
    %v9474 = vpack.c.b16 %v7682, %v7674
    %v9475 = vpack.c.b16 %v7683, %v7675
    %v9476 = vpack.c.b16 %v7684, %v7676
    %v9477 = vpack.c.b16 %v7685, %v7677
    %v9478 = vpack.c.b16 %v7686, %v7678
    %v9479 = vpack.c.b16 %v7695, %v7687
    %v9480 = vpack.c.b16 %v7696, %v7688
    %v9481 = vpack.c.b16 %v7697, %v7689
    %v9482 = vpack.c.b16 %v7698, %v7690
    %v9483 = vpack.c.b16 %v7699, %v7691
    %v9484 = vpack.c.b16 %v7700, %v7692
    %v9485 = vpack.c.b16 %v7701, %v7693
    %v9486 = vpack.c.b16 %v7702, %v7694
    %v9487 = vpack.c.b16 %v7711, %v7703
    %v9488 = vpack.c.b16 %v7712, %v7704
    %v9489 = vpack.c.b16 %v7713, %v7705
    %v9490 = vpack.c.b16 %v7714, %v7706
    %v9491 = vpack.c.b16 %v7715, %v7707
    %v9492 = vpack.c.b16 %v7716, %v7708
    %v9493 = vpack.c.b16 %v7717, %v7709
    %v9494 = vpack.c.b16 %v7718, %v7710
    %v9495 = vpack.c.b16 %v7727, %v7719
    %v9496 = vpack.c.b16 %v7728, %v7720
    %v9497 = vpack.c.b16 %v7729, %v7721
    %v9498 = vpack.c.b16 %v7730, %v7722
    %v9499 = vpack.c.b16 %v7731, %v7723
    %v9500 = vpack.c.b16 %v7732, %v7724
    %v9501 = vpack.c.b16 %v7733, %v7725
    %v9502 = vpack.c.b16 %v7734, %v7726
    %v9503 = vpack.c.b16 %v7743, %v7735
    %v9504 = vpack.c.b16 %v7744, %v7736
    %v9505 = vpack.c.b16 %v7745, %v7737
    %v9506 = vpack.c.b16 %v7746, %v7738
    %v9507 = vpack.c.b16 %v7747, %v7739
    %v9508 = vpack.c.b16 %v7748, %v7740
    %v9509 = vpack.c.b16 %v7749, %v7741
    %v9510 = vpack.c.b16 %v7750, %v7742
    %v9511 = vpack.c.b16 %v7759, %v7751
    %v9512 = vpack.c.b16 %v7760, %v7752
    %v9513 = vpack.c.b16 %v7761, %v7753
    %v9514 = vpack.c.b16 %v7762, %v7754
    %v9515 = vpack.c.b16 %v7763, %v7755
    %v9516 = vpack.c.b16 %v7764, %v7756
    %v9517 = vpack.c.b16 %v7765, %v7757
    %v9518 = vpack.c.b16 %v7766, %v7758
    %v9519 = vpack.c.b16 %v7775, %v7767
    %v9520 = vpack.c.b16 %v7776, %v7768
    %v9521 = vpack.c.b16 %v7777, %v7769
    %v9522 = vpack.c.b16 %v7778, %v7770
    %v9523 = vpack.c.b16 %v7779, %v7771
    %v9524 = vpack.c.b16 %v7780, %v7772
    %v9525 = vpack.c.b16 %v7781, %v7773
    %v9526 = vpack.c.b16 %v7782, %v7774
    %v9527 = vpack.c.b16 %v7791, %v7783
    %v9528 = vpack.c.b16 %v7792, %v7784
    %v9529 = vpack.c.b16 %v7793, %v7785
    %v9530 = vpack.c.b16 %v7794, %v7786
    %v9531 = vpack.c.b16 %v7795, %v7787
    %v9532 = vpack.c.b16 %v7796, %v7788
    %v9533 = vpack.c.b16 %v7797, %v7789
    %v9534 = vpack.c.b16 %v7798, %v7790
    %v9535 = vpack.c.b16 %v7807, %v7799
    %v9536 = vpack.c.b16 %v7808, %v7800
    %v9537 = vpack.c.b16 %v7809, %v7801
    %v9538 = vpack.c.b16 %v7810, %v7802
    %v9539 = vpack.c.b16 %v7811, %v7803
    %v9540 = vpack.c.b16 %v7812, %v7804
    %v9541 = vpack.c.b16 %v7813, %v7805
    %v9542 = vpack.c.b16 %v7814, %v7806
    %v9543 = vpack.c.b16 %v7823, %v7815
    %v9544 = vpack.c.b16 %v7824, %v7816
    %v9545 = vpack.c.b16 %v7825, %v7817
    %v9546 = vpack.c.b16 %v7826, %v7818
    %v9547 = vpack.c.b16 %v7827, %v7819
    %v9548 = vpack.c.b16 %v7828, %v7820
    %v9549 = vpack.c.b16 %v7829, %v7821
    %v9550 = vpack.c.b16 %v7830, %v7822
    %v9551 = vpack.c.b16 %v7839, %v7831
    %v9552 = vpack.c.b16 %v7840, %v7832
    %v9553 = vpack.c.b16 %v7841, %v7833
    %v9554 = vpack.c.b16 %v7842, %v7834
    %v9555 = vpack.c.b16 %v7843, %v7835
    %v9556 = vpack.c.b16 %v7844, %v7836
    %v9557 = vpack.c.b16 %v7845, %v7837
    %v9558 = vpack.c.b16 %v7846, %v7838
    %v9559 = vpack.c.b16 %v7855, %v7847
    %v9560 = vpack.c.b16 %v7856, %v7848
    %v9561 = vpack.c.b16 %v7857, %v7849
    %v9562 = vpack.c.b16 %v7858, %v7850
    %v9563 = vpack.c.b16 %v7859, %v7851
    %v9564 = vpack.c.b16 %v7860, %v7852
    %v9565 = vpack.c.b16 %v7861, %v7853
    %v9566 = vpack.c.b16 %v7862, %v7854
    %v9567 = vpack.c.b16 %v7871, %v7863
    %v9568 = vpack.c.b16 %v7872, %v7864
    %v9569 = vpack.c.b16 %v7873, %v7865
    %v9570 = vpack.c.b16 %v7874, %v7866
    %v9571 = vpack.c.b16 %v7875, %v7867
    %v9572 = vpack.c.b16 %v7876, %v7868
    %v9573 = vpack.c.b16 %v7877, %v7869
    %v9574 = vpack.c.b16 %v7878, %v7870
    %v9575 = vpack.c.b16 %v7887, %v7879
    %v9576 = vpack.c.b16 %v7888, %v7880
    %v9577 = vpack.c.b16 %v7889, %v7881
    %v9578 = vpack.c.b16 %v7890, %v7882
    %v9579 = vpack.c.b16 %v7891, %v7883
    %v9580 = vpack.c.b16 %v7892, %v7884
    %v9581 = vpack.c.b16 %v7893, %v7885
    %v9582 = vpack.c.b16 %v7894, %v7886
    %v9583 = vpack.c.b16 %v7903, %v7895
    %v9584 = vpack.c.b16 %v7904, %v7896
    %v9585 = vpack.c.b16 %v7905, %v7897
    %v9586 = vpack.c.b16 %v7906, %v7898
    %v9587 = vpack.c.b16 %v7907, %v7899
    %v9588 = vpack.c.b16 %v7908, %v7900
    %v9589 = vpack.c.b16 %v7909, %v7901
    %v9590 = vpack.c.b16 %v7910, %v7902
    %v9591 = vpack.c.b16 %v7919, %v7911
    %v9592 = vpack.c.b16 %v7920, %v7912
    %v9593 = vpack.c.b16 %v7921, %v7913
    %v9594 = vpack.c.b16 %v7922, %v7914
    %v9595 = vpack.c.b16 %v7923, %v7915
    %v9596 = vpack.c.b16 %v7924, %v7916
    %v9597 = vpack.c.b16 %v7925, %v7917
    %v9598 = vpack.c.b16 %v7926, %v7918
    %v9599 = vpack.c.b16 %v7935, %v7927
    %v9600 = vpack.c.b16 %v7936, %v7928
    %v9601 = vpack.c.b16 %v7937, %v7929
    %v9602 = vpack.c.b16 %v7938, %v7930
    %v9603 = vpack.c.b16 %v7939, %v7931
    %v9604 = vpack.c.b16 %v7940, %v7932
    %v9605 = vpack.c.b16 %v7941, %v7933
    %v9606 = vpack.c.b16 %v7942, %v7934
    %v9607 = vpack.c.b16 %v7951, %v7943
    %v9608 = vpack.c.b16 %v7952, %v7944
    %v9609 = vpack.c.b16 %v7953, %v7945
    %v9610 = vpack.c.b16 %v7954, %v7946
    %v9611 = vpack.c.b16 %v7955, %v7947
    %v9612 = vpack.c.b16 %v7956, %v7948
    %v9613 = vpack.c.b16 %v7957, %v7949
    %v9614 = vpack.c.b16 %v7958, %v7950
    %v9615 = vpack.c.b16 %v7967, %v7959
    %v9616 = vpack.c.b16 %v7968, %v7960
    %v9617 = vpack.c.b16 %v7969, %v7961
    %v9618 = vpack.c.b16 %v7970, %v7962
    %v9619 = vpack.c.b16 %v7971, %v7963
    %v9620 = vpack.c.b16 %v7972, %v7964
    %v9621 = vpack.c.b16 %v7973, %v7965
    %v9622 = vpack.c.b16 %v7974, %v7966
    %v9623 = vpack.c.b16 %v7983, %v7975
    %v9624 = vpack.c.b16 %v7984, %v7976
    %v9625 = vpack.c.b16 %v7985, %v7977
    %v9626 = vpack.c.b16 %v7986, %v7978
    %v9627 = vpack.c.b16 %v7987, %v7979
    %v9628 = vpack.c.b16 %v7988, %v7980
    %v9629 = vpack.c.b16 %v7989, %v7981
    %v9630 = vpack.c.b16 %v7990, %v7982
    %v9631 = vpack.c.b16 %v7999, %v7991
    %v9632 = vpack.c.b16 %v8000, %v7992
    %v9633 = vpack.c.b16 %v8001, %v7993
    %v9634 = vpack.c.b16 %v8002, %v7994
    %v9635 = vpack.c.b16 %v8003, %v7995
    %v9636 = vpack.c.b16 %v8004, %v7996
    %v9637 = vpack.c.b16 %v8005, %v7997
    %v9638 = vpack.c.b16 %v8006, %v7998
    %v9639 = vpack.c.b16 %v8015, %v8007
    %v9640 = vpack.c.b16 %v8016, %v8008
    %v9641 = vpack.c.b16 %v8017, %v8009
    %v9642 = vpack.c.b16 %v8018, %v8010
    %v9643 = vpack.c.b16 %v8019, %v8011
    %v9644 = vpack.c.b16 %v8020, %v8012
    %v9645 = vpack.c.b16 %v8021, %v8013
    %v9646 = vpack.c.b16 %v8022, %v8014
    %v9647 = vpack.c.b16 %v8031, %v8023
    %v9648 = vpack.c.b16 %v8032, %v8024
    %v9649 = vpack.c.b16 %v8033, %v8025
    %v9650 = vpack.c.b16 %v8034, %v8026
    %v9651 = vpack.c.b16 %v8035, %v8027
    %v9652 = vpack.c.b16 %v8036, %v8028
    %v9653 = vpack.c.b16 %v8037, %v8029
    %v9654 = vpack.c.b16 %v8038, %v8030
    %v9655 = vpack.c.b16 %v8047, %v8039
    %v9656 = vpack.c.b16 %v8048, %v8040
    %v9657 = vpack.c.b16 %v8049, %v8041
    %v9658 = vpack.c.b16 %v8050, %v8042
    %v9659 = vpack.c.b16 %v8051, %v8043
    %v9660 = vpack.c.b16 %v8052, %v8044
    %v9661 = vpack.c.b16 %v8053, %v8045
    %v9662 = vpack.c.b16 %v8054, %v8046
    %v9663 = vpack.c.b16 %v8063, %v8055
    %v9664 = vpack.c.b16 %v8064, %v8056
    %v9665 = vpack.c.b16 %v8065, %v8057
    %v9666 = vpack.c.b16 %v8066, %v8058
    %v9667 = vpack.c.b16 %v8067, %v8059
    %v9668 = vpack.c.b16 %v8068, %v8060
    %v9669 = vpack.c.b16 %v8069, %v8061
    %v9670 = vpack.c.b16 %v8070, %v8062
    %v9671 = vpack.c.b16 %v8079, %v8071
    %v9672 = vpack.c.b16 %v8080, %v8072
    %v9673 = vpack.c.b16 %v8081, %v8073
    %v9674 = vpack.c.b16 %v8082, %v8074
    %v9675 = vpack.c.b16 %v8083, %v8075
    %v9676 = vpack.c.b16 %v8084, %v8076
    %v9677 = vpack.c.b16 %v8085, %v8077
    %v9678 = vpack.c.b16 %v8086, %v8078
    %v9679 = vpack.c.b16 %v8095, %v8087
    %v9680 = vpack.c.b16 %v8096, %v8088
    %v9681 = vpack.c.b16 %v8097, %v8089
    %v9682 = vpack.c.b16 %v8098, %v8090
    %v9683 = vpack.c.b16 %v8099, %v8091
    %v9684 = vpack.c.b16 %v8100, %v8092
    %v9685 = vpack.c.b16 %v8101, %v8093
    %v9686 = vpack.c.b16 %v8102, %v8094
    %v9687 = vpack.c.b16 %v8111, %v8103
    %v9688 = vpack.c.b16 %v8112, %v8104
    %v9689 = vpack.c.b16 %v8113, %v8105
    %v9690 = vpack.c.b16 %v8114, %v8106
    %v9691 = vpack.c.b16 %v8115, %v8107
    %v9692 = vpack.c.b16 %v8116, %v8108
    %v9693 = vpack.c.b16 %v8117, %v8109
    %v9694 = vpack.c.b16 %v8118, %v8110
    %v9695 = vpack.c.b16 %v8127, %v8119
    %v9696 = vpack.c.b16 %v8128, %v8120
    %v9697 = vpack.c.b16 %v8129, %v8121
    %v9698 = vpack.c.b16 %v8130, %v8122
    %v9699 = vpack.c.b16 %v8131, %v8123
    %v9700 = vpack.c.b16 %v8132, %v8124
    %v9701 = vpack.c.b16 %v8133, %v8125
    %v9702 = vpack.c.b16 %v8134, %v8126
    %v9703 = vpack.c.b16 %v8143, %v8135
    %v9704 = vpack.c.b16 %v8144, %v8136
    %v9705 = vpack.c.b16 %v8145, %v8137
    %v9706 = vpack.c.b16 %v8146, %v8138
    %v9707 = vpack.c.b16 %v8147, %v8139
    %v9708 = vpack.c.b16 %v8148, %v8140
    %v9709 = vpack.c.b16 %v8149, %v8141
    %v9710 = vpack.c.b16 %v8150, %v8142
    %v9711 = vpack.c.b16 %v8159, %v8151
    %v9712 = vpack.c.b16 %v8160, %v8152
    %v9713 = vpack.c.b16 %v8161, %v8153
    %v9714 = vpack.c.b16 %v8162, %v8154
    %v9715 = vpack.c.b16 %v8163, %v8155
    %v9716 = vpack.c.b16 %v8164, %v8156
    %v9717 = vpack.c.b16 %v8165, %v8157
    %v9718 = vpack.c.b16 %v8166, %v8158
    %v9719 = vpack.c.b16 %v8175, %v8167
    %v9720 = vpack.c.b16 %v8176, %v8168
    %v9721 = vpack.c.b16 %v8177, %v8169
    %v9722 = vpack.c.b16 %v8178, %v8170
    %v9723 = vpack.c.b16 %v8179, %v8171
    %v9724 = vpack.c.b16 %v8180, %v8172
    %v9725 = vpack.c.b16 %v8181, %v8173
    %v9726 = vpack.c.b16 %v8182, %v8174
    %v9727 = vpack.c.b16 %v8191, %v8183
    %v9728 = vpack.c.b16 %v8192, %v8184
    %v9729 = vpack.c.b16 %v8193, %v8185
    %v9730 = vpack.c.b16 %v8194, %v8186
    %v9731 = vpack.c.b16 %v8195, %v8187
    %v9732 = vpack.c.b16 %v8196, %v8188
    %v9733 = vpack.c.b16 %v8197, %v8189
    %v9734 = vpack.c.b16 %v8198, %v8190
    %v9735 = vpack.c.b16 %v8207, %v8199
    %v9736 = vpack.c.b16 %v8208, %v8200
    %v9737 = vpack.c.b16 %v8209, %v8201
    %v9738 = vpack.c.b16 %v8210, %v8202
    %v9739 = vpack.c.b16 %v8211, %v8203
    %v9740 = vpack.c.b16 %v8212, %v8204
    %v9741 = vpack.c.b16 %v8213, %v8205
    %v9742 = vpack.c.b16 %v8214, %v8206
    %v9743 = vpack.c.b16 %v8223, %v8215
    %v9744 = vpack.c.b16 %v8224, %v8216
    %v9745 = vpack.c.b16 %v8225, %v8217
    %v9746 = vpack.c.b16 %v8226, %v8218
    %v9747 = vpack.c.b16 %v8227, %v8219
    %v9748 = vpack.c.b16 %v8228, %v8220
    %v9749 = vpack.c.b16 %v8229, %v8221
    %v9750 = vpack.c.b16 %v8230, %v8222
    %v9751 = vpack.c.b16 %v8239, %v8231
    %v9752 = vpack.c.b16 %v8240, %v8232
    %v9753 = vpack.c.b16 %v8241, %v8233
    %v9754 = vpack.c.b16 %v8242, %v8234
    %v9755 = vpack.c.b16 %v8243, %v8235
    %v9756 = vpack.c.b16 %v8244, %v8236
    %v9757 = vpack.c.b16 %v8245, %v8237
    %v9758 = vpack.c.b16 %v8246, %v8238
    %v9759 = vpack.c.b16 %v8255, %v8247
    %v9760 = vpack.c.b16 %v8256, %v8248
    %v9761 = vpack.c.b16 %v8257, %v8249
    %v9762 = vpack.c.b16 %v8258, %v8250
    %v9763 = vpack.c.b16 %v8259, %v8251
    %v9764 = vpack.c.b16 %v8260, %v8252
    %v9765 = vpack.c.b16 %v8261, %v8253
    %v9766 = vpack.c.b16 %v8262, %v8254
    %v9767 = vpack.c.b16 %v8271, %v8263
    %v9768 = vpack.c.b16 %v8272, %v8264
    %v9769 = vpack.c.b16 %v8273, %v8265
    %v9770 = vpack.c.b16 %v8274, %v8266
    %v9771 = vpack.c.b16 %v8275, %v8267
    %v9772 = vpack.c.b16 %v8276, %v8268
    %v9773 = vpack.c.b16 %v8277, %v8269
    %v9774 = vpack.c.b16 %v8278, %v8270
    %v9775 = vpack.c.b16 %v8287, %v8279
    %v9776 = vpack.c.b16 %v8288, %v8280
    %v9777 = vpack.c.b16 %v8289, %v8281
    %v9778 = vpack.c.b16 %v8290, %v8282
    %v9779 = vpack.c.b16 %v8291, %v8283
    %v9780 = vpack.c.b16 %v8292, %v8284
    %v9781 = vpack.c.b16 %v8293, %v8285
    %v9782 = vpack.c.b16 %v8294, %v8286
    %v9783 = vpack.c.b16 %v8303, %v8295
    %v9784 = vpack.c.b16 %v8304, %v8296
    %v9785 = vpack.c.b16 %v8305, %v8297
    %v9786 = vpack.c.b16 %v8306, %v8298
    %v9787 = vpack.c.b16 %v8307, %v8299
    %v9788 = vpack.c.b16 %v8308, %v8300
    %v9789 = vpack.c.b16 %v8309, %v8301
    %v9790 = vpack.c.b16 %v8310, %v8302
    %v9791 = vpack.c.b16 %v8319, %v8311
    %v9792 = vpack.c.b16 %v8320, %v8312
    %v9793 = vpack.c.b16 %v8321, %v8313
    %v9794 = vpack.c.b16 %v8322, %v8314
    %v9795 = vpack.c.b16 %v8323, %v8315
    %v9796 = vpack.c.b16 %v8324, %v8316
    %v9797 = vpack.c.b16 %v8325, %v8317
    %v9798 = vpack.c.b16 %v8326, %v8318
    %v9799 = vpack.c.b16 %v8335, %v8327
    %v9800 = vpack.c.b16 %v8336, %v8328
    %v9801 = vpack.c.b16 %v8337, %v8329
    %v9802 = vpack.c.b16 %v8338, %v8330
    %v9803 = vpack.c.b16 %v8339, %v8331
    %v9804 = vpack.c.b16 %v8340, %v8332
    %v9805 = vpack.c.b16 %v8341, %v8333
    %v9806 = vpack.c.b16 %v8342, %v8334
    %v9807 = vpack.c.b16 %v8351, %v8343
    %v9808 = vpack.c.b16 %v8352, %v8344
    %v9809 = vpack.c.b16 %v8353, %v8345
    %v9810 = vpack.c.b16 %v8354, %v8346
    %v9811 = vpack.c.b16 %v8355, %v8347
    %v9812 = vpack.c.b16 %v8356, %v8348
    %v9813 = vpack.c.b16 %v8357, %v8349
    %v9814 = vpack.c.b16 %v8358, %v8350
    %v9815 = vpack.c.b16 %v8367, %v8359
    %v9816 = vpack.c.b16 %v8368, %v8360
    %v9817 = vpack.c.b16 %v8369, %v8361
    %v9818 = vpack.c.b16 %v8370, %v8362
    %v9819 = vpack.c.b16 %v8371, %v8363
    %v9820 = vpack.c.b16 %v8372, %v8364
    %v9821 = vpack.c.b16 %v8373, %v8365
    %v9822 = vpack.c.b16 %v8374, %v8366
    %v9823 = vpack.c.b16 %v8383, %v8375
    %v9824 = vpack.c.b16 %v8384, %v8376
    %v9825 = vpack.c.b16 %v8385, %v8377
    %v9826 = vpack.c.b16 %v8386, %v8378
    %v9827 = vpack.c.b16 %v8387, %v8379
    %v9828 = vpack.c.b16 %v8388, %v8380
    %v9829 = vpack.c.b16 %v8389, %v8381
    %v9830 = vpack.c.b16 %v8390, %v8382
    %v9831 = vpack.c.b16 %v8399, %v8391
    %v9832 = vpack.c.b16 %v8400, %v8392
    %v9833 = vpack.c.b16 %v8401, %v8393
    %v9834 = vpack.c.b16 %v8402, %v8394
    %v9835 = vpack.c.b16 %v8403, %v8395
    %v9836 = vpack.c.b16 %v8404, %v8396
    %v9837 = vpack.c.b16 %v8405, %v8397
    %v9838 = vpack.c.b16 %v8406, %v8398
    %v9839 = vpack.c.b16 %v8415, %v8407
    %v9840 = vpack.c.b16 %v8416, %v8408
    %v9841 = vpack.c.b16 %v8417, %v8409
    %v9842 = vpack.c.b16 %v8418, %v8410
    %v9843 = vpack.c.b16 %v8419, %v8411
    %v9844 = vpack.c.b16 %v8420, %v8412
    %v9845 = vpack.c.b16 %v8421, %v8413
    %v9846 = vpack.c.b16 %v8422, %v8414
    %v9847 = vpack.c.b16 %v8431, %v8423
    %v9848 = vpack.c.b16 %v8432, %v8424
    %v9849 = vpack.c.b16 %v8433, %v8425
    %v9850 = vpack.c.b16 %v8434, %v8426
    %v9851 = vpack.c.b16 %v8435, %v8427
    %v9852 = vpack.c.b16 %v8436, %v8428
    %v9853 = vpack.c.b16 %v8437, %v8429
    %v9854 = vpack.c.b16 %v8438, %v8430
    %v9855 = vpack.c.b16 %v8447, %v8439
    %v9856 = vpack.c.b16 %v8448, %v8440
    %v9857 = vpack.c.b16 %v8449, %v8441
    %v9858 = vpack.c.b16 %v8450, %v8442
    %v9859 = vpack.c.b16 %v8451, %v8443
    %v9860 = vpack.c.b16 %v8452, %v8444
    %v9861 = vpack.c.b16 %v8453, %v8445
    %v9862 = vpack.c.b16 %v8454, %v8446
    %v9863 = vpack.c.b16 %v8463, %v8455
    %v9864 = vpack.c.b16 %v8464, %v8456
    %v9865 = vpack.c.b16 %v8465, %v8457
    %v9866 = vpack.c.b16 %v8466, %v8458
    %v9867 = vpack.c.b16 %v8467, %v8459
    %v9868 = vpack.c.b16 %v8468, %v8460
    %v9869 = vpack.c.b16 %v8469, %v8461
    %v9870 = vpack.c.b16 %v8470, %v8462
    %v9871 = vpack.c.b16 %v8479, %v8471
    %v9872 = vpack.c.b16 %v8480, %v8472
    %v9873 = vpack.c.b16 %v8481, %v8473
    %v9874 = vpack.c.b16 %v8482, %v8474
    %v9875 = vpack.c.b16 %v8483, %v8475
    %v9876 = vpack.c.b16 %v8484, %v8476
    %v9877 = vpack.c.b16 %v8485, %v8477
    %v9878 = vpack.c.b16 %v8486, %v8478
    %v9879 = vpack.c.b16 %v8495, %v8487
    %v9880 = vpack.c.b16 %v8496, %v8488
    %v9881 = vpack.c.b16 %v8497, %v8489
    %v9882 = vpack.c.b16 %v8498, %v8490
    %v9883 = vpack.c.b16 %v8499, %v8491
    %v9884 = vpack.c.b16 %v8500, %v8492
    %v9885 = vpack.c.b16 %v8501, %v8493
    %v9886 = vpack.c.b16 %v8502, %v8494
    %v9887 = vpack.c.b16 %v8511, %v8503
    %v9888 = vpack.c.b16 %v8512, %v8504
    %v9889 = vpack.c.b16 %v8513, %v8505
    %v9890 = vpack.c.b16 %v8514, %v8506
    %v9891 = vpack.c.b16 %v8515, %v8507
    %v9892 = vpack.c.b16 %v8516, %v8508
    %v9893 = vpack.c.b16 %v8517, %v8509
    %v9894 = vpack.c.b16 %v8518, %v8510
    %v9895 = vpack.c.b16 %v8527, %v8519
    %v9896 = vpack.c.b16 %v8528, %v8520
    %v9897 = vpack.c.b16 %v8529, %v8521
    %v9898 = vpack.c.b16 %v8530, %v8522
    %v9899 = vpack.c.b16 %v8531, %v8523
    %v9900 = vpack.c.b16 %v8532, %v8524
    %v9901 = vpack.c.b16 %v8533, %v8525
    %v9902 = vpack.c.b16 %v8534, %v8526
    %v9903 = vpack.c.b16 %v8543, %v8535
    %v9904 = vpack.c.b16 %v8544, %v8536
    %v9905 = vpack.c.b16 %v8545, %v8537
    %v9906 = vpack.c.b16 %v8546, %v8538
    %v9907 = vpack.c.b16 %v8547, %v8539
    %v9908 = vpack.c.b16 %v8548, %v8540
    %v9909 = vpack.c.b16 %v8549, %v8541
    %v9910 = vpack.c.b16 %v8550, %v8542
    %v9911 = vpack.c.b16 %v8559, %v8551
    %v9912 = vpack.c.b16 %v8560, %v8552
    %v9913 = vpack.c.b16 %v8561, %v8553
    %v9914 = vpack.c.b16 %v8562, %v8554
    %v9915 = vpack.c.b16 %v8563, %v8555
    %v9916 = vpack.c.b16 %v8564, %v8556
    %v9917 = vpack.c.b16 %v8565, %v8557
    %v9918 = vpack.c.b16 %v8566, %v8558
    %v9919 = vpack.c.b16 %v8575, %v8567
    %v9920 = vpack.c.b16 %v8576, %v8568
    %v9921 = vpack.c.b16 %v8577, %v8569
    %v9922 = vpack.c.b16 %v8578, %v8570
    %v9923 = vpack.c.b16 %v8579, %v8571
    %v9924 = vpack.c.b16 %v8580, %v8572
    %v9925 = vpack.c.b16 %v8581, %v8573
    %v9926 = vpack.c.b16 %v8582, %v8574
    %v9927 = vpack.c.b16 %v8591, %v8583
    %v9928 = vpack.c.b16 %v8592, %v8584
    %v9929 = vpack.c.b16 %v8593, %v8585
    %v9930 = vpack.c.b16 %v8594, %v8586
    %v9931 = vpack.c.b16 %v8595, %v8587
    %v9932 = vpack.c.b16 %v8596, %v8588
    %v9933 = vpack.c.b16 %v8597, %v8589
    %v9934 = vpack.c.b16 %v8598, %v8590
    %v9935 = vpack.c.b16 %v8607, %v8599
    %v9936 = vpack.c.b16 %v8608, %v8600
    %v9937 = vpack.c.b16 %v8609, %v8601
    %v9938 = vpack.c.b16 %v8610, %v8602
    %v9939 = vpack.c.b16 %v8611, %v8603
    %v9940 = vpack.c.b16 %v8612, %v8604
    %v9941 = vpack.c.b16 %v8613, %v8605
    %v9942 = vpack.c.b16 %v8614, %v8606
    %v9943 = vpack.c.b16 %v8623, %v8615
    %v9944 = vpack.c.b16 %v8624, %v8616
    %v9945 = vpack.c.b16 %v8625, %v8617
    %v9946 = vpack.c.b16 %v8626, %v8618
    %v9947 = vpack.c.b16 %v8627, %v8619
    %v9948 = vpack.c.b16 %v8628, %v8620
    %v9949 = vpack.c.b16 %v8629, %v8621
    %v9950 = vpack.c.b16 %v8630, %v8622
    %v9951 = vpack.c.b16 %v8639, %v8631
    %v9952 = vpack.c.b16 %v8640, %v8632
    %v9953 = vpack.c.b16 %v8641, %v8633
    %v9954 = vpack.c.b16 %v8642, %v8634
    %v9955 = vpack.c.b16 %v8643, %v8635
    %v9956 = vpack.c.b16 %v8644, %v8636
    %v9957 = vpack.c.b16 %v8645, %v8637
    %v9958 = vpack.c.b16 %v8646, %v8638
    %v9959 = vpack.c.b16 %v8655, %v8647
    %v9960 = vpack.c.b16 %v8656, %v8648
    %v9961 = vpack.c.b16 %v8657, %v8649
    %v9962 = vpack.c.b16 %v8658, %v8650
    %v9963 = vpack.c.b16 %v8659, %v8651
    %v9964 = vpack.c.b16 %v8660, %v8652
    %v9965 = vpack.c.b16 %v8661, %v8653
    %v9966 = vpack.c.b16 %v8662, %v8654
    %v9967 = vpack.c.b16 %v8671, %v8663
    %v9968 = vpack.c.b16 %v8672, %v8664
    %v9969 = vpack.c.b16 %v8673, %v8665
    %v9970 = vpack.c.b16 %v8674, %v8666
    %v9971 = vpack.c.b16 %v8675, %v8667
    %v9972 = vpack.c.b16 %v8676, %v8668
    %v9973 = vpack.c.b16 %v8677, %v8669
    %v9974 = vpack.c.b16 %v8678, %v8670
    %v9975 = vpack.c.b16 %v8687, %v8679
    %v9976 = vpack.c.b16 %v8688, %v8680
    %v9977 = vpack.c.b16 %v8689, %v8681
    %v9978 = vpack.c.b16 %v8690, %v8682
    %v9979 = vpack.c.b16 %v8691, %v8683
    %v9980 = vpack.c.b16 %v8692, %v8684
    %v9981 = vpack.c.b16 %v8693, %v8685
    %v9982 = vpack.c.b16 %v8694, %v8686
    %v9983 = vpack.c.b16 %v8703, %v8695
    %v9984 = vpack.c.b16 %v8704, %v8696
    %v9985 = vpack.c.b16 %v8705, %v8697
    %v9986 = vpack.c.b16 %v8706, %v8698
    %v9987 = vpack.c.b16 %v8707, %v8699
    %v9988 = vpack.c.b16 %v8708, %v8700
    %v9989 = vpack.c.b16 %v8709, %v8701
    %v9990 = vpack.c.b16 %v8710, %v8702
    %v9991 = vpack.c.b16 %v8719, %v8711
    %v9992 = vpack.c.b16 %v8720, %v8712
    %v9993 = vpack.c.b16 %v8721, %v8713
    %v9994 = vpack.c.b16 %v8722, %v8714
    %v9995 = vpack.c.b16 %v8723, %v8715
    %v9996 = vpack.c.b16 %v8724, %v8716
    %v9997 = vpack.c.b16 %v8725, %v8717
    %v9998 = vpack.c.b16 %v8726, %v8718
    %v9999 = vpack.c.b16 %v8735, %v8727
    %v10000 = vpack.c.b16 %v8736, %v8728
    %v10001 = vpack.c.b16 %v8737, %v8729
    %v10002 = vpack.c.b16 %v8738, %v8730
    %v10003 = vpack.c.b16 %v8739, %v8731
    %v10004 = vpack.c.b16 %v8740, %v8732
    %v10005 = vpack.c.b16 %v8741, %v8733
    %v10006 = vpack.c.b16 %v8742, %v8734
    %v10007 = vpack.c.b16 %v8751, %v8743
    %v10008 = vpack.c.b16 %v8752, %v8744
    %v10009 = vpack.c.b16 %v8753, %v8745
    %v10010 = vpack.c.b16 %v8754, %v8746
    %v10011 = vpack.c.b16 %v8755, %v8747
    %v10012 = vpack.c.b16 %v8756, %v8748
    %v10013 = vpack.c.b16 %v8757, %v8749
    %v10014 = vpack.c.b16 %v8758, %v8750
    %v10015 = vpack.c.b16 %v8767, %v8759
    %v10016 = vpack.c.b16 %v8768, %v8760
    %v10017 = vpack.c.b16 %v8769, %v8761
    %v10018 = vpack.c.b16 %v8770, %v8762
    %v10019 = vpack.c.b16 %v8771, %v8763
    %v10020 = vpack.c.b16 %v8772, %v8764
    %v10021 = vpack.c.b16 %v8773, %v8765
    %v10022 = vpack.c.b16 %v8774, %v8766
    %v10023 = vpack.c.b16 %v8783, %v8775
    %v10024 = vpack.c.b16 %v8784, %v8776
    %v10025 = vpack.c.b16 %v8785, %v8777
    %v10026 = vpack.c.b16 %v8786, %v8778
    %v10027 = vpack.c.b16 %v8787, %v8779
    %v10028 = vpack.c.b16 %v8788, %v8780
    %v10029 = vpack.c.b16 %v8789, %v8781
    %v10030 = vpack.c.b16 %v8790, %v8782
    %v10031 = vpack.c.b16 %v8799, %v8791
    %v10032 = vpack.c.b16 %v8800, %v8792
    %v10033 = vpack.c.b16 %v8801, %v8793
    %v10034 = vpack.c.b16 %v8802, %v8794
    %v10035 = vpack.c.b16 %v8803, %v8795
    %v10036 = vpack.c.b16 %v8804, %v8796
    %v10037 = vpack.c.b16 %v8805, %v8797
    %v10038 = vpack.c.b16 %v8806, %v8798
    %v10039 = vpack.c.b16 %v8815, %v8807
    %v10040 = vpack.c.b16 %v8816, %v8808
    %v10041 = vpack.c.b16 %v8817, %v8809
    %v10042 = vpack.c.b16 %v8818, %v8810
    %v10043 = vpack.c.b16 %v8819, %v8811
    %v10044 = vpack.c.b16 %v8820, %v8812
    %v10045 = vpack.c.b16 %v8821, %v8813
    %v10046 = vpack.c.b16 %v8822, %v8814
    %v10047 = vpack.c.b16 %v8831, %v8823
    %v10048 = vpack.c.b16 %v8832, %v8824
    %v10049 = vpack.c.b16 %v8833, %v8825
    %v10050 = vpack.c.b16 %v8834, %v8826
    %v10051 = vpack.c.b16 %v8835, %v8827
    %v10052 = vpack.c.b16 %v8836, %v8828
    %v10053 = vpack.c.b16 %v8837, %v8829
    %v10054 = vpack.c.b16 %v8838, %v8830
    %v10055 = vpack.c.b16 %v8847, %v8839
    %v10056 = vpack.c.b16 %v8848, %v8840
    %v10057 = vpack.c.b16 %v8849, %v8841
    %v10058 = vpack.c.b16 %v8850, %v8842
    %v10059 = vpack.c.b16 %v8851, %v8843
    %v10060 = vpack.c.b16 %v8852, %v8844
    %v10061 = vpack.c.b16 %v8853, %v8845
    %v10062 = vpack.c.b16 %v8854, %v8846
    %v10063 = vpack.c.b16 %v8863, %v8855
    %v10064 = vpack.c.b16 %v8864, %v8856
    %v10065 = vpack.c.b16 %v8865, %v8857
    %v10066 = vpack.c.b16 %v8866, %v8858
    %v10067 = vpack.c.b16 %v8867, %v8859
    %v10068 = vpack.c.b16 %v8868, %v8860
    %v10069 = vpack.c.b16 %v8869, %v8861
    %v10070 = vpack.c.b16 %v8870, %v8862
    %v10071 = vpack.c.b16 %v8879, %v8871
    %v10072 = vpack.c.b16 %v8880, %v8872
    %v10073 = vpack.c.b16 %v8881, %v8873
    %v10074 = vpack.c.b16 %v8882, %v8874
    %v10075 = vpack.c.b16 %v8883, %v8875
    %v10076 = vpack.c.b16 %v8884, %v8876
    %v10077 = vpack.c.b16 %v8885, %v8877
    %v10078 = vpack.c.b16 %v8886, %v8878
    %v10079 = vpack.c.b16 %v8895, %v8887
    %v10080 = vpack.c.b16 %v8896, %v8888
    %v10081 = vpack.c.b16 %v8897, %v8889
    %v10082 = vpack.c.b16 %v8898, %v8890
    %v10083 = vpack.c.b16 %v8899, %v8891
    %v10084 = vpack.c.b16 %v8900, %v8892
    %v10085 = vpack.c.b16 %v8901, %v8893
    %v10086 = vpack.c.b16 %v8902, %v8894
    %v10087 = vpack.c.b16 %v8911, %v8903
    %v10088 = vpack.c.b16 %v8912, %v8904
    %v10089 = vpack.c.b16 %v8913, %v8905
    %v10090 = vpack.c.b16 %v8914, %v8906
    %v10091 = vpack.c.b16 %v8915, %v8907
    %v10092 = vpack.c.b16 %v8916, %v8908
    %v10093 = vpack.c.b16 %v8917, %v8909
    %v10094 = vpack.c.b16 %v8918, %v8910
    %v10095 = vpack.c.b16 %v8927, %v8919
    %v10096 = vpack.c.b16 %v8928, %v8920
    %v10097 = vpack.c.b16 %v8929, %v8921
    %v10098 = vpack.c.b16 %v8930, %v8922
    %v10099 = vpack.c.b16 %v8931, %v8923
    %v10100 = vpack.c.b16 %v8932, %v8924
    %v10101 = vpack.c.b16 %v8933, %v8925
    %v10102 = vpack.c.b16 %v8934, %v8926
    %v10103 = vpack.c.b16 %v8943, %v8935
    %v10104 = vpack.c.b16 %v8944, %v8936
    %v10105 = vpack.c.b16 %v8945, %v8937
    %v10106 = vpack.c.b16 %v8946, %v8938
    %v10107 = vpack.c.b16 %v8947, %v8939
    %v10108 = vpack.c.b16 %v8948, %v8940
    %v10109 = vpack.c.b16 %v8949, %v8941
    %v10110 = vpack.c.b16 %v8950, %v8942
    %v10111 = vpack.c.b16 %v8959, %v8951
    %v10112 = vpack.c.b16 %v8960, %v8952
    %v10113 = vpack.c.b16 %v8961, %v8953
    %v10114 = vpack.c.b16 %v8962, %v8954
    %v10115 = vpack.c.b16 %v8963, %v8955
    %v10116 = vpack.c.b16 %v8964, %v8956
    %v10117 = vpack.c.b16 %v8965, %v8957
    %v10118 = vpack.c.b16 %v8966, %v8958
    %v10119 = vpack.c.b16 %v8975, %v8967
    %v10120 = vpack.c.b16 %v8976, %v8968
    %v10121 = vpack.c.b16 %v8977, %v8969
    %v10122 = vpack.c.b16 %v8978, %v8970
    %v10123 = vpack.c.b16 %v8979, %v8971
    %v10124 = vpack.c.b16 %v8980, %v8972
    %v10125 = vpack.c.b16 %v8981, %v8973
    %v10126 = vpack.c.b16 %v8982, %v8974
    %v10127 = vpack.c.b16 %v8991, %v8983
    %v10128 = vpack.c.b16 %v8992, %v8984
    %v10129 = vpack.c.b16 %v8993, %v8985
    %v10130 = vpack.c.b16 %v8994, %v8986
    %v10131 = vpack.c.b16 %v8995, %v8987
    %v10132 = vpack.c.b16 %v8996, %v8988
    %v10133 = vpack.c.b16 %v8997, %v8989
    %v10134 = vpack.c.b16 %v8998, %v8990
    %v10135 = vpack.c.b16 %v9007, %v8999
    %v10136 = vpack.c.b16 %v9008, %v9000
    %v10137 = vpack.c.b16 %v9009, %v9001
    %v10138 = vpack.c.b16 %v9010, %v9002
    %v10139 = vpack.c.b16 %v9011, %v9003
    %v10140 = vpack.c.b16 %v9012, %v9004
    %v10141 = vpack.c.b16 %v9013, %v9005
    %v10142 = vpack.c.b16 %v9014, %v9006
    %v10143 = vpack.c.b16 %v9023, %v9015
    %v10144 = vpack.c.b16 %v9024, %v9016
    %v10145 = vpack.c.b16 %v9025, %v9017
    %v10146 = vpack.c.b16 %v9026, %v9018
    %v10147 = vpack.c.b16 %v9027, %v9019
    %v10148 = vpack.c.b16 %v9028, %v9020
    %v10149 = vpack.c.b16 %v9029, %v9021
    %v10150 = vpack.c.b16 %v9030, %v9022
    %v10151 = vpack.c.b16 %v9039, %v9031
    %v10152 = vpack.c.b16 %v9040, %v9032
    %v10153 = vpack.c.b16 %v9041, %v9033
    %v10154 = vpack.c.b16 %v9042, %v9034
    %v10155 = vpack.c.b16 %v9043, %v9035
    %v10156 = vpack.c.b16 %v9044, %v9036
    %v10157 = vpack.c.b16 %v9045, %v9037
    %v10158 = vpack.c.b16 %v9046, %v9038
    %v10159 = vpack.c.b16 %v9055, %v9047
    %v10160 = vpack.c.b16 %v9056, %v9048
    %v10161 = vpack.c.b16 %v9057, %v9049
    %v10162 = vpack.c.b16 %v9058, %v9050
    %v10163 = vpack.c.b16 %v9059, %v9051
    %v10164 = vpack.c.b16 %v9060, %v9052
    %v10165 = vpack.c.b16 %v9061, %v9053
    %v10166 = vpack.c.b16 %v9062, %v9054
    %v10167 = vpack.c.b16 %v9071, %v9063
    %v10168 = vpack.c.b16 %v9072, %v9064
    %v10169 = vpack.c.b16 %v9073, %v9065
    %v10170 = vpack.c.b16 %v9074, %v9066
    %v10171 = vpack.c.b16 %v9075, %v9067
    %v10172 = vpack.c.b16 %v9076, %v9068
    %v10173 = vpack.c.b16 %v9077, %v9069
    %v10174 = vpack.c.b16 %v9078, %v9070
    %v10175 = vpack.c.b16 %v9087, %v9079
    %v10176 = vpack.c.b16 %v9088, %v9080
    %v10177 = vpack.c.b16 %v9089, %v9081
    %v10178 = vpack.c.b16 %v9090, %v9082
    %v10179 = vpack.c.b16 %v9091, %v9083
    %v10180 = vpack.c.b16 %v9092, %v9084
    %v10181 = vpack.c.b16 %v9093, %v9085
    %v10182 = vpack.c.b16 %v9094, %v9086
    %v10183 = vpack.c.b16 %v9103, %v9095
    %v10184 = vpack.c.b16 %v9104, %v9096
    %v10185 = vpack.c.b16 %v9105, %v9097
    %v10186 = vpack.c.b16 %v9106, %v9098
    %v10187 = vpack.c.b16 %v9107, %v9099
    %v10188 = vpack.c.b16 %v9108, %v9100
    %v10189 = vpack.c.b16 %v9109, %v9101
    %v10190 = vpack.c.b16 %v9110, %v9102
    %v10191 = vpack.c.b16 %v9119, %v9111
    %v10192 = vpack.c.b16 %v9120, %v9112
    %v10193 = vpack.c.b16 %v9121, %v9113
    %v10194 = vpack.c.b16 %v9122, %v9114
    %v10195 = vpack.c.b16 %v9123, %v9115
    %v10196 = vpack.c.b16 %v9124, %v9116
    %v10197 = vpack.c.b16 %v9125, %v9117
    %v10198 = vpack.c.b16 %v9126, %v9118
    %v10199 = vpack.c.b16 %v9135, %v9127
    %v10200 = vpack.c.b16 %v9136, %v9128
    %v10201 = vpack.c.b16 %v9137, %v9129
    %v10202 = vpack.c.b16 %v9138, %v9130
    %v10203 = vpack.c.b16 %v9139, %v9131
    %v10204 = vpack.c.b16 %v9140, %v9132
    %v10205 = vpack.c.b16 %v9141, %v9133
    %v10206 = vpack.c.b16 %v9142, %v9134
    %v10207 = vpack.c.b16 %v9151, %v9143
    %v10208 = vpack.c.b16 %v9152, %v9144
    %v10209 = vpack.c.b16 %v9153, %v9145
    %v10210 = vpack.c.b16 %v9154, %v9146
    %v10211 = vpack.c.b16 %v9155, %v9147
    %v10212 = vpack.c.b16 %v9156, %v9148
    %v10213 = vpack.c.b16 %v9157, %v9149
    %v10214 = vpack.c.b16 %v9158, %v9150
    %v10215 = vpack.c.b16 %v9167, %v9159
    %v10216 = vpack.c.b16 %v9168, %v9160
    %v10217 = vpack.c.b16 %v9169, %v9161
    %v10218 = vpack.c.b16 %v9170, %v9162
    %v10219 = vpack.c.b16 %v9171, %v9163
    %v10220 = vpack.c.b16 %v9172, %v9164
    %v10221 = vpack.c.b16 %v9173, %v9165
    %v10222 = vpack.c.b16 %v9174, %v9166
    %v10223 = vpack.c.b16 %v9183, %v9175
    %v10224 = vpack.c.b16 %v9184, %v9176
    %v10225 = vpack.c.b16 %v9185, %v9177
    %v10226 = vpack.c.b16 %v9186, %v9178
    %v10227 = vpack.c.b16 %v9187, %v9179
    %v10228 = vpack.c.b16 %v9188, %v9180
    %v10229 = vpack.c.b16 %v9189, %v9181
    %v10230 = vpack.c.b16 %v9190, %v9182
    %v10231 = vpack.c.b16 %v9199, %v9191
    %v10232 = vpack.c.b16 %v9200, %v9192
    %v10233 = vpack.c.b16 %v9201, %v9193
    %v10234 = vpack.c.b16 %v9202, %v9194
    %v10235 = vpack.c.b16 %v9203, %v9195
    %v10236 = vpack.c.b16 %v9204, %v9196
    %v10237 = vpack.c.b16 %v9205, %v9197
    %v10238 = vpack.c.b16 %v9206, %v9198
    %v10239 = vpack.c.b16 %v9215, %v9207
    %v10240 = vpack.c.b16 %v9216, %v9208
    %v10241 = vpack.c.b16 %v9217, %v9209
    %v10242 = vpack.c.b16 %v9218, %v9210
    %v10243 = vpack.c.b16 %v9219, %v9211
    %v10244 = vpack.c.b16 %v9220, %v9212
    %v10245 = vpack.c.b16 %v9221, %v9213
    %v10246 = vpack.c.b16 %v9222, %v9214
    %11271 = vmatprep.subr.bf16.mxu0 %v9224
    %11272 = vmatpush1.bf16.msra.mxu0 %v9223
    %11273 = vmatprep.subr.bf16.mxu0 %v9232
    %11274 = vmatpush1.bf16.msra.mxu0 %v9231
    %11275 = vmatprep.subr.bf16.mxu0 %v9240
    %11276 = vmatpush1.bf16.msra.mxu0 %v9239
    %11277 = vmatprep.subr.bf16.mxu0 %v9248
    %11278 = vmatpush1.bf16.msra.mxu0 %v9247
    %11279 = vmatprep.subr.bf16.mxu0 %v9256
    %11280 = vmatpush1.bf16.msra.mxu0 %v9255
    %11281 = vmatprep.subr.bf16.mxu0 %v9264
    %11282 = vmatpush1.bf16.msra.mxu0 %v9263
    %11283 = vmatprep.subr.bf16.mxu0 %v9272
    %11284 = vmatpush1.bf16.msra.mxu0 %v9271
    %11285 = vmatprep.subr.bf16.mxu0 %v9280
    %11286 = vmatpush1.bf16.msra.mxu0 %v9279
    %11287 = vmatprep.subr.bf16.mxu0 %v9288
    %11288 = vmatpush1.bf16.msra.mxu0 %v9287
    %11289 = vmatprep.subr.bf16.mxu0 %v9296
    %11290 = vmatpush1.bf16.msra.mxu0 %v9295
    %11291 = vmatprep.subr.bf16.mxu0 %v9304
    %11292 = vmatpush1.bf16.msra.mxu0 %v9303
    %11293 = vmatprep.subr.bf16.mxu0 %v9312
    %11294 = vmatpush1.bf16.msra.mxu0 %v9311
    %11295 = vmatprep.subr.bf16.mxu0 %v9320
    %11296 = vmatpush1.bf16.msra.mxu0 %v9319
    %11297 = vmatprep.subr.bf16.mxu0 %v9328
    %11298 = vmatpush1.bf16.msra.mxu0 %v9327
    %11299 = vmatprep.subr.bf16.mxu0 %v9336
    %11300 = vmatpush1.bf16.msra.mxu0 %v9335
    %11301 = vmatprep.subr.bf16.mxu0 %v9344
    %11302 = vmatpush1.bf16.msra.mxu0 %v9343
    %11303 = vmatprep.mubr.bf16.mxu0 %v5070
    %11304 = vmatmul.mubr.bf16.gmra.mrb[0].mxu0 %v5069
    %v11305 = vpop.f32.mrb[0].mxu0
    %v11306 = vadd.f32 %v6114, %v11305
    %v11307 = vpop.f32.mrb[0].mxu0
    %v11308 = vadd.f32 %v6118, %v11307
    %v11309 = vpop.f32.mrb[0].mxu0
    %v11310 = vpop.f32.mrb[0].mxu0
    %11311 = vdwg.mxu0
    %11312 = vmatprep.subr.bf16.mxu0 %v9352
    %11313 = vmatpush1.bf16.msra.mxu0 %v9351
    %11314 = vmatprep.subr.bf16.mxu0 %v9360
    %11315 = vmatpush1.bf16.msra.mxu0 %v9359
    %11316 = vmatprep.subr.bf16.mxu0 %v9368
    %11317 = vmatpush1.bf16.msra.mxu0 %v9367
    %11318 = vmatprep.subr.bf16.mxu0 %v9376
    %11319 = vmatpush1.bf16.msra.mxu0 %v9375
    %11320 = vmatprep.subr.bf16.mxu0 %v9384
    %11321 = vmatpush1.bf16.msra.mxu0 %v9383
    %11322 = vmatprep.subr.bf16.mxu0 %v9392
    %11323 = vmatpush1.bf16.msra.mxu0 %v9391
    %11324 = vmatprep.subr.bf16.mxu0 %v9400
    %11325 = vmatpush1.bf16.msra.mxu0 %v9399
    %11326 = vmatprep.subr.bf16.mxu0 %v9408
    %11327 = vmatpush1.bf16.msra.mxu0 %v9407
    %11328 = vmatprep.subr.bf16.mxu0 %v9416
    %11329 = vmatpush1.bf16.msra.mxu0 %v9415
    %11330 = vmatprep.subr.bf16.mxu0 %v9424
    %11331 = vmatpush1.bf16.msra.mxu0 %v9423
    %11332 = vmatprep.subr.bf16.mxu0 %v9432
    %11333 = vmatpush1.bf16.msra.mxu0 %v9431
    %11334 = vmatprep.subr.bf16.mxu0 %v9440
    %11335 = vmatpush1.bf16.msra.mxu0 %v9439
    %11336 = vmatprep.subr.bf16.mxu0 %v9448
    %11337 = vmatpush1.bf16.msra.mxu0 %v9447
    %11338 = vmatprep.subr.bf16.mxu0 %v9456
    %11339 = vmatpush1.bf16.msra.mxu0 %v9455
    %11340 = vmatprep.subr.bf16.mxu0 %v9464
    %11341 = vmatpush1.bf16.msra.mxu0 %v9463
    %11342 = vmatprep.subr.bf16.mxu0 %v9472
    %11343 = vmatpush1.bf16.msra.mxu0 %v9471
    %11344 = vmatprep.mubr.bf16.mxu0 %v5072
    %11345 = vmatmul.mubr.bf16.gmra.mrb[0].mxu0 %v5071
    %v11346 = vpop.f32.mrb[0].mxu0
    %v11347 = vadd.f32 %v11306, %v11346
    %v11348 = vpop.f32.mrb[0].mxu0
    %v11349 = vadd.f32 %v11308, %v11348
    %v11350 = vpop.f32.mrb[0].mxu0
    %v11351 = vpop.f32.mrb[0].mxu0
    %11352 = vdwg.mxu0
    %11353 = vmatprep.subr.bf16.mxu0 %v9480
    %11354 = vmatpush1.bf16.msra.mxu0 %v9479
    %11355 = vmatprep.subr.bf16.mxu0 %v9488
    %11356 = vmatpush1.bf16.msra.mxu0 %v9487
    %11357 = vmatprep.subr.bf16.mxu0 %v9496
    %11358 = vmatpush1.bf16.msra.mxu0 %v9495
    %11359 = vmatprep.subr.bf16.mxu0 %v9504
    %11360 = vmatpush1.bf16.msra.mxu0 %v9503
    %11361 = vmatprep.subr.bf16.mxu0 %v9512
    %11362 = vmatpush1.bf16.msra.mxu0 %v9511
    %11363 = vmatprep.subr.bf16.mxu0 %v9520
    %11364 = vmatpush1.bf16.msra.mxu0 %v9519
    %11365 = vmatprep.subr.bf16.mxu0 %v9528
    %11366 = vmatpush1.bf16.msra.mxu0 %v9527
    %11367 = vmatprep.subr.bf16.mxu0 %v9536
    %11368 = vmatpush1.bf16.msra.mxu0 %v9535
    %11369 = vmatprep.subr.bf16.mxu0 %v9544
    %11370 = vmatpush1.bf16.msra.mxu0 %v9543
    %11371 = vmatprep.subr.bf16.mxu0 %v9552
    %11372 = vmatpush1.bf16.msra.mxu0 %v9551
    %11373 = vmatprep.subr.bf16.mxu0 %v9560
    %11374 = vmatpush1.bf16.msra.mxu0 %v9559
    %11375 = vmatprep.subr.bf16.mxu0 %v9568
    %11376 = vmatpush1.bf16.msra.mxu0 %v9567
    %11377 = vmatprep.subr.bf16.mxu0 %v9576
    %11378 = vmatpush1.bf16.msra.mxu0 %v9575
    %11379 = vmatprep.subr.bf16.mxu0 %v9584
    %11380 = vmatpush1.bf16.msra.mxu0 %v9583
    %11381 = vmatprep.subr.bf16.mxu0 %v9592
    %11382 = vmatpush1.bf16.msra.mxu0 %v9591
    %11383 = vmatprep.subr.bf16.mxu0 %v9600
    %11384 = vmatpush1.bf16.msra.mxu0 %v9599
    %11385 = vmatprep.mubr.bf16.mxu0 %v5074
    %11386 = vmatmul.mubr.bf16.gmra.mrb[0].mxu0 %v5073
    %v11387 = vpop.f32.mrb[0].mxu0
    %v11388 = vadd.f32 %v11347, %v11387
    %v11389 = vpop.f32.mrb[0].mxu0
    %v11390 = vadd.f32 %v11349, %v11389
    %v11391 = vpop.f32.mrb[0].mxu0
    %v11392 = vpop.f32.mrb[0].mxu0
    %11393 = vdwg.mxu0
    %11394 = vmatprep.subr.bf16.mxu0 %v9608
    %11395 = vmatpush1.bf16.msra.mxu0 %v9607
    %11396 = vmatprep.subr.bf16.mxu0 %v9616
    %11397 = vmatpush1.bf16.msra.mxu0 %v9615
    %11398 = vmatprep.subr.bf16.mxu0 %v9624
    %11399 = vmatpush1.bf16.msra.mxu0 %v9623
    %11400 = vmatprep.subr.bf16.mxu0 %v9632
    %11401 = vmatpush1.bf16.msra.mxu0 %v9631
    %11402 = vmatprep.subr.bf16.mxu0 %v9640
    %11403 = vmatpush1.bf16.msra.mxu0 %v9639
    %11404 = vmatprep.subr.bf16.mxu0 %v9648
    %11405 = vmatpush1.bf16.msra.mxu0 %v9647
    %11406 = vmatprep.subr.bf16.mxu0 %v9656
    %11407 = vmatpush1.bf16.msra.mxu0 %v9655
    %11408 = vmatprep.subr.bf16.mxu0 %v9664
    %11409 = vmatpush1.bf16.msra.mxu0 %v9663
    %11410 = vmatprep.subr.bf16.mxu0 %v9672
    %11411 = vmatpush1.bf16.msra.mxu0 %v9671
    %11412 = vmatprep.subr.bf16.mxu0 %v9680
    %11413 = vmatpush1.bf16.msra.mxu0 %v9679
    %11414 = vmatprep.subr.bf16.mxu0 %v9688
    %11415 = vmatpush1.bf16.msra.mxu0 %v9687
    %11416 = vmatprep.subr.bf16.mxu0 %v9696
    %11417 = vmatpush1.bf16.msra.mxu0 %v9695
    %11418 = vmatprep.subr.bf16.mxu0 %v9704
    %11419 = vmatpush1.bf16.msra.mxu0 %v9703
    %11420 = vmatprep.subr.bf16.mxu0 %v9712
    %11421 = vmatpush1.bf16.msra.mxu0 %v9711
    %11422 = vmatprep.subr.bf16.mxu0 %v9720
    %11423 = vmatpush1.bf16.msra.mxu0 %v9719
    %11424 = vmatprep.subr.bf16.mxu0 %v9728
    %11425 = vmatpush1.bf16.msra.mxu0 %v9727
    %11426 = vmatprep.mubr.bf16.mxu0 %v5076
    %11427 = vmatmul.mubr.bf16.gmra.mrb[0].mxu0 %v5075
    %v11428 = vpop.f32.mrb[0].mxu0
    %v11429 = vadd.f32 %v11388, %v11428
    %v11430 = vpop.f32.mrb[0].mxu0
    %v11431 = vadd.f32 %v11390, %v11430
    %v11432 = vpop.f32.mrb[0].mxu0
    %v11433 = vpop.f32.mrb[0].mxu0
    %11434 = vdwg.mxu0
    %11435 = vmatprep.subr.bf16.mxu0 %v9736
    %11436 = vmatpush1.bf16.msra.mxu0 %v9735
    %11437 = vmatprep.subr.bf16.mxu0 %v9744
    %11438 = vmatpush1.bf16.msra.mxu0 %v9743
    %11439 = vmatprep.subr.bf16.mxu0 %v9752
    %11440 = vmatpush1.bf16.msra.mxu0 %v9751
    %11441 = vmatprep.subr.bf16.mxu0 %v9760
    %11442 = vmatpush1.bf16.msra.mxu0 %v9759
    %11443 = vmatprep.subr.bf16.mxu0 %v9768
    %11444 = vmatpush1.bf16.msra.mxu0 %v9767
    %11445 = vmatprep.subr.bf16.mxu0 %v9776
    %11446 = vmatpush1.bf16.msra.mxu0 %v9775
    %11447 = vmatprep.subr.bf16.mxu0 %v9784
    %11448 = vmatpush1.bf16.msra.mxu0 %v9783
    %11449 = vmatprep.subr.bf16.mxu0 %v9792
    %11450 = vmatpush1.bf16.msra.mxu0 %v9791
    %11451 = vmatprep.subr.bf16.mxu0 %v9800
    %11452 = vmatpush1.bf16.msra.mxu0 %v9799
    %11453 = vmatprep.subr.bf16.mxu0 %v9808
    %11454 = vmatpush1.bf16.msra.mxu0 %v9807
    %11455 = vmatprep.subr.bf16.mxu0 %v9816
    %11456 = vmatpush1.bf16.msra.mxu0 %v9815
    %11457 = vmatprep.subr.bf16.mxu0 %v9824
    %11458 = vmatpush1.bf16.msra.mxu0 %v9823
    %11459 = vmatprep.subr.bf16.mxu0 %v9832
    %11460 = vmatpush1.bf16.msra.mxu0 %v9831
    %11461 = vmatprep.subr.bf16.mxu0 %v9840
    %11462 = vmatpush1.bf16.msra.mxu0 %v9839
    %11463 = vmatprep.subr.bf16.mxu0 %v9848
    %11464 = vmatpush1.bf16.msra.mxu0 %v9847
    %11465 = vmatprep.subr.bf16.mxu0 %v9856
    %11466 = vmatpush1.bf16.msra.mxu0 %v9855
    %11467 = vmatprep.mubr.bf16.mxu0 %v5078
    %11468 = vmatmul.mubr.bf16.gmra.mrb[0].mxu0 %v5077
    %v11469 = vpop.f32.mrb[0].mxu0
    %v11470 = vadd.f32 %v11429, %v11469
    %v11471 = vpop.f32.mrb[0].mxu0
    %v11472 = vadd.f32 %v11431, %v11471
    %v11473 = vpop.f32.mrb[0].mxu0
    %v11474 = vpop.f32.mrb[0].mxu0
    %11475 = vdwg.mxu0
    %11476 = vmatprep.subr.bf16.mxu0 %v9864
    %11477 = vmatpush1.bf16.msra.mxu0 %v9863
    %11478 = vmatprep.subr.bf16.mxu0 %v9872
    %11479 = vmatpush1.bf16.msra.mxu0 %v9871
    %11480 = vmatprep.subr.bf16.mxu0 %v9880
    %11481 = vmatpush1.bf16.msra.mxu0 %v9879
    %11482 = vmatprep.subr.bf16.mxu0 %v9888
    %11483 = vmatpush1.bf16.msra.mxu0 %v9887
    %11484 = vmatprep.subr.bf16.mxu0 %v9896
    %11485 = vmatpush1.bf16.msra.mxu0 %v9895
    %11486 = vmatprep.subr.bf16.mxu0 %v9904
    %11487 = vmatpush1.bf16.msra.mxu0 %v9903
    %11488 = vmatprep.subr.bf16.mxu0 %v9912
    %11489 = vmatpush1.bf16.msra.mxu0 %v9911
    %11490 = vmatprep.subr.bf16.mxu0 %v9920
    %11491 = vmatpush1.bf16.msra.mxu0 %v9919
    %11492 = vmatprep.subr.bf16.mxu0 %v9928
    %11493 = vmatpush1.bf16.msra.mxu0 %v9927
    %11494 = vmatprep.subr.bf16.mxu0 %v9936
    %11495 = vmatpush1.bf16.msra.mxu0 %v9935
    %11496 = vmatprep.subr.bf16.mxu0 %v9944
    %11497 = vmatpush1.bf16.msra.mxu0 %v9943
    %11498 = vmatprep.subr.bf16.mxu0 %v9952
    %11499 = vmatpush1.bf16.msra.mxu0 %v9951
    %11500 = vmatprep.subr.bf16.mxu0 %v9960
    %11501 = vmatpush1.bf16.msra.mxu0 %v9959
    %11502 = vmatprep.subr.bf16.mxu0 %v9968
    %11503 = vmatpush1.bf16.msra.mxu0 %v9967
    %11504 = vmatprep.subr.bf16.mxu0 %v9976
    %11505 = vmatpush1.bf16.msra.mxu0 %v9975
    %11506 = vmatprep.subr.bf16.mxu0 %v9984
    %11507 = vmatpush1.bf16.msra.mxu0 %v9983
    %11508 = vmatprep.mubr.bf16.mxu0 %v5080
    %11509 = vmatmul.mubr.bf16.gmra.mrb[0].mxu0 %v5079
    %v11510 = vpop.f32.mrb[0].mxu0
    %v11511 = vadd.f32 %v11470, %v11510
    %v11512 = vpop.f32.mrb[0].mxu0
    %v11513 = vadd.f32 %v11472, %v11512
    %v11514 = vpop.f32.mrb[0].mxu0
    %v11515 = vpop.f32.mrb[0].mxu0
    %11516 = vdwg.mxu0
    %11517 = vmatprep.subr.bf16.mxu0 %v9992
    %11518 = vmatpush1.bf16.msra.mxu0 %v9991
    %11519 = vmatprep.subr.bf16.mxu0 %v10000
    %11520 = vmatpush1.bf16.msra.mxu0 %v9999
    %11521 = vmatprep.subr.bf16.mxu0 %v10008
    %11522 = vmatpush1.bf16.msra.mxu0 %v10007
    %11523 = vmatprep.subr.bf16.mxu0 %v10016
    %11524 = vmatpush1.bf16.msra.mxu0 %v10015
    %11525 = vmatprep.subr.bf16.mxu0 %v10024
    %11526 = vmatpush1.bf16.msra.mxu0 %v10023
    %11527 = vmatprep.subr.bf16.mxu0 %v10032
    %11528 = vmatpush1.bf16.msra.mxu0 %v10031
    %11529 = vmatprep.subr.bf16.mxu0 %v10040
    %11530 = vmatpush1.bf16.msra.mxu0 %v10039
    %11531 = vmatprep.subr.bf16.mxu0 %v10048
    %11532 = vmatpush1.bf16.msra.mxu0 %v10047
    %11533 = vmatprep.subr.bf16.mxu0 %v10056
    %11534 = vmatpush1.bf16.msra.mxu0 %v10055
    %11535 = vmatprep.subr.bf16.mxu0 %v10064
    %11536 = vmatpush1.bf16.msra.mxu0 %v10063
    %11537 = vmatprep.subr.bf16.mxu0 %v10072
    %11538 = vmatpush1.bf16.msra.mxu0 %v10071
    %11539 = vmatprep.subr.bf16.mxu0 %v10080
    %11540 = vmatpush1.bf16.msra.mxu0 %v10079
    %11541 = vmatprep.subr.bf16.mxu0 %v10088
    %11542 = vmatpush1.bf16.msra.mxu0 %v10087
    %11543 = vmatprep.subr.bf16.mxu0 %v10096
    %11544 = vmatpush1.bf16.msra.mxu0 %v10095
    %11545 = vmatprep.subr.bf16.mxu0 %v10104
    %11546 = vmatpush1.bf16.msra.mxu0 %v10103
    %11547 = vmatprep.subr.bf16.mxu0 %v10112
    %11548 = vmatpush1.bf16.msra.mxu0 %v10111
    %11549 = vmatprep.mubr.bf16.mxu0 %v5082
    %11550 = vmatmul.mubr.bf16.gmra.mrb[0].mxu0 %v5081
    %v11551 = vpop.f32.mrb[0].mxu0
    %v11552 = vadd.f32 %v11511, %v11551
    %v11553 = vpop.f32.mrb[0].mxu0
    %v11554 = vadd.f32 %v11513, %v11553
    %v11555 = vpop.f32.mrb[0].mxu0
    %v11556 = vpop.f32.mrb[0].mxu0
    %11557 = vdwg.mxu0
    %11558 = vmatprep.subr.bf16.mxu0 %v10120
    %11559 = vmatpush1.bf16.msra.mxu0 %v10119
    %11560 = vmatprep.subr.bf16.mxu0 %v10128
    %11561 = vmatpush1.bf16.msra.mxu0 %v10127
    %11562 = vmatprep.subr.bf16.mxu0 %v10136
    %11563 = vmatpush1.bf16.msra.mxu0 %v10135
    %11564 = vmatprep.subr.bf16.mxu0 %v10144
    %11565 = vmatpush1.bf16.msra.mxu0 %v10143
    %11566 = vmatprep.subr.bf16.mxu0 %v10152
    %11567 = vmatpush1.bf16.msra.mxu0 %v10151
    %11568 = vmatprep.subr.bf16.mxu0 %v10160
    %11569 = vmatpush1.bf16.msra.mxu0 %v10159
    %11570 = vmatprep.subr.bf16.mxu0 %v10168
    %11571 = vmatpush1.bf16.msra.mxu0 %v10167
    %11572 = vmatprep.subr.bf16.mxu0 %v10176
    %11573 = vmatpush1.bf16.msra.mxu0 %v10175
    %11574 = vmatprep.subr.bf16.mxu0 %v10184
    %11575 = vmatpush1.bf16.msra.mxu0 %v10183
    %11576 = vmatprep.subr.bf16.mxu0 %v10192
    %11577 = vmatpush1.bf16.msra.mxu0 %v10191
    %11578 = vmatprep.subr.bf16.mxu0 %v10200
    %11579 = vmatpush1.bf16.msra.mxu0 %v10199
    %11580 = vmatprep.subr.bf16.mxu0 %v10208
    %11581 = vmatpush1.bf16.msra.mxu0 %v10207
    %11582 = vmatprep.subr.bf16.mxu0 %v10216
    %11583 = vmatpush1.bf16.msra.mxu0 %v10215
    %11584 = vmatprep.subr.bf16.mxu0 %v10224
    %11585 = vmatpush1.bf16.msra.mxu0 %v10223
    %11586 = vmatprep.subr.bf16.mxu0 %v10232
    %11587 = vmatpush1.bf16.msra.mxu0 %v10231
    %11588 = vmatprep.subr.bf16.mxu0 %v10240
    %11589 = vmatpush1.bf16.msra.mxu0 %v10239
    %11590 = vmatprep.mubr.bf16.mxu0 %v5084
    %11591 = vmatmul.mubr.bf16.gmra.mrb[0].mxu0 %v5083
    %v11592 = vpop.f32.mrb[0].mxu0
    %v11593 = vadd.f32 %v11552, %v11592
    %v11594 = vpop.f32.mrb[0].mxu0
    %v11595 = vadd.f32 %v11554, %v11594
    %v11596 = vpop.f32.mrb[0].mxu0
    %v11597 = vpop.f32.mrb[0].mxu0
    %11598 = vdwg.mxu0
    %11599 = vmatprep.subr.bf16.mxu0 %v9226
    %11600 = vmatpush1.bf16.msra.mxu0 %v9225
    %11601 = vmatprep.subr.bf16.mxu0 %v9234
    %11602 = vmatpush1.bf16.msra.mxu0 %v9233
    %11603 = vmatprep.subr.bf16.mxu0 %v9242
    %11604 = vmatpush1.bf16.msra.mxu0 %v9241
    %11605 = vmatprep.subr.bf16.mxu0 %v9250
    %11606 = vmatpush1.bf16.msra.mxu0 %v9249
    %11607 = vmatprep.subr.bf16.mxu0 %v9258
    %11608 = vmatpush1.bf16.msra.mxu0 %v9257
    %11609 = vmatprep.subr.bf16.mxu0 %v9266
    %11610 = vmatpush1.bf16.msra.mxu0 %v9265
    %11611 = vmatprep.subr.bf16.mxu0 %v9274
    %11612 = vmatpush1.bf16.msra.mxu0 %v9273
    %11613 = vmatprep.subr.bf16.mxu0 %v9282
    %11614 = vmatpush1.bf16.msra.mxu0 %v9281
    %11615 = vmatprep.subr.bf16.mxu0 %v9290
    %11616 = vmatpush1.bf16.msra.mxu0 %v9289
    %11617 = vmatprep.subr.bf16.mxu0 %v9298
    %11618 = vmatpush1.bf16.msra.mxu0 %v9297
    %11619 = vmatprep.subr.bf16.mxu0 %v9306
    %11620 = vmatpush1.bf16.msra.mxu0 %v9305
    %11621 = vmatprep.subr.bf16.mxu0 %v9314
    %11622 = vmatpush1.bf16.msra.mxu0 %v9313
    %11623 = vmatprep.subr.bf16.mxu0 %v9322
    %11624 = vmatpush1.bf16.msra.mxu0 %v9321
    %11625 = vmatprep.subr.bf16.mxu0 %v9330
    %11626 = vmatpush1.bf16.msra.mxu0 %v9329
    %11627 = vmatprep.subr.bf16.mxu0 %v9338
    %11628 = vmatpush1.bf16.msra.mxu0 %v9337
    %11629 = vmatprep.subr.bf16.mxu0 %v9346
    %11630 = vmatpush1.bf16.msra.mxu0 %v9345
    %11631 = vmatprep.mubr.bf16.mxu0 %v5070
    %11632 = vmatmul.mubr.bf16.gmra.mrb[0].mxu0 %v5069
    %v11633 = vpop.f32.mrb[0].mxu0
    %v11634 = vadd.f32 %v6122, %v11633
    %v11635 = vpop.f32.mrb[0].mxu0
    %v11636 = vadd.f32 %v6126, %v11635
    %v11637 = vpop.f32.mrb[0].mxu0
    %v11638 = vpop.f32.mrb[0].mxu0
    %11639 = vdwg.mxu0
    %11640 = vmatprep.subr.bf16.mxu0 %v9354
    %11641 = vmatpush1.bf16.msra.mxu0 %v9353
    %11642 = vmatprep.subr.bf16.mxu0 %v9362
    %11643 = vmatpush1.bf16.msra.mxu0 %v9361
    %11644 = vmatprep.subr.bf16.mxu0 %v9370
    %11645 = vmatpush1.bf16.msra.mxu0 %v9369
    %11646 = vmatprep.subr.bf16.mxu0 %v9378
    %11647 = vmatpush1.bf16.msra.mxu0 %v9377
    %11648 = vmatprep.subr.bf16.mxu0 %v9386
    %11649 = vmatpush1.bf16.msra.mxu0 %v9385
    %11650 = vmatprep.subr.bf16.mxu0 %v9394
    %11651 = vmatpush1.bf16.msra.mxu0 %v9393
    %11652 = vmatprep.subr.bf16.mxu0 %v9402
    %11653 = vmatpush1.bf16.msra.mxu0 %v9401
    %11654 = vmatprep.subr.bf16.mxu0 %v9410
    %11655 = vmatpush1.bf16.msra.mxu0 %v9409
    %11656 = vmatprep.subr.bf16.mxu0 %v9418
    %11657 = vmatpush1.bf16.msra.mxu0 %v9417
    %11658 = vmatprep.subr.bf16.mxu0 %v9426
    %11659 = vmatpush1.bf16.msra.mxu0 %v9425
    %11660 = vmatprep.subr.bf16.mxu0 %v9434
    %11661 = vmatpush1.bf16.msra.mxu0 %v9433
    %11662 = vmatprep.subr.bf16.mxu0 %v9442
    %11663 = vmatpush1.bf16.msra.mxu0 %v9441
    %11664 = vmatprep.subr.bf16.mxu0 %v9450
    %11665 = vmatpush1.bf16.msra.mxu0 %v9449
    %11666 = vmatprep.subr.bf16.mxu0 %v9458
    %11667 = vmatpush1.bf16.msra.mxu0 %v9457
    %11668 = vmatprep.subr.bf16.mxu0 %v9466
    %11669 = vmatpush1.bf16.msra.mxu0 %v9465
    %11670 = vmatprep.subr.bf16.mxu0 %v9474
    %11671 = vmatpush1.bf16.msra.mxu0 %v9473
    %11672 = vmatprep.mubr.bf16.mxu0 %v5072
    %11673 = vmatmul.mubr.bf16.gmra.mrb[0].mxu0 %v5071
    %v11674 = vpop.f32.mrb[0].mxu0
    %v11675 = vadd.f32 %v11634, %v11674
    %v11676 = vpop.f32.mrb[0].mxu0
    %v11677 = vadd.f32 %v11636, %v11676
    %v11678 = vpop.f32.mrb[0].mxu0
    %v11679 = vpop.f32.mrb[0].mxu0
    %11680 = vdwg.mxu0
    %11681 = vmatprep.subr.bf16.mxu0 %v9482
    %11682 = vmatpush1.bf16.msra.mxu0 %v9481
    %11683 = vmatprep.subr.bf16.mxu0 %v9490
    %11684 = vmatpush1.bf16.msra.mxu0 %v9489
    %11685 = vmatprep.subr.bf16.mxu0 %v9498
    %11686 = vmatpush1.bf16.msra.mxu0 %v9497
    %11687 = vmatprep.subr.bf16.mxu0 %v9506
    %11688 = vmatpush1.bf16.msra.mxu0 %v9505
    %11689 = vmatprep.subr.bf16.mxu0 %v9514
    %11690 = vmatpush1.bf16.msra.mxu0 %v9513
    %11691 = vmatprep.subr.bf16.mxu0 %v9522
    %11692 = vmatpush1.bf16.msra.mxu0 %v9521
    %11693 = vmatprep.subr.bf16.mxu0 %v9530
    %11694 = vmatpush1.bf16.msra.mxu0 %v9529
    %11695 = vmatprep.subr.bf16.mxu0 %v9538
    %11696 = vmatpush1.bf16.msra.mxu0 %v9537
    %11697 = vmatprep.subr.bf16.mxu0 %v9546
    %11698 = vmatpush1.bf16.msra.mxu0 %v9545
    %11699 = vmatprep.subr.bf16.mxu0 %v9554
    %11700 = vmatpush1.bf16.msra.mxu0 %v9553
    %11701 = vmatprep.subr.bf16.mxu0 %v9562
    %11702 = vmatpush1.bf16.msra.mxu0 %v9561
    %11703 = vmatprep.subr.bf16.mxu0 %v9570
    %11704 = vmatpush1.bf16.msra.mxu0 %v9569
    %11705 = vmatprep.subr.bf16.mxu0 %v9578
    %11706 = vmatpush1.bf16.msra.mxu0 %v9577
    %11707 = vmatprep.subr.bf16.mxu0 %v9586
    %11708 = vmatpush1.bf16.msra.mxu0 %v9585
    %11709 = vmatprep.subr.bf16.mxu0 %v9594
    %11710 = vmatpush1.bf16.msra.mxu0 %v9593
    %11711 = vmatprep.subr.bf16.mxu0 %v9602
    %11712 = vmatpush1.bf16.msra.mxu0 %v9601
    %11713 = vmatprep.mubr.bf16.mxu0 %v5074
    %11714 = vmatmul.mubr.bf16.gmra.mrb[0].mxu0 %v5073
    %v11715 = vpop.f32.mrb[0].mxu0
    %v11716 = vadd.f32 %v11675, %v11715
    %v11717 = vpop.f32.mrb[0].mxu0
    %v11718 = vadd.f32 %v11677, %v11717
    %v11719 = vpop.f32.mrb[0].mxu0
    %v11720 = vpop.f32.mrb[0].mxu0
    %11721 = vdwg.mxu0
    %11722 = vmatprep.subr.bf16.mxu0 %v9610
    %11723 = vmatpush1.bf16.msra.mxu0 %v9609
    %11724 = vmatprep.subr.bf16.mxu0 %v9618
    %11725 = vmatpush1.bf16.msra.mxu0 %v9617
    %11726 = vmatprep.subr.bf16.mxu0 %v9626
    %11727 = vmatpush1.bf16.msra.mxu0 %v9625
    %11728 = vmatprep.subr.bf16.mxu0 %v9634
    %11729 = vmatpush1.bf16.msra.mxu0 %v9633
    %11730 = vmatprep.subr.bf16.mxu0 %v9642
    %11731 = vmatpush1.bf16.msra.mxu0 %v9641
    %11732 = vmatprep.subr.bf16.mxu0 %v9650
    %11733 = vmatpush1.bf16.msra.mxu0 %v9649
    %11734 = vmatprep.subr.bf16.mxu0 %v9658
    %11735 = vmatpush1.bf16.msra.mxu0 %v9657
    %11736 = vmatprep.subr.bf16.mxu0 %v9666
    %11737 = vmatpush1.bf16.msra.mxu0 %v9665
    %11738 = vmatprep.subr.bf16.mxu0 %v9674
    %11739 = vmatpush1.bf16.msra.mxu0 %v9673
    %11740 = vmatprep.subr.bf16.mxu0 %v9682
    %11741 = vmatpush1.bf16.msra.mxu0 %v9681
    %11742 = vmatprep.subr.bf16.mxu0 %v9690
    %11743 = vmatpush1.bf16.msra.mxu0 %v9689
    %11744 = vmatprep.subr.bf16.mxu0 %v9698
    %11745 = vmatpush1.bf16.msra.mxu0 %v9697
    %11746 = vmatprep.subr.bf16.mxu0 %v9706
    %11747 = vmatpush1.bf16.msra.mxu0 %v9705
    %11748 = vmatprep.subr.bf16.mxu0 %v9714
    %11749 = vmatpush1.bf16.msra.mxu0 %v9713
    %11750 = vmatprep.subr.bf16.mxu0 %v9722
    %11751 = vmatpush1.bf16.msra.mxu0 %v9721
    %11752 = vmatprep.subr.bf16.mxu0 %v9730
    %11753 = vmatpush1.bf16.msra.mxu0 %v9729
    %11754 = vmatprep.mubr.bf16.mxu0 %v5076
    %11755 = vmatmul.mubr.bf16.gmra.mrb[0].mxu0 %v5075
    %v11756 = vpop.f32.mrb[0].mxu0
    %v11757 = vadd.f32 %v11716, %v11756
    %v11758 = vpop.f32.mrb[0].mxu0
    %v11759 = vadd.f32 %v11718, %v11758
    %v11760 = vpop.f32.mrb[0].mxu0
    %v11761 = vpop.f32.mrb[0].mxu0
    %11762 = vdwg.mxu0
    %11763 = vmatprep.subr.bf16.mxu0 %v9738
    %11764 = vmatpush1.bf16.msra.mxu0 %v9737
    %11765 = vmatprep.subr.bf16.mxu0 %v9746
    %11766 = vmatpush1.bf16.msra.mxu0 %v9745
    %11767 = vmatprep.subr.bf16.mxu0 %v9754
    %11768 = vmatpush1.bf16.msra.mxu0 %v9753
    %11769 = vmatprep.subr.bf16.mxu0 %v9762
    %11770 = vmatpush1.bf16.msra.mxu0 %v9761
    %11771 = vmatprep.subr.bf16.mxu0 %v9770
    %11772 = vmatpush1.bf16.msra.mxu0 %v9769
    %11773 = vmatprep.subr.bf16.mxu0 %v9778
    %11774 = vmatpush1.bf16.msra.mxu0 %v9777
    %11775 = vmatprep.subr.bf16.mxu0 %v9786
    %11776 = vmatpush1.bf16.msra.mxu0 %v9785
    %11777 = vmatprep.subr.bf16.mxu0 %v9794
    %11778 = vmatpush1.bf16.msra.mxu0 %v9793
    %11779 = vmatprep.subr.bf16.mxu0 %v9802
    %11780 = vmatpush1.bf16.msra.mxu0 %v9801
    %11781 = vmatprep.subr.bf16.mxu0 %v9810
    %11782 = vmatpush1.bf16.msra.mxu0 %v9809
    %11783 = vmatprep.subr.bf16.mxu0 %v9818
    %11784 = vmatpush1.bf16.msra.mxu0 %v9817
    %11785 = vmatprep.subr.bf16.mxu0 %v9826
    %11786 = vmatpush1.bf16.msra.mxu0 %v9825
    %11787 = vmatprep.subr.bf16.mxu0 %v9834
    %11788 = vmatpush1.bf16.msra.mxu0 %v9833
    %11789 = vmatprep.subr.bf16.mxu0 %v9842
    %11790 = vmatpush1.bf16.msra.mxu0 %v9841
    %11791 = vmatprep.subr.bf16.mxu0 %v9850
    %11792 = vmatpush1.bf16.msra.mxu0 %v9849
    %11793 = vmatprep.subr.bf16.mxu0 %v9858
    %11794 = vmatpush1.bf16.msra.mxu0 %v9857
    %11795 = vmatprep.mubr.bf16.mxu0 %v5078
    %11796 = vmatmul.mubr.bf16.gmra.mrb[0].mxu0 %v5077
    %v11797 = vpop.f32.mrb[0].mxu0
    %v11798 = vadd.f32 %v11757, %v11797
    %v11799 = vpop.f32.mrb[0].mxu0
    %v11800 = vadd.f32 %v11759, %v11799
    %v11801 = vpop.f32.mrb[0].mxu0
    %v11802 = vpop.f32.mrb[0].mxu0
    %11803 = vdwg.mxu0
    %11804 = vmatprep.subr.bf16.mxu0 %v9866
    %11805 = vmatpush1.bf16.msra.mxu0 %v9865
    %11806 = vmatprep.subr.bf16.mxu0 %v9874
    %11807 = vmatpush1.bf16.msra.mxu0 %v9873
    %11808 = vmatprep.subr.bf16.mxu0 %v9882
    %11809 = vmatpush1.bf16.msra.mxu0 %v9881
    %11810 = vmatprep.subr.bf16.mxu0 %v9890
    %11811 = vmatpush1.bf16.msra.mxu0 %v9889
    %11812 = vmatprep.subr.bf16.mxu0 %v9898
    %11813 = vmatpush1.bf16.msra.mxu0 %v9897
    %11814 = vmatprep.subr.bf16.mxu0 %v9906
    %11815 = vmatpush1.bf16.msra.mxu0 %v9905
    %11816 = vmatprep.subr.bf16.mxu0 %v9914
    %11817 = vmatpush1.bf16.msra.mxu0 %v9913
    %11818 = vmatprep.subr.bf16.mxu0 %v9922
    %11819 = vmatpush1.bf16.msra.mxu0 %v9921
    %11820 = vmatprep.subr.bf16.mxu0 %v9930
    %11821 = vmatpush1.bf16.msra.mxu0 %v9929
    %11822 = vmatprep.subr.bf16.mxu0 %v9938
    %11823 = vmatpush1.bf16.msra.mxu0 %v9937
    %11824 = vmatprep.subr.bf16.mxu0 %v9946
    %11825 = vmatpush1.bf16.msra.mxu0 %v9945
    %11826 = vmatprep.subr.bf16.mxu0 %v9954
    %11827 = vmatpush1.bf16.msra.mxu0 %v9953
    %11828 = vmatprep.subr.bf16.mxu0 %v9962
    %11829 = vmatpush1.bf16.msra.mxu0 %v9961
    %11830 = vmatprep.subr.bf16.mxu0 %v9970
    %11831 = vmatpush1.bf16.msra.mxu0 %v9969
    %11832 = vmatprep.subr.bf16.mxu0 %v9978
    %11833 = vmatpush1.bf16.msra.mxu0 %v9977
    %11834 = vmatprep.subr.bf16.mxu0 %v9986
    %11835 = vmatpush1.bf16.msra.mxu0 %v9985
    %11836 = vmatprep.mubr.bf16.mxu0 %v5080
    %11837 = vmatmul.mubr.bf16.gmra.mrb[0].mxu0 %v5079
    %v11838 = vpop.f32.mrb[0].mxu0
    %v11839 = vadd.f32 %v11798, %v11838
    %v11840 = vpop.f32.mrb[0].mxu0
    %v11841 = vadd.f32 %v11800, %v11840
    %v11842 = vpop.f32.mrb[0].mxu0
    %v11843 = vpop.f32.mrb[0].mxu0
    %11844 = vdwg.mxu0
    %11845 = vmatprep.subr.bf16.mxu0 %v9994
    %11846 = vmatpush1.bf16.msra.mxu0 %v9993
    %11847 = vmatprep.subr.bf16.mxu0 %v10002
    %11848 = vmatpush1.bf16.msra.mxu0 %v10001
    %11849 = vmatprep.subr.bf16.mxu0 %v10010
    %11850 = vmatpush1.bf16.msra.mxu0 %v10009
    %11851 = vmatprep.subr.bf16.mxu0 %v10018
    %11852 = vmatpush1.bf16.msra.mxu0 %v10017
    %11853 = vmatprep.subr.bf16.mxu0 %v10026
    %11854 = vmatpush1.bf16.msra.mxu0 %v10025
    %11855 = vmatprep.subr.bf16.mxu0 %v10034
    %11856 = vmatpush1.bf16.msra.mxu0 %v10033
    %11857 = vmatprep.subr.bf16.mxu0 %v10042
    %11858 = vmatpush1.bf16.msra.mxu0 %v10041
    %11859 = vmatprep.subr.bf16.mxu0 %v10050
    %11860 = vmatpush1.bf16.msra.mxu0 %v10049
    %11861 = vmatprep.subr.bf16.mxu0 %v10058
    %11862 = vmatpush1.bf16.msra.mxu0 %v10057
    %11863 = vmatprep.subr.bf16.mxu0 %v10066
    %11864 = vmatpush1.bf16.msra.mxu0 %v10065
    %11865 = vmatprep.subr.bf16.mxu0 %v10074
    %11866 = vmatpush1.bf16.msra.mxu0 %v10073
    %11867 = vmatprep.subr.bf16.mxu0 %v10082
    %11868 = vmatpush1.bf16.msra.mxu0 %v10081
    %11869 = vmatprep.subr.bf16.mxu0 %v10090
    %11870 = vmatpush1.bf16.msra.mxu0 %v10089
    %11871 = vmatprep.subr.bf16.mxu0 %v10098
    %11872 = vmatpush1.bf16.msra.mxu0 %v10097
    %11873 = vmatprep.subr.bf16.mxu0 %v10106
    %11874 = vmatpush1.bf16.msra.mxu0 %v10105
    %11875 = vmatprep.subr.bf16.mxu0 %v10114
    %11876 = vmatpush1.bf16.msra.mxu0 %v10113
    %11877 = vmatprep.mubr.bf16.mxu0 %v5082
    %11878 = vmatmul.mubr.bf16.gmra.mrb[0].mxu0 %v5081
    %v11879 = vpop.f32.mrb[0].mxu0
    %v11880 = vadd.f32 %v11839, %v11879
    %v11881 = vpop.f32.mrb[0].mxu0
    %v11882 = vadd.f32 %v11841, %v11881
    %v11883 = vpop.f32.mrb[0].mxu0
    %v11884 = vpop.f32.mrb[0].mxu0
    %11885 = vdwg.mxu0
    %11886 = vmatprep.subr.bf16.mxu0 %v10122
    %11887 = vmatpush1.bf16.msra.mxu0 %v10121
    %11888 = vmatprep.subr.bf16.mxu0 %v10130
    %11889 = vmatpush1.bf16.msra.mxu0 %v10129
    %11890 = vmatprep.subr.bf16.mxu0 %v10138
    %11891 = vmatpush1.bf16.msra.mxu0 %v10137
    %11892 = vmatprep.subr.bf16.mxu0 %v10146
    %11893 = vmatpush1.bf16.msra.mxu0 %v10145
    %11894 = vmatprep.subr.bf16.mxu0 %v10154
    %11895 = vmatpush1.bf16.msra.mxu0 %v10153
    %11896 = vmatprep.subr.bf16.mxu0 %v10162
    %11897 = vmatpush1.bf16.msra.mxu0 %v10161
    %11898 = vmatprep.subr.bf16.mxu0 %v10170
    %11899 = vmatpush1.bf16.msra.mxu0 %v10169
    %11900 = vmatprep.subr.bf16.mxu0 %v10178
    %11901 = vmatpush1.bf16.msra.mxu0 %v10177
    %11902 = vmatprep.subr.bf16.mxu0 %v10186
    %11903 = vmatpush1.bf16.msra.mxu0 %v10185
    %11904 = vmatprep.subr.bf16.mxu0 %v10194
    %11905 = vmatpush1.bf16.msra.mxu0 %v10193
    %11906 = vmatprep.subr.bf16.mxu0 %v10202
    %11907 = vmatpush1.bf16.msra.mxu0 %v10201
    %11908 = vmatprep.subr.bf16.mxu0 %v10210
    %11909 = vmatpush1.bf16.msra.mxu0 %v10209
    %11910 = vmatprep.subr.bf16.mxu0 %v10218
    %11911 = vmatpush1.bf16.msra.mxu0 %v10217
    %11912 = vmatprep.subr.bf16.mxu0 %v10226
    %11913 = vmatpush1.bf16.msra.mxu0 %v10225
    %11914 = vmatprep.subr.bf16.mxu0 %v10234
    %11915 = vmatpush1.bf16.msra.mxu0 %v10233
    %11916 = vmatprep.subr.bf16.mxu0 %v10242
    %11917 = vmatpush1.bf16.msra.mxu0 %v10241
    %11918 = vmatprep.mubr.bf16.mxu0 %v5084
    %11919 = vmatmul.mubr.bf16.gmra.mrb[0].mxu0 %v5083
    %v11920 = vpop.f32.mrb[0].mxu0
    %v11921 = vadd.f32 %v11880, %v11920
    %v11922 = vpop.f32.mrb[0].mxu0
    %v11923 = vadd.f32 %v11882, %v11922
    %v11924 = vpop.f32.mrb[0].mxu0
    %v11925 = vpop.f32.mrb[0].mxu0
    %11926 = vdwg.mxu0
    %11927 = vmatprep.subr.bf16.mxu0 %v9228
    %11928 = vmatpush1.bf16.msra.mxu0 %v9227
    %11929 = vmatprep.subr.bf16.mxu0 %v9236
    %11930 = vmatpush1.bf16.msra.mxu0 %v9235
    %11931 = vmatprep.subr.bf16.mxu0 %v9244
    %11932 = vmatpush1.bf16.msra.mxu0 %v9243
    %11933 = vmatprep.subr.bf16.mxu0 %v9252
    %11934 = vmatpush1.bf16.msra.mxu0 %v9251
    %11935 = vmatprep.subr.bf16.mxu0 %v9260
    %11936 = vmatpush1.bf16.msra.mxu0 %v9259
    %11937 = vmatprep.subr.bf16.mxu0 %v9268
    %11938 = vmatpush1.bf16.msra.mxu0 %v9267
    %11939 = vmatprep.subr.bf16.mxu0 %v9276
    %11940 = vmatpush1.bf16.msra.mxu0 %v9275
    %11941 = vmatprep.subr.bf16.mxu0 %v9284
    %11942 = vmatpush1.bf16.msra.mxu0 %v9283
    %11943 = vmatprep.subr.bf16.mxu0 %v9292
    %11944 = vmatpush1.bf16.msra.mxu0 %v9291
    %11945 = vmatprep.subr.bf16.mxu0 %v9300
    %11946 = vmatpush1.bf16.msra.mxu0 %v9299
    %11947 = vmatprep.subr.bf16.mxu0 %v9308
    %11948 = vmatpush1.bf16.msra.mxu0 %v9307
    %11949 = vmatprep.subr.bf16.mxu0 %v9316
    %11950 = vmatpush1.bf16.msra.mxu0 %v9315
    %11951 = vmatprep.subr.bf16.mxu0 %v9324
    %11952 = vmatpush1.bf16.msra.mxu0 %v9323
    %11953 = vmatprep.subr.bf16.mxu0 %v9332
    %11954 = vmatpush1.bf16.msra.mxu0 %v9331
    %11955 = vmatprep.subr.bf16.mxu0 %v9340
    %11956 = vmatpush1.bf16.msra.mxu0 %v9339
    %11957 = vmatprep.subr.bf16.mxu0 %v9348
    %11958 = vmatpush1.bf16.msra.mxu0 %v9347
    %11959 = vmatprep.mubr.bf16.mxu0 %v5070
    %11960 = vmatmul.mubr.bf16.gmra.mrb[0].mxu0 %v5069
    %v11961 = vpop.f32.mrb[0].mxu0
    %v11962 = vadd.f32 %v6130, %v11961
    %v11963 = vpop.f32.mrb[0].mxu0
    %v11964 = vadd.f32 %v6134, %v11963
    %v11965 = vpop.f32.mrb[0].mxu0
    %v11966 = vpop.f32.mrb[0].mxu0
    %11967 = vdwg.mxu0
    %11968 = vmatprep.subr.bf16.mxu0 %v9356
    %11969 = vmatpush1.bf16.msra.mxu0 %v9355
    %11970 = vmatprep.subr.bf16.mxu0 %v9364
    %11971 = vmatpush1.bf16.msra.mxu0 %v9363
    %11972 = vmatprep.subr.bf16.mxu0 %v9372
    %11973 = vmatpush1.bf16.msra.mxu0 %v9371
    %11974 = vmatprep.subr.bf16.mxu0 %v9380
    %11975 = vmatpush1.bf16.msra.mxu0 %v9379
    %11976 = vmatprep.subr.bf16.mxu0 %v9388
    %11977 = vmatpush1.bf16.msra.mxu0 %v9387
    %11978 = vmatprep.subr.bf16.mxu0 %v9396
    %11979 = vmatpush1.bf16.msra.mxu0 %v9395
    %11980 = vmatprep.subr.bf16.mxu0 %v9404
    %11981 = vmatpush1.bf16.msra.mxu0 %v9403
    %11982 = vmatprep.subr.bf16.mxu0 %v9412
    %11983 = vmatpush1.bf16.msra.mxu0 %v9411
    %11984 = vmatprep.subr.bf16.mxu0 %v9420
    %11985 = vmatpush1.bf16.msra.mxu0 %v9419
    %11986 = vmatprep.subr.bf16.mxu0 %v9428
    %11987 = vmatpush1.bf16.msra.mxu0 %v9427
    %11988 = vmatprep.subr.bf16.mxu0 %v9436
    %11989 = vmatpush1.bf16.msra.mxu0 %v9435
    %11990 = vmatprep.subr.bf16.mxu0 %v9444
    %11991 = vmatpush1.bf16.msra.mxu0 %v9443
    %11992 = vmatprep.subr.bf16.mxu0 %v9452
    %11993 = vmatpush1.bf16.msra.mxu0 %v9451
    %11994 = vmatprep.subr.bf16.mxu0 %v9460
    %11995 = vmatpush1.bf16.msra.mxu0 %v9459
    %11996 = vmatprep.subr.bf16.mxu0 %v9468
    %11997 = vmatpush1.bf16.msra.mxu0 %v9467
    %11998 = vmatprep.subr.bf16.mxu0 %v9476
    %11999 = vmatpush1.bf16.msra.mxu0 %v9475
    %12000 = vmatprep.mubr.bf16.mxu0 %v5072
    %12001 = vmatmul.mubr.bf16.gmra.mrb[0].mxu0 %v5071
    %v12002 = vpop.f32.mrb[0].mxu0
    %v12003 = vadd.f32 %v11962, %v12002
    %v12004 = vpop.f32.mrb[0].mxu0
    %v12005 = vadd.f32 %v11964, %v12004
    %v12006 = vpop.f32.mrb[0].mxu0
    %v12007 = vpop.f32.mrb[0].mxu0
    %12008 = vdwg.mxu0
    %12009 = vmatprep.subr.bf16.mxu0 %v9484
    %12010 = vmatpush1.bf16.msra.mxu0 %v9483
    %12011 = vmatprep.subr.bf16.mxu0 %v9492
    %12012 = vmatpush1.bf16.msra.mxu0 %v9491
    %12013 = vmatprep.subr.bf16.mxu0 %v9500
    %12014 = vmatpush1.bf16.msra.mxu0 %v9499
    %12015 = vmatprep.subr.bf16.mxu0 %v9508
    %12016 = vmatpush1.bf16.msra.mxu0 %v9507
    %12017 = vmatprep.subr.bf16.mxu0 %v9516
    %12018 = vmatpush1.bf16.msra.mxu0 %v9515
    %12019 = vmatprep.subr.bf16.mxu0 %v9524
    %12020 = vmatpush1.bf16.msra.mxu0 %v9523
    %12021 = vmatprep.subr.bf16.mxu0 %v9532
    %12022 = vmatpush1.bf16.msra.mxu0 %v9531
    %12023 = vmatprep.subr.bf16.mxu0 %v9540
    %12024 = vmatpush1.bf16.msra.mxu0 %v9539
    %12025 = vmatprep.subr.bf16.mxu0 %v9548
    %12026 = vmatpush1.bf16.msra.mxu0 %v9547
    %12027 = vmatprep.subr.bf16.mxu0 %v9556
    %12028 = vmatpush1.bf16.msra.mxu0 %v9555
    %12029 = vmatprep.subr.bf16.mxu0 %v9564
    %12030 = vmatpush1.bf16.msra.mxu0 %v9563
    %12031 = vmatprep.subr.bf16.mxu0 %v9572
    %12032 = vmatpush1.bf16.msra.mxu0 %v9571
    %12033 = vmatprep.subr.bf16.mxu0 %v9580
    %12034 = vmatpush1.bf16.msra.mxu0 %v9579
    %12035 = vmatprep.subr.bf16.mxu0 %v9588
    %12036 = vmatpush1.bf16.msra.mxu0 %v9587
    %12037 = vmatprep.subr.bf16.mxu0 %v9596
    %12038 = vmatpush1.bf16.msra.mxu0 %v9595
    %12039 = vmatprep.subr.bf16.mxu0 %v9604
    %12040 = vmatpush1.bf16.msra.mxu0 %v9603
    %12041 = vmatprep.mubr.bf16.mxu0 %v5074
    %12042 = vmatmul.mubr.bf16.gmra.mrb[0].mxu0 %v5073
    %v12043 = vpop.f32.mrb[0].mxu0
    %v12044 = vadd.f32 %v12003, %v12043
    %v12045 = vpop.f32.mrb[0].mxu0
    %v12046 = vadd.f32 %v12005, %v12045
    %v12047 = vpop.f32.mrb[0].mxu0
    %v12048 = vpop.f32.mrb[0].mxu0
    %12049 = vdwg.mxu0
    %12050 = vmatprep.subr.bf16.mxu0 %v9612
    %12051 = vmatpush1.bf16.msra.mxu0 %v9611
    %12052 = vmatprep.subr.bf16.mxu0 %v9620
    %12053 = vmatpush1.bf16.msra.mxu0 %v9619
    %12054 = vmatprep.subr.bf16.mxu0 %v9628
    %12055 = vmatpush1.bf16.msra.mxu0 %v9627
    %12056 = vmatprep.subr.bf16.mxu0 %v9636
    %12057 = vmatpush1.bf16.msra.mxu0 %v9635
    %12058 = vmatprep.subr.bf16.mxu0 %v9644
    %12059 = vmatpush1.bf16.msra.mxu0 %v9643
    %12060 = vmatprep.subr.bf16.mxu0 %v9652
    %12061 = vmatpush1.bf16.msra.mxu0 %v9651
    %12062 = vmatprep.subr.bf16.mxu0 %v9660
    %12063 = vmatpush1.bf16.msra.mxu0 %v9659
    %12064 = vmatprep.subr.bf16.mxu0 %v9668
    %12065 = vmatpush1.bf16.msra.mxu0 %v9667
    %12066 = vmatprep.subr.bf16.mxu0 %v9676
    %12067 = vmatpush1.bf16.msra.mxu0 %v9675
    %12068 = vmatprep.subr.bf16.mxu0 %v9684
    %12069 = vmatpush1.bf16.msra.mxu0 %v9683
    %12070 = vmatprep.subr.bf16.mxu0 %v9692
    %12071 = vmatpush1.bf16.msra.mxu0 %v9691
    %12072 = vmatprep.subr.bf16.mxu0 %v9700
    %12073 = vmatpush1.bf16.msra.mxu0 %v9699
    %12074 = vmatprep.subr.bf16.mxu0 %v9708
    %12075 = vmatpush1.bf16.msra.mxu0 %v9707
    %12076 = vmatprep.subr.bf16.mxu0 %v9716
    %12077 = vmatpush1.bf16.msra.mxu0 %v9715
    %12078 = vmatprep.subr.bf16.mxu0 %v9724
    %12079 = vmatpush1.bf16.msra.mxu0 %v9723
    %12080 = vmatprep.subr.bf16.mxu0 %v9732
    %12081 = vmatpush1.bf16.msra.mxu0 %v9731
    %12082 = vmatprep.mubr.bf16.mxu0 %v5076
    %12083 = vmatmul.mubr.bf16.gmra.mrb[0].mxu0 %v5075
    %v12084 = vpop.f32.mrb[0].mxu0
    %v12085 = vadd.f32 %v12044, %v12084
    %v12086 = vpop.f32.mrb[0].mxu0
    %v12087 = vadd.f32 %v12046, %v12086
    %v12088 = vpop.f32.mrb[0].mxu0
    %v12089 = vpop.f32.mrb[0].mxu0
    %12090 = vdwg.mxu0
    %12091 = vmatprep.subr.bf16.mxu0 %v9740
    %12092 = vmatpush1.bf16.msra.mxu0 %v9739
    %12093 = vmatprep.subr.bf16.mxu0 %v9748
    %12094 = vmatpush1.bf16.msra.mxu0 %v9747
    %12095 = vmatprep.subr.bf16.mxu0 %v9756
    %12096 = vmatpush1.bf16.msra.mxu0 %v9755
    %12097 = vmatprep.subr.bf16.mxu0 %v9764
    %12098 = vmatpush1.bf16.msra.mxu0 %v9763
    %12099 = vmatprep.subr.bf16.mxu0 %v9772
    %12100 = vmatpush1.bf16.msra.mxu0 %v9771
    %12101 = vmatprep.subr.bf16.mxu0 %v9780
    %12102 = vmatpush1.bf16.msra.mxu0 %v9779
    %12103 = vmatprep.subr.bf16.mxu0 %v9788
    %12104 = vmatpush1.bf16.msra.mxu0 %v9787
    %12105 = vmatprep.subr.bf16.mxu0 %v9796
    %12106 = vmatpush1.bf16.msra.mxu0 %v9795
    %12107 = vmatprep.subr.bf16.mxu0 %v9804
    %12108 = vmatpush1.bf16.msra.mxu0 %v9803
    %12109 = vmatprep.subr.bf16.mxu0 %v9812
    %12110 = vmatpush1.bf16.msra.mxu0 %v9811
    %12111 = vmatprep.subr.bf16.mxu0 %v9820
    %12112 = vmatpush1.bf16.msra.mxu0 %v9819
    %12113 = vmatprep.subr.bf16.mxu0 %v9828
    %12114 = vmatpush1.bf16.msra.mxu0 %v9827
    %12115 = vmatprep.subr.bf16.mxu0 %v9836
    %12116 = vmatpush1.bf16.msra.mxu0 %v9835
    %12117 = vmatprep.subr.bf16.mxu0 %v9844
    %12118 = vmatpush1.bf16.msra.mxu0 %v9843
    %12119 = vmatprep.subr.bf16.mxu0 %v9852
    %12120 = vmatpush1.bf16.msra.mxu0 %v9851
    %12121 = vmatprep.subr.bf16.mxu0 %v9860
    %12122 = vmatpush1.bf16.msra.mxu0 %v9859
    %12123 = vmatprep.mubr.bf16.mxu0 %v5078
    %12124 = vmatmul.mubr.bf16.gmra.mrb[0].mxu0 %v5077
    %v12125 = vpop.f32.mrb[0].mxu0
    %v12126 = vadd.f32 %v12085, %v12125
    %v12127 = vpop.f32.mrb[0].mxu0
    %v12128 = vadd.f32 %v12087, %v12127
    %v12129 = vpop.f32.mrb[0].mxu0
    %v12130 = vpop.f32.mrb[0].mxu0
    %12131 = vdwg.mxu0
    %12132 = vmatprep.subr.bf16.mxu0 %v9868
    %12133 = vmatpush1.bf16.msra.mxu0 %v9867
    %12134 = vmatprep.subr.bf16.mxu0 %v9876
    %12135 = vmatpush1.bf16.msra.mxu0 %v9875
    %12136 = vmatprep.subr.bf16.mxu0 %v9884
    %12137 = vmatpush1.bf16.msra.mxu0 %v9883
    %12138 = vmatprep.subr.bf16.mxu0 %v9892
    %12139 = vmatpush1.bf16.msra.mxu0 %v9891
    %12140 = vmatprep.subr.bf16.mxu0 %v9900
    %12141 = vmatpush1.bf16.msra.mxu0 %v9899
    %12142 = vmatprep.subr.bf16.mxu0 %v9908
    %12143 = vmatpush1.bf16.msra.mxu0 %v9907
    %12144 = vmatprep.subr.bf16.mxu0 %v9916
    %12145 = vmatpush1.bf16.msra.mxu0 %v9915
    %12146 = vmatprep.subr.bf16.mxu0 %v9924
    %12147 = vmatpush1.bf16.msra.mxu0 %v9923
    %12148 = vmatprep.subr.bf16.mxu0 %v9932
    %12149 = vmatpush1.bf16.msra.mxu0 %v9931
    %12150 = vmatprep.subr.bf16.mxu0 %v9940
    %12151 = vmatpush1.bf16.msra.mxu0 %v9939
    %12152 = vmatprep.subr.bf16.mxu0 %v9948
    %12153 = vmatpush1.bf16.msra.mxu0 %v9947
    %12154 = vmatprep.subr.bf16.mxu0 %v9956
    %12155 = vmatpush1.bf16.msra.mxu0 %v9955
    %12156 = vmatprep.subr.bf16.mxu0 %v9964
    %12157 = vmatpush1.bf16.msra.mxu0 %v9963
    %12158 = vmatprep.subr.bf16.mxu0 %v9972
    %12159 = vmatpush1.bf16.msra.mxu0 %v9971
    %12160 = vmatprep.subr.bf16.mxu0 %v9980
    %12161 = vmatpush1.bf16.msra.mxu0 %v9979
    %12162 = vmatprep.subr.bf16.mxu0 %v9988
    %12163 = vmatpush1.bf16.msra.mxu0 %v9987
    %12164 = vmatprep.mubr.bf16.mxu0 %v5080
    %12165 = vmatmul.mubr.bf16.gmra.mrb[0].mxu0 %v5079
    %v12166 = vpop.f32.mrb[0].mxu0
    %v12167 = vadd.f32 %v12126, %v12166
    %v12168 = vpop.f32.mrb[0].mxu0
    %v12169 = vadd.f32 %v12128, %v12168
    %v12170 = vpop.f32.mrb[0].mxu0
    %v12171 = vpop.f32.mrb[0].mxu0
    %12172 = vdwg.mxu0
    %12173 = vmatprep.subr.bf16.mxu0 %v9996
    %12174 = vmatpush1.bf16.msra.mxu0 %v9995
    %12175 = vmatprep.subr.bf16.mxu0 %v10004
    %12176 = vmatpush1.bf16.msra.mxu0 %v10003
    %12177 = vmatprep.subr.bf16.mxu0 %v10012
    %12178 = vmatpush1.bf16.msra.mxu0 %v10011
    %12179 = vmatprep.subr.bf16.mxu0 %v10020
    %12180 = vmatpush1.bf16.msra.mxu0 %v10019
    %12181 = vmatprep.subr.bf16.mxu0 %v10028
    %12182 = vmatpush1.bf16.msra.mxu0 %v10027
    %12183 = vmatprep.subr.bf16.mxu0 %v10036
    %12184 = vmatpush1.bf16.msra.mxu0 %v10035
    %12185 = vmatprep.subr.bf16.mxu0 %v10044
    %12186 = vmatpush1.bf16.msra.mxu0 %v10043
    %12187 = vmatprep.subr.bf16.mxu0 %v10052
    %12188 = vmatpush1.bf16.msra.mxu0 %v10051
    %12189 = vmatprep.subr.bf16.mxu0 %v10060
    %12190 = vmatpush1.bf16.msra.mxu0 %v10059
    %12191 = vmatprep.subr.bf16.mxu0 %v10068
    %12192 = vmatpush1.bf16.msra.mxu0 %v10067
    %12193 = vmatprep.subr.bf16.mxu0 %v10076
    %12194 = vmatpush1.bf16.msra.mxu0 %v10075
    %12195 = vmatprep.subr.bf16.mxu0 %v10084
    %12196 = vmatpush1.bf16.msra.mxu0 %v10083
    %12197 = vmatprep.subr.bf16.mxu0 %v10092
    %12198 = vmatpush1.bf16.msra.mxu0 %v10091
    %12199 = vmatprep.subr.bf16.mxu0 %v10100
    %12200 = vmatpush1.bf16.msra.mxu0 %v10099
    %12201 = vmatprep.subr.bf16.mxu0 %v10108
    %12202 = vmatpush1.bf16.msra.mxu0 %v10107
    %12203 = vmatprep.subr.bf16.mxu0 %v10116
    %12204 = vmatpush1.bf16.msra.mxu0 %v10115
    %12205 = vmatprep.mubr.bf16.mxu0 %v5082
    %12206 = vmatmul.mubr.bf16.gmra.mrb[0].mxu0 %v5081
    %v12207 = vpop.f32.mrb[0].mxu0
    %v12208 = vadd.f32 %v12167, %v12207
    %v12209 = vpop.f32.mrb[0].mxu0
    %v12210 = vadd.f32 %v12169, %v12209
    %v12211 = vpop.f32.mrb[0].mxu0
    %v12212 = vpop.f32.mrb[0].mxu0
    %12213 = vdwg.mxu0
    %12214 = vmatprep.subr.bf16.mxu0 %v10124
    %12215 = vmatpush1.bf16.msra.mxu0 %v10123
    %12216 = vmatprep.subr.bf16.mxu0 %v10132
    %12217 = vmatpush1.bf16.msra.mxu0 %v10131
    %12218 = vmatprep.subr.bf16.mxu0 %v10140
    %12219 = vmatpush1.bf16.msra.mxu0 %v10139
    %12220 = vmatprep.subr.bf16.mxu0 %v10148
    %12221 = vmatpush1.bf16.msra.mxu0 %v10147
    %12222 = vmatprep.subr.bf16.mxu0 %v10156
    %12223 = vmatpush1.bf16.msra.mxu0 %v10155
    %12224 = vmatprep.subr.bf16.mxu0 %v10164
    %12225 = vmatpush1.bf16.msra.mxu0 %v10163
    %12226 = vmatprep.subr.bf16.mxu0 %v10172
    %12227 = vmatpush1.bf16.msra.mxu0 %v10171
    %12228 = vmatprep.subr.bf16.mxu0 %v10180
    %12229 = vmatpush1.bf16.msra.mxu0 %v10179
    %12230 = vmatprep.subr.bf16.mxu0 %v10188
    %12231 = vmatpush1.bf16.msra.mxu0 %v10187
    %12232 = vmatprep.subr.bf16.mxu0 %v10196
    %12233 = vmatpush1.bf16.msra.mxu0 %v10195
    %12234 = vmatprep.subr.bf16.mxu0 %v10204
    %12235 = vmatpush1.bf16.msra.mxu0 %v10203
    %12236 = vmatprep.subr.bf16.mxu0 %v10212
    %12237 = vmatpush1.bf16.msra.mxu0 %v10211
    %12238 = vmatprep.subr.bf16.mxu0 %v10220
    %12239 = vmatpush1.bf16.msra.mxu0 %v10219
    %12240 = vmatprep.subr.bf16.mxu0 %v10228
    %12241 = vmatpush1.bf16.msra.mxu0 %v10227
    %12242 = vmatprep.subr.bf16.mxu0 %v10236
    %12243 = vmatpush1.bf16.msra.mxu0 %v10235
    %12244 = vmatprep.subr.bf16.mxu0 %v10244
    %12245 = vmatpush1.bf16.msra.mxu0 %v10243
    %12246 = vmatprep.mubr.bf16.mxu0 %v5084
    %12247 = vmatmul.mubr.bf16.gmra.mrb[0].mxu0 %v5083
    %v12248 = vpop.f32.mrb[0].mxu0
    %v12249 = vadd.f32 %v12208, %v12248
    %v12250 = vpop.f32.mrb[0].mxu0
    %v12251 = vadd.f32 %v12210, %v12250
    %v12252 = vpop.f32.mrb[0].mxu0
    %v12253 = vpop.f32.mrb[0].mxu0
    %12254 = vdwg.mxu0
    %12255 = vmatprep.subr.bf16.mxu0 %v9230
    %12256 = vmatpush1.bf16.msra.mxu0 %v9229
    %12257 = vmatprep.subr.bf16.mxu0 %v9238
    %12258 = vmatpush1.bf16.msra.mxu0 %v9237
    %12259 = vmatprep.subr.bf16.mxu0 %v9246
    %12260 = vmatpush1.bf16.msra.mxu0 %v9245
    %12261 = vmatprep.subr.bf16.mxu0 %v9254
    %12262 = vmatpush1.bf16.msra.mxu0 %v9253
    %12263 = vmatprep.subr.bf16.mxu0 %v9262
    %12264 = vmatpush1.bf16.msra.mxu0 %v9261
    %12265 = vmatprep.subr.bf16.mxu0 %v9270
    %12266 = vmatpush1.bf16.msra.mxu0 %v9269
    %12267 = vmatprep.subr.bf16.mxu0 %v9278
    %12268 = vmatpush1.bf16.msra.mxu0 %v9277
    %12269 = vmatprep.subr.bf16.mxu0 %v9286
    %12270 = vmatpush1.bf16.msra.mxu0 %v9285
    %12271 = vmatprep.subr.bf16.mxu0 %v9294
    %12272 = vmatpush1.bf16.msra.mxu0 %v9293
    %12273 = vmatprep.subr.bf16.mxu0 %v9302
    %12274 = vmatpush1.bf16.msra.mxu0 %v9301
    %12275 = vmatprep.subr.bf16.mxu0 %v9310
    %12276 = vmatpush1.bf16.msra.mxu0 %v9309
    %12277 = vmatprep.subr.bf16.mxu0 %v9318
    %12278 = vmatpush1.bf16.msra.mxu0 %v9317
    %12279 = vmatprep.subr.bf16.mxu0 %v9326
    %12280 = vmatpush1.bf16.msra.mxu0 %v9325
    %12281 = vmatprep.subr.bf16.mxu0 %v9334
    %12282 = vmatpush1.bf16.msra.mxu0 %v9333
    %12283 = vmatprep.subr.bf16.mxu0 %v9342
    %12284 = vmatpush1.bf16.msra.mxu0 %v9341
    %12285 = vmatprep.subr.bf16.mxu0 %v9350
    %12286 = vmatpush1.bf16.msra.mxu0 %v9349
    %12287 = vmatprep.mubr.bf16.mxu0 %v5070
    %12288 = vmatmul.mubr.bf16.gmra.mrb[0].mxu0 %v5069
    %v12289 = vpop.f32.mrb[0].mxu0
    %v12290 = vadd.f32 %v6138, %v12289
    %v12291 = vpop.f32.mrb[0].mxu0
    %v12292 = vadd.f32 %v6142, %v12291
    %v12293 = vpop.f32.mrb[0].mxu0
    %v12294 = vpop.f32.mrb[0].mxu0
    %12295 = vdwg.mxu0
    %12296 = vmatprep.subr.bf16.mxu0 %v9358
    %12297 = vmatpush1.bf16.msra.mxu0 %v9357
    %12298 = vmatprep.subr.bf16.mxu0 %v9366
    %12299 = vmatpush1.bf16.msra.mxu0 %v9365
    %12300 = vmatprep.subr.bf16.mxu0 %v9374
    %12301 = vmatpush1.bf16.msra.mxu0 %v9373
    %12302 = vmatprep.subr.bf16.mxu0 %v9382
    %12303 = vmatpush1.bf16.msra.mxu0 %v9381
    %12304 = vmatprep.subr.bf16.mxu0 %v9390
    %12305 = vmatpush1.bf16.msra.mxu0 %v9389
    %12306 = vmatprep.subr.bf16.mxu0 %v9398
    %12307 = vmatpush1.bf16.msra.mxu0 %v9397
    %12308 = vmatprep.subr.bf16.mxu0 %v9406
    %12309 = vmatpush1.bf16.msra.mxu0 %v9405
    %12310 = vmatprep.subr.bf16.mxu0 %v9414
    %12311 = vmatpush1.bf16.msra.mxu0 %v9413
    %12312 = vmatprep.subr.bf16.mxu0 %v9422
    %12313 = vmatpush1.bf16.msra.mxu0 %v9421
    %12314 = vmatprep.subr.bf16.mxu0 %v9430
    %12315 = vmatpush1.bf16.msra.mxu0 %v9429
    %12316 = vmatprep.subr.bf16.mxu0 %v9438
    %12317 = vmatpush1.bf16.msra.mxu0 %v9437
    %12318 = vmatprep.subr.bf16.mxu0 %v9446
    %12319 = vmatpush1.bf16.msra.mxu0 %v9445
    %12320 = vmatprep.subr.bf16.mxu0 %v9454
    %12321 = vmatpush1.bf16.msra.mxu0 %v9453
    %12322 = vmatprep.subr.bf16.mxu0 %v9462
    %12323 = vmatpush1.bf16.msra.mxu0 %v9461
    %12324 = vmatprep.subr.bf16.mxu0 %v9470
    %12325 = vmatpush1.bf16.msra.mxu0 %v9469
    %12326 = vmatprep.subr.bf16.mxu0 %v9478
    %12327 = vmatpush1.bf16.msra.mxu0 %v9477
    %12328 = vmatprep.mubr.bf16.mxu0 %v5072
    %12329 = vmatmul.mubr.bf16.gmra.mrb[0].mxu0 %v5071
    %v12330 = vpop.f32.mrb[0].mxu0
    %v12331 = vadd.f32 %v12290, %v12330
    %v12332 = vpop.f32.mrb[0].mxu0
    %v12333 = vadd.f32 %v12292, %v12332
    %v12334 = vpop.f32.mrb[0].mxu0
    %v12335 = vpop.f32.mrb[0].mxu0
    %12336 = vdwg.mxu0
    %12337 = vmatprep.subr.bf16.mxu0 %v9486
    %12338 = vmatpush1.bf16.msra.mxu0 %v9485
    %12339 = vmatprep.subr.bf16.mxu0 %v9494
    %12340 = vmatpush1.bf16.msra.mxu0 %v9493
    %12341 = vmatprep.subr.bf16.mxu0 %v9502
    %12342 = vmatpush1.bf16.msra.mxu0 %v9501
    %12343 = vmatprep.subr.bf16.mxu0 %v9510
    %12344 = vmatpush1.bf16.msra.mxu0 %v9509
    %12345 = vmatprep.subr.bf16.mxu0 %v9518
    %12346 = vmatpush1.bf16.msra.mxu0 %v9517
    %12347 = vmatprep.subr.bf16.mxu0 %v9526
    %12348 = vmatpush1.bf16.msra.mxu0 %v9525
    %12349 = vmatprep.subr.bf16.mxu0 %v9534
    %12350 = vmatpush1.bf16.msra.mxu0 %v9533
    %12351 = vmatprep.subr.bf16.mxu0 %v9542
    %12352 = vmatpush1.bf16.msra.mxu0 %v9541
    %12353 = vmatprep.subr.bf16.mxu0 %v9550
    %12354 = vmatpush1.bf16.msra.mxu0 %v9549
    %12355 = vmatprep.subr.bf16.mxu0 %v9558
    %12356 = vmatpush1.bf16.msra.mxu0 %v9557
    %12357 = vmatprep.subr.bf16.mxu0 %v9566
    %12358 = vmatpush1.bf16.msra.mxu0 %v9565
    %12359 = vmatprep.subr.bf16.mxu0 %v9574
    %12360 = vmatpush1.bf16.msra.mxu0 %v9573
    %12361 = vmatprep.subr.bf16.mxu0 %v9582
    %12362 = vmatpush1.bf16.msra.mxu0 %v9581
    %12363 = vmatprep.subr.bf16.mxu0 %v9590
    %12364 = vmatpush1.bf16.msra.mxu0 %v9589
    %12365 = vmatprep.subr.bf16.mxu0 %v9598
    %12366 = vmatpush1.bf16.msra.mxu0 %v9597
    %12367 = vmatprep.subr.bf16.mxu0 %v9606
    %12368 = vmatpush1.bf16.msra.mxu0 %v9605
    %12369 = vmatprep.mubr.bf16.mxu0 %v5074
    %12370 = vmatmul.mubr.bf16.gmra.mrb[0].mxu0 %v5073
    %v12371 = vpop.f32.mrb[0].mxu0
    %v12372 = vadd.f32 %v12331, %v12371
    %v12373 = vpop.f32.mrb[0].mxu0
    %v12374 = vadd.f32 %v12333, %v12373
    %v12375 = vpop.f32.mrb[0].mxu0
    %v12376 = vpop.f32.mrb[0].mxu0
    %12377 = vdwg.mxu0
    %12378 = vmatprep.subr.bf16.mxu0 %v9614
    %12379 = vmatpush1.bf16.msra.mxu0 %v9613
    %12380 = vmatprep.subr.bf16.mxu0 %v9622
    %12381 = vmatpush1.bf16.msra.mxu0 %v9621
    %12382 = vmatprep.subr.bf16.mxu0 %v9630
    %12383 = vmatpush1.bf16.msra.mxu0 %v9629
    %12384 = vmatprep.subr.bf16.mxu0 %v9638
    %12385 = vmatpush1.bf16.msra.mxu0 %v9637
    %12386 = vmatprep.subr.bf16.mxu0 %v9646
    %12387 = vmatpush1.bf16.msra.mxu0 %v9645
    %12388 = vmatprep.subr.bf16.mxu0 %v9654
    %12389 = vmatpush1.bf16.msra.mxu0 %v9653
    %12390 = vmatprep.subr.bf16.mxu0 %v9662
    %12391 = vmatpush1.bf16.msra.mxu0 %v9661
    %12392 = vmatprep.subr.bf16.mxu0 %v9670
    %12393 = vmatpush1.bf16.msra.mxu0 %v9669
    %12394 = vmatprep.subr.bf16.mxu0 %v9678
    %12395 = vmatpush1.bf16.msra.mxu0 %v9677
    %12396 = vmatprep.subr.bf16.mxu0 %v9686
    %12397 = vmatpush1.bf16.msra.mxu0 %v9685
    %12398 = vmatprep.subr.bf16.mxu0 %v9694
    %12399 = vmatpush1.bf16.msra.mxu0 %v9693
    %12400 = vmatprep.subr.bf16.mxu0 %v9702
    %12401 = vmatpush1.bf16.msra.mxu0 %v9701
    %12402 = vmatprep.subr.bf16.mxu0 %v9710
    %12403 = vmatpush1.bf16.msra.mxu0 %v9709
    %12404 = vmatprep.subr.bf16.mxu0 %v9718
    %12405 = vmatpush1.bf16.msra.mxu0 %v9717
    %12406 = vmatprep.subr.bf16.mxu0 %v9726
    %12407 = vmatpush1.bf16.msra.mxu0 %v9725
    %12408 = vmatprep.subr.bf16.mxu0 %v9734
    %12409 = vmatpush1.bf16.msra.mxu0 %v9733
    %12410 = vmatprep.mubr.bf16.mxu0 %v5076
    %12411 = vmatmul.mubr.bf16.gmra.mrb[0].mxu0 %v5075
    %v12412 = vpop.f32.mrb[0].mxu0
    %v12413 = vadd.f32 %v12372, %v12412
    %v12414 = vpop.f32.mrb[0].mxu0
    %v12415 = vadd.f32 %v12374, %v12414
    %v12416 = vpop.f32.mrb[0].mxu0
    %v12417 = vpop.f32.mrb[0].mxu0
    %12418 = vdwg.mxu0
    %12419 = vmatprep.subr.bf16.mxu0 %v9742
    %12420 = vmatpush1.bf16.msra.mxu0 %v9741
    %12421 = vmatprep.subr.bf16.mxu0 %v9750
    %12422 = vmatpush1.bf16.msra.mxu0 %v9749
    %12423 = vmatprep.subr.bf16.mxu0 %v9758
    %12424 = vmatpush1.bf16.msra.mxu0 %v9757
    %12425 = vmatprep.subr.bf16.mxu0 %v9766
    %12426 = vmatpush1.bf16.msra.mxu0 %v9765
    %12427 = vmatprep.subr.bf16.mxu0 %v9774
    %12428 = vmatpush1.bf16.msra.mxu0 %v9773
    %12429 = vmatprep.subr.bf16.mxu0 %v9782
    %12430 = vmatpush1.bf16.msra.mxu0 %v9781
    %12431 = vmatprep.subr.bf16.mxu0 %v9790
    %12432 = vmatpush1.bf16.msra.mxu0 %v9789
    %12433 = vmatprep.subr.bf16.mxu0 %v9798
    %12434 = vmatpush1.bf16.msra.mxu0 %v9797
    %12435 = vmatprep.subr.bf16.mxu0 %v9806
    %12436 = vmatpush1.bf16.msra.mxu0 %v9805
    %12437 = vmatprep.subr.bf16.mxu0 %v9814
    %12438 = vmatpush1.bf16.msra.mxu0 %v9813
    %12439 = vmatprep.subr.bf16.mxu0 %v9822
    %12440 = vmatpush1.bf16.msra.mxu0 %v9821
    %12441 = vmatprep.subr.bf16.mxu0 %v9830
    %12442 = vmatpush1.bf16.msra.mxu0 %v9829
    %12443 = vmatprep.subr.bf16.mxu0 %v9838
    %12444 = vmatpush1.bf16.msra.mxu0 %v9837
    %12445 = vmatprep.subr.bf16.mxu0 %v9846
    %12446 = vmatpush1.bf16.msra.mxu0 %v9845
    %12447 = vmatprep.subr.bf16.mxu0 %v9854
    %12448 = vmatpush1.bf16.msra.mxu0 %v9853
    %12449 = vmatprep.subr.bf16.mxu0 %v9862
    %12450 = vmatpush1.bf16.msra.mxu0 %v9861
    %12451 = vmatprep.mubr.bf16.mxu0 %v5078
    %12452 = vmatmul.mubr.bf16.gmra.mrb[0].mxu0 %v5077
    %v12453 = vpop.f32.mrb[0].mxu0
    %v12454 = vadd.f32 %v12413, %v12453
    %v12455 = vpop.f32.mrb[0].mxu0
    %v12456 = vadd.f32 %v12415, %v12455
    %v12457 = vpop.f32.mrb[0].mxu0
    %v12458 = vpop.f32.mrb[0].mxu0
    %12459 = vdwg.mxu0
    %12460 = vmatprep.subr.bf16.mxu0 %v9870
    %12461 = vmatpush1.bf16.msra.mxu0 %v9869
    %12462 = vmatprep.subr.bf16.mxu0 %v9878
    %12463 = vmatpush1.bf16.msra.mxu0 %v9877
    %12464 = vmatprep.subr.bf16.mxu0 %v9886
    %12465 = vmatpush1.bf16.msra.mxu0 %v9885
    %12466 = vmatprep.subr.bf16.mxu0 %v9894
    %12467 = vmatpush1.bf16.msra.mxu0 %v9893
    %12468 = vmatprep.subr.bf16.mxu0 %v9902
    %12469 = vmatpush1.bf16.msra.mxu0 %v9901
    %12470 = vmatprep.subr.bf16.mxu0 %v9910
    %12471 = vmatpush1.bf16.msra.mxu0 %v9909
    %12472 = vmatprep.subr.bf16.mxu0 %v9918
    %12473 = vmatpush1.bf16.msra.mxu0 %v9917
    %12474 = vmatprep.subr.bf16.mxu0 %v9926
    %12475 = vmatpush1.bf16.msra.mxu0 %v9925
    %12476 = vmatprep.subr.bf16.mxu0 %v9934
    %12477 = vmatpush1.bf16.msra.mxu0 %v9933
    %12478 = vmatprep.subr.bf16.mxu0 %v9942
    %12479 = vmatpush1.bf16.msra.mxu0 %v9941
    %12480 = vmatprep.subr.bf16.mxu0 %v9950
    %12481 = vmatpush1.bf16.msra.mxu0 %v9949
    %12482 = vmatprep.subr.bf16.mxu0 %v9958
    %12483 = vmatpush1.bf16.msra.mxu0 %v9957
    %12484 = vmatprep.subr.bf16.mxu0 %v9966
    %12485 = vmatpush1.bf16.msra.mxu0 %v9965
    %12486 = vmatprep.subr.bf16.mxu0 %v9974
    %12487 = vmatpush1.bf16.msra.mxu0 %v9973
    %12488 = vmatprep.subr.bf16.mxu0 %v9982
    %12489 = vmatpush1.bf16.msra.mxu0 %v9981
    %12490 = vmatprep.subr.bf16.mxu0 %v9990
    %12491 = vmatpush1.bf16.msra.mxu0 %v9989
    %12492 = vmatprep.mubr.bf16.mxu0 %v5080
    %12493 = vmatmul.mubr.bf16.gmra.mrb[0].mxu0 %v5079
    %v12494 = vpop.f32.mrb[0].mxu0
    %v12495 = vadd.f32 %v12454, %v12494
    %v12496 = vpop.f32.mrb[0].mxu0
    %v12497 = vadd.f32 %v12456, %v12496
    %v12498 = vpop.f32.mrb[0].mxu0
    %v12499 = vpop.f32.mrb[0].mxu0
    %12500 = vdwg.mxu0
    %12501 = vmatprep.subr.bf16.mxu0 %v9998
    %12502 = vmatpush1.bf16.msra.mxu0 %v9997
    %12503 = vmatprep.subr.bf16.mxu0 %v10006
    %12504 = vmatpush1.bf16.msra.mxu0 %v10005
    %12505 = vmatprep.subr.bf16.mxu0 %v10014
    %12506 = vmatpush1.bf16.msra.mxu0 %v10013
    %12507 = vmatprep.subr.bf16.mxu0 %v10022
    %12508 = vmatpush1.bf16.msra.mxu0 %v10021
    %12509 = vmatprep.subr.bf16.mxu0 %v10030
    %12510 = vmatpush1.bf16.msra.mxu0 %v10029
    %12511 = vmatprep.subr.bf16.mxu0 %v10038
    %12512 = vmatpush1.bf16.msra.mxu0 %v10037
    %12513 = vmatprep.subr.bf16.mxu0 %v10046
    %12514 = vmatpush1.bf16.msra.mxu0 %v10045
    %12515 = vmatprep.subr.bf16.mxu0 %v10054
    %12516 = vmatpush1.bf16.msra.mxu0 %v10053
    %12517 = vmatprep.subr.bf16.mxu0 %v10062
    %12518 = vmatpush1.bf16.msra.mxu0 %v10061
    %12519 = vmatprep.subr.bf16.mxu0 %v10070
    %12520 = vmatpush1.bf16.msra.mxu0 %v10069
    %12521 = vmatprep.subr.bf16.mxu0 %v10078
    %12522 = vmatpush1.bf16.msra.mxu0 %v10077
    %12523 = vmatprep.subr.bf16.mxu0 %v10086
    %12524 = vmatpush1.bf16.msra.mxu0 %v10085
    %12525 = vmatprep.subr.bf16.mxu0 %v10094
    %12526 = vmatpush1.bf16.msra.mxu0 %v10093
    %12527 = vmatprep.subr.bf16.mxu0 %v10102
    %12528 = vmatpush1.bf16.msra.mxu0 %v10101
    %12529 = vmatprep.subr.bf16.mxu0 %v10110
    %12530 = vmatpush1.bf16.msra.mxu0 %v10109
    %12531 = vmatprep.subr.bf16.mxu0 %v10118
    %12532 = vmatpush1.bf16.msra.mxu0 %v10117
    %12533 = vmatprep.mubr.bf16.mxu0 %v5082
    %12534 = vmatmul.mubr.bf16.gmra.mrb[0].mxu0 %v5081
    %v12535 = vpop.f32.mrb[0].mxu0
    %v12536 = vadd.f32 %v12495, %v12535
    %v12537 = vpop.f32.mrb[0].mxu0
    %v12538 = vadd.f32 %v12497, %v12537
    %v12539 = vpop.f32.mrb[0].mxu0
    %v12540 = vpop.f32.mrb[0].mxu0
    %12541 = vdwg.mxu0
    %12542 = vmatprep.subr.bf16.mxu0 %v10126
    %12543 = vmatpush1.bf16.msra.mxu0 %v10125
    %12544 = vmatprep.subr.bf16.mxu0 %v10134
    %12545 = vmatpush1.bf16.msra.mxu0 %v10133
    %12546 = vmatprep.subr.bf16.mxu0 %v10142
    %12547 = vmatpush1.bf16.msra.mxu0 %v10141
    %12548 = vmatprep.subr.bf16.mxu0 %v10150
    %12549 = vmatpush1.bf16.msra.mxu0 %v10149
    %12550 = vmatprep.subr.bf16.mxu0 %v10158
    %12551 = vmatpush1.bf16.msra.mxu0 %v10157
    %12552 = vmatprep.subr.bf16.mxu0 %v10166
    %12553 = vmatpush1.bf16.msra.mxu0 %v10165
    %12554 = vmatprep.subr.bf16.mxu0 %v10174
    %12555 = vmatpush1.bf16.msra.mxu0 %v10173
    %12556 = vmatprep.subr.bf16.mxu0 %v10182
    %12557 = vmatpush1.bf16.msra.mxu0 %v10181
    %12558 = vmatprep.subr.bf16.mxu0 %v10190
    %12559 = vmatpush1.bf16.msra.mxu0 %v10189
    %12560 = vmatprep.subr.bf16.mxu0 %v10198
    %12561 = vmatpush1.bf16.msra.mxu0 %v10197
    %12562 = vmatprep.subr.bf16.mxu0 %v10206
    %12563 = vmatpush1.bf16.msra.mxu0 %v10205
    %12564 = vmatprep.subr.bf16.mxu0 %v10214
    %12565 = vmatpush1.bf16.msra.mxu0 %v10213
    %12566 = vmatprep.subr.bf16.mxu0 %v10222
    %12567 = vmatpush1.bf16.msra.mxu0 %v10221
    %12568 = vmatprep.subr.bf16.mxu0 %v10230
    %12569 = vmatpush1.bf16.msra.mxu0 %v10229
    %12570 = vmatprep.subr.bf16.mxu0 %v10238
    %12571 = vmatpush1.bf16.msra.mxu0 %v10237
    %12572 = vmatprep.subr.bf16.mxu0 %v10246
    %12573 = vmatpush1.bf16.msra.mxu0 %v10245
    %12574 = vmatprep.mubr.bf16.mxu0 %v5084
    %12575 = vmatmul.mubr.bf16.gmra.mrb[0].mxu0 %v5083
    %v12576 = vpop.f32.mrb[0].mxu0
    %v12577 = vadd.f32 %v12536, %v12576
    %v12578 = vpop.f32.mrb[0].mxu0
    %v12579 = vadd.f32 %v12538, %v12578
    %v12580 = vpop.f32.mrb[0].mxu0
    %v12581 = vpop.f32.mrb[0].mxu0
    %12582 = vdwg.mxu0
    %v12583 = vmax.f32 %v11593, 0.0
    %v12584 = vmax.f32 %v11595, 0.0
    %v12585 = vmax.f32 %v11921, 0.0
    %v12586 = vmax.f32 %v11923, 0.0
    %v12587 = vmax.f32 %v12249, 0.0
    %v12588 = vmax.f32 %v12251, 0.0
    %v12589 = vmax.f32 %v12577, 0.0
    %v12590 = vmax.f32 %v12579, 0.0
    %v12591 = vpack.c.bf16 %v12583, %v12583
    %v12592 = vpack.c.bf16 %v12584, %v12584
    %v12593 = vpack.c.bf16 %v12585, %v12585
    %v12594 = vpack.c.bf16 %v12586, %v12586
    %v12595 = vpack.c.bf16 %v12587, %v12587
    %v12596 = vpack.c.bf16 %v12588, %v12588
    %v12597 = vpack.c.bf16 %v12589, %v12589
    %v12598 = vpack.c.bf16 %v12590, %v12590
    %v12599 = vld [vmem:[#allocation10] sm:$0xff]
    %v12600 = vld [vmem:[#allocation10 + $0x8] sm:$0xff]
    %v12601 = vld [vmem:[#allocation10 + $0x10] sm:$0xff]
    %v12602 = vld [vmem:[#allocation10 + $0x18] sm:$0xff]
    %v12603 = vld [vmem:[#allocation10 + $0x20] sm:$0xff]
    %v12604 = vld [vmem:[#allocation10 + $0x28] sm:$0xff]
    %v12605 = vld [vmem:[#allocation10 + $0x30] sm:$0xff]
    %v12606 = vld [vmem:[#allocation10 + $0x38] sm:$0xff]
    %v12607 = vld [vmem:[#allocation10 + $0x40] sm:$0xff]
    %v12608 = vld [vmem:[#allocation10 + $0x48] sm:$0xff]
    %v12609 = vld [vmem:[#allocation10 + $0x50] sm:$0xff]
    %v12610 = vld [vmem:[#allocation10 + $0x58] sm:$0xff]
    %v12611 = vld [vmem:[#allocation10 + $0x60] sm:$0xff]
    %v12612 = vld [vmem:[#allocation10 + $0x68] sm:$0xff]
    %v12613 = vld [vmem:[#allocation10 + $0x70] sm:$0xff]
    %v12614 = vld [vmem:[#allocation10 + $0x78] sm:$0xff]
    %v12615 = vld [vmem:[#allocation10 + $0x80] sm:$0xff]
    %v12616 = vld [vmem:[#allocation10 + $0x88] sm:$0xff]
    %v12617 = vld [vmem:[#allocation10 + $0x90] sm:$0xff]
    %v12618 = vld [vmem:[#allocation10 + $0x98] sm:$0xff]
    %v12619 = vld [vmem:[#allocation10 + $0xa0] sm:$0xff]
    %v12620 = vld [vmem:[#allocation10 + $0xa8] sm:$0xff]
    %v12621 = vld [vmem:[#allocation10 + $0xb0] sm:$0xff]
    %v12622 = vld [vmem:[#allocation10 + $0xb8] sm:$0xff]
    %v12623 = vld [vmem:[#allocation10 + $0xc0] sm:$0xff]
    %v12624 = vld [vmem:[#allocation10 + $0xc8] sm:$0xff]
    %v12625 = vld [vmem:[#allocation10 + $0xd0] sm:$0xff]
    %v12626 = vld [vmem:[#allocation10 + $0xd8] sm:$0xff]
    %v12627 = vld [vmem:[#allocation10 + $0xe0] sm:$0xff]
    %v12628 = vld [vmem:[#allocation10 + $0xe8] sm:$0xff]
    %v12629 = vld [vmem:[#allocation10 + $0xf0] sm:$0xff]
    %v12630 = vld [vmem:[#allocation10 + $0xf8] sm:$0xff]
    %v12631 = vld [vmem:[#allocation10 + $0x100] sm:$0xff]
    %v12632 = vld [vmem:[#allocation10 + $0x108] sm:$0xff]
    %v12633 = vld [vmem:[#allocation10 + $0x110] sm:$0xff]
    %v12634 = vld [vmem:[#allocation10 + $0x118] sm:$0xff]
    %v12635 = vld [vmem:[#allocation10 + $0x120] sm:$0xff]
    %v12636 = vld [vmem:[#allocation10 + $0x128] sm:$0xff]
    %v12637 = vld [vmem:[#allocation10 + $0x130] sm:$0xff]
    %v12638 = vld [vmem:[#allocation10 + $0x138] sm:$0xff]
    %v12639 = vld [vmem:[#allocation10 + $0x140] sm:$0xff]
    %v12640 = vld [vmem:[#allocation10 + $0x148] sm:$0xff]
    %v12641 = vld [vmem:[#allocation10 + $0x150] sm:$0xff]
    %v12642 = vld [vmem:[#allocation10 + $0x158] sm:$0xff]
    %v12643 = vld [vmem:[#allocation10 + $0x160] sm:$0xff]
    %v12644 = vld [vmem:[#allocation10 + $0x168] sm:$0xff]
    %v12645 = vld [vmem:[#allocation10 + $0x170] sm:$0xff]
    %v12646 = vld [vmem:[#allocation10 + $0x178] sm:$0xff]
    %v12647 = vld [vmem:[#allocation10 + $0x180] sm:$0xff]
    %v12648 = vld [vmem:[#allocation10 + $0x188] sm:$0xff]
    %v12649 = vld [vmem:[#allocation10 + $0x190] sm:$0xff]
    %v12650 = vld [vmem:[#allocation10 + $0x198] sm:$0xff]
    %v12651 = vld [vmem:[#allocation10 + $0x1a0] sm:$0xff]
    %v12652 = vld [vmem:[#allocation10 + $0x1a8] sm:$0xff]
    %v12653 = vld [vmem:[#allocation10 + $0x1b0] sm:$0xff]
    %v12654 = vld [vmem:[#allocation10 + $0x1b8] sm:$0xff]
    %v12655 = vld [vmem:[#allocation10 + $0x1c0] sm:$0xff]
    %v12656 = vld [vmem:[#allocation10 + $0x1c8] sm:$0xff]
    %v12657 = vld [vmem:[#allocation10 + $0x1d0] sm:$0xff]
    %v12658 = vld [vmem:[#allocation10 + $0x1d8] sm:$0xff]
    %v12659 = vld [vmem:[#allocation10 + $0x1e0] sm:$0xff]
    %v12660 = vld [vmem:[#allocation10 + $0x1e8] sm:$0xff]
    %v12661 = vld [vmem:[#allocation10 + $0x1f0] sm:$0xff]
    %v12662 = vld [vmem:[#allocation10 + $0x1f8] sm:$0xff]
    %v12663 = vld [vmem:[#allocation10 + $0x200] sm:$0xff]
    %v12664 = vld [vmem:[#allocation10 + $0x208] sm:$0xff]
    %v12665 = vld [vmem:[#allocation10 + $0x210] sm:$0xff]
    %v12666 = vld [vmem:[#allocation10 + $0x218] sm:$0xff]
    %v12667 = vld [vmem:[#allocation10 + $0x220] sm:$0xff]
    %v12668 = vld [vmem:[#allocation10 + $0x228] sm:$0xff]
    %v12669 = vld [vmem:[#allocation10 + $0x230] sm:$0xff]
    %v12670 = vld [vmem:[#allocation10 + $0x238] sm:$0xff]
    %v12671 = vld [vmem:[#allocation10 + $0x240] sm:$0xff]
    %v12672 = vld [vmem:[#allocation10 + $0x248] sm:$0xff]
    %v12673 = vld [vmem:[#allocation10 + $0x250] sm:$0xff]
    %v12674 = vld [vmem:[#allocation10 + $0x258] sm:$0xff]
    %v12675 = vld [vmem:[#allocation10 + $0x260] sm:$0xff]
    %v12676 = vld [vmem:[#allocation10 + $0x268] sm:$0xff]
    %v12677 = vld [vmem:[#allocation10 + $0x270] sm:$0xff]
    %v12678 = vld [vmem:[#allocation10 + $0x278] sm:$0xff]
    %v12679 = vld [vmem:[#allocation10 + $0x280] sm:$0xff]
    %v12680 = vld [vmem:[#allocation10 + $0x288] sm:$0xff]
    %v12681 = vld [vmem:[#allocation10 + $0x290] sm:$0xff]
    %v12682 = vld [vmem:[#allocation10 + $0x298] sm:$0xff]
    %v12683 = vld [vmem:[#allocation10 + $0x2a0] sm:$0xff]
    %v12684 = vld [vmem:[#allocation10 + $0x2a8] sm:$0xff]
    %v12685 = vld [vmem:[#allocation10 + $0x2b0] sm:$0xff]
    %v12686 = vld [vmem:[#allocation10 + $0x2b8] sm:$0xff]
    %v12687 = vld [vmem:[#allocation10 + $0x2c0] sm:$0xff]
    %v12688 = vld [vmem:[#allocation10 + $0x2c8] sm:$0xff]
    %v12689 = vld [vmem:[#allocation10 + $0x2d0] sm:$0xff]
    %v12690 = vld [vmem:[#allocation10 + $0x2d8] sm:$0xff]
    %v12691 = vld [vmem:[#allocation10 + $0x2e0] sm:$0xff]
    %v12692 = vld [vmem:[#allocation10 + $0x2e8] sm:$0xff]
    %v12693 = vld [vmem:[#allocation10 + $0x2f0] sm:$0xff]
    %v12694 = vld [vmem:[#allocation10 + $0x2f8] sm:$0xff]
    %v12695 = vld [vmem:[#allocation10 + $0x300] sm:$0xff]
    %v12696 = vld [vmem:[#allocation10 + $0x308] sm:$0xff]
    %v12697 = vld [vmem:[#allocation10 + $0x310] sm:$0xff]
    %v12698 = vld [vmem:[#allocation10 + $0x318] sm:$0xff]
    %v12699 = vld [vmem:[#allocation10 + $0x320] sm:$0xff]
    %v12700 = vld [vmem:[#allocation10 + $0x328] sm:$0xff]
    %v12701 = vld [vmem:[#allocation10 + $0x330] sm:$0xff]
    %v12702 = vld [vmem:[#allocation10 + $0x338] sm:$0xff]
    %v12703 = vld [vmem:[#allocation10 + $0x340] sm:$0xff]
    %v12704 = vld [vmem:[#allocation10 + $0x348] sm:$0xff]
    %v12705 = vld [vmem:[#allocation10 + $0x350] sm:$0xff]
    %v12706 = vld [vmem:[#allocation10 + $0x358] sm:$0xff]
    %v12707 = vld [vmem:[#allocation10 + $0x360] sm:$0xff]
    %v12708 = vld [vmem:[#allocation10 + $0x368] sm:$0xff]
    %v12709 = vld [vmem:[#allocation10 + $0x370] sm:$0xff]
    %v12710 = vld [vmem:[#allocation10 + $0x378] sm:$0xff]
    %v12711 = vld [vmem:[#allocation10 + $0x380] sm:$0xff]
    %v12712 = vld [vmem:[#allocation10 + $0x388] sm:$0xff]
    %v12713 = vld [vmem:[#allocation10 + $0x390] sm:$0xff]
    %v12714 = vld [vmem:[#allocation10 + $0x398] sm:$0xff]
    %v12715 = vld [vmem:[#allocation10 + $0x3a0] sm:$0xff]
    %v12716 = vld [vmem:[#allocation10 + $0x3a8] sm:$0xff]
    %v12717 = vld [vmem:[#allocation10 + $0x3b0] sm:$0xff]
    %v12718 = vld [vmem:[#allocation10 + $0x3b8] sm:$0xff]
    %v12719 = vld [vmem:[#allocation10 + $0x3c0] sm:$0xff]
    %v12720 = vld [vmem:[#allocation10 + $0x3c8] sm:$0xff]
    %v12721 = vld [vmem:[#allocation10 + $0x3d0] sm:$0xff]
    %v12722 = vld [vmem:[#allocation10 + $0x3d8] sm:$0xff]
    %v12723 = vld [vmem:[#allocation10 + $0x3e0] sm:$0xff]
    %v12724 = vld [vmem:[#allocation10 + $0x3e8] sm:$0xff]
    %v12725 = vld [vmem:[#allocation10 + $0x3f0] sm:$0xff]
    %v12726 = vld [vmem:[#allocation10 + $0x3f8] sm:$0xff]
    %v12727 = vld [vmem:[#allocation11] sm:$0x3]
    %v12729 = vlaneseq
    %v12730 = vshrl.u32 %v12729, 7
    %v12731 = vsub.s32 0, %v12730
    %v12732 = vrot.slane %v12727, %v12731
    %v12733 = vlaneseq
    %v12734 = vshrl.u32 %v12733, 7
    %v12735 = vsub.s32 1, %v12734
    %v12736 = vrot.slane %v12727, %v12735
    %v12867 = vunpack.c.l.b16 %v12599
    %v12868 = vunpack.c.h.b16 %v12599
    %v12869 = vunpack.c.l.b16 %v12600
    %v12870 = vunpack.c.h.b16 %v12600
    %v12871 = vunpack.c.l.b16 %v12601
    %v12872 = vunpack.c.h.b16 %v12601
    %v12873 = vunpack.c.l.b16 %v12602
    %v12874 = vunpack.c.h.b16 %v12602
    %v12875 = vunpack.c.l.b16 %v12603
    %v12876 = vunpack.c.h.b16 %v12603
    %v12877 = vunpack.c.l.b16 %v12604
    %v12878 = vunpack.c.h.b16 %v12604
    %v12879 = vunpack.c.l.b16 %v12605
    %v12880 = vunpack.c.h.b16 %v12605
    %v12881 = vunpack.c.l.b16 %v12606
    %v12882 = vunpack.c.h.b16 %v12606
    %v12883 = vunpack.c.l.b16 %v12607
    %v12884 = vunpack.c.h.b16 %v12607
    %v12885 = vunpack.c.l.b16 %v12608
    %v12886 = vunpack.c.h.b16 %v12608
    %v12887 = vunpack.c.l.b16 %v12609
    %v12888 = vunpack.c.h.b16 %v12609
    %v12889 = vunpack.c.l.b16 %v12610
    %v12890 = vunpack.c.h.b16 %v12610
    %v12891 = vunpack.c.l.b16 %v12611
    %v12892 = vunpack.c.h.b16 %v12611
    %v12893 = vunpack.c.l.b16 %v12612
    %v12894 = vunpack.c.h.b16 %v12612
    %v12895 = vunpack.c.l.b16 %v12613
    %v12896 = vunpack.c.h.b16 %v12613
    %v12897 = vunpack.c.l.b16 %v12614
    %v12898 = vunpack.c.h.b16 %v12614
    %v12899 = vunpack.c.l.b16 %v12615
    %v12900 = vunpack.c.h.b16 %v12615
    %v12901 = vunpack.c.l.b16 %v12616
    %v12902 = vunpack.c.h.b16 %v12616
    %v12903 = vunpack.c.l.b16 %v12617
    %v12904 = vunpack.c.h.b16 %v12617
    %v12905 = vunpack.c.l.b16 %v12618
    %v12906 = vunpack.c.h.b16 %v12618
    %v12907 = vunpack.c.l.b16 %v12619
    %v12908 = vunpack.c.h.b16 %v12619
    %v12909 = vunpack.c.l.b16 %v12620
    %v12910 = vunpack.c.h.b16 %v12620
    %v12911 = vunpack.c.l.b16 %v12621
    %v12912 = vunpack.c.h.b16 %v12621
    %v12913 = vunpack.c.l.b16 %v12622
    %v12914 = vunpack.c.h.b16 %v12622
    %v12915 = vunpack.c.l.b16 %v12623
    %v12916 = vunpack.c.h.b16 %v12623
    %v12917 = vunpack.c.l.b16 %v12624
    %v12918 = vunpack.c.h.b16 %v12624
    %v12919 = vunpack.c.l.b16 %v12625
    %v12920 = vunpack.c.h.b16 %v12625
    %v12921 = vunpack.c.l.b16 %v12626
    %v12922 = vunpack.c.h.b16 %v12626
    %v12923 = vunpack.c.l.b16 %v12627
    %v12924 = vunpack.c.h.b16 %v12627
    %v12925 = vunpack.c.l.b16 %v12628
    %v12926 = vunpack.c.h.b16 %v12628
    %v12927 = vunpack.c.l.b16 %v12629
    %v12928 = vunpack.c.h.b16 %v12629
    %v12929 = vunpack.c.l.b16 %v12630
    %v12930 = vunpack.c.h.b16 %v12630
    %v12931 = vunpack.c.l.b16 %v12631
    %v12932 = vunpack.c.h.b16 %v12631
    %v12933 = vunpack.c.l.b16 %v12632
    %v12934 = vunpack.c.h.b16 %v12632
    %v12935 = vunpack.c.l.b16 %v12633
    %v12936 = vunpack.c.h.b16 %v12633
    %v12937 = vunpack.c.l.b16 %v12634
    %v12938 = vunpack.c.h.b16 %v12634
    %v12939 = vunpack.c.l.b16 %v12635
    %v12940 = vunpack.c.h.b16 %v12635
    %v12941 = vunpack.c.l.b16 %v12636
    %v12942 = vunpack.c.h.b16 %v12636
    %v12943 = vunpack.c.l.b16 %v12637
    %v12944 = vunpack.c.h.b16 %v12637
    %v12945 = vunpack.c.l.b16 %v12638
    %v12946 = vunpack.c.h.b16 %v12638
    %v12947 = vunpack.c.l.b16 %v12639
    %v12948 = vunpack.c.h.b16 %v12639
    %v12949 = vunpack.c.l.b16 %v12640
    %v12950 = vunpack.c.h.b16 %v12640
    %v12951 = vunpack.c.l.b16 %v12641
    %v12952 = vunpack.c.h.b16 %v12641
    %v12953 = vunpack.c.l.b16 %v12642
    %v12954 = vunpack.c.h.b16 %v12642
    %v12955 = vunpack.c.l.b16 %v12643
    %v12956 = vunpack.c.h.b16 %v12643
    %v12957 = vunpack.c.l.b16 %v12644
    %v12958 = vunpack.c.h.b16 %v12644
    %v12959 = vunpack.c.l.b16 %v12645
    %v12960 = vunpack.c.h.b16 %v12645
    %v12961 = vunpack.c.l.b16 %v12646
    %v12962 = vunpack.c.h.b16 %v12646
    %v12963 = vunpack.c.l.b16 %v12647
    %v12964 = vunpack.c.h.b16 %v12647
    %v12965 = vunpack.c.l.b16 %v12648
    %v12966 = vunpack.c.h.b16 %v12648
    %v12967 = vunpack.c.l.b16 %v12649
    %v12968 = vunpack.c.h.b16 %v12649
    %v12969 = vunpack.c.l.b16 %v12650
    %v12970 = vunpack.c.h.b16 %v12650
    %v12971 = vunpack.c.l.b16 %v12651
    %v12972 = vunpack.c.h.b16 %v12651
    %v12973 = vunpack.c.l.b16 %v12652
    %v12974 = vunpack.c.h.b16 %v12652
    %v12975 = vunpack.c.l.b16 %v12653
    %v12976 = vunpack.c.h.b16 %v12653
    %v12977 = vunpack.c.l.b16 %v12654
    %v12978 = vunpack.c.h.b16 %v12654
    %v12979 = vunpack.c.l.b16 %v12655
    %v12980 = vunpack.c.h.b16 %v12655
    %v12981 = vunpack.c.l.b16 %v12656
    %v12982 = vunpack.c.h.b16 %v12656
    %v12983 = vunpack.c.l.b16 %v12657
    %v12984 = vunpack.c.h.b16 %v12657
    %v12985 = vunpack.c.l.b16 %v12658
    %v12986 = vunpack.c.h.b16 %v12658
    %v12987 = vunpack.c.l.b16 %v12659
    %v12988 = vunpack.c.h.b16 %v12659
    %v12989 = vunpack.c.l.b16 %v12660
    %v12990 = vunpack.c.h.b16 %v12660
    %v12991 = vunpack.c.l.b16 %v12661
    %v12992 = vunpack.c.h.b16 %v12661
    %v12993 = vunpack.c.l.b16 %v12662
    %v12994 = vunpack.c.h.b16 %v12662
    %v12995 = vunpack.c.l.b16 %v12663
    %v12996 = vunpack.c.h.b16 %v12663
    %v12997 = vunpack.c.l.b16 %v12664
    %v12998 = vunpack.c.h.b16 %v12664
    %v12999 = vunpack.c.l.b16 %v12665
    %v13000 = vunpack.c.h.b16 %v12665
    %v13001 = vunpack.c.l.b16 %v12666
    %v13002 = vunpack.c.h.b16 %v12666
    %v13003 = vunpack.c.l.b16 %v12667
    %v13004 = vunpack.c.h.b16 %v12667
    %v13005 = vunpack.c.l.b16 %v12668
    %v13006 = vunpack.c.h.b16 %v12668
    %v13007 = vunpack.c.l.b16 %v12669
    %v13008 = vunpack.c.h.b16 %v12669
    %v13009 = vunpack.c.l.b16 %v12670
    %v13010 = vunpack.c.h.b16 %v12670
    %v13011 = vunpack.c.l.b16 %v12671
    %v13012 = vunpack.c.h.b16 %v12671
    %v13013 = vunpack.c.l.b16 %v12672
    %v13014 = vunpack.c.h.b16 %v12672
    %v13015 = vunpack.c.l.b16 %v12673
    %v13016 = vunpack.c.h.b16 %v12673
    %v13017 = vunpack.c.l.b16 %v12674
    %v13018 = vunpack.c.h.b16 %v12674
    %v13019 = vunpack.c.l.b16 %v12675
    %v13020 = vunpack.c.h.b16 %v12675
    %v13021 = vunpack.c.l.b16 %v12676
    %v13022 = vunpack.c.h.b16 %v12676
    %v13023 = vunpack.c.l.b16 %v12677
    %v13024 = vunpack.c.h.b16 %v12677
    %v13025 = vunpack.c.l.b16 %v12678
    %v13026 = vunpack.c.h.b16 %v12678
    %v13027 = vunpack.c.l.b16 %v12679
    %v13028 = vunpack.c.h.b16 %v12679
    %v13029 = vunpack.c.l.b16 %v12680
    %v13030 = vunpack.c.h.b16 %v12680
    %v13031 = vunpack.c.l.b16 %v12681
    %v13032 = vunpack.c.h.b16 %v12681
    %v13033 = vunpack.c.l.b16 %v12682
    %v13034 = vunpack.c.h.b16 %v12682
    %v13035 = vunpack.c.l.b16 %v12683
    %v13036 = vunpack.c.h.b16 %v12683
    %v13037 = vunpack.c.l.b16 %v12684
    %v13038 = vunpack.c.h.b16 %v12684
    %v13039 = vunpack.c.l.b16 %v12685
    %v13040 = vunpack.c.h.b16 %v12685
    %v13041 = vunpack.c.l.b16 %v12686
    %v13042 = vunpack.c.h.b16 %v12686
    %v13043 = vunpack.c.l.b16 %v12687
    %v13044 = vunpack.c.h.b16 %v12687
    %v13045 = vunpack.c.l.b16 %v12688
    %v13046 = vunpack.c.h.b16 %v12688
    %v13047 = vunpack.c.l.b16 %v12689
    %v13048 = vunpack.c.h.b16 %v12689
    %v13049 = vunpack.c.l.b16 %v12690
    %v13050 = vunpack.c.h.b16 %v12690
    %v13051 = vunpack.c.l.b16 %v12691
    %v13052 = vunpack.c.h.b16 %v12691
    %v13053 = vunpack.c.l.b16 %v12692
    %v13054 = vunpack.c.h.b16 %v12692
    %v13055 = vunpack.c.l.b16 %v12693
    %v13056 = vunpack.c.h.b16 %v12693
    %v13057 = vunpack.c.l.b16 %v12694
    %v13058 = vunpack.c.h.b16 %v12694
    %v13059 = vunpack.c.l.b16 %v12695
    %v13060 = vunpack.c.h.b16 %v12695
    %v13061 = vunpack.c.l.b16 %v12696
    %v13062 = vunpack.c.h.b16 %v12696
    %v13063 = vunpack.c.l.b16 %v12697
    %v13064 = vunpack.c.h.b16 %v12697
    %v13065 = vunpack.c.l.b16 %v12698
    %v13066 = vunpack.c.h.b16 %v12698
    %v13067 = vunpack.c.l.b16 %v12699
    %v13068 = vunpack.c.h.b16 %v12699
    %v13069 = vunpack.c.l.b16 %v12700
    %v13070 = vunpack.c.h.b16 %v12700
    %v13071 = vunpack.c.l.b16 %v12701
    %v13072 = vunpack.c.h.b16 %v12701
    %v13073 = vunpack.c.l.b16 %v12702
    %v13074 = vunpack.c.h.b16 %v12702
    %v13075 = vunpack.c.l.b16 %v12703
    %v13076 = vunpack.c.h.b16 %v12703
    %v13077 = vunpack.c.l.b16 %v12704
    %v13078 = vunpack.c.h.b16 %v12704
    %v13079 = vunpack.c.l.b16 %v12705
    %v13080 = vunpack.c.h.b16 %v12705
    %v13081 = vunpack.c.l.b16 %v12706
    %v13082 = vunpack.c.h.b16 %v12706
    %v13083 = vunpack.c.l.b16 %v12707
    %v13084 = vunpack.c.h.b16 %v12707
    %v13085 = vunpack.c.l.b16 %v12708
    %v13086 = vunpack.c.h.b16 %v12708
    %v13087 = vunpack.c.l.b16 %v12709
    %v13088 = vunpack.c.h.b16 %v12709
    %v13089 = vunpack.c.l.b16 %v12710
    %v13090 = vunpack.c.h.b16 %v12710
    %v13091 = vunpack.c.l.b16 %v12711
    %v13092 = vunpack.c.h.b16 %v12711
    %v13093 = vunpack.c.l.b16 %v12712
    %v13094 = vunpack.c.h.b16 %v12712
    %v13095 = vunpack.c.l.b16 %v12713
    %v13096 = vunpack.c.h.b16 %v12713
    %v13097 = vunpack.c.l.b16 %v12714
    %v13098 = vunpack.c.h.b16 %v12714
    %v13099 = vunpack.c.l.b16 %v12715
    %v13100 = vunpack.c.h.b16 %v12715
    %v13101 = vunpack.c.l.b16 %v12716
    %v13102 = vunpack.c.h.b16 %v12716
    %v13103 = vunpack.c.l.b16 %v12717
    %v13104 = vunpack.c.h.b16 %v12717
    %v13105 = vunpack.c.l.b16 %v12718
    %v13106 = vunpack.c.h.b16 %v12718
    %v13107 = vunpack.c.l.b16 %v12719
    %v13108 = vunpack.c.h.b16 %v12719
    %v13109 = vunpack.c.l.b16 %v12720
    %v13110 = vunpack.c.h.b16 %v12720
    %v13111 = vunpack.c.l.b16 %v12721
    %v13112 = vunpack.c.h.b16 %v12721
    %v13113 = vunpack.c.l.b16 %v12722
    %v13114 = vunpack.c.h.b16 %v12722
    %v13115 = vunpack.c.l.b16 %v12723
    %v13116 = vunpack.c.h.b16 %v12723
    %v13117 = vunpack.c.l.b16 %v12724
    %v13118 = vunpack.c.h.b16 %v12724
    %v13119 = vunpack.c.l.b16 %v12725
    %v13120 = vunpack.c.h.b16 %v12725
    %v13121 = vunpack.c.l.b16 %v12726
    %v13122 = vunpack.c.h.b16 %v12726
    %v13123 = vpack.c.b16 %v12869, %v12867
    %v13124 = vpack.c.b16 %v12870, %v12868
    %v13125 = vpack.c.b16 %v12873, %v12871
    %v13126 = vpack.c.b16 %v12874, %v12872
    %v13127 = vpack.c.b16 %v12877, %v12875
    %v13128 = vpack.c.b16 %v12878, %v12876
    %v13129 = vpack.c.b16 %v12881, %v12879
    %v13130 = vpack.c.b16 %v12882, %v12880
    %v13131 = vpack.c.b16 %v12885, %v12883
    %v13132 = vpack.c.b16 %v12886, %v12884
    %v13133 = vpack.c.b16 %v12889, %v12887
    %v13134 = vpack.c.b16 %v12890, %v12888
    %v13135 = vpack.c.b16 %v12893, %v12891
    %v13136 = vpack.c.b16 %v12894, %v12892
    %v13137 = vpack.c.b16 %v12897, %v12895
    %v13138 = vpack.c.b16 %v12898, %v12896
    %v13139 = vpack.c.b16 %v12901, %v12899
    %v13140 = vpack.c.b16 %v12902, %v12900
    %v13141 = vpack.c.b16 %v12905, %v12903
    %v13142 = vpack.c.b16 %v12906, %v12904
    %v13143 = vpack.c.b16 %v12909, %v12907
    %v13144 = vpack.c.b16 %v12910, %v12908
    %v13145 = vpack.c.b16 %v12913, %v12911
    %v13146 = vpack.c.b16 %v12914, %v12912
    %v13147 = vpack.c.b16 %v12917, %v12915
    %v13148 = vpack.c.b16 %v12918, %v12916
    %v13149 = vpack.c.b16 %v12921, %v12919
    %v13150 = vpack.c.b16 %v12922, %v12920
    %v13151 = vpack.c.b16 %v12925, %v12923
    %v13152 = vpack.c.b16 %v12926, %v12924
    %v13153 = vpack.c.b16 %v12929, %v12927
    %v13154 = vpack.c.b16 %v12930, %v12928
    %v13155 = vpack.c.b16 %v12933, %v12931
    %v13156 = vpack.c.b16 %v12934, %v12932
    %v13157 = vpack.c.b16 %v12937, %v12935
    %v13158 = vpack.c.b16 %v12938, %v12936
    %v13159 = vpack.c.b16 %v12941, %v12939
    %v13160 = vpack.c.b16 %v12942, %v12940
    %v13161 = vpack.c.b16 %v12945, %v12943
    %v13162 = vpack.c.b16 %v12946, %v12944
    %v13163 = vpack.c.b16 %v12949, %v12947
    %v13164 = vpack.c.b16 %v12950, %v12948
    %v13165 = vpack.c.b16 %v12953, %v12951
    %v13166 = vpack.c.b16 %v12954, %v12952
    %v13167 = vpack.c.b16 %v12957, %v12955
    %v13168 = vpack.c.b16 %v12958, %v12956
    %v13169 = vpack.c.b16 %v12961, %v12959
    %v13170 = vpack.c.b16 %v12962, %v12960
    %v13171 = vpack.c.b16 %v12965, %v12963
    %v13172 = vpack.c.b16 %v12966, %v12964
    %v13173 = vpack.c.b16 %v12969, %v12967
    %v13174 = vpack.c.b16 %v12970, %v12968
    %v13175 = vpack.c.b16 %v12973, %v12971
    %v13176 = vpack.c.b16 %v12974, %v12972
    %v13177 = vpack.c.b16 %v12977, %v12975
    %v13178 = vpack.c.b16 %v12978, %v12976
    %v13179 = vpack.c.b16 %v12981, %v12979
    %v13180 = vpack.c.b16 %v12982, %v12980
    %v13181 = vpack.c.b16 %v12985, %v12983
    %v13182 = vpack.c.b16 %v12986, %v12984
    %v13183 = vpack.c.b16 %v12989, %v12987
    %v13184 = vpack.c.b16 %v12990, %v12988
    %v13185 = vpack.c.b16 %v12993, %v12991
    %v13186 = vpack.c.b16 %v12994, %v12992
    %v13187 = vpack.c.b16 %v12997, %v12995
    %v13188 = vpack.c.b16 %v12998, %v12996
    %v13189 = vpack.c.b16 %v13001, %v12999
    %v13190 = vpack.c.b16 %v13002, %v13000
    %v13191 = vpack.c.b16 %v13005, %v13003
    %v13192 = vpack.c.b16 %v13006, %v13004
    %v13193 = vpack.c.b16 %v13009, %v13007
    %v13194 = vpack.c.b16 %v13010, %v13008
    %v13195 = vpack.c.b16 %v13013, %v13011
    %v13196 = vpack.c.b16 %v13014, %v13012
    %v13197 = vpack.c.b16 %v13017, %v13015
    %v13198 = vpack.c.b16 %v13018, %v13016
    %v13199 = vpack.c.b16 %v13021, %v13019
    %v13200 = vpack.c.b16 %v13022, %v13020
    %v13201 = vpack.c.b16 %v13025, %v13023
    %v13202 = vpack.c.b16 %v13026, %v13024
    %v13203 = vpack.c.b16 %v13029, %v13027
    %v13204 = vpack.c.b16 %v13030, %v13028
    %v13205 = vpack.c.b16 %v13033, %v13031
    %v13206 = vpack.c.b16 %v13034, %v13032
    %v13207 = vpack.c.b16 %v13037, %v13035
    %v13208 = vpack.c.b16 %v13038, %v13036
    %v13209 = vpack.c.b16 %v13041, %v13039
    %v13210 = vpack.c.b16 %v13042, %v13040
    %v13211 = vpack.c.b16 %v13045, %v13043
    %v13212 = vpack.c.b16 %v13046, %v13044
    %v13213 = vpack.c.b16 %v13049, %v13047
    %v13214 = vpack.c.b16 %v13050, %v13048
    %v13215 = vpack.c.b16 %v13053, %v13051
    %v13216 = vpack.c.b16 %v13054, %v13052
    %v13217 = vpack.c.b16 %v13057, %v13055
    %v13218 = vpack.c.b16 %v13058, %v13056
    %v13219 = vpack.c.b16 %v13061, %v13059
    %v13220 = vpack.c.b16 %v13062, %v13060
    %v13221 = vpack.c.b16 %v13065, %v13063
    %v13222 = vpack.c.b16 %v13066, %v13064
    %v13223 = vpack.c.b16 %v13069, %v13067
    %v13224 = vpack.c.b16 %v13070, %v13068
    %v13225 = vpack.c.b16 %v13073, %v13071
    %v13226 = vpack.c.b16 %v13074, %v13072
    %v13227 = vpack.c.b16 %v13077, %v13075
    %v13228 = vpack.c.b16 %v13078, %v13076
    %v13229 = vpack.c.b16 %v13081, %v13079
    %v13230 = vpack.c.b16 %v13082, %v13080
    %v13231 = vpack.c.b16 %v13085, %v13083
    %v13232 = vpack.c.b16 %v13086, %v13084
    %v13233 = vpack.c.b16 %v13089, %v13087
    %v13234 = vpack.c.b16 %v13090, %v13088
    %v13235 = vpack.c.b16 %v13093, %v13091
    %v13236 = vpack.c.b16 %v13094, %v13092
    %v13237 = vpack.c.b16 %v13097, %v13095
    %v13238 = vpack.c.b16 %v13098, %v13096
    %v13239 = vpack.c.b16 %v13101, %v13099
    %v13240 = vpack.c.b16 %v13102, %v13100
    %v13241 = vpack.c.b16 %v13105, %v13103
    %v13242 = vpack.c.b16 %v13106, %v13104
    %v13243 = vpack.c.b16 %v13109, %v13107
    %v13244 = vpack.c.b16 %v13110, %v13108
    %v13245 = vpack.c.b16 %v13113, %v13111
    %v13246 = vpack.c.b16 %v13114, %v13112
    %v13247 = vpack.c.b16 %v13117, %v13115
    %v13248 = vpack.c.b16 %v13118, %v13116
    %v13249 = vpack.c.b16 %v13121, %v13119
    %v13250 = vpack.c.b16 %v13122, %v13120
    %13379 = vmatprep.subr.bf16.mxu0 %v13124
    %13380 = vmatpush1.bf16.msra.mxu0 %v13123
    %13381 = vmatprep.subr.bf16.mxu0 %v13126
    %13382 = vmatpush1.bf16.msra.mxu0 %v13125
    %13383 = vmatprep.subr.bf16.mxu0 %v13128
    %13384 = vmatpush1.bf16.msra.mxu0 %v13127
    %13385 = vmatprep.subr.bf16.mxu0 %v13130
    %13386 = vmatpush1.bf16.msra.mxu0 %v13129
    %13387 = vmatprep.subr.bf16.mxu0 %v13132
    %13388 = vmatpush1.bf16.msra.mxu0 %v13131
    %13389 = vmatprep.subr.bf16.mxu0 %v13134
    %13390 = vmatpush1.bf16.msra.mxu0 %v13133
    %13391 = vmatprep.subr.bf16.mxu0 %v13136
    %13392 = vmatpush1.bf16.msra.mxu0 %v13135
    %13393 = vmatprep.subr.bf16.mxu0 %v13138
    %13394 = vmatpush1.bf16.msra.mxu0 %v13137
    %13395 = vmatprep.subr.bf16.mxu0 %v13140
    %13396 = vmatpush1.bf16.msra.mxu0 %v13139
    %13397 = vmatprep.subr.bf16.mxu0 %v13142
    %13398 = vmatpush1.bf16.msra.mxu0 %v13141
    %13399 = vmatprep.subr.bf16.mxu0 %v13144
    %13400 = vmatpush1.bf16.msra.mxu0 %v13143
    %13401 = vmatprep.subr.bf16.mxu0 %v13146
    %13402 = vmatpush1.bf16.msra.mxu0 %v13145
    %13403 = vmatprep.subr.bf16.mxu0 %v13148
    %13404 = vmatpush1.bf16.msra.mxu0 %v13147
    %13405 = vmatprep.subr.bf16.mxu0 %v13150
    %13406 = vmatpush1.bf16.msra.mxu0 %v13149
    %13407 = vmatprep.subr.bf16.mxu0 %v13152
    %13408 = vmatpush1.bf16.msra.mxu0 %v13151
    %13409 = vmatprep.subr.bf16.mxu0 %v13154
    %13410 = vmatpush1.bf16.msra.mxu0 %v13153
    %13411 = vmatprep.mubr.bf16.mxu0 %v12592
    %13412 = vmatmul.mubr.bf16.gmra.mrb[0].mxu0 %v12591
    %v13413 = vpop.f32.mrb[0].mxu0
    %v13414 = vadd.f32 %v12732, %v13413
    %v13415 = vpop.f32.mrb[0].mxu0
    %v13416 = vadd.f32 %v12736, %v13415
    %v13417 = vpop.f32.mrb[0].mxu0
    %v13418 = vpop.f32.mrb[0].mxu0
    %13419 = vdwg.mxu0
    %13420 = vmatprep.subr.bf16.mxu0 %v13156
    %13421 = vmatpush1.bf16.msra.mxu0 %v13155
    %13422 = vmatprep.subr.bf16.mxu0 %v13158
    %13423 = vmatpush1.bf16.msra.mxu0 %v13157
    %13424 = vmatprep.subr.bf16.mxu0 %v13160
    %13425 = vmatpush1.bf16.msra.mxu0 %v13159
    %13426 = vmatprep.subr.bf16.mxu0 %v13162
    %13427 = vmatpush1.bf16.msra.mxu0 %v13161
    %13428 = vmatprep.subr.bf16.mxu0 %v13164
    %13429 = vmatpush1.bf16.msra.mxu0 %v13163
    %13430 = vmatprep.subr.bf16.mxu0 %v13166
    %13431 = vmatpush1.bf16.msra.mxu0 %v13165
    %13432 = vmatprep.subr.bf16.mxu0 %v13168
    %13433 = vmatpush1.bf16.msra.mxu0 %v13167
    %13434 = vmatprep.subr.bf16.mxu0 %v13170
    %13435 = vmatpush1.bf16.msra.mxu0 %v13169
    %13436 = vmatprep.subr.bf16.mxu0 %v13172
    %13437 = vmatpush1.bf16.msra.mxu0 %v13171
    %13438 = vmatprep.subr.bf16.mxu0 %v13174
    %13439 = vmatpush1.bf16.msra.mxu0 %v13173
    %13440 = vmatprep.subr.bf16.mxu0 %v13176
    %13441 = vmatpush1.bf16.msra.mxu0 %v13175
    %13442 = vmatprep.subr.bf16.mxu0 %v13178
    %13443 = vmatpush1.bf16.msra.mxu0 %v13177
    %13444 = vmatprep.subr.bf16.mxu0 %v13180
    %13445 = vmatpush1.bf16.msra.mxu0 %v13179
    %13446 = vmatprep.subr.bf16.mxu0 %v13182
    %13447 = vmatpush1.bf16.msra.mxu0 %v13181
    %13448 = vmatprep.subr.bf16.mxu0 %v13184
    %13449 = vmatpush1.bf16.msra.mxu0 %v13183
    %13450 = vmatprep.subr.bf16.mxu0 %v13186
    %13451 = vmatpush1.bf16.msra.mxu0 %v13185
    %13452 = vmatprep.mubr.bf16.mxu0 %v12594
    %13453 = vmatmul.mubr.bf16.gmra.mrb[0].mxu0 %v12593
    %v13454 = vpop.f32.mrb[0].mxu0
    %v13455 = vadd.f32 %v13414, %v13454
    %v13456 = vpop.f32.mrb[0].mxu0
    %v13457 = vadd.f32 %v13416, %v13456
    %v13458 = vpop.f32.mrb[0].mxu0
    %v13459 = vpop.f32.mrb[0].mxu0
    %13460 = vdwg.mxu0
    %13461 = vmatprep.subr.bf16.mxu0 %v13188
    %13462 = vmatpush1.bf16.msra.mxu0 %v13187
    %13463 = vmatprep.subr.bf16.mxu0 %v13190
    %13464 = vmatpush1.bf16.msra.mxu0 %v13189
    %13465 = vmatprep.subr.bf16.mxu0 %v13192
    %13466 = vmatpush1.bf16.msra.mxu0 %v13191
    %13467 = vmatprep.subr.bf16.mxu0 %v13194
    %13468 = vmatpush1.bf16.msra.mxu0 %v13193
    %13469 = vmatprep.subr.bf16.mxu0 %v13196
    %13470 = vmatpush1.bf16.msra.mxu0 %v13195
    %13471 = vmatprep.subr.bf16.mxu0 %v13198
    %13472 = vmatpush1.bf16.msra.mxu0 %v13197
    %13473 = vmatprep.subr.bf16.mxu0 %v13200
    %13474 = vmatpush1.bf16.msra.mxu0 %v13199
    %13475 = vmatprep.subr.bf16.mxu0 %v13202
    %13476 = vmatpush1.bf16.msra.mxu0 %v13201
    %13477 = vmatprep.subr.bf16.mxu0 %v13204
    %13478 = vmatpush1.bf16.msra.mxu0 %v13203
    %13479 = vmatprep.subr.bf16.mxu0 %v13206
    %13480 = vmatpush1.bf16.msra.mxu0 %v13205
    %13481 = vmatprep.subr.bf16.mxu0 %v13208
    %13482 = vmatpush1.bf16.msra.mxu0 %v13207
    %13483 = vmatprep.subr.bf16.mxu0 %v13210
    %13484 = vmatpush1.bf16.msra.mxu0 %v13209
    %13485 = vmatprep.subr.bf16.mxu0 %v13212
    %13486 = vmatpush1.bf16.msra.mxu0 %v13211
    %13487 = vmatprep.subr.bf16.mxu0 %v13214
    %13488 = vmatpush1.bf16.msra.mxu0 %v13213
    %13489 = vmatprep.subr.bf16.mxu0 %v13216
    %13490 = vmatpush1.bf16.msra.mxu0 %v13215
    %13491 = vmatprep.subr.bf16.mxu0 %v13218
    %13492 = vmatpush1.bf16.msra.mxu0 %v13217
    %13493 = vmatprep.mubr.bf16.mxu0 %v12596
    %13494 = vmatmul.mubr.bf16.gmra.mrb[0].mxu0 %v12595
    %v13495 = vpop.f32.mrb[0].mxu0
    %v13496 = vadd.f32 %v13455, %v13495
    %v13497 = vpop.f32.mrb[0].mxu0
    %v13498 = vadd.f32 %v13457, %v13497
    %v13499 = vpop.f32.mrb[0].mxu0
    %v13500 = vpop.f32.mrb[0].mxu0
    %13501 = vdwg.mxu0
    %13502 = vmatprep.subr.bf16.mxu0 %v13220
    %13503 = vmatpush1.bf16.msra.mxu0 %v13219
    %13504 = vmatprep.subr.bf16.mxu0 %v13222
    %13505 = vmatpush1.bf16.msra.mxu0 %v13221
    %13506 = vmatprep.subr.bf16.mxu0 %v13224
    %13507 = vmatpush1.bf16.msra.mxu0 %v13223
    %13508 = vmatprep.subr.bf16.mxu0 %v13226
    %13509 = vmatpush1.bf16.msra.mxu0 %v13225
    %13510 = vmatprep.subr.bf16.mxu0 %v13228
    %13511 = vmatpush1.bf16.msra.mxu0 %v13227
    %13512 = vmatprep.subr.bf16.mxu0 %v13230
    %13513 = vmatpush1.bf16.msra.mxu0 %v13229
    %13514 = vmatprep.subr.bf16.mxu0 %v13232
    %13515 = vmatpush1.bf16.msra.mxu0 %v13231
    %13516 = vmatprep.subr.bf16.mxu0 %v13234
    %13517 = vmatpush1.bf16.msra.mxu0 %v13233
    %13518 = vmatprep.subr.bf16.mxu0 %v13236
    %13519 = vmatpush1.bf16.msra.mxu0 %v13235
    %13520 = vmatprep.subr.bf16.mxu0 %v13238
    %13521 = vmatpush1.bf16.msra.mxu0 %v13237
    %13522 = vmatprep.subr.bf16.mxu0 %v13240
    %13523 = vmatpush1.bf16.msra.mxu0 %v13239
    %13524 = vmatprep.subr.bf16.mxu0 %v13242
    %13525 = vmatpush1.bf16.msra.mxu0 %v13241
    %13526 = vmatprep.subr.bf16.mxu0 %v13244
    %13527 = vmatpush1.bf16.msra.mxu0 %v13243
    %13528 = vmatprep.subr.bf16.mxu0 %v13246
    %13529 = vmatpush1.bf16.msra.mxu0 %v13245
    %13530 = vmatprep.subr.bf16.mxu0 %v13248
    %13531 = vmatpush1.bf16.msra.mxu0 %v13247
    %13532 = vmatprep.subr.bf16.mxu0 %v13250
    %13533 = vmatpush1.bf16.msra.mxu0 %v13249
    %13534 = vmatprep.mubr.bf16.mxu0 %v12598
    %13535 = vmatmul.mubr.bf16.gmra.mrb[0].mxu0 %v12597
    %v13536 = vpop.f32.mrb[0].mxu0
    %v13537 = vadd.f32 %v13496, %v13536
    %v13538 = vpop.f32.mrb[0].mxu0
    %v13539 = vadd.f32 %v13498, %v13538
    %v13540 = vpop.f32.mrb[0].mxu0
    %v13541 = vpop.f32.mrb[0].mxu0
    %13542 = vdwg.mxu0
    %v13543 = vmax.f32 %v13537, 0.0
    %v13544 = vmax.f32 %v13539, 0.0
    %v13545 = vpack.c.bf16 %v13543, %v13543
    %v13546 = vpack.c.bf16 %v13544, %v13544
    %v13547 = vld [vmem:[#allocation13] sm:$0xf]
    %v13548 = vld [vmem:[#allocation13 + $0x4] sm:$0xf]
    %v13549 = vld [vmem:[#allocation13 + $0x8] sm:$0xf]
    %v13550 = vld [vmem:[#allocation13 + $0xc] sm:$0xf]
    %v13551 = vld [vmem:[#allocation13 + $0x10] sm:$0xf]
    %v13552 = vld [vmem:[#allocation13 + $0x14] sm:$0xf]
    %v13553 = vld [vmem:[#allocation13 + $0x18] sm:$0xf]
    %v13554 = vld [vmem:[#allocation13 + $0x1c] sm:$0xf]
    %v13555 = vld [vmem:[#allocation13 + $0x20] sm:$0xf]
    %v13556 = vld [vmem:[#allocation13 + $0x24] sm:$0xf]
    %v13557 = vld [vmem:[#allocation13 + $0x28] sm:$0xf]
    %v13558 = vld [vmem:[#allocation13 + $0x2c] sm:$0xf]
    %v13559 = vld [vmem:[#allocation13 + $0x30] sm:$0xf]
    %v13560 = vld [vmem:[#allocation13 + $0x34] sm:$0xf]
    %v13561 = vld [vmem:[#allocation13 + $0x38] sm:$0xf]
    %v13562 = vld [vmem:[#allocation13 + $0x3c] sm:$0xf]
    %v13563 = vld [vmem:[#allocation13 + $0x40] sm:$0xf]
    %v13564 = vld [vmem:[#allocation13 + $0x44] sm:$0xf]
    %v13565 = vld [vmem:[#allocation13 + $0x48] sm:$0xf]
    %v13566 = vld [vmem:[#allocation13 + $0x4c] sm:$0xf]
    %v13567 = vld [vmem:[#allocation13 + $0x50] sm:$0xf]
    %v13568 = vld [vmem:[#allocation13 + $0x54] sm:$0xf]
    %v13569 = vld [vmem:[#allocation13 + $0x58] sm:$0xf]
    %v13570 = vld [vmem:[#allocation13 + $0x5c] sm:$0xf]
    %v13571 = vld [vmem:[#allocation13 + $0x60] sm:$0xf]
    %v13572 = vld [vmem:[#allocation13 + $0x64] sm:$0xf]
    %v13573 = vld [vmem:[#allocation13 + $0x68] sm:$0xf]
    %v13574 = vld [vmem:[#allocation13 + $0x6c] sm:$0xf]
    %v13575 = vld [vmem:[#allocation13 + $0x70] sm:$0xf]
    %v13576 = vld [vmem:[#allocation13 + $0x74] sm:$0xf]
    %v13577 = vld [vmem:[#allocation13 + $0x78] sm:$0xf]
    %v13578 = vld [vmem:[#allocation13 + $0x7c] sm:$0xf]
    %v13579 = vld [vmem:[#allocation14] sm:$0x1]
    %v13581 = vlaneseq
    %v13582 = vshrl.u32 %v13581, 7
    %v13583 = vsub.s32 0, %v13582
    %v13584 = vrot.slane %v13579, %v13583
    %v13618 = vunpack.c.l.b16 %v13547
    %v13619 = vunpack.c.l.b16 %v13548
    %v13620 = vunpack.c.l.b16 %v13549
    %v13621 = vunpack.c.l.b16 %v13550
    %v13622 = vunpack.c.l.b16 %v13551
    %v13623 = vunpack.c.l.b16 %v13552
    %v13624 = vunpack.c.l.b16 %v13553
    %v13625 = vunpack.c.l.b16 %v13554
    %v13626 = vunpack.c.l.b16 %v13555
    %v13627 = vunpack.c.l.b16 %v13556
    %v13628 = vunpack.c.l.b16 %v13557
    %v13629 = vunpack.c.l.b16 %v13558
    %v13630 = vunpack.c.l.b16 %v13559
    %v13631 = vunpack.c.l.b16 %v13560
    %v13632 = vunpack.c.l.b16 %v13561
    %v13633 = vunpack.c.l.b16 %v13562
    %v13634 = vunpack.c.l.b16 %v13563
    %v13635 = vunpack.c.l.b16 %v13564
    %v13636 = vunpack.c.l.b16 %v13565
    %v13637 = vunpack.c.l.b16 %v13566
    %v13638 = vunpack.c.l.b16 %v13567
    %v13639 = vunpack.c.l.b16 %v13568
    %v13640 = vunpack.c.l.b16 %v13569
    %v13641 = vunpack.c.l.b16 %v13570
    %v13642 = vunpack.c.l.b16 %v13571
    %v13643 = vunpack.c.l.b16 %v13572
    %v13644 = vunpack.c.l.b16 %v13573
    %v13645 = vunpack.c.l.b16 %v13574
    %v13646 = vunpack.c.l.b16 %v13575
    %v13647 = vunpack.c.l.b16 %v13576
    %v13648 = vunpack.c.l.b16 %v13577
    %v13649 = vunpack.c.l.b16 %v13578
    %v13650 = vpack.c.b16 %v13619, %v13618
    %v13651 = vpack.c.b16 %v13621, %v13620
    %v13652 = vpack.c.b16 %v13623, %v13622
    %v13653 = vpack.c.b16 %v13625, %v13624
    %v13654 = vpack.c.b16 %v13627, %v13626
    %v13655 = vpack.c.b16 %v13629, %v13628
    %v13656 = vpack.c.b16 %v13631, %v13630
    %v13657 = vpack.c.b16 %v13633, %v13632
    %v13658 = vpack.c.b16 %v13635, %v13634
    %v13659 = vpack.c.b16 %v13637, %v13636
    %v13660 = vpack.c.b16 %v13639, %v13638
    %v13661 = vpack.c.b16 %v13641, %v13640
    %v13662 = vpack.c.b16 %v13643, %v13642
    %v13663 = vpack.c.b16 %v13645, %v13644
    %v13664 = vpack.c.b16 %v13647, %v13646
    %v13665 = vpack.c.b16 %v13649, %v13648
    %13682 = vmatprep.subr.bf16.mxu0 0
    %13683 = vmatpush1.bf16.msra.mxu0 %v13650
    %13684 = vmatprep.subr.bf16.mxu0 0
    %13685 = vmatpush1.bf16.msra.mxu0 %v13651
    %13686 = vmatprep.subr.bf16.mxu0 0
    %13687 = vmatpush1.bf16.msra.mxu0 %v13652
    %13688 = vmatprep.subr.bf16.mxu0 0
    %13689 = vmatpush1.bf16.msra.mxu0 %v13653
    %13690 = vmatprep.subr.bf16.mxu0 0
    %13691 = vmatpush1.bf16.msra.mxu0 %v13654
    %13692 = vmatprep.subr.bf16.mxu0 0
    %13693 = vmatpush1.bf16.msra.mxu0 %v13655
    %13694 = vmatprep.subr.bf16.mxu0 0
    %13695 = vmatpush1.bf16.msra.mxu0 %v13656
    %13696 = vmatprep.subr.bf16.mxu0 0
    %13697 = vmatpush1.bf16.msra.mxu0 %v13657
    %13698 = vmatprep.subr.bf16.mxu0 0
    %13699 = vmatpush1.bf16.msra.mxu0 %v13658
    %13700 = vmatprep.subr.bf16.mxu0 0
    %13701 = vmatpush1.bf16.msra.mxu0 %v13659
    %13702 = vmatprep.subr.bf16.mxu0 0
    %13703 = vmatpush1.bf16.msra.mxu0 %v13660
    %13704 = vmatprep.subr.bf16.mxu0 0
    %13705 = vmatpush1.bf16.msra.mxu0 %v13661
    %13706 = vmatprep.subr.bf16.mxu0 0
    %13707 = vmatpush1.bf16.msra.mxu0 %v13662
    %13708 = vmatprep.subr.bf16.mxu0 0
    %13709 = vmatpush1.bf16.msra.mxu0 %v13663
    %13710 = vmatprep.subr.bf16.mxu0 0
    %13711 = vmatpush1.bf16.msra.mxu0 %v13664
    %13712 = vmatprep.subr.bf16.mxu0 0
    %13713 = vmatpush1.bf16.msra.mxu0 %v13665
    %13714 = vmatprep.mubr.bf16.mxu0 %v13546
    %13715 = vmatmul.mubr.bf16.gmra.mrb[0].mxu0 %v13545
    %v13716 = vpop.f32.mrb[0].mxu0
    %v13717 = vadd.f32 %v13584, %v13716
    %v13718 = vpop.f32.mrb[0].mxu0
    %v13719 = vpop.f32.mrb[0].mxu0
    %v13720 = vpop.f32.mrb[0].mxu0
    %13721 = vdwg.mxu0
    %13722 = vst [vmem:[#allocation16] sm:$0xff] %v13717
    // Predicated region
    $region70: #{mnist_2nn_forward.1} parent=1 // pred_check
      _
    $region71: #{mnist_2nn_forward.1} parent=1 // pred_check_branch
      %13724 = sbr.rel (0) target = $region73
    $region72: #{mnist_2nn_forward.1} parent=1 // pred_region
      %s13726 = ssub.s32 128, 128
      %13727 = vsyncadd [#allocation4], %s13726
      %s13729 = sshll.u32 [#allocation16], 4
      %s13730 = int_to_ptr.vmem [resolvable:$true] %s13729
      %13732 = dma.vmem_to_hbm [thread:$0]  %s13730, 128, %s9, [#allocation4]
    $region73: #{mnist_2nn_forward.1} parent=1 // pred_fallthru
      _
    // Predicated region
    $region74: #{mnist_2nn_forward.1} parent=1 // pred_check
      _
    $region75: #{mnist_2nn_forward.1} parent=1 // pred_check_branch
      %13734 = sbr.rel (0) target = $region77
    $region76: #{mnist_2nn_forward.1} parent=1 // pred_region
      %13735 = dma.done [#allocation4], 128
    $region77: #{mnist_2nn_forward.1} parent=1 // pred_fallthru
      _
    %13736 = vsyncpa [#allocation3], 1
    %13737 = vsyncpa [#allocation6], 1
    %13738 = vsyncpa [#allocation9], 1
    %13739 = vsyncpa [#allocation12], 1
    %13740 = vsyncpa [#allocation15], 1
    %13741 = vsyncpa [#allocation4], 1

</llo_original>
